<compile_context>
chip_gen: v7x
topology: tpu7x:2x2x1
jax: 0.10.0
libtpu: 0.0.40
codegen_flags: <defaults>
</compile_context>

<pallas_src>
import functools

import numpy as np
import jax
import jax.numpy as jnp
from jax import lax
from jax.experimental import pallas as pl
from jax.experimental.pallas import tpu as pltpu

SHARED_DIM = 128
SIM_DIM = 64
NUM_EXPERTS = 2          # fused expert weights assume K == 2
EXPERT_HIDDEN = 8


def _full_spec(shape):
    nd = len(shape)
    return pl.BlockSpec(tuple(shape), lambda i, _n=nd: (0,) * _n)


_ARB = pltpu.CompilerParams(dimension_semantics=("arbitrary",))


# -----------------------------------------------------------------------------
# The single fused kernel
# -----------------------------------------------------------------------------
def _fused_kernel(*refs, expert_update):
    it = iter(refs)
    nx = lambda: next(it)
    img_ref, txt_ref, oh_ref, v_ref, eps_ref = nx(), nx(), nx(), nx(), nx()
    iw1, ib1, iw2, ib2, iw3, ib3, iw4, ib4 = nx(), nx(), nx(), nx(), nx(), nx(), nx(), nx()
    tw1, tb1, tw2, tb2, tw3, tb3, tw4, tb4 = nx(), nx(), nx(), nx(), nx(), nx(), nx(), nx()
    fw1, fb1, fw2, fb2 = nx(), nx(), nx(), nx()
    mw1, mb1, mw2, mb2 = nx(), nx(), nx(), nx()          # block-diag map_dist (x3)
    gw1, gb1, gw2, gb2 = nx(), nx(), nx(), nx()          # dynamics_feature_map
    dW1, dB1, dW2, dB2 = nx(), nx(), nx(), nx()          # experts: disc (fused K=2)
    eW1, eB1, eW2, eB2 = nx(), nx(), nx(), nx()          # experts: enc
    zmW, zmB, zlW, zlB = nx(), nx(), nx(), nx()          # experts: z_mean / z_log_var
    cW1, cB1, cW2, cB2 = nx(), nx(), nx(), nx()          # experts: dec
    rw1, rb1, rw2, rb2 = nx(), nx(), nx(), nx()          # routing
    pw1, pb1, pw2, pb2 = nx(), nx(), nx(), nx()          # routing_map
    sW1d, sW1g, sB1, sW2, sB2 = nx(), nx(), nx(), nx(), nx()  # sim_classifier
    zt_o, main_o, mu_o, sig_o, gram1_o = nx(), nx(), nx(), nx(), nx()

    def lin(x, w_ref, b_ref, relu=True):
        y = jnp.dot(x, w_ref[...], preferred_element_type=jnp.float32) + b_ref[...]
        return jnp.maximum(y, 0.0) if relu else y

    D = SIM_DIM
    D2 = D // 2
    H = EXPERT_HIDDEN

    # ---- image / text encoder stacks (BN folded, dropout = eval identity) ----
    iz = img_ref[...]
    for w, b in ((iw1, ib1), (iw2, ib2), (iw3, ib3), (iw4, ib4)):
        iz = lin(iz, w, b)                               # shared_image + image_aligner
    tz = txt_ref[...]
    for w, b in ((tw1, tb1), (tw2, tb2), (tw3, tb3), (tw4, tb4)):
        tz = lin(tz, w, b)                               # shared_text + text_aligner

    # ---- fusion(cat([text_z, image_z], -1)) via split matmul (no lane concat) ----
    h = (jnp.dot(tz, fw1[0:D, :], preferred_element_type=jnp.float32)
         + jnp.dot(iz, fw1[D:2 * D, :], preferred_element_type=jnp.float32) + fb1[...])
    h = jnp.maximum(h, 0.0)
    ti = lin(h, fw2, fb2)                                # Linear + ReLU (no BN)

    # ---- map_dist applied to [ti | iz | tz] through block-diagonal weights ----
    # result columns: [map(text_image) | map(image_z) | map(text_z)]  (B, 96)
    md_in = jnp.concatenate([ti, iz, tz], axis=-1)       # (B, 192)
    md = lin(lin(md_in, mw1, mb1), mw2, mb2)             # (B, 96)

    onehot = oh_ref[...]                                 # (B, 2)

    # ---- masked per-label-group gaussian statistics (fixed shapes) ----
    def group_stats(mask):                               # mask: (B,1) 0/1
        n = jnp.sum(mask, keepdims=True)                 # (1,1), >= 2 by branch guard
        mu_cat = jnp.sum(md * mask, axis=0, keepdims=True) / n          # (1,96)
        xc = (md - mu_cat) * mask                                        # (B,96)
        gram = lax.dot_general(xc, xc, (((0,), (0,)), ((), ())),
                               preferred_element_type=jnp.float32) / (n - 1.0)
        mixed_mu = (mu_cat[:, 0:D2] + mu_cat[:, D2:2 * D2] + mu_cat[:, 2 * D2:]) / 3.0
        dev = mu_cat - jnp.concatenate([mixed_mu, mixed_mu, mixed_mu], axis=-1)
        big = gram + lax.dot_general(dev, dev, (((0,), (0,)), ((), ())),
                                     preferred_element_type=jnp.float32)
        mixed_sigma = (big[0:D2, 0:D2] + big[D2:2 * D2, D2:2 * D2]
                       + big[2 * D2:, 2 * D2:]) / 3.0
        return mixed_mu, mixed_sigma, gram

    mu0, sigma0, _ = group_stats(onehot[:, 0:1])
    mu1, sigma1, gram1 = group_stats(onehot[:, 1:2])

    # ---- gaussian feature: mu + Sigma @ v, then dynamics_feature_map on one row ----
    v0 = v_ref[0:1, :]
    v1 = v_ref[1:2, :]
    part0 = mu0 + lax.dot_general(v0, sigma0, (((1,), (1,)), ((), ())),
                                  preferred_element_type=jnp.float32)
    part1 = mu1 + lax.dot_general(v1, sigma1, (((1,), (1,)), ((), ())),
                                  preferred_element_type=jnp.float32)
    g_row = lin(lin(jnp.concatenate([part0, part1], axis=-1), gw1, gb1), gw2, gb2)  # (1,16)
    # gaussian feature's contribution to the sim_classifier hidden, computed once
    gc1 = jnp.dot(g_row, sW1g[...], preferred_element_type=jnp.float32)             # (1,64)

    def classifier(d):                                   # d: (B, 64)
        hh = jnp.dot(d, sW1d[...], preferred_element_type=jnp.float32) + gc1 + sB1[...]
        hh = jnp.maximum(hh, 0.0)
        return jnp.dot(hh, sW2[...], preferred_element_type=jnp.float32) + sB2[...]

    # ---- experts (K=2) fused into lane-dense matmuls ----
    x = ti
    dh = lin(x, dW1, dB1)                                # (B, 16) = [h_e0 | h_e1]
    disc_cat = lin(dh, dW2, dB2, relu=False)             # (B, 128) = [disc0 | disc1]
    disc0 = disc_cat[:, 0:D]
    disc1 = disc_cat[:, D:2 * D]

    if expert_update:
        eh = lin(x, eW1, eB1)                            # (B, 16)
        eh = lin(eh, eW2, eB2, relu=False)               # (B, 16)
        z_mean = lin(eh, zmW, zmB, relu=False)           # (B, 16)
        z_log_var = lin(eh, zlW, zlB, relu=False)        # (B, 16)
        z = z_mean + eps_ref[...] * jnp.exp(0.5 * z_log_var)   # reparameterize
        ch = lin(z, cW1, cB1)                            # (B, 128)
        recon_cat = lin(ch, cW2, cB2, relu=False)        # (B, 128) = [recon0 | recon1]
        kld = 0.5 * (-z_log_var + jnp.exp(z_log_var) + z_mean * z_mean - 1.0)
        losses = []
        for k in range(NUM_EXPERTS):
            logits = classifier(disc_cat[:, k * D:(k + 1) * D])
            m = jnp.max(logits, axis=-1, keepdims=True)
            lse = m + jnp.log(jnp.sum(jnp.exp(logits - m), axis=-1, keepdims=True))
            logp = logits - lse
            loss_d = -jnp.mean(jnp.sum(onehot * logp, axis=-1, keepdims=True),
                               axis=0, keepdims=True)                    # CE loss
            mse = jnp.mean((x - recon_cat[:, k * D:(k + 1) * D]) ** 2,
                           axis=-1, keepdims=True)
            loss_g = jnp.mean(jnp.exp(-mse), axis=0, keepdims=True)
            loss_kl = jnp.mean(jnp.sum(kld[:, k * H:(k + 1) * H], axis=-1, keepdims=True),
                               axis=0, keepdims=True)
            losses.append(loss_d + loss_g + loss_kl)
        # softmax is monotone => argmin(softmax(losses)) == argmin(losses); K == 2
        w = (losses[0] <= losses[1]).astype(jnp.float32)                 # (1,1)
        # experts[-1] after a potential deepcopy-append of experts[0]
        disc_last = w * disc0 + (1.0 - w) * disc1
    else:
        disc_last = disc1

    # ---- routing + routing_map + sim_classifier ----
    rw = lin(lin(x, rw1, rb1), rw2, rb2, relu=False)     # (B, 1)
    mixed = rw * disc0 + (1.0 - rw) * disc_last
    rf = lin(lin(mixed, pw1, pb1), pw2, pb2)             # routing_map (BN folded)
    class_out = classifier(rf)                           # (B, 2)  (dropout = eval id)

    # ---- sim head (exact arithmetic; eps guards all-zero post-ReLU rows) ----
    dot = jnp.sum(iz * tz, axis=-1, keepdims=True)
    nanb = jnp.sqrt(jnp.sum(iz * iz, axis=-1, keepdims=True)
                    * jnp.sum(tz * tz, axis=-1, keepdims=True))
    sim = (dot + nanb) / (2.0 * nanb + 1e-12)

    # ---- lane-dense output slabs ----
    B = x.shape[0]
    zt_o[...] = jnp.concatenate([iz, tz], axis=-1)                        # (B, 128)
    main_o[...] = jnp.concatenate(
        [ti, class_out, sim, 1.0 - sim, jnp.zeros((B, 2 * D - (D + 4)), jnp.float32)],
        axis=-1)                                                          # (B, 128)
    mu_o[...] = jnp.concatenate([mu0, mu1], axis=-1)                      # (1, 64)
    sig_o[...] = jnp.concatenate([sigma0, sigma1], axis=-1)               # (32, 64)
    gram1_o[...] = gram1                                                  # (96, 96)


def _run_fused(prep, image_feat, text_hidden, onehot, v01, eps, expert_update):
    B = image_feat.shape[0]
    D = SIM_DIM
    D2 = D // 2
    ins = [image_feat, text_hidden, onehot, v01, eps] + prep["fused"]
    out_shape = (
        jax.ShapeDtypeStruct((B, 2 * D), jnp.float32),       # [image_z | text_z]
        jax.ShapeDtypeStruct((B, 2 * D), jnp.float32),       # [text_image | cls | sim | 1-sim | pad]
        jax.ShapeDtypeStruct((1, 2 * D2), jnp.float32),      # [mu_0 | mu_1]
        jax.ShapeDtypeStruct((D2, 2 * D2), jnp.float32),     # [sigma_0 | sigma_1]
        jax.ShapeDtypeStruct((3 * D2, 3 * D2), jnp.float32),  # group-1 covariance blocks
    )
    kern = functools.partial(_fused_kernel, expert_update=expert_update)
    return pl.pallas_call(
        kern,
        out_shape=out_shape,
        grid=(1,),
        in_specs=[_full_spec(a.shape) for a in ins],
        out_specs=tuple(_full_spec(s.shape) for s in out_shape),
        compiler_params=_ARB,
    )(*ins)


# -----------------------------------------------------------------------------
# deterministic parameter construction (synthetic, PRNGKey-based)
# -----------------------------------------------------------------------------
def init_linear(key, din, dout):
    kw, kb = jax.random.split(key)
    bound = 1.0 / np.sqrt(din)
    return {"W": jax.random.uniform(kw, (din, dout), jnp.float32, -bound, bound),
            "b": jax.random.uniform(kb, (dout,), jnp.float32, -bound, bound)}


def init_bn(key, d, eps=1e-5):
    k1, k2, k3, k4 = jax.random.split(key, 4)
    gamma = jax.random.uniform(k1, (d,), jnp.float32, 0.5, 1.5)
    beta = 0.1 * jax.random.normal(k2, (d,), jnp.float32)
    rm = 0.1 * jax.random.normal(k3, (d,), jnp.float32)
    rv = jax.random.uniform(k4, (d,), jnp.float32, 0.5, 1.5)
    scale = gamma / jnp.sqrt(rv + eps)
    return {"scale": scale, "shift": beta - rm * scale}


def init_expert(key, input_dim, hidden_dim, output_dim):
    ks = jax.random.split(key, 8)
    return {
        "disc": [init_linear(ks[0], input_dim, hidden_dim),
                 init_linear(ks[1], hidden_dim, output_dim)],
        "enc": [init_linear(ks[2], input_dim, hidden_dim),
                init_linear(ks[3], hidden_dim, hidden_dim)],
        "z_mean": init_linear(ks[4], hidden_dim, hidden_dim),
        "z_log_var": init_linear(ks[5], hidden_dim, hidden_dim),
        "dec": [init_linear(ks[6], hidden_dim, output_dim),
                init_linear(ks[7], output_dim, output_dim)],
    }


def build_params(key, bert_hidden, num_ftrs, shared_dim=SHARED_DIM, sim_dim=SIM_DIM,
                 k=NUM_EXPERTS):
    keys = iter(jax.random.split(key, 64))
    nk = lambda: next(keys)
    p = {}
    p["shared_image"] = [init_linear(nk(), num_ftrs, 256), init_linear(nk(), 256, shared_dim)]
    p["shared_image_bn"] = [init_bn(nk(), 256), init_bn(nk(), shared_dim)]
    p["shared_text"] = [init_linear(nk(), bert_hidden, 256), init_linear(nk(), 256, shared_dim)]
    p["shared_text_bn"] = [init_bn(nk(), 256), init_bn(nk(), shared_dim)]
    p["image_aligner"] = [init_linear(nk(), shared_dim, shared_dim), init_linear(nk(), shared_dim, sim_dim)]
    p["image_aligner_bn"] = [init_bn(nk(), shared_dim), init_bn(nk(), sim_dim)]
    p["text_aligner"] = [init_linear(nk(), shared_dim, shared_dim), init_linear(nk(), shared_dim, sim_dim)]
    p["text_aligner_bn"] = [init_bn(nk(), shared_dim), init_bn(nk(), sim_dim)]
    p["fusion"] = [init_linear(nk(), 2 * sim_dim, 2 * sim_dim), init_linear(nk(), 2 * sim_dim, sim_dim)]
    p["fusion_bn"] = [init_bn(nk(), 2 * sim_dim)]
    p["sim_classifier"] = [init_linear(nk(), sim_dim + sim_dim // 4, sim_dim), init_linear(nk(), sim_dim, 2)]
    p["sim_classifier_bn"] = [init_bn(nk(), sim_dim)]
    p["routing"] = [init_linear(nk(), sim_dim, sim_dim), init_linear(nk(), sim_dim, 1)]
    p["routing_map"] = [init_linear(nk(), sim_dim, sim_dim), init_linear(nk(), sim_dim, sim_dim)]
    p["routing_map_bn"] = [init_bn(nk(), sim_dim), init_bn(nk(), sim_dim)]
    p["map_dist"] = [init_linear(nk(), sim_dim, sim_dim), init_linear(nk(), sim_dim, sim_dim // 2)]
    p["map_dist_bn"] = [init_bn(nk(), sim_dim), init_bn(nk(), sim_dim // 2)]
    p["dyn_feat_map"] = [init_linear(nk(), sim_dim, sim_dim), init_linear(nk(), sim_dim, sim_dim // 4)]
    p["dyn_feat_map_bn"] = [init_bn(nk(), sim_dim), init_bn(nk(), sim_dim // 4)]
    p["experts"] = [init_expert(nk(), sim_dim, EXPERT_HIDDEN, sim_dim) for _ in range(k)]
    return p


def prepare_inference_params(params):
    """Fold BN eval affines into (W, b) (all f32), build the fused/block-diag
    expert and map_dist weights, and flatten into the kernel input order."""
    def lin(p, bn=None):
        W, b = p["W"], p["b"]
        if bn is not None:
            W = W * bn["scale"][None, :]
            b = b * bn["scale"] + bn["shift"]
        return [W.astype(jnp.float32), b.reshape(1, -1).astype(jnp.float32)]

    def block_diag(mats):
        R = sum(m.shape[0] for m in mats)
        C = sum(m.shape[1] for m in mats)
        out = jnp.zeros((R, C), jnp.float32)
        r = c = 0
        for m in mats:
            out = out.at[r:r + m.shape[0], c:c + m.shape[1]].set(m.astype(jnp.float32))
            r += m.shape[0]
            c += m.shape[1]
        return out

    fused = []
    fused += lin(params["shared_image"][0], params["shared_image_bn"][0])
    fused += lin(params["shared_image"][1], params["shared_image_bn"][1])
    fused += lin(params["image_aligner"][0], params["image_aligner_bn"][0])
    fused += lin(params["image_aligner"][1], params["image_aligner_bn"][1])
    fused += lin(params["shared_text"][0], params["shared_text_bn"][0])
    fused += lin(params["shared_text"][1], params["shared_text_bn"][1])
    fused += lin(params["text_aligner"][0], params["text_aligner_bn"][0])
    fused += lin(params["text_aligner"][1], params["text_aligner_bn"][1])
    fused += lin(params["fusion"][0], params["fusion_bn"][0])
    fused += lin(params["fusion"][1])                           # ReLU only, no BN

    # map_dist: same weights applied to three inputs -> block-diagonal (x3)
    mw1, mb1 = lin(params["map_dist"][0], params["map_dist_bn"][0])
    mw2, mb2 = lin(params["map_dist"][1], params["map_dist_bn"][1])
    fused += [block_diag([mw1] * 3), jnp.tile(mb1, (1, 3)),
              block_diag([mw2] * 3), jnp.tile(mb2, (1, 3))]

    fused += lin(params["dyn_feat_map"][0], params["dyn_feat_map_bn"][0])
    fused += lin(params["dyn_feat_map"][1], params["dyn_feat_map_bn"][1])

    experts = params["experts"]

    def cat_out(get):   # layer fed by the shared input x: concat along outputs
        W = jnp.concatenate([get(e)["W"] for e in experts], axis=1).astype(jnp.float32)
        b = jnp.concatenate([get(e)["b"].reshape(1, -1) for e in experts],
                            axis=1).astype(jnp.float32)
        return [W, b]

    def bd_out(get):    # layer fed by already per-expert features: block-diagonal
        W = block_diag([get(e)["W"] for e in experts])
        b = jnp.concatenate([get(e)["b"].reshape(1, -1) for e in experts],
                            axis=1).astype(jnp.float32)
        return [W, b]

    fused += cat_out(lambda e: e["disc"][0]) + bd_out(lambda e: e["disc"][1])
    fused += cat_out(lambda e: e["enc"][0]) + bd_out(lambda e: e["enc"][1])
    fused += bd_out(lambda e: e["z_mean"]) + bd_out(lambda e: e["z_log_var"])
    fused += bd_out(lambda e: e["dec"][0]) + bd_out(lambda e: e["dec"][1])

    fused += lin(params["routing"][0]) + lin(params["routing"][1])
    fused += lin(params["routing_map"][0], params["routing_map_bn"][0])
    fused += lin(params["routing_map"][1], params["routing_map_bn"][1])

    sW1, sb1 = lin(params["sim_classifier"][0], params["sim_classifier_bn"][0])
    sW2, sb2 = lin(params["sim_classifier"][1])
    # split layer-1 rows: [route_feature/disc rows | gaussian_feature rows]
    fused += [sW1[:SIM_DIM, :], sW1[SIM_DIM:, :], sb1, sW2, sb2]
    return {"fused": fused}


# -----------------------------------------------------------------------------
# jitted forward core: ONE fused Pallas kernel + cheap output slicing
# -----------------------------------------------------------------------------
@functools.partial(jax.jit, static_argnames=("expert_update",))
def _forward_core(prep, image_feat, text_hidden, onehot, rng, expert_update):
    B = image_feat.shape[0]
    D = SIM_DIM
    D2 = D // 2
    k0, k1 = jax.random.split(rng)
    v01 = jax.random.normal(k0, (2, D2), jnp.float32)               # sampling vectors
    eps = jax.random.normal(k1, (B, NUM_EXPERTS * EXPERT_HIDDEN), jnp.float32)

    zt, main, mu, sig, gram1 = _run_fused(prep, image_feat, text_hidden,
                                          onehot, v01, eps, expert_update)

    image_z = zt[:, :D]
    text_z = zt[:, D:]
    text_image = main[:, :D]
    class_output = main[:, D:D + 2]
    sim2 = main[:, D + 2:D + 4]
    mu_0 = mu[0, :D2]
    mu_1 = mu[0, D2:]
    sigma_0 = sig[:, :D2]
    sigma_1 = sig[:, D2:]
    img_txt_sigma_1 = gram1[0:D2, 0:D2]
    img_sigma_1 = gram1[D2:2 * D2, D2:2 * D2]
    txt_sigma_1 = gram1[2 * D2:, 2 * D2:]
    return (class_output, text_image, image_z, text_z, sim2,
            mu_0, sigma_0, mu_1, sigma_1,
            img_txt_sigma_1, img_sigma_1, txt_sigma_1)


def our_model_forward(prep, image_feat, text_hidden, label, eventi, rng, event_flag):
    # TODO(synk): torchvision resnet34 visual backbone not implemented; `image_feat`
    # stands in for self.visualmodal(image).
    # TODO(synk): pretrained BertModel not implemented; `text_hidden` stands in for
    # torch.mean(self.bertModel(text)[0], dim=1).
    label_np = np.asarray(label)
    # example exercises the `label is not None and len-1 > sum > 1 and mu_0 is None` branch
    assert len(label_np) - 1 > int(label_np.sum()) > 1
    onehot = jnp.asarray(np.eye(2, dtype=np.float32)[label_np])

    if eventi not in event_flag:
        event_flag[eventi] = 0
    expert_update = (event_flag[eventi] == 0)
    # TODO(synk): host-side self.event_flag[eventi] = 1 mutation depends on a traced
    # argmin; not applied for this single-call kernel demo.

    (class_output, text_image, image_z, text_z, sim2,
     mu_0, sigma_0, mu_1, sigma_1,
     img_txt_sigma_1, img_sigma_1, txt_sigma_1) = _forward_core(
        prep, image_feat, text_hidden, onehot, rng, expert_update=expert_update)

    loss_dyn = None
    dynamics_label_sigma_1 = None
    dynamics_pred_sigma_1 = sigma_1
    return (class_output, text_image, image_z, text_z, sim2,
            mu_0, sigma_0, mu_1, sigma_1, loss_dyn,
            [img_txt_sigma_1, img_sigma_1, txt_sigma_1,
             dynamics_label_sigma_1, dynamics_pred_sigma_1])


# -----------------------------------------------------------------------------
if __name__ == "__main__":
    key = jax.random.PRNGKey(0)
    kp, kx1, kx2, kr = jax.random.split(key, 4)

    B = 8
    BERT_HIDDEN = 64   # args.bert_hidden_dim (backbone stubbed)
    NUM_FTRS = 32      # resnet34 fc out_features (backbone stubbed)

    params = build_params(kp, BERT_HIDDEN, NUM_FTRS)
    prep = prepare_inference_params(params)

    image_feat = jax.random.normal(kx1, (B, NUM_FTRS), jnp.float32)
    text_hidden = jax.random.normal(kx2, (B, BERT_HIDDEN), jnp.float32)
    label = np.array([0, 1, 0, 1, 0, 1, 0, 1], dtype=np.int32)

    event_flag = {}
    outs = our_model_forward(prep, image_feat, text_hidden, label,
                             eventi=0, rng=kr, event_flag=event_flag)
    jax.block_until_ready(jax.tree_util.tree_leaves(outs))
    print("KERNEL_OK")
</pallas_src>

<mosaic_0001>
module attributes {stable_mosaic.version = 11 : i64} {
  func.func @_fused_kernel(%arg0: i32, %arg1: memref<8x32xf32, #tpu.memory_space<vmem>>, %arg2: memref<8x64xf32, #tpu.memory_space<vmem>>, %arg3: memref<8x2xf32, #tpu.memory_space<vmem>>, %arg4: memref<2x32xf32, #tpu.memory_space<vmem>>, %arg5: memref<8x16xf32, #tpu.memory_space<vmem>>, %arg6: memref<32x256xf32, #tpu.memory_space<vmem>>, %arg7: memref<1x256xf32, #tpu.memory_space<vmem>>, %arg8: memref<256x128xf32, #tpu.memory_space<vmem>>, %arg9: memref<1x128xf32, #tpu.memory_space<vmem>>, %arg10: memref<128x128xf32, #tpu.memory_space<vmem>>, %arg11: memref<1x128xf32, #tpu.memory_space<vmem>>, %arg12: memref<128x64xf32, #tpu.memory_space<vmem>>, %arg13: memref<1x64xf32, #tpu.memory_space<vmem>>, %arg14: memref<64x256xf32, #tpu.memory_space<vmem>>, %arg15: memref<1x256xf32, #tpu.memory_space<vmem>>, %arg16: memref<256x128xf32, #tpu.memory_space<vmem>>, %arg17: memref<1x128xf32, #tpu.memory_space<vmem>>, %arg18: memref<128x128xf32, #tpu.memory_space<vmem>>, %arg19: memref<1x128xf32, #tpu.memory_space<vmem>>, %arg20: memref<128x64xf32, #tpu.memory_space<vmem>>, %arg21: memref<1x64xf32, #tpu.memory_space<vmem>>, %arg22: memref<128x128xf32, #tpu.memory_space<vmem>>, %arg23: memref<1x128xf32, #tpu.memory_space<vmem>>, %arg24: memref<128x64xf32, #tpu.memory_space<vmem>>, %arg25: memref<1x64xf32, #tpu.memory_space<vmem>>, %arg26: memref<192x192xf32, #tpu.memory_space<vmem>>, %arg27: memref<1x192xf32, #tpu.memory_space<vmem>>, %arg28: memref<192x96xf32, #tpu.memory_space<vmem>>, %arg29: memref<1x96xf32, #tpu.memory_space<vmem>>, %arg30: memref<64x64xf32, #tpu.memory_space<vmem>>, %arg31: memref<1x64xf32, #tpu.memory_space<vmem>>, %arg32: memref<64x16xf32, #tpu.memory_space<vmem>>, %arg33: memref<1x16xf32, #tpu.memory_space<vmem>>, %arg34: memref<64x16xf32, #tpu.memory_space<vmem>>, %arg35: memref<1x16xf32, #tpu.memory_space<vmem>>, %arg36: memref<16x128xf32, #tpu.memory_space<vmem>>, %arg37: memref<1x128xf32, #tpu.memory_space<vmem>>, %arg38: memref<64x16xf32, #tpu.memory_space<vmem>>, %arg39: memref<1x16xf32, #tpu.memory_space<vmem>>, %arg40: memref<16x16xf32, #tpu.memory_space<vmem>>, %arg41: memref<1x16xf32, #tpu.memory_space<vmem>>, %arg42: memref<16x16xf32, #tpu.memory_space<vmem>>, %arg43: memref<1x16xf32, #tpu.memory_space<vmem>>, %arg44: memref<16x16xf32, #tpu.memory_space<vmem>>, %arg45: memref<1x16xf32, #tpu.memory_space<vmem>>, %arg46: memref<16x128xf32, #tpu.memory_space<vmem>>, %arg47: memref<1x128xf32, #tpu.memory_space<vmem>>, %arg48: memref<128x128xf32, #tpu.memory_space<vmem>>, %arg49: memref<1x128xf32, #tpu.memory_space<vmem>>, %arg50: memref<64x64xf32, #tpu.memory_space<vmem>>, %arg51: memref<1x64xf32, #tpu.memory_space<vmem>>, %arg52: memref<64x1xf32, #tpu.memory_space<vmem>>, %arg53: memref<1x1xf32, #tpu.memory_space<vmem>>, %arg54: memref<64x64xf32, #tpu.memory_space<vmem>>, %arg55: memref<1x64xf32, #tpu.memory_space<vmem>>, %arg56: memref<64x64xf32, #tpu.memory_space<vmem>>, %arg57: memref<1x64xf32, #tpu.memory_space<vmem>>, %arg58: memref<64x64xf32, #tpu.memory_space<vmem>>, %arg59: memref<16x64xf32, #tpu.memory_space<vmem>>, %arg60: memref<1x64xf32, #tpu.memory_space<vmem>>, %arg61: memref<64x2xf32, #tpu.memory_space<vmem>>, %arg62: memref<1x2xf32, #tpu.memory_space<vmem>>, %arg63: memref<8x128xf32, #tpu.memory_space<vmem>>, %arg64: memref<8x128xf32, #tpu.memory_space<vmem>>, %arg65: memref<1x64xf32, #tpu.memory_space<vmem>>, %arg66: memref<32x64xf32, #tpu.memory_space<vmem>>, %arg67: memref<96x96xf32, #tpu.memory_space<vmem>>) attributes {dimension_semantics = [#tpu.dimension_semantics<arbitrary>], iteration_bounds = array<i64: 1>, scalar_prefetch = 0 : i64, scratch_operands = 0 : i64, tpu.core_type = #tpu.core_type<tc>, window_params = [{pipeline_mode = #tpu.pipeline_mode<synchronous>, transform_indices = @transform_0, window_bounds = array<i64: 8, 32>}, {pipeline_mode = #tpu.pipeline_mode<synchronous>, transform_indices = @transform_1, window_bounds = array<i64: 8, 64>}, {pipeline_mode = #tpu.pipeline_mode<synchronous>, transform_indices = @transform_2, window_bounds = array<i64: 8, 2>}, {pipeline_mode = #tpu.pipeline_mode<synchronous>, transform_indices = @transform_3, window_bounds = array<i64: 2, 32>}, {pipeline_mode = #tpu.pipeline_mode<synchronous>, transform_indices = @transform_4, window_bounds = array<i64: 8, 16>}, {pipeline_mode = #tpu.pipeline_mode<synchronous>, transform_indices = @transform_5, window_bounds = array<i64: 32, 256>}, {pipeline_mode = #tpu.pipeline_mode<synchronous>, transform_indices = @transform_6, window_bounds = array<i64: 1, 256>}, {pipeline_mode = #tpu.pipeline_mode<synchronous>, transform_indices = @transform_7, window_bounds = array<i64: 256, 128>}, {pipeline_mode = #tpu.pipeline_mode<synchronous>, transform_indices = @transform_8, window_bounds = array<i64: 1, 128>}, {pipeline_mode = #tpu.pipeline_mode<synchronous>, transform_indices = @transform_9, window_bounds = array<i64: 128, 128>}, {pipeline_mode = #tpu.pipeline_mode<synchronous>, transform_indices = @transform_10, window_bounds = array<i64: 1, 128>}, {pipeline_mode = #tpu.pipeline_mode<synchronous>, transform_indices = @transform_11, window_bounds = array<i64: 128, 64>}, {pipeline_mode = #tpu.pipeline_mode<synchronous>, transform_indices = @transform_12, window_bounds = array<i64: 1, 64>}, {pipeline_mode = #tpu.pipeline_mode<synchronous>, transform_indices = @transform_13, window_bounds = array<i64: 64, 256>}, {pipeline_mode = #tpu.pipeline_mode<synchronous>, transform_indices = @transform_14, window_bounds = array<i64: 1, 256>}, {pipeline_mode = #tpu.pipeline_mode<synchronous>, transform_indices = @transform_15, window_bounds = array<i64: 256, 128>}, {pipeline_mode = #tpu.pipeline_mode<synchronous>, transform_indices = @transform_16, window_bounds = array<i64: 1, 128>}, {pipeline_mode = #tpu.pipeline_mode<synchronous>, transform_indices = @transform_17, window_bounds = array<i64: 128, 128>}, {pipeline_mode = #tpu.pipeline_mode<synchronous>, transform_indices = @transform_18, window_bounds = array<i64: 1, 128>}, {pipeline_mode = #tpu.pipeline_mode<synchronous>, transform_indices = @transform_19, window_bounds = array<i64: 128, 64>}, {pipeline_mode = #tpu.pipeline_mode<synchronous>, transform_indices = @transform_20, window_bounds = array<i64: 1, 64>}, {pipeline_mode = #tpu.pipeline_mode<synchronous>, transform_indices = @transform_21, window_bounds = array<i64: 128, 128>}, {pipeline_mode = #tpu.pipeline_mode<synchronous>, transform_indices = @transform_22, window_bounds = array<i64: 1, 128>}, {pipeline_mode = #tpu.pipeline_mode<synchronous>, transform_indices = @transform_23, window_bounds = array<i64: 128, 64>}, {pipeline_mode = #tpu.pipeline_mode<synchronous>, transform_indices = @transform_24, window_bounds = array<i64: 1, 64>}, {pipeline_mode = #tpu.pipeline_mode<synchronous>, transform_indices = @transform_25, window_bounds = array<i64: 192, 192>}, {pipeline_mode = #tpu.pipeline_mode<synchronous>, transform_indices = @transform_26, window_bounds = array<i64: 1, 192>}, {pipeline_mode = #tpu.pipeline_mode<synchronous>, transform_indices = @transform_27, window_bounds = array<i64: 192, 96>}, {pipeline_mode = #tpu.pipeline_mode<synchronous>, transform_indices = @transform_28, window_bounds = array<i64: 1, 96>}, {pipeline_mode = #tpu.pipeline_mode<synchronous>, transform_indices = @transform_29, window_bounds = array<i64: 64, 64>}, {pipeline_mode = #tpu.pipeline_mode<synchronous>, transform_indices = @transform_30, window_bounds = array<i64: 1, 64>}, {pipeline_mode = #tpu.pipeline_mode<synchronous>, transform_indices = @transform_31, window_bounds = array<i64: 64, 16>}, {pipeline_mode = #tpu.pipeline_mode<synchronous>, transform_indices = @transform_32, window_bounds = array<i64: 1, 16>}, {pipeline_mode = #tpu.pipeline_mode<synchronous>, transform_indices = @transform_33, window_bounds = array<i64: 64, 16>}, {pipeline_mode = #tpu.pipeline_mode<synchronous>, transform_indices = @transform_34, window_bounds = array<i64: 1, 16>}, {pipeline_mode = #tpu.pipeline_mode<synchronous>, transform_indices = @transform_35, window_bounds = array<i64: 16, 128>}, {pipeline_mode = #tpu.pipeline_mode<synchronous>, transform_indices = @transform_36, window_bounds = array<i64: 1, 128>}, {pipeline_mode = #tpu.pipeline_mode<synchronous>, transform_indices = @transform_37, window_bounds = array<i64: 64, 16>}, {pipeline_mode = #tpu.pipeline_mode<synchronous>, transform_indices = @transform_38, window_bounds = array<i64: 1, 16>}, {pipeline_mode = #tpu.pipeline_mode<synchronous>, transform_indices = @transform_39, window_bounds = array<i64: 16, 16>}, {pipeline_mode = #tpu.pipeline_mode<synchronous>, transform_indices = @transform_40, window_bounds = array<i64: 1, 16>}, {pipeline_mode = #tpu.pipeline_mode<synchronous>, transform_indices = @transform_41, window_bounds = array<i64: 16, 16>}, {pipeline_mode = #tpu.pipeline_mode<synchronous>, transform_indices = @transform_42, window_bounds = array<i64: 1, 16>}, {pipeline_mode = #tpu.pipeline_mode<synchronous>, transform_indices = @transform_43, window_bounds = array<i64: 16, 16>}, {pipeline_mode = #tpu.pipeline_mode<synchronous>, transform_indices = @transform_44, window_bounds = array<i64: 1, 16>}, {pipeline_mode = #tpu.pipeline_mode<synchronous>, transform_indices = @transform_45, window_bounds = array<i64: 16, 128>}, {pipeline_mode = #tpu.pipeline_mode<synchronous>, transform_indices = @transform_46, window_bounds = array<i64: 1, 128>}, {pipeline_mode = #tpu.pipeline_mode<synchronous>, transform_indices = @transform_47, window_bounds = array<i64: 128, 128>}, {pipeline_mode = #tpu.pipeline_mode<synchronous>, transform_indices = @transform_48, window_bounds = array<i64: 1, 128>}, {pipeline_mode = #tpu.pipeline_mode<synchronous>, transform_indices = @transform_49, window_bounds = array<i64: 64, 64>}, {pipeline_mode = #tpu.pipeline_mode<synchronous>, transform_indices = @transform_50, window_bounds = array<i64: 1, 64>}, {pipeline_mode = #tpu.pipeline_mode<synchronous>, transform_indices = @transform_51, window_bounds = array<i64: 64, 1>}, {pipeline_mode = #tpu.pipeline_mode<synchronous>, transform_indices = @transform_52, window_bounds = array<i64: 1, 1>}, {pipeline_mode = #tpu.pipeline_mode<synchronous>, transform_indices = @transform_53, window_bounds = array<i64: 64, 64>}, {pipeline_mode = #tpu.pipeline_mode<synchronous>, transform_indices = @transform_54, window_bounds = array<i64: 1, 64>}, {pipeline_mode = #tpu.pipeline_mode<synchronous>, transform_indices = @transform_55, window_bounds = array<i64: 64, 64>}, {pipeline_mode = #tpu.pipeline_mode<synchronous>, transform_indices = @transform_56, window_bounds = array<i64: 1, 64>}, {pipeline_mode = #tpu.pipeline_mode<synchronous>, transform_indices = @transform_57, window_bounds = array<i64: 64, 64>}, {pipeline_mode = #tpu.pipeline_mode<synchronous>, transform_indices = @transform_58, window_bounds = array<i64: 16, 64>}, {pipeline_mode = #tpu.pipeline_mode<synchronous>, transform_indices = @transform_59, window_bounds = array<i64: 1, 64>}, {pipeline_mode = #tpu.pipeline_mode<synchronous>, transform_indices = @transform_60, window_bounds = array<i64: 64, 2>}, {pipeline_mode = #tpu.pipeline_mode<synchronous>, transform_indices = @transform_61, window_bounds = array<i64: 1, 2>}, {pipeline_mode = #tpu.pipeline_mode<synchronous>, transform_indices = @transform_62, window_bounds = array<i64: 8, 128>}, {pipeline_mode = #tpu.pipeline_mode<synchronous>, transform_indices = @transform_63, window_bounds = array<i64: 8, 128>}, {pipeline_mode = #tpu.pipeline_mode<synchronous>, transform_indices = @transform_64, window_bounds = array<i64: 1, 64>}, {pipeline_mode = #tpu.pipeline_mode<synchronous>, transform_indices = @transform_65, window_bounds = array<i64: 32, 64>}, {pipeline_mode = #tpu.pipeline_mode<synchronous>, transform_indices = @transform_66, window_bounds = array<i64: 96, 96>}]} {
    %c0 = arith.constant 0 : index
    %c0_0 = arith.constant 0 : index
    %0 = vector.load %arg1[%c0, %c0_0] : memref<8x32xf32, #tpu.memory_space<vmem>>, vector<8x32xf32>
    %c0_1 = arith.constant 0 : index
    %c0_2 = arith.constant 0 : index
    %1 = vector.load %arg6[%c0_1, %c0_2] : memref<32x256xf32, #tpu.memory_space<vmem>>, vector<32x256xf32>
    %cst = arith.constant dense<0.000000e+00> : vector<8x256xf32>
    %2 = tpu.matmul %0, %1, %cst {dimension_numbers = #tpu.dot_dimension_numbers<[1], [0], [0], [1], [0, 0, 1, 1], [], []>} : vector<8x32xf32>, vector<32x256xf32>, vector<8x256xf32> -> vector<8x256xf32>
    %c0_3 = arith.constant 0 : index
    %c0_4 = arith.constant 0 : index
    %3 = vector.load %arg7[%c0_3, %c0_4] : memref<1x256xf32, #tpu.memory_space<vmem>>, vector<1x256xf32>
    %4 = vector.broadcast %3 : vector<1x256xf32> to vector<8x256xf32>
    %5 = arith.addf %2, %4 : vector<8x256xf32>
    %cst_5 = arith.constant 0.000000e+00 : f32
    %6 = vector.broadcast %cst_5 : f32 to vector<8x256xf32>
    %7 = arith.maximumf %5, %6 : vector<8x256xf32>
    %c0_6 = arith.constant 0 : index
    %c0_7 = arith.constant 0 : index
    %8 = vector.load %arg8[%c0_6, %c0_7] : memref<256x128xf32, #tpu.memory_space<vmem>>, vector<256x128xf32>
    %cst_8 = arith.constant dense<0.000000e+00> : vector<8x128xf32>
    %9 = tpu.matmul %7, %8, %cst_8 {dimension_numbers = #tpu.dot_dimension_numbers<[1], [0], [0], [1], [0, 0, 1, 1], [], []>} : vector<8x256xf32>, vector<256x128xf32>, vector<8x128xf32> -> vector<8x128xf32>
    %c0_9 = arith.constant 0 : index
    %c0_10 = arith.constant 0 : index
    %10 = vector.load %arg9[%c0_9, %c0_10] : memref<1x128xf32, #tpu.memory_space<vmem>>, vector<1x128xf32>
    %11 = vector.broadcast %10 : vector<1x128xf32> to vector<8x128xf32>
    %12 = arith.addf %9, %11 : vector<8x128xf32>
    %cst_11 = arith.constant 0.000000e+00 : f32
    %13 = vector.broadcast %cst_11 : f32 to vector<8x128xf32>
    %14 = arith.maximumf %12, %13 : vector<8x128xf32>
    %c0_12 = arith.constant 0 : index
    %c0_13 = arith.constant 0 : index
    %15 = vector.load %arg10[%c0_12, %c0_13] : memref<128x128xf32, #tpu.memory_space<vmem>>, vector<128x128xf32>
    %cst_14 = arith.constant dense<0.000000e+00> : vector<8x128xf32>
    %16 = tpu.matmul %14, %15, %cst_14 {dimension_numbers = #tpu.dot_dimension_numbers<[1], [0], [0], [1], [0, 0, 1, 1], [], []>} : vector<8x128xf32>, vector<128x128xf32>, vector<8x128xf32> -> vector<8x128xf32>
    %c0_15 = arith.constant 0 : index
    %c0_16 = arith.constant 0 : index
    %17 = vector.load %arg11[%c0_15, %c0_16] : memref<1x128xf32, #tpu.memory_space<vmem>>, vector<1x128xf32>
    %18 = vector.broadcast %17 : vector<1x128xf32> to vector<8x128xf32>
    %19 = arith.addf %16, %18 : vector<8x128xf32>
    %cst_17 = arith.constant 0.000000e+00 : f32
    %20 = vector.broadcast %cst_17 : f32 to vector<8x128xf32>
    %21 = arith.maximumf %19, %20 : vector<8x128xf32>
    %c0_18 = arith.constant 0 : index
    %c0_19 = arith.constant 0 : index
    %22 = vector.load %arg12[%c0_18, %c0_19] : memref<128x64xf32, #tpu.memory_space<vmem>>, vector<128x64xf32>
    %cst_20 = arith.constant dense<0.000000e+00> : vector<8x64xf32>
    %23 = tpu.matmul %21, %22, %cst_20 {dimension_numbers = #tpu.dot_dimension_numbers<[1], [0], [0], [1], [0, 0, 1, 1], [], []>} : vector<8x128xf32>, vector<128x64xf32>, vector<8x64xf32> -> vector<8x64xf32>
    %c0_21 = arith.constant 0 : index
    %c0_22 = arith.constant 0 : index
    %24 = vector.load %arg13[%c0_21, %c0_22] : memref<1x64xf32, #tpu.memory_space<vmem>>, vector<1x64xf32>
    %25 = vector.broadcast %24 : vector<1x64xf32> to vector<8x64xf32>
    %26 = arith.addf %23, %25 : vector<8x64xf32>
    %cst_23 = arith.constant 0.000000e+00 : f32
    %27 = vector.broadcast %cst_23 : f32 to vector<8x64xf32>
    %28 = arith.maximumf %26, %27 : vector<8x64xf32>
    %c0_24 = arith.constant 0 : index
    %c0_25 = arith.constant 0 : index
    %29 = vector.load %arg2[%c0_24, %c0_25] : memref<8x64xf32, #tpu.memory_space<vmem>>, vector<8x64xf32>
    %c0_26 = arith.constant 0 : index
    %c0_27 = arith.constant 0 : index
    %30 = vector.load %arg14[%c0_26, %c0_27] : memref<64x256xf32, #tpu.memory_space<vmem>>, vector<64x256xf32>
    %cst_28 = arith.constant dense<0.000000e+00> : vector<8x256xf32>
    %31 = tpu.matmul %29, %30, %cst_28 {dimension_numbers = #tpu.dot_dimension_numbers<[1], [0], [0], [1], [0, 0, 1, 1], [], []>} : vector<8x64xf32>, vector<64x256xf32>, vector<8x256xf32> -> vector<8x256xf32>
    %c0_29 = arith.constant 0 : index
    %c0_30 = arith.constant 0 : index
    %32 = vector.load %arg15[%c0_29, %c0_30] : memref<1x256xf32, #tpu.memory_space<vmem>>, vector<1x256xf32>
    %33 = vector.broadcast %32 : vector<1x256xf32> to vector<8x256xf32>
    %34 = arith.addf %31, %33 : vector<8x256xf32>
    %cst_31 = arith.constant 0.000000e+00 : f32
    %35 = vector.broadcast %cst_31 : f32 to vector<8x256xf32>
    %36 = arith.maximumf %34, %35 : vector<8x256xf32>
    %c0_32 = arith.constant 0 : index
    %c0_33 = arith.constant 0 : index
    %37 = vector.load %arg16[%c0_32, %c0_33] : memref<256x128xf32, #tpu.memory_space<vmem>>, vector<256x128xf32>
    %cst_34 = arith.constant dense<0.000000e+00> : vector<8x128xf32>
    %38 = tpu.matmul %36, %37, %cst_34 {dimension_numbers = #tpu.dot_dimension_numbers<[1], [0], [0], [1], [0, 0, 1, 1], [], []>} : vector<8x256xf32>, vector<256x128xf32>, vector<8x128xf32> -> vector<8x128xf32>
    %c0_35 = arith.constant 0 : index
    %c0_36 = arith.constant 0 : index
    %39 = vector.load %arg17[%c0_35, %c0_36] : memref<1x128xf32, #tpu.memory_space<vmem>>, vector<1x128xf32>
    %40 = vector.broadcast %39 : vector<1x128xf32> to vector<8x128xf32>
    %41 = arith.addf %38, %40 : vector<8x128xf32>
    %cst_37 = arith.constant 0.000000e+00 : f32
    %42 = vector.broadcast %cst_37 : f32 to vector<8x128xf32>
    %43 = arith.maximumf %41, %42 : vector<8x128xf32>
    %c0_38 = arith.constant 0 : index
    %c0_39 = arith.constant 0 : index
    %44 = vector.load %arg18[%c0_38, %c0_39] : memref<128x128xf32, #tpu.memory_space<vmem>>, vector<128x128xf32>
    %cst_40 = arith.constant dense<0.000000e+00> : vector<8x128xf32>
    %45 = tpu.matmul %43, %44, %cst_40 {dimension_numbers = #tpu.dot_dimension_numbers<[1], [0], [0], [1], [0, 0, 1, 1], [], []>} : vector<8x128xf32>, vector<128x128xf32>, vector<8x128xf32> -> vector<8x128xf32>
    %c0_41 = arith.constant 0 : index
    %c0_42 = arith.constant 0 : index
    %46 = vector.load %arg19[%c0_41, %c0_42] : memref<1x128xf32, #tpu.memory_space<vmem>>, vector<1x128xf32>
    %47 = vector.broadcast %46 : vector<1x128xf32> to vector<8x128xf32>
    %48 = arith.addf %45, %47 : vector<8x128xf32>
    %cst_43 = arith.constant 0.000000e+00 : f32
    %49 = vector.broadcast %cst_43 : f32 to vector<8x128xf32>
    %50 = arith.maximumf %48, %49 : vector<8x128xf32>
    %c0_44 = arith.constant 0 : index
    %c0_45 = arith.constant 0 : index
    %51 = vector.load %arg20[%c0_44, %c0_45] : memref<128x64xf32, #tpu.memory_space<vmem>>, vector<128x64xf32>
    %cst_46 = arith.constant dense<0.000000e+00> : vector<8x64xf32>
    %52 = tpu.matmul %50, %51, %cst_46 {dimension_numbers = #tpu.dot_dimension_numbers<[1], [0], [0], [1], [0, 0, 1, 1], [], []>} : vector<8x128xf32>, vector<128x64xf32>, vector<8x64xf32> -> vector<8x64xf32>
    %c0_47 = arith.constant 0 : index
    %c0_48 = arith.constant 0 : index
    %53 = vector.load %arg21[%c0_47, %c0_48] : memref<1x64xf32, #tpu.memory_space<vmem>>, vector<1x64xf32>
    %54 = vector.broadcast %53 : vector<1x64xf32> to vector<8x64xf32>
    %55 = arith.addf %52, %54 : vector<8x64xf32>
    %cst_49 = arith.constant 0.000000e+00 : f32
    %56 = vector.broadcast %cst_49 : f32 to vector<8x64xf32>
    %57 = arith.maximumf %55, %56 : vector<8x64xf32>
    %c0_50 = arith.constant 0 : index
    %c0_51 = arith.constant 0 : index
    %58 = vector.load %arg22[%c0_50, %c0_51] : memref<128x128xf32, #tpu.memory_space<vmem>>, vector<64x128xf32>
    %cst_52 = arith.constant dense<0.000000e+00> : vector<8x128xf32>
    %59 = tpu.matmul %57, %58, %cst_52 {dimension_numbers = #tpu.dot_dimension_numbers<[1], [0], [0], [1], [0, 0, 1, 1], [], []>} : vector<8x64xf32>, vector<64x128xf32>, vector<8x128xf32> -> vector<8x128xf32>
    %c64 = arith.constant 64 : index
    %c0_53 = arith.constant 0 : index
    %60 = vector.load %arg22[%c64, %c0_53] : memref<128x128xf32, #tpu.memory_space<vmem>>, vector<64x128xf32>
    %cst_54 = arith.constant dense<0.000000e+00> : vector<8x128xf32>
    %61 = tpu.matmul %28, %60, %cst_54 {dimension_numbers = #tpu.dot_dimension_numbers<[1], [0], [0], [1], [0, 0, 1, 1], [], []>} : vector<8x64xf32>, vector<64x128xf32>, vector<8x128xf32> -> vector<8x128xf32>
    %62 = arith.addf %59, %61 : vector<8x128xf32>
    %c0_55 = arith.constant 0 : index
    %c0_56 = arith.constant 0 : index
    %63 = vector.load %arg23[%c0_55, %c0_56] : memref<1x128xf32, #tpu.memory_space<vmem>>, vector<1x128xf32>
    %64 = vector.broadcast %63 : vector<1x128xf32> to vector<8x128xf32>
    %65 = arith.addf %62, %64 : vector<8x128xf32>
    %cst_57 = arith.constant 0.000000e+00 : f32
    %66 = vector.broadcast %cst_57 : f32 to vector<8x128xf32>
    %67 = arith.maximumf %65, %66 : vector<8x128xf32>
    %c0_58 = arith.constant 0 : index
    %c0_59 = arith.constant 0 : index
    %68 = vector.load %arg24[%c0_58, %c0_59] : memref<128x64xf32, #tpu.memory_space<vmem>>, vector<128x64xf32>
    %cst_60 = arith.constant dense<0.000000e+00> : vector<8x64xf32>
    %69 = tpu.matmul %67, %68, %cst_60 {dimension_numbers = #tpu.dot_dimension_numbers<[1], [0], [0], [1], [0, 0, 1, 1], [], []>} : vector<8x128xf32>, vector<128x64xf32>, vector<8x64xf32> -> vector<8x64xf32>
    %c0_61 = arith.constant 0 : index
    %c0_62 = arith.constant 0 : index
    %70 = vector.load %arg25[%c0_61, %c0_62] : memref<1x64xf32, #tpu.memory_space<vmem>>, vector<1x64xf32>
    %71 = vector.broadcast %70 : vector<1x64xf32> to vector<8x64xf32>
    %72 = arith.addf %69, %71 : vector<8x64xf32>
    %cst_63 = arith.constant 0.000000e+00 : f32
    %73 = vector.broadcast %cst_63 : f32 to vector<8x64xf32>
    %74 = arith.maximumf %72, %73 : vector<8x64xf32>
    %75 = tpu.concatenate %74, %28, %57 in 1 : vector<8x64xf32>, vector<8x64xf32>, vector<8x64xf32> -> vector<8x192xf32>
    %c0_64 = arith.constant 0 : index
    %c0_65 = arith.constant 0 : index
    %76 = vector.load %arg26[%c0_64, %c0_65] : memref<192x192xf32, #tpu.memory_space<vmem>>, vector<192x192xf32>
    %cst_66 = arith.constant dense<0.000000e+00> : vector<8x192xf32>
    %77 = tpu.matmul %75, %76, %cst_66 {dimension_numbers = #tpu.dot_dimension_numbers<[1], [0], [0], [1], [0, 0, 1, 1], [], []>} : vector<8x192xf32>, vector<192x192xf32>, vector<8x192xf32> -> vector<8x192xf32>
    %c0_67 = arith.constant 0 : index
    %c0_68 = arith.constant 0 : index
    %78 = vector.load %arg27[%c0_67, %c0_68] : memref<1x192xf32, #tpu.memory_space<vmem>>, vector<1x192xf32>
    %79 = vector.broadcast %78 : vector<1x192xf32> to vector<8x192xf32>
    %80 = arith.addf %77, %79 : vector<8x192xf32>
    %cst_69 = arith.constant 0.000000e+00 : f32
    %81 = vector.broadcast %cst_69 : f32 to vector<8x192xf32>
    %82 = arith.maximumf %80, %81 : vector<8x192xf32>
    %c0_70 = arith.constant 0 : index
    %c0_71 = arith.constant 0 : index
    %83 = vector.load %arg28[%c0_70, %c0_71] : memref<192x96xf32, #tpu.memory_space<vmem>>, vector<192x96xf32>
    %cst_72 = arith.constant dense<0.000000e+00> : vector<8x96xf32>
    %84 = tpu.matmul %82, %83, %cst_72 {dimension_numbers = #tpu.dot_dimension_numbers<[1], [0], [0], [1], [0, 0, 1, 1], [], []>} : vector<8x192xf32>, vector<192x96xf32>, vector<8x96xf32> -> vector<8x96xf32>
    %c0_73 = arith.constant 0 : index
    %c0_74 = arith.constant 0 : index
    %85 = vector.load %arg29[%c0_73, %c0_74] : memref<1x96xf32, #tpu.memory_space<vmem>>, vector<1x96xf32>
    %86 = vector.broadcast %85 : vector<1x96xf32> to vector<8x96xf32>
    %87 = arith.addf %84, %86 : vector<8x96xf32>
    %cst_75 = arith.constant 0.000000e+00 : f32
    %88 = vector.broadcast %cst_75 : f32 to vector<8x96xf32>
    %89 = arith.maximumf %87, %88 : vector<8x96xf32>
    %c0_76 = arith.constant 0 : index
    %c0_77 = arith.constant 0 : index
    %90 = vector.load %arg3[%c0_76, %c0_77] : memref<8x2xf32, #tpu.memory_space<vmem>>, vector<8x2xf32>
    %91 = vector.extract_strided_slice %90 {offsets = [0, 0], sizes = [8, 1], strides = [1, 1]} : vector<8x2xf32> to vector<8x1xf32>
    %92 = vector.shape_cast %91 : vector<8x1xf32> to vector<1x8x1xf32>
    %cst_78 = arith.constant dense<0.000000e+00> : vector<1xf32>
    %93 = vector.multi_reduction <add>, %92, %cst_78 [1, 2] : vector<1x8x1xf32> to vector<1xf32>
    %94 = vector.shape_cast %93 : vector<1xf32> to vector<1x1x1xf32>
    %95 = vector.extract %94[0, 0, 0] : f32 from vector<1x1x1xf32>
    %96 = vector.broadcast %95 : f32 to vector<1x1xf32>
    %97 = vector.broadcast %91 : vector<8x1xf32> to vector<8x96xf32>
    %98 = arith.mulf %89, %97 : vector<8x96xf32>
    %cst_79 = arith.constant dense<0.000000e+00> : vector<96xf32>
    %99 = vector.multi_reduction <add>, %98, %cst_79 [0] : vector<8x96xf32> to vector<96xf32>
    %100 = vector.shape_cast %99 : vector<96xf32> to vector<1x96xf32>
    %101 = vector.broadcast %96 : vector<1x1xf32> to vector<1x96xf32>
    %102 = arith.divf %100, %101 : vector<1x96xf32>
    %103 = vector.broadcast %102 : vector<1x96xf32> to vector<8x96xf32>
    %104 = arith.subf %89, %103 : vector<8x96xf32>
    %105 = vector.broadcast %91 : vector<8x1xf32> to vector<8x96xf32>
    %106 = arith.mulf %104, %105 : vector<8x96xf32>
    %cst_80 = arith.constant dense<0.000000e+00> : vector<96x96xf32>
    %107 = tpu.matmul %106, %106, %cst_80 {dimension_numbers = #tpu.dot_dimension_numbers<[0], [0], [1], [1], [0, 1, 1, 1], [], []>} : vector<8x96xf32>, vector<8x96xf32>, vector<96x96xf32> -> vector<96x96xf32>
    %cst_81 = arith.constant 1.000000e+00 : f32
    %108 = vector.broadcast %cst_81 : f32 to vector<1x1xf32>
    %109 = arith.subf %96, %108 : vector<1x1xf32>
    %110 = vector.broadcast %109 : vector<1x1xf32> to vector<96x96xf32>
    %111 = arith.divf %107, %110 : vector<96x96xf32>
    %112 = vector.extract_strided_slice %102 {offsets = [0, 0], sizes = [1, 32], strides = [1, 1]} : vector<1x96xf32> to vector<1x32xf32>
    %113 = vector.extract_strided_slice %102 {offsets = [0, 32], sizes = [1, 32], strides = [1, 1]} : vector<1x96xf32> to vector<1x32xf32>
    %114 = arith.addf %112, %113 : vector<1x32xf32>
    %115 = vector.extract_strided_slice %102 {offsets = [0, 64], sizes = [1, 32], strides = [1, 1]} : vector<1x96xf32> to vector<1x32xf32>
    %116 = arith.addf %114, %115 : vector<1x32xf32>
    %cst_82 = arith.constant 3.000000e+00 : f32
    %117 = vector.broadcast %cst_82 : f32 to vector<1x32xf32>
    %118 = arith.divf %116, %117 : vector<1x32xf32>
    %119 = tpu.concatenate %118, %118, %118 in 1 : vector<1x32xf32>, vector<1x32xf32>, vector<1x32xf32> -> vector<1x96xf32>
    %120 = arith.subf %102, %119 : vector<1x96xf32>
    %cst_83 = arith.constant dense<0.000000e+00> : vector<96x96xf32>
    %121 = tpu.matmul %120, %120, %cst_83 {dimension_numbers = #tpu.dot_dimension_numbers<[0], [0], [1], [1], [0, 1, 1, 1], [], []>} : vector<1x96xf32>, vector<1x96xf32>, vector<96x96xf32> -> vector<96x96xf32>
    %122 = arith.addf %111, %121 : vector<96x96xf32>
    %123 = vector.extract_strided_slice %122 {offsets = [0, 0], sizes = [32, 32], strides = [1, 1]} : vector<96x96xf32> to vector<32x32xf32>
    %124 = vector.extract_strided_slice %122 {offsets = [32, 32], sizes = [32, 32], strides = [1, 1]} : vector<96x96xf32> to vector<32x32xf32>
    %125 = arith.addf %123, %124 : vector<32x32xf32>
    %126 = vector.extract_strided_slice %122 {offsets = [64, 64], sizes = [32, 32], strides = [1, 1]} : vector<96x96xf32> to vector<32x32xf32>
    %127 = arith.addf %125, %126 : vector<32x32xf32>
    %cst_84 = arith.constant 3.000000e+00 : f32
    %128 = vector.broadcast %cst_84 : f32 to vector<32x32xf32>
    %129 = arith.divf %127, %128 : vector<32x32xf32>
    %130 = vector.extract_strided_slice %90 {offsets = [0, 1], sizes = [8, 1], strides = [1, 1]} : vector<8x2xf32> to vector<8x1xf32>
    %131 = vector.shape_cast %130 : vector<8x1xf32> to vector<1x8x1xf32>
    %cst_85 = arith.constant dense<0.000000e+00> : vector<1xf32>
    %132 = vector.multi_reduction <add>, %131, %cst_85 [1, 2] : vector<1x8x1xf32> to vector<1xf32>
    %133 = vector.shape_cast %132 : vector<1xf32> to vector<1x1x1xf32>
    %134 = vector.extract %133[0, 0, 0] : f32 from vector<1x1x1xf32>
    %135 = vector.broadcast %134 : f32 to vector<1x1xf32>
    %136 = vector.broadcast %130 : vector<8x1xf32> to vector<8x96xf32>
    %137 = arith.mulf %89, %136 : vector<8x96xf32>
    %cst_86 = arith.constant dense<0.000000e+00> : vector<96xf32>
    %138 = vector.multi_reduction <add>, %137, %cst_86 [0] : vector<8x96xf32> to vector<96xf32>
    %139 = vector.shape_cast %138 : vector<96xf32> to vector<1x96xf32>
    %140 = vector.broadcast %135 : vector<1x1xf32> to vector<1x96xf32>
    %141 = arith.divf %139, %140 : vector<1x96xf32>
    %142 = vector.broadcast %141 : vector<1x96xf32> to vector<8x96xf32>
    %143 = arith.subf %89, %142 : vector<8x96xf32>
    %144 = vector.broadcast %130 : vector<8x1xf32> to vector<8x96xf32>
    %145 = arith.mulf %143, %144 : vector<8x96xf32>
    %cst_87 = arith.constant dense<0.000000e+00> : vector<96x96xf32>
    %146 = tpu.matmul %145, %145, %cst_87 {dimension_numbers = #tpu.dot_dimension_numbers<[0], [0], [1], [1], [0, 1, 1, 1], [], []>} : vector<8x96xf32>, vector<8x96xf32>, vector<96x96xf32> -> vector<96x96xf32>
    %cst_88 = arith.constant 1.000000e+00 : f32
    %147 = vector.broadcast %cst_88 : f32 to vector<1x1xf32>
    %148 = arith.subf %135, %147 : vector<1x1xf32>
    %149 = vector.broadcast %148 : vector<1x1xf32> to vector<96x96xf32>
    %150 = arith.divf %146, %149 : vector<96x96xf32>
    %151 = vector.extract_strided_slice %141 {offsets = [0, 0], sizes = [1, 32], strides = [1, 1]} : vector<1x96xf32> to vector<1x32xf32>
    %152 = vector.extract_strided_slice %141 {offsets = [0, 32], sizes = [1, 32], strides = [1, 1]} : vector<1x96xf32> to vector<1x32xf32>
    %153 = arith.addf %151, %152 : vector<1x32xf32>
    %154 = vector.extract_strided_slice %141 {offsets = [0, 64], sizes = [1, 32], strides = [1, 1]} : vector<1x96xf32> to vector<1x32xf32>
    %155 = arith.addf %153, %154 : vector<1x32xf32>
    %cst_89 = arith.constant 3.000000e+00 : f32
    %156 = vector.broadcast %cst_89 : f32 to vector<1x32xf32>
    %157 = arith.divf %155, %156 : vector<1x32xf32>
    %158 = tpu.concatenate %157, %157, %157 in 1 : vector<1x32xf32>, vector<1x32xf32>, vector<1x32xf32> -> vector<1x96xf32>
    %159 = arith.subf %141, %158 : vector<1x96xf32>
    %cst_90 = arith.constant dense<0.000000e+00> : vector<96x96xf32>
    %160 = tpu.matmul %159, %159, %cst_90 {dimension_numbers = #tpu.dot_dimension_numbers<[0], [0], [1], [1], [0, 1, 1, 1], [], []>} : vector<1x96xf32>, vector<1x96xf32>, vector<96x96xf32> -> vector<96x96xf32>
    %161 = arith.addf %150, %160 : vector<96x96xf32>
    %162 = vector.extract_strided_slice %161 {offsets = [0, 0], sizes = [32, 32], strides = [1, 1]} : vector<96x96xf32> to vector<32x32xf32>
    %163 = vector.extract_strided_slice %161 {offsets = [32, 32], sizes = [32, 32], strides = [1, 1]} : vector<96x96xf32> to vector<32x32xf32>
    %164 = arith.addf %162, %163 : vector<32x32xf32>
    %165 = vector.extract_strided_slice %161 {offsets = [64, 64], sizes = [32, 32], strides = [1, 1]} : vector<96x96xf32> to vector<32x32xf32>
    %166 = arith.addf %164, %165 : vector<32x32xf32>
    %cst_91 = arith.constant 3.000000e+00 : f32
    %167 = vector.broadcast %cst_91 : f32 to vector<32x32xf32>
    %168 = arith.divf %166, %167 : vector<32x32xf32>
    %c0_92 = arith.constant 0 : index
    %c0_93 = arith.constant 0 : index
    %169 = vector.load %arg4[%c0_92, %c0_93] : memref<2x32xf32, #tpu.memory_space<vmem>>, vector<1x32xf32>
    %c1 = arith.constant 1 : index
    %c0_94 = arith.constant 0 : index
    %170 = vector.load %arg4[%c1, %c0_94] : memref<2x32xf32, #tpu.memory_space<vmem>>, vector<1x32xf32>
    %cst_95 = arith.constant dense<0.000000e+00> : vector<1x32xf32>
    %171 = tpu.matmul %169, %129, %cst_95 {dimension_numbers = #tpu.dot_dimension_numbers<[1], [1], [0], [0], [0, 0, 1, 0], [], []>} : vector<1x32xf32>, vector<32x32xf32>, vector<1x32xf32> -> vector<1x32xf32>
    %172 = arith.addf %118, %171 : vector<1x32xf32>
    %cst_96 = arith.constant dense<0.000000e+00> : vector<1x32xf32>
    %173 = tpu.matmul %170, %168, %cst_96 {dimension_numbers = #tpu.dot_dimension_numbers<[1], [1], [0], [0], [0, 0, 1, 0], [], []>} : vector<1x32xf32>, vector<32x32xf32>, vector<1x32xf32> -> vector<1x32xf32>
    %174 = arith.addf %157, %173 : vector<1x32xf32>
    %175 = tpu.concatenate %172, %174 in 1 : vector<1x32xf32>, vector<1x32xf32> -> vector<1x64xf32>
    %c0_97 = arith.constant 0 : index
    %c0_98 = arith.constant 0 : index
    %176 = vector.load %arg30[%c0_97, %c0_98] : memref<64x64xf32, #tpu.memory_space<vmem>>, vector<64x64xf32>
    %cst_99 = arith.constant dense<0.000000e+00> : vector<1x64xf32>
    %177 = tpu.matmul %175, %176, %cst_99 {dimension_numbers = #tpu.dot_dimension_numbers<[1], [0], [0], [1], [0, 0, 1, 1], [], []>} : vector<1x64xf32>, vector<64x64xf32>, vector<1x64xf32> -> vector<1x64xf32>
    %c0_100 = arith.constant 0 : index
    %c0_101 = arith.constant 0 : index
    %178 = vector.load %arg31[%c0_100, %c0_101] : memref<1x64xf32, #tpu.memory_space<vmem>>, vector<1x64xf32>
    %179 = arith.addf %177, %178 : vector<1x64xf32>
    %cst_102 = arith.constant 0.000000e+00 : f32
    %180 = vector.broadcast %cst_102 : f32 to vector<1x64xf32>
    %181 = arith.maximumf %179, %180 : vector<1x64xf32>
    %c0_103 = arith.constant 0 : index
    %c0_104 = arith.constant 0 : index
    %182 = vector.load %arg32[%c0_103, %c0_104] : memref<64x16xf32, #tpu.memory_space<vmem>>, vector<64x16xf32>
    %cst_105 = arith.constant dense<0.000000e+00> : vector<1x16xf32>
    %183 = tpu.matmul %181, %182, %cst_105 {dimension_numbers = #tpu.dot_dimension_numbers<[1], [0], [0], [1], [0, 0, 1, 1], [], []>} : vector<1x64xf32>, vector<64x16xf32>, vector<1x16xf32> -> vector<1x16xf32>
    %c0_106 = arith.constant 0 : index
    %c0_107 = arith.constant 0 : index
    %184 = vector.load %arg33[%c0_106, %c0_107] : memref<1x16xf32, #tpu.memory_space<vmem>>, vector<1x16xf32>
    %185 = arith.addf %183, %184 : vector<1x16xf32>
    %cst_108 = arith.constant 0.000000e+00 : f32
    %186 = vector.broadcast %cst_108 : f32 to vector<1x16xf32>
    %187 = arith.maximumf %185, %186 : vector<1x16xf32>
    %c0_109 = arith.constant 0 : index
    %c0_110 = arith.constant 0 : index
    %188 = vector.load %arg59[%c0_109, %c0_110] : memref<16x64xf32, #tpu.memory_space<vmem>>, vector<16x64xf32>
    %cst_111 = arith.constant dense<0.000000e+00> : vector<1x64xf32>
    %189 = tpu.matmul %187, %188, %cst_111 {dimension_numbers = #tpu.dot_dimension_numbers<[1], [0], [0], [1], [0, 0, 1, 1], [], []>} : vector<1x16xf32>, vector<16x64xf32>, vector<1x64xf32> -> vector<1x64xf32>
    %c0_112 = arith.constant 0 : index
    %c0_113 = arith.constant 0 : index
    %190 = vector.load %arg34[%c0_112, %c0_113] : memref<64x16xf32, #tpu.memory_space<vmem>>, vector<64x16xf32>
    %cst_114 = arith.constant dense<0.000000e+00> : vector<8x16xf32>
    %191 = tpu.matmul %74, %190, %cst_114 {dimension_numbers = #tpu.dot_dimension_numbers<[1], [0], [0], [1], [0, 0, 1, 1], [], []>} : vector<8x64xf32>, vector<64x16xf32>, vector<8x16xf32> -> vector<8x16xf32>
    %c0_115 = arith.constant 0 : index
    %c0_116 = arith.constant 0 : index
    %192 = vector.load %arg35[%c0_115, %c0_116] : memref<1x16xf32, #tpu.memory_space<vmem>>, vector<1x16xf32>
    %193 = vector.broadcast %192 : vector<1x16xf32> to vector<8x16xf32>
    %194 = arith.addf %191, %193 : vector<8x16xf32>
    %cst_117 = arith.constant 0.000000e+00 : f32
    %195 = vector.broadcast %cst_117 : f32 to vector<8x16xf32>
    %196 = arith.maximumf %194, %195 : vector<8x16xf32>
    %c0_118 = arith.constant 0 : index
    %c0_119 = arith.constant 0 : index
    %197 = vector.load %arg36[%c0_118, %c0_119] : memref<16x128xf32, #tpu.memory_space<vmem>>, vector<16x128xf32>
    %cst_120 = arith.constant dense<0.000000e+00> : vector<8x128xf32>
    %198 = tpu.matmul %196, %197, %cst_120 {dimension_numbers = #tpu.dot_dimension_numbers<[1], [0], [0], [1], [0, 0, 1, 1], [], []>} : vector<8x16xf32>, vector<16x128xf32>, vector<8x128xf32> -> vector<8x128xf32>
    %c0_121 = arith.constant 0 : index
    %c0_122 = arith.constant 0 : index
    %199 = vector.load %arg37[%c0_121, %c0_122] : memref<1x128xf32, #tpu.memory_space<vmem>>, vector<1x128xf32>
    %200 = vector.broadcast %199 : vector<1x128xf32> to vector<8x128xf32>
    %201 = arith.addf %198, %200 : vector<8x128xf32>
    %202 = vector.extract_strided_slice %201 {offsets = [0, 0], sizes = [8, 64], strides = [1, 1]} : vector<8x128xf32> to vector<8x64xf32>
    %203 = vector.extract_strided_slice %201 {offsets = [0, 64], sizes = [8, 64], strides = [1, 1]} : vector<8x128xf32> to vector<8x64xf32>
    %c0_123 = arith.constant 0 : index
    %c0_124 = arith.constant 0 : index
    %204 = vector.load %arg38[%c0_123, %c0_124] : memref<64x16xf32, #tpu.memory_space<vmem>>, vector<64x16xf32>
    %cst_125 = arith.constant dense<0.000000e+00> : vector<8x16xf32>
    %205 = tpu.matmul %74, %204, %cst_125 {dimension_numbers = #tpu.dot_dimension_numbers<[1], [0], [0], [1], [0, 0, 1, 1], [], []>} : vector<8x64xf32>, vector<64x16xf32>, vector<8x16xf32> -> vector<8x16xf32>
    %c0_126 = arith.constant 0 : index
    %c0_127 = arith.constant 0 : index
    %206 = vector.load %arg39[%c0_126, %c0_127] : memref<1x16xf32, #tpu.memory_space<vmem>>, vector<1x16xf32>
    %207 = vector.broadcast %206 : vector<1x16xf32> to vector<8x16xf32>
    %208 = arith.addf %205, %207 : vector<8x16xf32>
    %cst_128 = arith.constant 0.000000e+00 : f32
    %209 = vector.broadcast %cst_128 : f32 to vector<8x16xf32>
    %210 = arith.maximumf %208, %209 : vector<8x16xf32>
    %c0_129 = arith.constant 0 : index
    %c0_130 = arith.constant 0 : index
    %211 = vector.load %arg40[%c0_129, %c0_130] : memref<16x16xf32, #tpu.memory_space<vmem>>, vector<16x16xf32>
    %cst_131 = arith.constant dense<0.000000e+00> : vector<8x16xf32>
    %212 = tpu.matmul %210, %211, %cst_131 {dimension_numbers = #tpu.dot_dimension_numbers<[1], [0], [0], [1], [0, 0, 1, 1], [], []>} : vector<8x16xf32>, vector<16x16xf32>, vector<8x16xf32> -> vector<8x16xf32>
    %c0_132 = arith.constant 0 : index
    %c0_133 = arith.constant 0 : index
    %213 = vector.load %arg41[%c0_132, %c0_133] : memref<1x16xf32, #tpu.memory_space<vmem>>, vector<1x16xf32>
    %214 = vector.broadcast %213 : vector<1x16xf32> to vector<8x16xf32>
    %215 = arith.addf %212, %214 : vector<8x16xf32>
    %c0_134 = arith.constant 0 : index
    %c0_135 = arith.constant 0 : index
    %216 = vector.load %arg42[%c0_134, %c0_135] : memref<16x16xf32, #tpu.memory_space<vmem>>, vector<16x16xf32>
    %cst_136 = arith.constant dense<0.000000e+00> : vector<8x16xf32>
    %217 = tpu.matmul %215, %216, %cst_136 {dimension_numbers = #tpu.dot_dimension_numbers<[1], [0], [0], [1], [0, 0, 1, 1], [], []>} : vector<8x16xf32>, vector<16x16xf32>, vector<8x16xf32> -> vector<8x16xf32>
    %c0_137 = arith.constant 0 : index
    %c0_138 = arith.constant 0 : index
    %218 = vector.load %arg43[%c0_137, %c0_138] : memref<1x16xf32, #tpu.memory_space<vmem>>, vector<1x16xf32>
    %219 = vector.broadcast %218 : vector<1x16xf32> to vector<8x16xf32>
    %220 = arith.addf %217, %219 : vector<8x16xf32>
    %c0_139 = arith.constant 0 : index
    %c0_140 = arith.constant 0 : index
    %221 = vector.load %arg44[%c0_139, %c0_140] : memref<16x16xf32, #tpu.memory_space<vmem>>, vector<16x16xf32>
    %cst_141 = arith.constant dense<0.000000e+00> : vector<8x16xf32>
    %222 = tpu.matmul %215, %221, %cst_141 {dimension_numbers = #tpu.dot_dimension_numbers<[1], [0], [0], [1], [0, 0, 1, 1], [], []>} : vector<8x16xf32>, vector<16x16xf32>, vector<8x16xf32> -> vector<8x16xf32>
    %c0_142 = arith.constant 0 : index
    %c0_143 = arith.constant 0 : index
    %223 = vector.load %arg45[%c0_142, %c0_143] : memref<1x16xf32, #tpu.memory_space<vmem>>, vector<1x16xf32>
    %224 = vector.broadcast %223 : vector<1x16xf32> to vector<8x16xf32>
    %225 = arith.addf %222, %224 : vector<8x16xf32>
    %c0_144 = arith.constant 0 : index
    %c0_145 = arith.constant 0 : index
    %226 = vector.load %arg5[%c0_144, %c0_145] : memref<8x16xf32, #tpu.memory_space<vmem>>, vector<8x16xf32>
    %cst_146 = arith.constant 5.000000e-01 : f32
    %227 = vector.broadcast %cst_146 : f32 to vector<8x16xf32>
    %228 = arith.mulf %227, %225 : vector<8x16xf32>
    %229 = math.exp %228 : vector<8x16xf32>
    %230 = arith.mulf %226, %229 : vector<8x16xf32>
    %231 = arith.addf %220, %230 : vector<8x16xf32>
    %c0_147 = arith.constant 0 : index
    %c0_148 = arith.constant 0 : index
    %232 = vector.load %arg46[%c0_147, %c0_148] : memref<16x128xf32, #tpu.memory_space<vmem>>, vector<16x128xf32>
    %cst_149 = arith.constant dense<0.000000e+00> : vector<8x128xf32>
    %233 = tpu.matmul %231, %232, %cst_149 {dimension_numbers = #tpu.dot_dimension_numbers<[1], [0], [0], [1], [0, 0, 1, 1], [], []>} : vector<8x16xf32>, vector<16x128xf32>, vector<8x128xf32> -> vector<8x128xf32>
    %c0_150 = arith.constant 0 : index
    %c0_151 = arith.constant 0 : index
    %234 = vector.load %arg47[%c0_150, %c0_151] : memref<1x128xf32, #tpu.memory_space<vmem>>, vector<1x128xf32>
    %235 = vector.broadcast %234 : vector<1x128xf32> to vector<8x128xf32>
    %236 = arith.addf %233, %235 : vector<8x128xf32>
    %cst_152 = arith.constant 0.000000e+00 : f32
    %237 = vector.broadcast %cst_152 : f32 to vector<8x128xf32>
    %238 = arith.maximumf %236, %237 : vector<8x128xf32>
    %c0_153 = arith.constant 0 : index
    %c0_154 = arith.constant 0 : index
    %239 = vector.load %arg48[%c0_153, %c0_154] : memref<128x128xf32, #tpu.memory_space<vmem>>, vector<128x128xf32>
    %cst_155 = arith.constant dense<0.000000e+00> : vector<8x128xf32>
    %240 = tpu.matmul %238, %239, %cst_155 {dimension_numbers = #tpu.dot_dimension_numbers<[1], [0], [0], [1], [0, 0, 1, 1], [], []>} : vector<8x128xf32>, vector<128x128xf32>, vector<8x128xf32> -> vector<8x128xf32>
    %c0_156 = arith.constant 0 : index
    %c0_157 = arith.constant 0 : index
    %241 = vector.load %arg49[%c0_156, %c0_157] : memref<1x128xf32, #tpu.memory_space<vmem>>, vector<1x128xf32>
    %242 = vector.broadcast %241 : vector<1x128xf32> to vector<8x128xf32>
    %243 = arith.addf %240, %242 : vector<8x128xf32>
    %cst_158 = arith.constant 0.000000e+00 : f32
    %244 = vector.broadcast %cst_158 : f32 to vector<8x16xf32>
    %245 = arith.subf %244, %225 : vector<8x16xf32>
    %246 = math.exp %225 : vector<8x16xf32>
    %247 = arith.addf %245, %246 : vector<8x16xf32>
    %248 = arith.mulf %220, %220 : vector<8x16xf32>
    %249 = arith.addf %247, %248 : vector<8x16xf32>
    %cst_159 = arith.constant 1.000000e+00 : f32
    %250 = vector.broadcast %cst_159 : f32 to vector<8x16xf32>
    %251 = arith.subf %249, %250 : vector<8x16xf32>
    %cst_160 = arith.constant 5.000000e-01 : f32
    %252 = vector.broadcast %cst_160 : f32 to vector<8x16xf32>
    %253 = arith.mulf %252, %251 : vector<8x16xf32>
    %254 = vector.extract_strided_slice %201 {offsets = [0, 0], sizes = [8, 64], strides = [1, 1]} : vector<8x128xf32> to vector<8x64xf32>
    %c0_161 = arith.constant 0 : index
    %c0_162 = arith.constant 0 : index
    %255 = vector.load %arg58[%c0_161, %c0_162] : memref<64x64xf32, #tpu.memory_space<vmem>>, vector<64x64xf32>
    %cst_163 = arith.constant dense<0.000000e+00> : vector<8x64xf32>
    %256 = tpu.matmul %254, %255, %cst_163 {dimension_numbers = #tpu.dot_dimension_numbers<[1], [0], [0], [1], [0, 0, 1, 1], [], []>} : vector<8x64xf32>, vector<64x64xf32>, vector<8x64xf32> -> vector<8x64xf32>
    %257 = vector.broadcast %189 : vector<1x64xf32> to vector<8x64xf32>
    %258 = arith.addf %256, %257 : vector<8x64xf32>
    %c0_164 = arith.constant 0 : index
    %c0_165 = arith.constant 0 : index
    %259 = vector.load %arg60[%c0_164, %c0_165] : memref<1x64xf32, #tpu.memory_space<vmem>>, vector<1x64xf32>
    %260 = vector.broadcast %259 : vector<1x64xf32> to vector<8x64xf32>
    %261 = arith.addf %258, %260 : vector<8x64xf32>
    %cst_166 = arith.constant 0.000000e+00 : f32
    %262 = vector.broadcast %cst_166 : f32 to vector<8x64xf32>
    %263 = arith.maximumf %261, %262 : vector<8x64xf32>
    %c0_167 = arith.constant 0 : index
    %c0_168 = arith.constant 0 : index
    %264 = vector.load %arg61[%c0_167, %c0_168] : memref<64x2xf32, #tpu.memory_space<vmem>>, vector<64x2xf32>
    %cst_169 = arith.constant dense<0.000000e+00> : vector<8x2xf32>
    %265 = tpu.matmul %263, %264, %cst_169 {dimension_numbers = #tpu.dot_dimension_numbers<[1], [0], [0], [1], [0, 0, 1, 1], [], []>} : vector<8x64xf32>, vector<64x2xf32>, vector<8x2xf32> -> vector<8x2xf32>
    %c0_170 = arith.constant 0 : index
    %c0_171 = arith.constant 0 : index
    %266 = vector.load %arg62[%c0_170, %c0_171] : memref<1x2xf32, #tpu.memory_space<vmem>>, vector<1x2xf32>
    %267 = vector.broadcast %266 : vector<1x2xf32> to vector<8x2xf32>
    %268 = arith.addf %265, %267 : vector<8x2xf32>
    %cst_172 = arith.constant dense<0xFF800000> : vector<8xf32>
    %269 = vector.multi_reduction <maximumf>, %268, %cst_172 [1] : vector<8x2xf32> to vector<8xf32>
    %270 = vector.shape_cast %269 : vector<8xf32> to vector<8x1xf32>
    %271 = vector.broadcast %270 : vector<8x1xf32> to vector<8x2xf32>
    %272 = arith.subf %268, %271 : vector<8x2xf32>
    %273 = math.exp %272 : vector<8x2xf32>
    %cst_173 = arith.constant dense<0.000000e+00> : vector<8xf32>
    %274 = vector.multi_reduction <add>, %273, %cst_173 [1] : vector<8x2xf32> to vector<8xf32>
    %275 = vector.shape_cast %274 : vector<8xf32> to vector<8x1xf32>
    %276 = math.log %275 : vector<8x1xf32>
    %277 = arith.addf %270, %276 : vector<8x1xf32>
    %278 = vector.broadcast %277 : vector<8x1xf32> to vector<8x2xf32>
    %279 = arith.subf %268, %278 : vector<8x2xf32>
    %280 = arith.mulf %90, %279 : vector<8x2xf32>
    %cst_174 = arith.constant dense<0.000000e+00> : vector<8xf32>
    %281 = vector.multi_reduction <add>, %280, %cst_174 [1] : vector<8x2xf32> to vector<8xf32>
    %282 = vector.shape_cast %281 : vector<8xf32> to vector<8x1xf32>
    %cst_175 = arith.constant dense<0.000000e+00> : vector<1xf32>
    %283 = vector.multi_reduction <add>, %282, %cst_175 [0] : vector<8x1xf32> to vector<1xf32>
    %284 = vector.shape_cast %283 : vector<1xf32> to vector<1x1xf32>
    %cst_176 = arith.constant 8.000000e+00 : f32
    %285 = vector.broadcast %cst_176 : f32 to vector<1x1xf32>
    %286 = arith.divf %284, %285 : vector<1x1xf32>
    %cst_177 = arith.constant 0.000000e+00 : f32
    %287 = vector.broadcast %cst_177 : f32 to vector<1x1xf32>
    %288 = arith.subf %287, %286 : vector<1x1xf32>
    %289 = vector.extract_strided_slice %243 {offsets = [0, 0], sizes = [8, 64], strides = [1, 1]} : vector<8x128xf32> to vector<8x64xf32>
    %290 = arith.subf %74, %289 : vector<8x64xf32>
    %291 = arith.mulf %290, %290 : vector<8x64xf32>
    %cst_178 = arith.constant dense<0.000000e+00> : vector<8xf32>
    %292 = vector.multi_reduction <add>, %291, %cst_178 [1] : vector<8x64xf32> to vector<8xf32>
    %293 = vector.shape_cast %292 : vector<8xf32> to vector<8x1xf32>
    %cst_179 = arith.constant 6.400000e+01 : f32
    %294 = vector.broadcast %cst_179 : f32 to vector<8x1xf32>
    %295 = arith.divf %293, %294 : vector<8x1xf32>
    %cst_180 = arith.constant 0.000000e+00 : f32
    %296 = vector.broadcast %cst_180 : f32 to vector<8x1xf32>
    %297 = arith.subf %296, %295 : vector<8x1xf32>
    %298 = math.exp %297 : vector<8x1xf32>
    %cst_181 = arith.constant dense<0.000000e+00> : vector<1xf32>
    %299 = vector.multi_reduction <add>, %298, %cst_181 [0] : vector<8x1xf32> to vector<1xf32>
    %300 = vector.shape_cast %299 : vector<1xf32> to vector<1x1xf32>
    %cst_182 = arith.constant 8.000000e+00 : f32
    %301 = vector.broadcast %cst_182 : f32 to vector<1x1xf32>
    %302 = arith.divf %300, %301 : vector<1x1xf32>
    %303 = vector.extract_strided_slice %253 {offsets = [0, 0], sizes = [8, 8], strides = [1, 1]} : vector<8x16xf32> to vector<8x8xf32>
    %cst_183 = arith.constant dense<0.000000e+00> : vector<8xf32>
    %304 = vector.multi_reduction <add>, %303, %cst_183 [1] : vector<8x8xf32> to vector<8xf32>
    %305 = vector.shape_cast %304 : vector<8xf32> to vector<8x1xf32>
    %cst_184 = arith.constant dense<0.000000e+00> : vector<1xf32>
    %306 = vector.multi_reduction <add>, %305, %cst_184 [0] : vector<8x1xf32> to vector<1xf32>
    %307 = vector.shape_cast %306 : vector<1xf32> to vector<1x1xf32>
    %cst_185 = arith.constant 8.000000e+00 : f32
    %308 = vector.broadcast %cst_185 : f32 to vector<1x1xf32>
    %309 = arith.divf %307, %308 : vector<1x1xf32>
    %310 = arith.addf %288, %302 : vector<1x1xf32>
    %311 = arith.addf %310, %309 : vector<1x1xf32>
    %312 = vector.extract_strided_slice %201 {offsets = [0, 64], sizes = [8, 64], strides = [1, 1]} : vector<8x128xf32> to vector<8x64xf32>
    %c0_186 = arith.constant 0 : index
    %c0_187 = arith.constant 0 : index
    %313 = vector.load %arg58[%c0_186, %c0_187] : memref<64x64xf32, #tpu.memory_space<vmem>>, vector<64x64xf32>
    %cst_188 = arith.constant dense<0.000000e+00> : vector<8x64xf32>
    %314 = tpu.matmul %312, %313, %cst_188 {dimension_numbers = #tpu.dot_dimension_numbers<[1], [0], [0], [1], [0, 0, 1, 1], [], []>} : vector<8x64xf32>, vector<64x64xf32>, vector<8x64xf32> -> vector<8x64xf32>
    %315 = vector.broadcast %189 : vector<1x64xf32> to vector<8x64xf32>
    %316 = arith.addf %314, %315 : vector<8x64xf32>
    %c0_189 = arith.constant 0 : index
    %c0_190 = arith.constant 0 : index
    %317 = vector.load %arg60[%c0_189, %c0_190] : memref<1x64xf32, #tpu.memory_space<vmem>>, vector<1x64xf32>
    %318 = vector.broadcast %317 : vector<1x64xf32> to vector<8x64xf32>
    %319 = arith.addf %316, %318 : vector<8x64xf32>
    %cst_191 = arith.constant 0.000000e+00 : f32
    %320 = vector.broadcast %cst_191 : f32 to vector<8x64xf32>
    %321 = arith.maximumf %319, %320 : vector<8x64xf32>
    %c0_192 = arith.constant 0 : index
    %c0_193 = arith.constant 0 : index
    %322 = vector.load %arg61[%c0_192, %c0_193] : memref<64x2xf32, #tpu.memory_space<vmem>>, vector<64x2xf32>
    %cst_194 = arith.constant dense<0.000000e+00> : vector<8x2xf32>
    %323 = tpu.matmul %321, %322, %cst_194 {dimension_numbers = #tpu.dot_dimension_numbers<[1], [0], [0], [1], [0, 0, 1, 1], [], []>} : vector<8x64xf32>, vector<64x2xf32>, vector<8x2xf32> -> vector<8x2xf32>
    %c0_195 = arith.constant 0 : index
    %c0_196 = arith.constant 0 : index
    %324 = vector.load %arg62[%c0_195, %c0_196] : memref<1x2xf32, #tpu.memory_space<vmem>>, vector<1x2xf32>
    %325 = vector.broadcast %324 : vector<1x2xf32> to vector<8x2xf32>
    %326 = arith.addf %323, %325 : vector<8x2xf32>
    %cst_197 = arith.constant dense<0xFF800000> : vector<8xf32>
    %327 = vector.multi_reduction <maximumf>, %326, %cst_197 [1] : vector<8x2xf32> to vector<8xf32>
    %328 = vector.shape_cast %327 : vector<8xf32> to vector<8x1xf32>
    %329 = vector.broadcast %328 : vector<8x1xf32> to vector<8x2xf32>
    %330 = arith.subf %326, %329 : vector<8x2xf32>
    %331 = math.exp %330 : vector<8x2xf32>
    %cst_198 = arith.constant dense<0.000000e+00> : vector<8xf32>
    %332 = vector.multi_reduction <add>, %331, %cst_198 [1] : vector<8x2xf32> to vector<8xf32>
    %333 = vector.shape_cast %332 : vector<8xf32> to vector<8x1xf32>
    %334 = math.log %333 : vector<8x1xf32>
    %335 = arith.addf %328, %334 : vector<8x1xf32>
    %336 = vector.broadcast %335 : vector<8x1xf32> to vector<8x2xf32>
    %337 = arith.subf %326, %336 : vector<8x2xf32>
    %338 = arith.mulf %90, %337 : vector<8x2xf32>
    %cst_199 = arith.constant dense<0.000000e+00> : vector<8xf32>
    %339 = vector.multi_reduction <add>, %338, %cst_199 [1] : vector<8x2xf32> to vector<8xf32>
    %340 = vector.shape_cast %339 : vector<8xf32> to vector<8x1xf32>
    %cst_200 = arith.constant dense<0.000000e+00> : vector<1xf32>
    %341 = vector.multi_reduction <add>, %340, %cst_200 [0] : vector<8x1xf32> to vector<1xf32>
    %342 = vector.shape_cast %341 : vector<1xf32> to vector<1x1xf32>
    %cst_201 = arith.constant 8.000000e+00 : f32
    %343 = vector.broadcast %cst_201 : f32 to vector<1x1xf32>
    %344 = arith.divf %342, %343 : vector<1x1xf32>
    %cst_202 = arith.constant 0.000000e+00 : f32
    %345 = vector.broadcast %cst_202 : f32 to vector<1x1xf32>
    %346 = arith.subf %345, %344 : vector<1x1xf32>
    %347 = vector.extract_strided_slice %243 {offsets = [0, 64], sizes = [8, 64], strides = [1, 1]} : vector<8x128xf32> to vector<8x64xf32>
    %348 = arith.subf %74, %347 : vector<8x64xf32>
    %349 = arith.mulf %348, %348 : vector<8x64xf32>
    %cst_203 = arith.constant dense<0.000000e+00> : vector<8xf32>
    %350 = vector.multi_reduction <add>, %349, %cst_203 [1] : vector<8x64xf32> to vector<8xf32>
    %351 = vector.shape_cast %350 : vector<8xf32> to vector<8x1xf32>
    %cst_204 = arith.constant 6.400000e+01 : f32
    %352 = vector.broadcast %cst_204 : f32 to vector<8x1xf32>
    %353 = arith.divf %351, %352 : vector<8x1xf32>
    %cst_205 = arith.constant 0.000000e+00 : f32
    %354 = vector.broadcast %cst_205 : f32 to vector<8x1xf32>
    %355 = arith.subf %354, %353 : vector<8x1xf32>
    %356 = math.exp %355 : vector<8x1xf32>
    %cst_206 = arith.constant dense<0.000000e+00> : vector<1xf32>
    %357 = vector.multi_reduction <add>, %356, %cst_206 [0] : vector<8x1xf32> to vector<1xf32>
    %358 = vector.shape_cast %357 : vector<1xf32> to vector<1x1xf32>
    %cst_207 = arith.constant 8.000000e+00 : f32
    %359 = vector.broadcast %cst_207 : f32 to vector<1x1xf32>
    %360 = arith.divf %358, %359 : vector<1x1xf32>
    %361 = vector.extract_strided_slice %253 {offsets = [0, 8], sizes = [8, 8], strides = [1, 1]} : vector<8x16xf32> to vector<8x8xf32>
    %cst_208 = arith.constant dense<0.000000e+00> : vector<8xf32>
    %362 = vector.multi_reduction <add>, %361, %cst_208 [1] : vector<8x8xf32> to vector<8xf32>
    %363 = vector.shape_cast %362 : vector<8xf32> to vector<8x1xf32>
    %cst_209 = arith.constant dense<0.000000e+00> : vector<1xf32>
    %364 = vector.multi_reduction <add>, %363, %cst_209 [0] : vector<8x1xf32> to vector<1xf32>
    %365 = vector.shape_cast %364 : vector<1xf32> to vector<1x1xf32>
    %cst_210 = arith.constant 8.000000e+00 : f32
    %366 = vector.broadcast %cst_210 : f32 to vector<1x1xf32>
    %367 = arith.divf %365, %366 : vector<1x1xf32>
    %368 = arith.addf %346, %360 : vector<1x1xf32>
    %369 = arith.addf %368, %367 : vector<1x1xf32>
    %370 = arith.cmpf ole, %311, %369 : vector<1x1xf32>
    %371 = arith.extui %370 : vector<1x1xi1> to vector<1x1xi32>
    %372 = arith.sitofp %371 : vector<1x1xi32> to vector<1x1xf32>
    %373 = vector.broadcast %372 : vector<1x1xf32> to vector<8x64xf32>
    %374 = arith.mulf %373, %202 : vector<8x64xf32>
    %cst_211 = arith.constant 1.000000e+00 : f32
    %375 = vector.broadcast %cst_211 : f32 to vector<1x1xf32>
    %376 = arith.subf %375, %372 : vector<1x1xf32>
    %377 = vector.broadcast %376 : vector<1x1xf32> to vector<8x64xf32>
    %378 = arith.mulf %377, %203 : vector<8x64xf32>
    %379 = arith.addf %374, %378 : vector<8x64xf32>
    %c0_212 = arith.constant 0 : index
    %c0_213 = arith.constant 0 : index
    %380 = vector.load %arg50[%c0_212, %c0_213] : memref<64x64xf32, #tpu.memory_space<vmem>>, vector<64x64xf32>
    %cst_214 = arith.constant dense<0.000000e+00> : vector<8x64xf32>
    %381 = tpu.matmul %74, %380, %cst_214 {dimension_numbers = #tpu.dot_dimension_numbers<[1], [0], [0], [1], [0, 0, 1, 1], [], []>} : vector<8x64xf32>, vector<64x64xf32>, vector<8x64xf32> -> vector<8x64xf32>
    %c0_215 = arith.constant 0 : index
    %c0_216 = arith.constant 0 : index
    %382 = vector.load %arg51[%c0_215, %c0_216] : memref<1x64xf32, #tpu.memory_space<vmem>>, vector<1x64xf32>
    %383 = vector.broadcast %382 : vector<1x64xf32> to vector<8x64xf32>
    %384 = arith.addf %381, %383 : vector<8x64xf32>
    %cst_217 = arith.constant 0.000000e+00 : f32
    %385 = vector.broadcast %cst_217 : f32 to vector<8x64xf32>
    %386 = arith.maximumf %384, %385 : vector<8x64xf32>
    %c0_218 = arith.constant 0 : index
    %c0_219 = arith.constant 0 : index
    %387 = vector.load %arg52[%c0_218, %c0_219] : memref<64x1xf32, #tpu.memory_space<vmem>>, vector<64x1xf32>
    %cst_220 = arith.constant dense<0.000000e+00> : vector<8x1xf32>
    %388 = tpu.matmul %386, %387, %cst_220 {dimension_numbers = #tpu.dot_dimension_numbers<[1], [0], [0], [1], [0, 0, 1, 1], [], []>} : vector<8x64xf32>, vector<64x1xf32>, vector<8x1xf32> -> vector<8x1xf32>
    %c0_221 = arith.constant 0 : index
    %c0_222 = arith.constant 0 : index
    %389 = vector.load %arg53[%c0_221, %c0_222] : memref<1x1xf32, #tpu.memory_space<vmem>>, vector<1x1xf32>
    %390 = vector.broadcast %389 : vector<1x1xf32> to vector<8x1xf32>
    %391 = arith.addf %388, %390 : vector<8x1xf32>
    %392 = vector.broadcast %391 : vector<8x1xf32> to vector<8x64xf32>
    %393 = arith.mulf %392, %202 : vector<8x64xf32>
    %cst_223 = arith.constant 1.000000e+00 : f32
    %394 = vector.broadcast %cst_223 : f32 to vector<8x1xf32>
    %395 = arith.subf %394, %391 : vector<8x1xf32>
    %396 = vector.broadcast %395 : vector<8x1xf32> to vector<8x64xf32>
    %397 = arith.mulf %396, %379 : vector<8x64xf32>
    %398 = arith.addf %393, %397 : vector<8x64xf32>
    %c0_224 = arith.constant 0 : index
    %c0_225 = arith.constant 0 : index
    %399 = vector.load %arg54[%c0_224, %c0_225] : memref<64x64xf32, #tpu.memory_space<vmem>>, vector<64x64xf32>
    %cst_226 = arith.constant dense<0.000000e+00> : vector<8x64xf32>
    %400 = tpu.matmul %398, %399, %cst_226 {dimension_numbers = #tpu.dot_dimension_numbers<[1], [0], [0], [1], [0, 0, 1, 1], [], []>} : vector<8x64xf32>, vector<64x64xf32>, vector<8x64xf32> -> vector<8x64xf32>
    %c0_227 = arith.constant 0 : index
    %c0_228 = arith.constant 0 : index
    %401 = vector.load %arg55[%c0_227, %c0_228] : memref<1x64xf32, #tpu.memory_space<vmem>>, vector<1x64xf32>
    %402 = vector.broadcast %401 : vector<1x64xf32> to vector<8x64xf32>
    %403 = arith.addf %400, %402 : vector<8x64xf32>
    %cst_229 = arith.constant 0.000000e+00 : f32
    %404 = vector.broadcast %cst_229 : f32 to vector<8x64xf32>
    %405 = arith.maximumf %403, %404 : vector<8x64xf32>
    %c0_230 = arith.constant 0 : index
    %c0_231 = arith.constant 0 : index
    %406 = vector.load %arg56[%c0_230, %c0_231] : memref<64x64xf32, #tpu.memory_space<vmem>>, vector<64x64xf32>
    %cst_232 = arith.constant dense<0.000000e+00> : vector<8x64xf32>
    %407 = tpu.matmul %405, %406, %cst_232 {dimension_numbers = #tpu.dot_dimension_numbers<[1], [0], [0], [1], [0, 0, 1, 1], [], []>} : vector<8x64xf32>, vector<64x64xf32>, vector<8x64xf32> -> vector<8x64xf32>
    %c0_233 = arith.constant 0 : index
    %c0_234 = arith.constant 0 : index
    %408 = vector.load %arg57[%c0_233, %c0_234] : memref<1x64xf32, #tpu.memory_space<vmem>>, vector<1x64xf32>
    %409 = vector.broadcast %408 : vector<1x64xf32> to vector<8x64xf32>
    %410 = arith.addf %407, %409 : vector<8x64xf32>
    %cst_235 = arith.constant 0.000000e+00 : f32
    %411 = vector.broadcast %cst_235 : f32 to vector<8x64xf32>
    %412 = arith.maximumf %410, %411 : vector<8x64xf32>
    %c0_236 = arith.constant 0 : index
    %c0_237 = arith.constant 0 : index
    %413 = vector.load %arg58[%c0_236, %c0_237] : memref<64x64xf32, #tpu.memory_space<vmem>>, vector<64x64xf32>
    %cst_238 = arith.constant dense<0.000000e+00> : vector<8x64xf32>
    %414 = tpu.matmul %412, %413, %cst_238 {dimension_numbers = #tpu.dot_dimension_numbers<[1], [0], [0], [1], [0, 0, 1, 1], [], []>} : vector<8x64xf32>, vector<64x64xf32>, vector<8x64xf32> -> vector<8x64xf32>
    %415 = vector.broadcast %189 : vector<1x64xf32> to vector<8x64xf32>
    %416 = arith.addf %414, %415 : vector<8x64xf32>
    %c0_239 = arith.constant 0 : index
    %c0_240 = arith.constant 0 : index
    %417 = vector.load %arg60[%c0_239, %c0_240] : memref<1x64xf32, #tpu.memory_space<vmem>>, vector<1x64xf32>
    %418 = vector.broadcast %417 : vector<1x64xf32> to vector<8x64xf32>
    %419 = arith.addf %416, %418 : vector<8x64xf32>
    %cst_241 = arith.constant 0.000000e+00 : f32
    %420 = vector.broadcast %cst_241 : f32 to vector<8x64xf32>
    %421 = arith.maximumf %419, %420 : vector<8x64xf32>
    %c0_242 = arith.constant 0 : index
    %c0_243 = arith.constant 0 : index
    %422 = vector.load %arg61[%c0_242, %c0_243] : memref<64x2xf32, #tpu.memory_space<vmem>>, vector<64x2xf32>
    %cst_244 = arith.constant dense<0.000000e+00> : vector<8x2xf32>
    %423 = tpu.matmul %421, %422, %cst_244 {dimension_numbers = #tpu.dot_dimension_numbers<[1], [0], [0], [1], [0, 0, 1, 1], [], []>} : vector<8x64xf32>, vector<64x2xf32>, vector<8x2xf32> -> vector<8x2xf32>
    %c0_245 = arith.constant 0 : index
    %c0_246 = arith.constant 0 : index
    %424 = vector.load %arg62[%c0_245, %c0_246] : memref<1x2xf32, #tpu.memory_space<vmem>>, vector<1x2xf32>
    %425 = vector.broadcast %424 : vector<1x2xf32> to vector<8x2xf32>
    %426 = arith.addf %423, %425 : vector<8x2xf32>
    %427 = arith.mulf %28, %57 : vector<8x64xf32>
    %cst_247 = arith.constant dense<0.000000e+00> : vector<8xf32>
    %428 = vector.multi_reduction <add>, %427, %cst_247 [1] : vector<8x64xf32> to vector<8xf32>
    %429 = vector.shape_cast %428 : vector<8xf32> to vector<8x1xf32>
    %430 = arith.mulf %28, %28 : vector<8x64xf32>
    %cst_248 = arith.constant dense<0.000000e+00> : vector<8xf32>
    %431 = vector.multi_reduction <add>, %430, %cst_248 [1] : vector<8x64xf32> to vector<8xf32>
    %432 = vector.shape_cast %431 : vector<8xf32> to vector<8x1xf32>
    %433 = arith.mulf %57, %57 : vector<8x64xf32>
    %cst_249 = arith.constant dense<0.000000e+00> : vector<8xf32>
    %434 = vector.multi_reduction <add>, %433, %cst_249 [1] : vector<8x64xf32> to vector<8xf32>
    %435 = vector.shape_cast %434 : vector<8xf32> to vector<8x1xf32>
    %436 = arith.mulf %432, %435 : vector<8x1xf32>
    %437 = math.sqrt %436 : vector<8x1xf32>
    %438 = arith.addf %429, %437 : vector<8x1xf32>
    %cst_250 = arith.constant 2.000000e+00 : f32
    %439 = vector.broadcast %cst_250 : f32 to vector<8x1xf32>
    %440 = arith.mulf %439, %437 : vector<8x1xf32>
    %cst_251 = arith.constant 9.99999996E-13 : f32
    %441 = vector.broadcast %cst_251 : f32 to vector<8x1xf32>
    %442 = arith.addf %440, %441 : vector<8x1xf32>
    %443 = arith.divf %438, %442 : vector<8x1xf32>
    %444 = tpu.concatenate %28, %57 in 1 : vector<8x64xf32>, vector<8x64xf32> -> vector<8x128xf32>
    %c0_252 = arith.constant 0 : index
    %c0_253 = arith.constant 0 : index
    %445 = vector.load %arg63[%c0_252, %c0_253] : memref<8x128xf32, #tpu.memory_space<vmem>>, vector<8x128xf32>
    tpu.vector_store %arg63[%c0_252, %c0_253], %444 {strides = array<i32>} : memref<8x128xf32, #tpu.memory_space<vmem>>, vector<8x128xf32>,
    %cst_254 = arith.constant 1.000000e+00 : f32
    %446 = vector.broadcast %cst_254 : f32 to vector<8x1xf32>
    %447 = arith.subf %446, %443 : vector<8x1xf32>
    %cst_255 = arith.constant 0.000000e+00 : f32
    %448 = vector.broadcast %cst_255 : f32 to vector<8x60xf32>
    %449 = tpu.concatenate %74, %426, %443, %447, %448 in 1 : vector<8x64xf32>, vector<8x2xf32>, vector<8x1xf32>, vector<8x1xf32>, vector<8x60xf32> -> vector<8x128xf32>
    %c0_256 = arith.constant 0 : index
    %c0_257 = arith.constant 0 : index
    %450 = vector.load %arg64[%c0_256, %c0_257] : memref<8x128xf32, #tpu.memory_space<vmem>>, vector<8x128xf32>
    tpu.vector_store %arg64[%c0_256, %c0_257], %449 {strides = array<i32>} : memref<8x128xf32, #tpu.memory_space<vmem>>, vector<8x128xf32>,
    %451 = tpu.concatenate %118, %157 in 1 : vector<1x32xf32>, vector<1x32xf32> -> vector<1x64xf32>
    %c0_258 = arith.constant 0 : index
    %c0_259 = arith.constant 0 : index
    %452 = vector.load %arg65[%c0_258, %c0_259] : memref<1x64xf32, #tpu.memory_space<vmem>>, vector<1x64xf32>
    tpu.vector_store %arg65[%c0_258, %c0_259], %451 {strides = array<i32>} : memref<1x64xf32, #tpu.memory_space<vmem>>, vector<1x64xf32>,
    %453 = tpu.concatenate %129, %168 in 1 : vector<32x32xf32>, vector<32x32xf32> -> vector<32x64xf32>
    %c0_260 = arith.constant 0 : index
    %c0_261 = arith.constant 0 : index
    %454 = vector.load %arg66[%c0_260, %c0_261] : memref<32x64xf32, #tpu.memory_space<vmem>>, vector<32x64xf32>
    tpu.vector_store %arg66[%c0_260, %c0_261], %453 {strides = array<i32>} : memref<32x64xf32, #tpu.memory_space<vmem>>, vector<32x64xf32>,
    %c0_262 = arith.constant 0 : index
    %c0_263 = arith.constant 0 : index
    %455 = vector.load %arg67[%c0_262, %c0_263] : memref<96x96xf32, #tpu.memory_space<vmem>>, vector<96x96xf32>
    tpu.vector_store %arg67[%c0_262, %c0_263], %150 {strides = array<i32>} : memref<96x96xf32, #tpu.memory_space<vmem>>, vector<96x96xf32>,
    return
  }
  func.func @transform_0(%arg0: i32) -> (i32, i32) {
    %c0_i32 = arith.constant 0 : i32
    %c0_i32_0 = arith.constant 0 : i32
    %c0_i32_1 = arith.constant 0 : i32
    return %c0_i32, %c0_i32_0 : i32, i32
  }
  func.func @transform_1(%arg0: i32) -> (i32, i32) {
    %c0_i32 = arith.constant 0 : i32
    %c0_i32_0 = arith.constant 0 : i32
    %c0_i32_1 = arith.constant 0 : i32
    return %c0_i32, %c0_i32_0 : i32, i32
  }
  func.func @transform_2(%arg0: i32) -> (i32, i32) {
    %c0_i32 = arith.constant 0 : i32
    %c0_i32_0 = arith.constant 0 : i32
    %c0_i32_1 = arith.constant 0 : i32
    return %c0_i32, %c0_i32_0 : i32, i32
  }
  func.func @transform_3(%arg0: i32) -> (i32, i32) {
    %c0_i32 = arith.constant 0 : i32
    %c0_i32_0 = arith.constant 0 : i32
    %c0_i32_1 = arith.constant 0 : i32
    return %c0_i32, %c0_i32_0 : i32, i32
  }
  func.func @transform_4(%arg0: i32) -> (i32, i32) {
    %c0_i32 = arith.constant 0 : i32
    %c0_i32_0 = arith.constant 0 : i32
    %c0_i32_1 = arith.constant 0 : i32
    return %c0_i32, %c0_i32_0 : i32, i32
  }
  func.func @transform_5(%arg0: i32) -> (i32, i32) {
    %c0_i32 = arith.constant 0 : i32
    %c0_i32_0 = arith.constant 0 : i32
    %c0_i32_1 = arith.constant 0 : i32
    return %c0_i32, %c0_i32_0 : i32, i32
  }
  func.func @transform_6(%arg0: i32) -> (i32, i32) {
    %c0_i32 = arith.constant 0 : i32
    %c0_i32_0 = arith.constant 0 : i32
    %c0_i32_1 = arith.constant 0 : i32
    return %c0_i32, %c0_i32_0 : i32, i32
  }
  func.func @transform_7(%arg0: i32) -> (i32, i32) {
    %c0_i32 = arith.constant 0 : i32
    %c0_i32_0 = arith.constant 0 : i32
    %c0_i32_1 = arith.constant 0 : i32
    return %c0_i32, %c0_i32_0 : i32, i32
  }
  func.func @transform_8(%arg0: i32) -> (i32, i32) {
    %c0_i32 = arith.constant 0 : i32
    %c0_i32_0 = arith.constant 0 : i32
    %c0_i32_1 = arith.constant 0 : i32
    return %c0_i32, %c0_i32_0 : i32, i32
  }
  func.func @transform_9(%arg0: i32) -> (i32, i32) {
    %c0_i32 = arith.constant 0 : i32
    %c0_i32_0 = arith.constant 0 : i32
    %c0_i32_1 = arith.constant 0 : i32
    return %c0_i32, %c0_i32_0 : i32, i32
  }
  func.func @transform_10(%arg0: i32) -> (i32, i32) {
    %c0_i32 = arith.constant 0 : i32
    %c0_i32_0 = arith.constant 0 : i32
    %c0_i32_1 = arith.constant 0 : i32
    return %c0_i32, %c0_i32_0 : i32, i32
  }
  func.func @transform_11(%arg0: i32) -> (i32, i32) {
    %c0_i32 = arith.constant 0 : i32
    %c0_i32_0 = arith.constant 0 : i32
    %c0_i32_1 = arith.constant 0 : i32
    return %c0_i32, %c0_i32_0 : i32, i32
  }
  func.func @transform_12(%arg0: i32) -> (i32, i32) {
    %c0_i32 = arith.constant 0 : i32
    %c0_i32_0 = arith.constant 0 : i32
    %c0_i32_1 = arith.constant 0 : i32
    return %c0_i32, %c0_i32_0 : i32, i32
  }
  func.func @transform_13(%arg0: i32) -> (i32, i32) {
    %c0_i32 = arith.constant 0 : i32
    %c0_i32_0 = arith.constant 0 : i32
    %c0_i32_1 = arith.constant 0 : i32
    return %c0_i32, %c0_i32_0 : i32, i32
  }
  func.func @transform_14(%arg0: i32) -> (i32, i32) {
    %c0_i32 = arith.constant 0 : i32
    %c0_i32_0 = arith.constant 0 : i32
    %c0_i32_1 = arith.constant 0 : i32
    return %c0_i32, %c0_i32_0 : i32, i32
  }
  func.func @transform_15(%arg0: i32) -> (i32, i32) {
    %c0_i32 = arith.constant 0 : i32
    %c0_i32_0 = arith.constant 0 : i32
    %c0_i32_1 = arith.constant 0 : i32
    return %c0_i32, %c0_i32_0 : i32, i32
  }
  func.func @transform_16(%arg0: i32) -> (i32, i32) {
    %c0_i32 = arith.constant 0 : i32
    %c0_i32_0 = arith.constant 0 : i32
    %c0_i32_1 = arith.constant 0 : i32
    return %c0_i32, %c0_i32_0 : i32, i32
  }
  func.func @transform_17(%arg0: i32) -> (i32, i32) {
    %c0_i32 = arith.constant 0 : i32
    %c0_i32_0 = arith.constant 0 : i32
    %c0_i32_1 = arith.constant 0 : i32
    return %c0_i32, %c0_i32_0 : i32, i32
  }
  func.func @transform_18(%arg0: i32) -> (i32, i32) {
    %c0_i32 = arith.constant 0 : i32
    %c0_i32_0 = arith.constant 0 : i32
    %c0_i32_1 = arith.constant 0 : i32
    return %c0_i32, %c0_i32_0 : i32, i32
  }
  func.func @transform_19(%arg0: i32) -> (i32, i32) {
    %c0_i32 = arith.constant 0 : i32
    %c0_i32_0 = arith.constant 0 : i32
    %c0_i32_1 = arith.constant 0 : i32
    return %c0_i32, %c0_i32_0 : i32, i32
  }
  func.func @transform_20(%arg0: i32) -> (i32, i32) {
    %c0_i32 = arith.constant 0 : i32
    %c0_i32_0 = arith.constant 0 : i32
    %c0_i32_1 = arith.constant 0 : i32
    return %c0_i32, %c0_i32_0 : i32, i32
  }
  func.func @transform_21(%arg0: i32) -> (i32, i32) {
    %c0_i32 = arith.constant 0 : i32
    %c0_i32_0 = arith.constant 0 : i32
    %c0_i32_1 = arith.constant 0 : i32
    return %c0_i32, %c0_i32_0 : i32, i32
  }
  func.func @transform_22(%arg0: i32) -> (i32, i32) {
    %c0_i32 = arith.constant 0 : i32
    %c0_i32_0 = arith.constant 0 : i32
    %c0_i32_1 = arith.constant 0 : i32
    return %c0_i32, %c0_i32_0 : i32, i32
  }
  func.func @transform_23(%arg0: i32) -> (i32, i32) {
    %c0_i32 = arith.constant 0 : i32
    %c0_i32_0 = arith.constant 0 : i32
    %c0_i32_1 = arith.constant 0 : i32
    return %c0_i32, %c0_i32_0 : i32, i32
  }
  func.func @transform_24(%arg0: i32) -> (i32, i32) {
    %c0_i32 = arith.constant 0 : i32
    %c0_i32_0 = arith.constant 0 : i32
    %c0_i32_1 = arith.constant 0 : i32
    return %c0_i32, %c0_i32_0 : i32, i32
  }
  func.func @transform_25(%arg0: i32) -> (i32, i32) {
    %c0_i32 = arith.constant 0 : i32
    %c0_i32_0 = arith.constant 0 : i32
    %c0_i32_1 = arith.constant 0 : i32
    return %c0_i32, %c0_i32_0 : i32, i32
  }
  func.func @transform_26(%arg0: i32) -> (i32, i32) {
    %c0_i32 = arith.constant 0 : i32
    %c0_i32_0 = arith.constant 0 : i32
    %c0_i32_1 = arith.constant 0 : i32
    return %c0_i32, %c0_i32_0 : i32, i32
  }
  func.func @transform_27(%arg0: i32) -> (i32, i32) {
    %c0_i32 = arith.constant 0 : i32
    %c0_i32_0 = arith.constant 0 : i32
    %c0_i32_1 = arith.constant 0 : i32
    return %c0_i32, %c0_i32_0 : i32, i32
  }
  func.func @transform_28(%arg0: i32) -> (i32, i32) {
    %c0_i32 = arith.constant 0 : i32
    %c0_i32_0 = arith.constant 0 : i32
    %c0_i32_1 = arith.constant 0 : i32
    return %c0_i32, %c0_i32_0 : i32, i32
  }
  func.func @transform_29(%arg0: i32) -> (i32, i32) {
    %c0_i32 = arith.constant 0 : i32
    %c0_i32_0 = arith.constant 0 : i32
    %c0_i32_1 = arith.constant 0 : i32
    return %c0_i32, %c0_i32_0 : i32, i32
  }
  func.func @transform_30(%arg0: i32) -> (i32, i32) {
    %c0_i32 = arith.constant 0 : i32
    %c0_i32_0 = arith.constant 0 : i32
    %c0_i32_1 = arith.constant 0 : i32
    return %c0_i32, %c0_i32_0 : i32, i32
  }
  func.func @transform_31(%arg0: i32) -> (i32, i32) {
    %c0_i32 = arith.constant 0 : i32
    %c0_i32_0 = arith.constant 0 : i32
    %c0_i32_1 = arith.constant 0 : i32
    return %c0_i32, %c0_i32_0 : i32, i32
  }
  func.func @transform_32(%arg0: i32) -> (i32, i32) {
    %c0_i32 = arith.constant 0 : i32
    %c0_i32_0 = arith.constant 0 : i32
    %c0_i32_1 = arith.constant 0 : i32
    return %c0_i32, %c0_i32_0 : i32, i32
  }
  func.func @transform_33(%arg0: i32) -> (i32, i32) {
    %c0_i32 = arith.constant 0 : i32
    %c0_i32_0 = arith.constant 0 : i32
    %c0_i32_1 = arith.constant 0 : i32
    return %c0_i32, %c0_i32_0 : i32, i32
  }
  func.func @transform_34(%arg0: i32) -> (i32, i32) {
    %c0_i32 = arith.constant 0 : i32
    %c0_i32_0 = arith.constant 0 : i32
    %c0_i32_1 = arith.constant 0 : i32
    return %c0_i32, %c0_i32_0 : i32, i32
  }
  func.func @transform_35(%arg0: i32) -> (i32, i32) {
    %c0_i32 = arith.constant 0 : i32
    %c0_i32_0 = arith.constant 0 : i32
    %c0_i32_1 = arith.constant 0 : i32
    return %c0_i32, %c0_i32_0 : i32, i32
  }
  func.func @transform_36(%arg0: i32) -> (i32, i32) {
    %c0_i32 = arith.constant 0 : i32
    %c0_i32_0 = arith.constant 0 : i32
    %c0_i32_1 = arith.constant 0 : i32
    return %c0_i32, %c0_i32_0 : i32, i32
  }
  func.func @transform_37(%arg0: i32) -> (i32, i32) {
    %c0_i32 = arith.constant 0 : i32
    %c0_i32_0 = arith.constant 0 : i32
    %c0_i32_1 = arith.constant 0 : i32
    return %c0_i32, %c0_i32_0 : i32, i32
  }
  func.func @transform_38(%arg0: i32) -> (i32, i32) {
    %c0_i32 = arith.constant 0 : i32
    %c0_i32_0 = arith.constant 0 : i32
    %c0_i32_1 = arith.constant 0 : i32
    return %c0_i32, %c0_i32_0 : i32, i32
  }
  func.func @transform_39(%arg0: i32) -> (i32, i32) {
    %c0_i32 = arith.constant 0 : i32
    %c0_i32_0 = arith.constant 0 : i32
    %c0_i32_1 = arith.constant 0 : i32
    return %c0_i32, %c0_i32_0 : i32, i32
  }
  func.func @transform_40(%arg0: i32) -> (i32, i32) {
    %c0_i32 = arith.constant 0 : i32
    %c0_i32_0 = arith.constant 0 : i32
    %c0_i32_1 = arith.constant 0 : i32
    return %c0_i32, %c0_i32_0 : i32, i32
  }
  func.func @transform_41(%arg0: i32) -> (i32, i32) {
    %c0_i32 = arith.constant 0 : i32
    %c0_i32_0 = arith.constant 0 : i32
    %c0_i32_1 = arith.constant 0 : i32
    return %c0_i32, %c0_i32_0 : i32, i32
  }
  func.func @transform_42(%arg0: i32) -> (i32, i32) {
    %c0_i32 = arith.constant 0 : i32
    %c0_i32_0 = arith.constant 0 : i32
    %c0_i32_1 = arith.constant 0 : i32
    return %c0_i32, %c0_i32_0 : i32, i32
  }
  func.func @transform_43(%arg0: i32) -> (i32, i32) {
    %c0_i32 = arith.constant 0 : i32
    %c0_i32_0 = arith.constant 0 : i32
    %c0_i32_1 = arith.constant 0 : i32
    return %c0_i32, %c0_i32_0 : i32, i32
  }
  func.func @transform_44(%arg0: i32) -> (i32, i32) {
    %c0_i32 = arith.constant 0 : i32
    %c0_i32_0 = arith.constant 0 : i32
    %c0_i32_1 = arith.constant 0 : i32
    return %c0_i32, %c0_i32_0 : i32, i32
  }
  func.func @transform_45(%arg0: i32) -> (i32, i32) {
    %c0_i32 = arith.constant 0 : i32
    %c0_i32_0 = arith.constant 0 : i32
    %c0_i32_1 = arith.constant 0 : i32
    return %c0_i32, %c0_i32_0 : i32, i32
  }
  func.func @transform_46(%arg0: i32) -> (i32, i32) {
    %c0_i32 = arith.constant 0 : i32
    %c0_i32_0 = arith.constant 0 : i32
    %c0_i32_1 = arith.constant 0 : i32
    return %c0_i32, %c0_i32_0 : i32, i32
  }
  func.func @transform_47(%arg0: i32) -> (i32, i32) {
    %c0_i32 = arith.constant 0 : i32
    %c0_i32_0 = arith.constant 0 : i32
    %c0_i32_1 = arith.constant 0 : i32
    return %c0_i32, %c0_i32_0 : i32, i32
  }
  func.func @transform_48(%arg0: i32) -> (i32, i32) {
    %c0_i32 = arith.constant 0 : i32
    %c0_i32_0 = arith.constant 0 : i32
    %c0_i32_1 = arith.constant 0 : i32
    return %c0_i32, %c0_i32_0 : i32, i32
  }
  func.func @transform_49(%arg0: i32) -> (i32, i32) {
    %c0_i32 = arith.constant 0 : i32
    %c0_i32_0 = arith.constant 0 : i32
    %c0_i32_1 = arith.constant 0 : i32
    return %c0_i32, %c0_i32_0 : i32, i32
  }
  func.func @transform_50(%arg0: i32) -> (i32, i32) {
    %c0_i32 = arith.constant 0 : i32
    %c0_i32_0 = arith.constant 0 : i32
    %c0_i32_1 = arith.constant 0 : i32
    return %c0_i32, %c0_i32_0 : i32, i32
  }
  func.func @transform_51(%arg0: i32) -> (i32, i32) {
    %c0_i32 = arith.constant 0 : i32
    %c0_i32_0 = arith.constant 0 : i32
    %c0_i32_1 = arith.constant 0 : i32
    return %c0_i32, %c0_i32_0 : i32, i32
  }
  func.func @transform_52(%arg0: i32) -> (i32, i32) {
    %c0_i32 = arith.constant 0 : i32
    %c0_i32_0 = arith.constant 0 : i32
    %c0_i32_1 = arith.constant 0 : i32
    return %c0_i32, %c0_i32_0 : i32, i32
  }
  func.func @transform_53(%arg0: i32) -> (i32, i32) {
    %c0_i32 = arith.constant 0 : i32
    %c0_i32_0 = arith.constant 0 : i32
    %c0_i32_1 = arith.constant 0 : i32
    return %c0_i32, %c0_i32_0 : i32, i32
  }
  func.func @transform_54(%arg0: i32) -> (i32, i32) {
    %c0_i32 = arith.constant 0 : i32
    %c0_i32_0 = arith.constant 0 : i32
    %c0_i32_1 = arith.constant 0 : i32
    return %c0_i32, %c0_i32_0 : i32, i32
  }
  func.func @transform_55(%arg0: i32) -> (i32, i32) {
    %c0_i32 = arith.constant 0 : i32
    %c0_i32_0 = arith.constant 0 : i32
    %c0_i32_1 = arith.constant 0 : i32
    return %c0_i32, %c0_i32_0 : i32, i32
  }
  func.func @transform_56(%arg0: i32) -> (i32, i32) {
    %c0_i32 = arith.constant 0 : i32
    %c0_i32_0 = arith.constant 0 : i32
    %c0_i32_1 = arith.constant 0 : i32
    return %c0_i32, %c0_i32_0 : i32, i32
  }
  func.func @transform_57(%arg0: i32) -> (i32, i32) {
    %c0_i32 = arith.constant 0 : i32
    %c0_i32_0 = arith.constant 0 : i32
    %c0_i32_1 = arith.constant 0 : i32
    return %c0_i32, %c0_i32_0 : i32, i32
  }
  func.func @transform_58(%arg0: i32) -> (i32, i32) {
    %c0_i32 = arith.constant 0 : i32
    %c0_i32_0 = arith.constant 0 : i32
    %c0_i32_1 = arith.constant 0 : i32
    return %c0_i32, %c0_i32_0 : i32, i32
  }
  func.func @transform_59(%arg0: i32) -> (i32, i32) {
    %c0_i32 = arith.constant 0 : i32
    %c0_i32_0 = arith.constant 0 : i32
    %c0_i32_1 = arith.constant 0 : i32
    return %c0_i32, %c0_i32_0 : i32, i32
  }
  func.func @transform_60(%arg0: i32) -> (i32, i32) {
    %c0_i32 = arith.constant 0 : i32
    %c0_i32_0 = arith.constant 0 : i32
    %c0_i32_1 = arith.constant 0 : i32
    return %c0_i32, %c0_i32_0 : i32, i32
  }
  func.func @transform_61(%arg0: i32) -> (i32, i32) {
    %c0_i32 = arith.constant 0 : i32
    %c0_i32_0 = arith.constant 0 : i32
    %c0_i32_1 = arith.constant 0 : i32
    return %c0_i32, %c0_i32_0 : i32, i32
  }
  func.func @transform_62(%arg0: i32) -> (i32, i32) {
    %c0_i32 = arith.constant 0 : i32
    %c0_i32_0 = arith.constant 0 : i32
    %c0_i32_1 = arith.constant 0 : i32
    return %c0_i32, %c0_i32_0 : i32, i32
  }
  func.func @transform_63(%arg0: i32) -> (i32, i32) {
    %c0_i32 = arith.constant 0 : i32
    %c0_i32_0 = arith.constant 0 : i32
    %c0_i32_1 = arith.constant 0 : i32
    return %c0_i32, %c0_i32_0 : i32, i32
  }
  func.func @transform_64(%arg0: i32) -> (i32, i32) {
    %c0_i32 = arith.constant 0 : i32
    %c0_i32_0 = arith.constant 0 : i32
    %c0_i32_1 = arith.constant 0 : i32
    return %c0_i32, %c0_i32_0 : i32, i32
  }
  func.func @transform_65(%arg0: i32) -> (i32, i32) {
    %c0_i32 = arith.constant 0 : i32
    %c0_i32_0 = arith.constant 0 : i32
    %c0_i32_1 = arith.constant 0 : i32
    return %c0_i32, %c0_i32_0 : i32, i32
  }
  func.func @transform_66(%arg0: i32) -> (i32, i32) {
    %c0_i32 = arith.constant 0 : i32
    %c0_i32_0 = arith.constant 0 : i32
    %c0_i32_1 = arith.constant 0 : i32
    return %c0_i32, %c0_i32_0 : i32, i32
  }
}

</mosaic_0001>

<llo_original>
// kernel: _forward_core.3
$region0: #{_forward_core.3}
  #allocation0 [shape = 'u32[]', space=smem, size = 0x4, offset = 0x4, fixed_abs, tag = 'smem constant byte address 0x4 - core index']
  #allocation1 [shape = 'u32[144,128]{1,0:T(1,128)}', space=vmem, size = 0x12000, scoped, tag = 'internal scratch']
  #allocation2 [shape = 'f32[1,1]{1,0:T(1,128)S(1)}', space=vmem, size = 0x200, scoped, tag = 'scoped memory for _forward_core.3']
  %s0 = inlined_call_operand.smem [shape: u32[67], index: -1, kind: input, shape index: {}]
  %s1 = sld [smem:[%s0]]
  %s2 = scalar_lea.smem %s0, 1
  %s3 = sld [smem:[%s2]]
  %s4 = scalar_lea.smem %s0, 2
  %s5 = sld [smem:[%s4]]
  %s6 = scalar_lea.smem %s0, 3
  %s7 = sld [smem:[%s6]]
  %s8 = scalar_lea.smem %s0, 4
  %s9 = sld [smem:[%s8]]
  %s10 = scalar_lea.smem %s0, 5
  %s11 = sld [smem:[%s10]]
  %s12 = scalar_lea.smem %s0, 6
  %s13 = sld [smem:[%s12]]
  %s14 = scalar_lea.smem %s0, 7
  %s15 = sld [smem:[%s14]]
  %s16 = scalar_lea.smem %s0, 8
  %s17 = sld [smem:[%s16]]
  %s18 = scalar_lea.smem %s0, 9
  %s19 = sld [smem:[%s18]]
  %s20 = scalar_lea.smem %s0, 10
  %s21 = sld [smem:[%s20]]
  %s22 = scalar_lea.smem %s0, 11
  %s23 = sld [smem:[%s22]]
  %s24 = scalar_lea.smem %s0, 12
  %s25 = sld [smem:[%s24]]
  %s26 = scalar_lea.smem %s0, 13
  %s27 = sld [smem:[%s26]]
  %s28 = scalar_lea.smem %s0, 14
  %s29 = sld [smem:[%s28]]
  %s30 = scalar_lea.smem %s0, 15
  %s31 = sld [smem:[%s30]]
  %s32 = scalar_lea.smem %s0, 16
  %s33 = sld [smem:[%s32]]
  %s34 = scalar_lea.smem %s0, 17
  %s35 = sld [smem:[%s34]]
  %s36 = scalar_lea.smem %s0, 18
  %s37 = sld [smem:[%s36]]
  %s38 = scalar_lea.smem %s0, 19
  %s39 = sld [smem:[%s38]]
  %s40 = scalar_lea.smem %s0, 20
  %s41 = sld [smem:[%s40]]
  %s42 = scalar_lea.smem %s0, 21
  %s43 = sld [smem:[%s42]]
  %s44 = scalar_lea.smem %s0, 22
  %s45 = sld [smem:[%s44]]
  %s46 = scalar_lea.smem %s0, 23
  %s47 = sld [smem:[%s46]]
  %s48 = scalar_lea.smem %s0, 24
  %s49 = sld [smem:[%s48]]
  %s50 = scalar_lea.smem %s0, 25
  %s51 = sld [smem:[%s50]]
  %s52 = scalar_lea.smem %s0, 26
  %s53 = sld [smem:[%s52]]
  %s54 = scalar_lea.smem %s0, 27
  %s55 = sld [smem:[%s54]]
  %s56 = scalar_lea.smem %s0, 28
  %s57 = sld [smem:[%s56]]
  %s58 = scalar_lea.smem %s0, 29
  %s59 = sld [smem:[%s58]]
  %s60 = scalar_lea.smem %s0, 30
  %s61 = sld [smem:[%s60]]
  %s62 = scalar_lea.smem %s0, 31
  %s63 = sld [smem:[%s62]]
  %s64 = scalar_lea.smem %s0, 32
  %s65 = sld [smem:[%s64]]
  %s66 = scalar_lea.smem %s0, 33
  %s67 = sld [smem:[%s66]]
  %s68 = scalar_lea.smem %s0, 34
  %s69 = sld [smem:[%s68]]
  %s70 = scalar_lea.smem %s0, 35
  %s71 = sld [smem:[%s70]]
  %s72 = scalar_lea.smem %s0, 36
  %s73 = sld [smem:[%s72]]
  %s74 = scalar_lea.smem %s0, 37
  %s75 = sld [smem:[%s74]]
  %s76 = scalar_lea.smem %s0, 38
  %s77 = sld [smem:[%s76]]
  %s78 = scalar_lea.smem %s0, 39
  %s79 = sld [smem:[%s78]]
  %s80 = scalar_lea.smem %s0, 40
  %s81 = sld [smem:[%s80]]
  %s82 = scalar_lea.smem %s0, 41
  %s83 = sld [smem:[%s82]]
  %s84 = scalar_lea.smem %s0, 42
  %s85 = sld [smem:[%s84]]
  %s86 = scalar_lea.smem %s0, 43
  %s87 = sld [smem:[%s86]]
  %s88 = scalar_lea.smem %s0, 44
  %s89 = sld [smem:[%s88]]
  %s90 = scalar_lea.smem %s0, 45
  %s91 = sld [smem:[%s90]]
  %s92 = scalar_lea.smem %s0, 46
  %s93 = sld [smem:[%s92]]
  %s94 = scalar_lea.smem %s0, 47
  %s95 = sld [smem:[%s94]]
  %s96 = scalar_lea.smem %s0, 48
  %s97 = sld [smem:[%s96]]
  %s98 = scalar_lea.smem %s0, 49
  %s99 = sld [smem:[%s98]]
  %s100 = scalar_lea.smem %s0, 50
  %s101 = sld [smem:[%s100]]
  %s102 = scalar_lea.smem %s0, 51
  %s103 = sld [smem:[%s102]]
  %s104 = scalar_lea.smem %s0, 52
  %s105 = sld [smem:[%s104]]
  %s106 = scalar_lea.smem %s0, 53
  %s107 = sld [smem:[%s106]]
  %s108 = scalar_lea.smem %s0, 54
  %s109 = sld [smem:[%s108]]
  %s110 = scalar_lea.smem %s0, 55
  %s111 = sld [smem:[%s110]]
  %s112 = scalar_lea.smem %s0, 56
  %s113 = sld [smem:[%s112]]
  %s114 = scalar_lea.smem %s0, 57
  %s115 = sld [smem:[%s114]]
  %s116 = scalar_lea.smem %s0, 58
  %s117 = sld [smem:[%s116]]
  %s118 = scalar_lea.smem %s0, 59
  %s119 = sld [smem:[%s118]]
  %s120 = scalar_lea.smem %s0, 60
  %s121 = sld [smem:[%s120]]
  %s122 = scalar_lea.smem %s0, 61
  %s123 = sld [smem:[%s122]]
  %s124 = scalar_lea.smem %s0, 62
  %s125 = sld [smem:[%s124]]
  %s126 = scalar_lea.smem %s0, 63
  %s127 = sld [smem:[%s126]]
  %s128 = scalar_lea.smem %s0, 64
  %s129 = sld [smem:[%s128]]
  %s130 = scalar_lea.smem %s0, 65
  %s131 = sld [smem:[%s130]]
  %s132 = scalar_lea.smem %s0, 66
  %s133 = sld [smem:[%s132]]
  %134 = xla_tuple %s125, %s127, %s129, %s131, %s133
  %s135 = sld [smem:[#allocation0]]
  $region438: #{_forward_core.3} parent=0
    _
  %s137 = ssub.s32 1, %s135
  %s138 = scalar_select 0, %s137, %s135
  %v139 = vstv %s105
  %140 = vst [vmem:[#allocation2] sm:$0x1] %v139
  $region1: #{_forward_core.3} parent=0
    #allocation3 [shape = 'u8[4096]{0}', space=vmem, size = 0x1000, scoped, tag = 'input window, operand 0, single buffered']
    #allocation4 [shape = 's32[1]{0}', space=sflag, size = 0x4, scoped, tag = 'scoped memory for _forward_core.3']
    #allocation5 [shape = 'u8[4096]{0}', space=vmem, size = 0x1000, scoped, tag = 'input window, operand 1, single buffered']
    #allocation6 [shape = 's32[1]{0}', space=sflag, size = 0x4, scoped, tag = 'scoped memory for _forward_core.3']
    #allocation7 [shape = 'u8[32768]{0}', space=vmem, size = 0x8000, scoped, tag = 'input window, operand 5, single buffered']
    #allocation8 [shape = 'u8[1024]{0}', space=vmem, size = 0x400, scoped, tag = 'input window, operand 6, single buffered']
    #allocation9 [shape = 's32[1]{0}', space=sflag, size = 0x4, scoped, tag = 'scoped memory for _forward_core.3']
    #allocation10 [shape = 'u8[512]{0}', space=vmem, size = 0x400, scoped, tag = 'input window, operand 8, single buffered']
    #allocation11 [shape = 'u8[65536]{0}', space=vmem, size = 0x10000, scoped, tag = 'input window, operand 9, single buffered']
    #allocation12 [shape = 's32[1]{0}', space=sflag, size = 0x4, scoped, tag = 'scoped memory for _forward_core.3']
    #allocation13 [shape = 'u8[512]{0}', space=vmem, size = 0x400, scoped, tag = 'input window, operand 10, single buffered']
    #allocation14 [shape = 'u8[512]{0}', space=vmem, size = 0x400, scoped, tag = 'input window, operand 12, single buffered']
    #allocation15 [shape = 's32[1]{0}', space=sflag, size = 0x4, scoped, tag = 'scoped memory for _forward_core.3']
    #allocation16 [shape = 'u8[65536]{0}', space=vmem, size = 0x10000, scoped, tag = 'input window, operand 13, single buffered']
    #allocation17 [shape = 'u8[1024]{0}', space=vmem, size = 0x400, scoped, tag = 'input window, operand 14, single buffered']
    #allocation18 [shape = 's32[1]{0}', space=sflag, size = 0x4, scoped, tag = 'scoped memory for _forward_core.3']
    #allocation19 [shape = 'u8[512]{0}', space=vmem, size = 0x400, scoped, tag = 'input window, operand 16, single buffered']
    #allocation20 [shape = 'u8[65536]{0}', space=vmem, size = 0x10000, scoped, tag = 'input window, operand 17, single buffered']
    #allocation21 [shape = 's32[1]{0}', space=sflag, size = 0x4, scoped, tag = 'scoped memory for _forward_core.3']
    #allocation22 [shape = 'u8[512]{0}', space=vmem, size = 0x400, scoped, tag = 'input window, operand 18, single buffered']
    #allocation23 [shape = 'u8[512]{0}', space=vmem, size = 0x400, scoped, tag = 'input window, operand 20, single buffered']
    #allocation24 [shape = 's32[1]{0}', space=sflag, size = 0x4, scoped, tag = 'scoped memory for _forward_core.3']
    #allocation25 [shape = 'u8[65536]{0}', space=vmem, size = 0x10000, scoped, tag = 'input window, operand 21, single buffered']
    #allocation26 [shape = 'u8[512]{0}', space=vmem, size = 0x400, scoped, tag = 'input window, operand 22, single buffered']
    #allocation27 [shape = 's32[1]{0}', space=sflag, size = 0x4, scoped, tag = 'scoped memory for _forward_core.3']
    #allocation28 [shape = 'u8[512]{0}', space=vmem, size = 0x400, scoped, tag = 'input window, operand 24, single buffered']
    #allocation29 [shape = 'u8[1024]{0}', space=vmem, size = 0x400, scoped, tag = 'input window, operand 26, single buffered']
    #allocation30 [shape = 's32[1]{0}', space=sflag, size = 0x4, scoped, tag = 'scoped memory for _forward_core.3']
    #allocation31 [shape = 'u8[512]{0}', space=vmem, size = 0x400, scoped, tag = 'input window, operand 28, single buffered']
    #allocation32 [shape = 'u8[32768]{0}', space=vmem, size = 0x8000, scoped, tag = 'input window, operand 29, single buffered']
    #allocation33 [shape = 's32[1]{0}', space=sflag, size = 0x4, scoped, tag = 'scoped memory for _forward_core.3']
    #allocation34 [shape = 'u8[512]{0}', space=vmem, size = 0x400, scoped, tag = 'input window, operand 30, single buffered']
    #allocation35 [shape = 'u8[512]{0}', space=vmem, size = 0x400, scoped, tag = 'input window, operand 32, single buffered']
    #allocation36 [shape = 's32[1]{0}', space=sflag, size = 0x4, scoped, tag = 'scoped memory for _forward_core.3']
    #allocation37 [shape = 'u8[512]{0}', space=vmem, size = 0x400, scoped, tag = 'input window, operand 34, single buffered']
    #allocation38 [shape = 'u8[8192]{0}', space=vmem, size = 0x2000, scoped, tag = 'input window, operand 35, single buffered']
    #allocation39 [shape = 's32[1]{0}', space=sflag, size = 0x4, scoped, tag = 'scoped memory for _forward_core.3']
    #allocation40 [shape = 'u8[512]{0}', space=vmem, size = 0x400, scoped, tag = 'input window, operand 36, single buffered']
    #allocation41 [shape = 'u8[512]{0}', space=vmem, size = 0x400, scoped, tag = 'input window, operand 38, single buffered']
    #allocation42 [shape = 's32[1]{0}', space=sflag, size = 0x4, scoped, tag = 'scoped memory for _forward_core.3']
    #allocation43 [shape = 'u8[8192]{0}', space=vmem, size = 0x2000, scoped, tag = 'input window, operand 39, single buffered']
    #allocation44 [shape = 'u8[512]{0}', space=vmem, size = 0x400, scoped, tag = 'input window, operand 40, single buffered']
    #allocation45 [shape = 's32[1]{0}', space=sflag, size = 0x4, scoped, tag = 'scoped memory for _forward_core.3']
    #allocation46 [shape = 'u8[8192]{0}', space=vmem, size = 0x2000, scoped, tag = 'input window, operand 41, single buffered']
    #allocation47 [shape = 'u8[512]{0}', space=vmem, size = 0x400, scoped, tag = 'input window, operand 42, single buffered']
    #allocation48 [shape = 's32[1]{0}', space=sflag, size = 0x4, scoped, tag = 'scoped memory for _forward_core.3']
    #allocation49 [shape = 'u8[8192]{0}', space=vmem, size = 0x2000, scoped, tag = 'input window, operand 43, single buffered']
    #allocation50 [shape = 'u8[512]{0}', space=vmem, size = 0x400, scoped, tag = 'input window, operand 44, single buffered']
    #allocation51 [shape = 's32[1]{0}', space=sflag, size = 0x4, scoped, tag = 'scoped memory for _forward_core.3']
    #allocation52 [shape = 'u8[8192]{0}', space=vmem, size = 0x2000, scoped, tag = 'input window, operand 45, single buffered']
    #allocation53 [shape = 'u8[512]{0}', space=vmem, size = 0x400, scoped, tag = 'input window, operand 46, single buffered']
    #allocation54 [shape = 's32[1]{0}', space=sflag, size = 0x4, scoped, tag = 'scoped memory for _forward_core.3']
    #allocation55 [shape = 'u8[32768]{0}', space=vmem, size = 0x8000, scoped, tag = 'input window, operand 53, single buffered']
    #allocation56 [shape = 'u8[32768]{0}', space=vmem, size = 0x8000, scoped, tag = 'input window, operand 55, single buffered']
    #allocation57 [shape = 's32[1]{0}', space=sflag, size = 0x4, scoped, tag = 'scoped memory for _forward_core.3']
    #allocation58 [shape = 'u8[32768]{0}', space=vmem, size = 0x8000, scoped, tag = 'input window, operand 57, single buffered']
    %141 = vsyncpa [#allocation4], 0
    %142 = vsyncpa [#allocation6], 0
    %143 = vsyncpa [#allocation9], 0
    %144 = vsyncpa [#allocation12], 0
    %145 = vsyncpa [#allocation15], 0
    %146 = vsyncpa [#allocation18], 0
    %147 = vsyncpa [#allocation21], 0
    %148 = vsyncpa [#allocation24], 0
    %149 = vsyncpa [#allocation27], 0
    %150 = vsyncpa [#allocation30], 0
    %151 = vsyncpa [#allocation33], 0
    %152 = vsyncpa [#allocation36], 0
    %153 = vsyncpa [#allocation39], 0
    %154 = vsyncpa [#allocation42], 0
    %155 = vsyncpa [#allocation45], 0
    %156 = vsyncpa [#allocation48], 0
    %157 = vsyncpa [#allocation51], 0
    %158 = vsyncpa [#allocation54], 0
    %159 = vsyncpa [#allocation57], 0
    // Predicated region
    $region2: #{_forward_core.3} parent=1 // pred_check
      _
    $region3: #{_forward_core.3} parent=1 // pred_check_branch
      %161 = sbr.rel (0) target = $region5
    $region4: #{_forward_core.3} parent=1 // pred_region
      %s163 = ssub.s32 128, 128
      %164 = vsyncadd [#allocation4], %s163
      %s166 = sshll.u32 [#allocation3], 4
      %s167 = int_to_ptr.vmem [resolvable:$true] %s166
      %169 = dma.hbm_to_vmem [thread:$0]  %s1, 128, %s167, [#allocation4]
    $region5: #{_forward_core.3} parent=1 // pred_fallthru
      _
    // Predicated region
    $region6: #{_forward_core.3} parent=1 // pred_check
      _
    $region7: #{_forward_core.3} parent=1 // pred_check_branch
      %171 = sbr.rel (0) target = $region9
    $region8: #{_forward_core.3} parent=1 // pred_region
      %s173 = ssub.s32 128, 128
      %174 = vsyncadd [#allocation6], %s173
      %s176 = sshll.u32 [#allocation5], 4
      %s177 = int_to_ptr.vmem [resolvable:$true] %s176
      %179 = dma.hbm_to_vmem [thread:$0]  %s3, 128, %s177, [#allocation6]
    $region9: #{_forward_core.3} parent=1 // pred_fallthru
      _
    // Predicated region
    $region10: #{_forward_core.3} parent=1 // pred_check
      _
    $region11: #{_forward_core.3} parent=1 // pred_check_branch
      %181 = sbr.rel (0) target = $region13
    $region12: #{_forward_core.3} parent=1 // pred_region
      _
    $region13: #{_forward_core.3} parent=1 // pred_fallthru
      _
    // Predicated region
    $region14: #{_forward_core.3} parent=1 // pred_check
      _
    $region15: #{_forward_core.3} parent=1 // pred_check_branch
      %183 = sbr.rel (0) target = $region17
    $region16: #{_forward_core.3} parent=1 // pred_region
      _
    $region17: #{_forward_core.3} parent=1 // pred_fallthru
      _
    // Predicated region
    $region18: #{_forward_core.3} parent=1 // pred_check
      _
    $region19: #{_forward_core.3} parent=1 // pred_check_branch
      %185 = sbr.rel (0) target = $region21
    $region20: #{_forward_core.3} parent=1 // pred_region
      _
    $region21: #{_forward_core.3} parent=1 // pred_fallthru
      _
    // Predicated region
    $region22: #{_forward_core.3} parent=1 // pred_check
      _
    $region23: #{_forward_core.3} parent=1 // pred_check_branch
      %187 = sbr.rel (0) target = $region25
    $region24: #{_forward_core.3} parent=1 // pred_region
      %s189 = ssub.s32 1024, 1024
      %190 = vsyncadd [#allocation6], %s189
      %s191 = sshll.u32 [#allocation7], 4
      %s192 = int_to_ptr.vmem [resolvable:$true] %s191
      %197 = dma.hbm_to_vmem [thread:$0]  %s11, 1024, %s192, [#allocation6], 256, 256, 16
    $region25: #{_forward_core.3} parent=1 // pred_fallthru
      _
    // Predicated region
    $region26: #{_forward_core.3} parent=1 // pred_check
      _
    $region27: #{_forward_core.3} parent=1 // pred_check_branch
      %199 = sbr.rel (0) target = $region29
    $region28: #{_forward_core.3} parent=1 // pred_region
      %s201 = ssub.s32 32, 32
      %202 = vsyncadd [#allocation9], %s201
      %s204 = sshll.u32 [#allocation8], 4
      %s205 = int_to_ptr.vmem [resolvable:$true] %s204
      %207 = dma.hbm_to_vmem [thread:$0]  %s13, 32, %s205, [#allocation9]
    $region29: #{_forward_core.3} parent=1 // pred_fallthru
      _
    // Predicated region
    $region30: #{_forward_core.3} parent=1 // pred_check
      _
    $region31: #{_forward_core.3} parent=1 // pred_check_branch
      %209 = sbr.rel (0) target = $region33
    $region32: #{_forward_core.3} parent=1 // pred_region
      _
    $region33: #{_forward_core.3} parent=1 // pred_fallthru
      _
    // Predicated region
    $region34: #{_forward_core.3} parent=1 // pred_check
      _
    $region35: #{_forward_core.3} parent=1 // pred_check_branch
      %211 = sbr.rel (0) target = $region37
    $region36: #{_forward_core.3} parent=1 // pred_region
      %s213 = ssub.s32 16, 16
      %214 = vsyncadd [#allocation9], %s213
      %s216 = sshll.u32 [#allocation10], 4
      %s217 = int_to_ptr.vmem [resolvable:$true] %s216
      %219 = dma.hbm_to_vmem [thread:$0]  %s17, 16, %s217, [#allocation9]
    $region37: #{_forward_core.3} parent=1 // pred_fallthru
      _
    // Predicated region
    $region38: #{_forward_core.3} parent=1 // pred_check
      _
    $region39: #{_forward_core.3} parent=1 // pred_check_branch
      %221 = sbr.rel (0) target = $region41
    $region40: #{_forward_core.3} parent=1 // pred_region
      %s223 = ssub.s32 2048, 2048
      %224 = vsyncadd [#allocation12], %s223
      %s225 = sshll.u32 [#allocation11], 4
      %s226 = int_to_ptr.vmem [resolvable:$true] %s225
      %231 = dma.hbm_to_vmem [thread:$0]  %s19, 2048, %s226, [#allocation12], 128, 128, 8
    $region41: #{_forward_core.3} parent=1 // pred_fallthru
      _
    // Predicated region
    $region42: #{_forward_core.3} parent=1 // pred_check
      _
    $region43: #{_forward_core.3} parent=1 // pred_check_branch
      %233 = sbr.rel (0) target = $region45
    $region44: #{_forward_core.3} parent=1 // pred_region
      %s235 = ssub.s32 16, 16
      %236 = vsyncadd [#allocation12], %s235
      %s238 = sshll.u32 [#allocation13], 4
      %s239 = int_to_ptr.vmem [resolvable:$true] %s238
      %241 = dma.hbm_to_vmem [thread:$0]  %s21, 16, %s239, [#allocation12]
    $region45: #{_forward_core.3} parent=1 // pred_fallthru
      _
    // Predicated region
    $region46: #{_forward_core.3} parent=1 // pred_check
      _
    $region47: #{_forward_core.3} parent=1 // pred_check_branch
      %243 = sbr.rel (0) target = $region49
    $region48: #{_forward_core.3} parent=1 // pred_region
      _
    $region49: #{_forward_core.3} parent=1 // pred_fallthru
      _
    // Predicated region
    $region50: #{_forward_core.3} parent=1 // pred_check
      _
    $region51: #{_forward_core.3} parent=1 // pred_check_branch
      %245 = sbr.rel (0) target = $region53
    $region52: #{_forward_core.3} parent=1 // pred_region
      %s247 = ssub.s32 16, 16
      %248 = vsyncadd [#allocation15], %s247
      %s250 = sshll.u32 [#allocation14], 4
      %s251 = int_to_ptr.vmem [resolvable:$true] %s250
      %253 = dma.hbm_to_vmem [thread:$0]  %s25, 16, %s251, [#allocation15]
    $region53: #{_forward_core.3} parent=1 // pred_fallthru
      _
    // Predicated region
    $region54: #{_forward_core.3} parent=1 // pred_check
      _
    $region55: #{_forward_core.3} parent=1 // pred_check_branch
      %255 = sbr.rel (0) target = $region57
    $region56: #{_forward_core.3} parent=1 // pred_region
      %s257 = ssub.s32 2048, 2048
      %258 = vsyncadd [#allocation15], %s257
      %s259 = sshll.u32 [#allocation16], 4
      %s260 = int_to_ptr.vmem [resolvable:$true] %s259
      %265 = dma.hbm_to_vmem [thread:$0]  %s27, 2048, %s260, [#allocation15], 256, 256, 16
    $region57: #{_forward_core.3} parent=1 // pred_fallthru
      _
    // Predicated region
    $region58: #{_forward_core.3} parent=1 // pred_check
      _
    $region59: #{_forward_core.3} parent=1 // pred_check_branch
      %267 = sbr.rel (0) target = $region61
    $region60: #{_forward_core.3} parent=1 // pred_region
      %s269 = ssub.s32 32, 32
      %270 = vsyncadd [#allocation18], %s269
      %s272 = sshll.u32 [#allocation17], 4
      %s273 = int_to_ptr.vmem [resolvable:$true] %s272
      %275 = dma.hbm_to_vmem [thread:$0]  %s29, 32, %s273, [#allocation18]
    $region61: #{_forward_core.3} parent=1 // pred_fallthru
      _
    // Predicated region
    $region62: #{_forward_core.3} parent=1 // pred_check
      _
    $region63: #{_forward_core.3} parent=1 // pred_check_branch
      %277 = sbr.rel (0) target = $region65
    $region64: #{_forward_core.3} parent=1 // pred_region
      _
    $region65: #{_forward_core.3} parent=1 // pred_fallthru
      _
    // Predicated region
    $region66: #{_forward_core.3} parent=1 // pred_check
      _
    $region67: #{_forward_core.3} parent=1 // pred_check_branch
      %279 = sbr.rel (0) target = $region69
    $region68: #{_forward_core.3} parent=1 // pred_region
      %s281 = ssub.s32 16, 16
      %282 = vsyncadd [#allocation18], %s281
      %s284 = sshll.u32 [#allocation19], 4
      %s285 = int_to_ptr.vmem [resolvable:$true] %s284
      %287 = dma.hbm_to_vmem [thread:$0]  %s33, 16, %s285, [#allocation18]
    $region69: #{_forward_core.3} parent=1 // pred_fallthru
      _
    // Predicated region
    $region70: #{_forward_core.3} parent=1 // pred_check
      _
    $region71: #{_forward_core.3} parent=1 // pred_check_branch
      %289 = sbr.rel (0) target = $region73
    $region72: #{_forward_core.3} parent=1 // pred_region
      %s291 = ssub.s32 2048, 2048
      %292 = vsyncadd [#allocation21], %s291
      %s293 = sshll.u32 [#allocation20], 4
      %s294 = int_to_ptr.vmem [resolvable:$true] %s293
      %299 = dma.hbm_to_vmem [thread:$0]  %s35, 2048, %s294, [#allocation21], 128, 128, 8
    $region73: #{_forward_core.3} parent=1 // pred_fallthru
      _
    // Predicated region
    $region74: #{_forward_core.3} parent=1 // pred_check
      _
    $region75: #{_forward_core.3} parent=1 // pred_check_branch
      %301 = sbr.rel (0) target = $region77
    $region76: #{_forward_core.3} parent=1 // pred_region
      %s303 = ssub.s32 16, 16
      %304 = vsyncadd [#allocation21], %s303
      %s306 = sshll.u32 [#allocation22], 4
      %s307 = int_to_ptr.vmem [resolvable:$true] %s306
      %309 = dma.hbm_to_vmem [thread:$0]  %s37, 16, %s307, [#allocation21]
    $region77: #{_forward_core.3} parent=1 // pred_fallthru
      _
    // Predicated region
    $region78: #{_forward_core.3} parent=1 // pred_check
      _
    $region79: #{_forward_core.3} parent=1 // pred_check_branch
      %311 = sbr.rel (0) target = $region81
    $region80: #{_forward_core.3} parent=1 // pred_region
      _
    $region81: #{_forward_core.3} parent=1 // pred_fallthru
      _
    // Predicated region
    $region82: #{_forward_core.3} parent=1 // pred_check
      _
    $region83: #{_forward_core.3} parent=1 // pred_check_branch
      %313 = sbr.rel (0) target = $region85
    $region84: #{_forward_core.3} parent=1 // pred_region
      %s315 = ssub.s32 16, 16
      %316 = vsyncadd [#allocation24], %s315
      %s318 = sshll.u32 [#allocation23], 4
      %s319 = int_to_ptr.vmem [resolvable:$true] %s318
      %321 = dma.hbm_to_vmem [thread:$0]  %s41, 16, %s319, [#allocation24]
    $region85: #{_forward_core.3} parent=1 // pred_fallthru
      _
    // Predicated region
    $region86: #{_forward_core.3} parent=1 // pred_check
      _
    $region87: #{_forward_core.3} parent=1 // pred_check_branch
      %323 = sbr.rel (0) target = $region89
    $region88: #{_forward_core.3} parent=1 // pred_region
      %s325 = ssub.s32 2048, 2048
      %326 = vsyncadd [#allocation24], %s325
      %s327 = sshll.u32 [#allocation25], 4
      %s328 = int_to_ptr.vmem [resolvable:$true] %s327
      %333 = dma.hbm_to_vmem [thread:$0]  %s43, 2048, %s328, [#allocation24], 128, 128, 8
    $region89: #{_forward_core.3} parent=1 // pred_fallthru
      _
    // Predicated region
    $region90: #{_forward_core.3} parent=1 // pred_check
      _
    $region91: #{_forward_core.3} parent=1 // pred_check_branch
      %335 = sbr.rel (0) target = $region93
    $region92: #{_forward_core.3} parent=1 // pred_region
      %s337 = ssub.s32 16, 16
      %338 = vsyncadd [#allocation27], %s337
      %s340 = sshll.u32 [#allocation26], 4
      %s341 = int_to_ptr.vmem [resolvable:$true] %s340
      %343 = dma.hbm_to_vmem [thread:$0]  %s45, 16, %s341, [#allocation27]
    $region93: #{_forward_core.3} parent=1 // pred_fallthru
      _
    // Predicated region
    $region94: #{_forward_core.3} parent=1 // pred_check
      _
    $region95: #{_forward_core.3} parent=1 // pred_check_branch
      %345 = sbr.rel (0) target = $region97
    $region96: #{_forward_core.3} parent=1 // pred_region
      _
    $region97: #{_forward_core.3} parent=1 // pred_fallthru
      _
    // Predicated region
    $region98: #{_forward_core.3} parent=1 // pred_check
      _
    $region99: #{_forward_core.3} parent=1 // pred_check_branch
      %347 = sbr.rel (0) target = $region101
    $region100: #{_forward_core.3} parent=1 // pred_region
      %s349 = ssub.s32 16, 16
      %350 = vsyncadd [#allocation27], %s349
      %s352 = sshll.u32 [#allocation28], 4
      %s353 = int_to_ptr.vmem [resolvable:$true] %s352
      %355 = dma.hbm_to_vmem [thread:$0]  %s49, 16, %s353, [#allocation27]
    $region101: #{_forward_core.3} parent=1 // pred_fallthru
      _
    // Predicated region
    $region102: #{_forward_core.3} parent=1 // pred_check
      _
    $region103: #{_forward_core.3} parent=1 // pred_check_branch
      %357 = sbr.rel (0) target = $region105
    $region104: #{_forward_core.3} parent=1 // pred_region
      _
    $region105: #{_forward_core.3} parent=1 // pred_fallthru
      _
    // Predicated region
    $region106: #{_forward_core.3} parent=1 // pred_check
      _
    $region107: #{_forward_core.3} parent=1 // pred_check_branch
      %359 = sbr.rel (0) target = $region109
    $region108: #{_forward_core.3} parent=1 // pred_region
      %s361 = ssub.s32 32, 32
      %362 = vsyncadd [#allocation30], %s361
      %s364 = sshll.u32 [#allocation29], 4
      %s365 = int_to_ptr.vmem [resolvable:$true] %s364
      %367 = dma.hbm_to_vmem [thread:$0]  %s53, 32, %s365, [#allocation30]
    $region109: #{_forward_core.3} parent=1 // pred_fallthru
      _
    // Predicated region
    $region110: #{_forward_core.3} parent=1 // pred_check
      _
    $region111: #{_forward_core.3} parent=1 // pred_check_branch
      %369 = sbr.rel (0) target = $region113
    $region112: #{_forward_core.3} parent=1 // pred_region
      _
    $region113: #{_forward_core.3} parent=1 // pred_fallthru
      _
    // Predicated region
    $region114: #{_forward_core.3} parent=1 // pred_check
      _
    $region115: #{_forward_core.3} parent=1 // pred_check_branch
      %371 = sbr.rel (0) target = $region117
    $region116: #{_forward_core.3} parent=1 // pred_region
      %s373 = ssub.s32 16, 16
      %374 = vsyncadd [#allocation30], %s373
      %s376 = sshll.u32 [#allocation31], 4
      %s377 = int_to_ptr.vmem [resolvable:$true] %s376
      %379 = dma.hbm_to_vmem [thread:$0]  %s57, 16, %s377, [#allocation30]
    $region117: #{_forward_core.3} parent=1 // pred_fallthru
      _
    // Predicated region
    $region118: #{_forward_core.3} parent=1 // pred_check
      _
    $region119: #{_forward_core.3} parent=1 // pred_check_branch
      %381 = sbr.rel (0) target = $region121
    $region120: #{_forward_core.3} parent=1 // pred_region
      %s383 = ssub.s32 1024, 1024
      %384 = vsyncadd [#allocation33], %s383
      %s385 = sshll.u32 [#allocation32], 4
      %s386 = int_to_ptr.vmem [resolvable:$true] %s385
      %391 = dma.hbm_to_vmem [thread:$0]  %s59, 1024, %s386, [#allocation33], 128, 128, 8
    $region121: #{_forward_core.3} parent=1 // pred_fallthru
      _
    // Predicated region
    $region122: #{_forward_core.3} parent=1 // pred_check
      _
    $region123: #{_forward_core.3} parent=1 // pred_check_branch
      %393 = sbr.rel (0) target = $region125
    $region124: #{_forward_core.3} parent=1 // pred_region
      %s395 = ssub.s32 16, 16
      %396 = vsyncadd [#allocation33], %s395
      %s398 = sshll.u32 [#allocation34], 4
      %s399 = int_to_ptr.vmem [resolvable:$true] %s398
      %401 = dma.hbm_to_vmem [thread:$0]  %s61, 16, %s399, [#allocation33]
    $region125: #{_forward_core.3} parent=1 // pred_fallthru
      _
    // Predicated region
    $region126: #{_forward_core.3} parent=1 // pred_check
      _
    $region127: #{_forward_core.3} parent=1 // pred_check_branch
      %403 = sbr.rel (0) target = $region129
    $region128: #{_forward_core.3} parent=1 // pred_region
      _
    $region129: #{_forward_core.3} parent=1 // pred_fallthru
      _
    // Predicated region
    $region130: #{_forward_core.3} parent=1 // pred_check
      _
    $region131: #{_forward_core.3} parent=1 // pred_check_branch
      %405 = sbr.rel (0) target = $region133
    $region132: #{_forward_core.3} parent=1 // pred_region
      %s407 = ssub.s32 16, 16
      %408 = vsyncadd [#allocation36], %s407
      %s410 = sshll.u32 [#allocation35], 4
      %s411 = int_to_ptr.vmem [resolvable:$true] %s410
      %413 = dma.hbm_to_vmem [thread:$0]  %s65, 16, %s411, [#allocation36]
    $region133: #{_forward_core.3} parent=1 // pred_fallthru
      _
    // Predicated region
    $region134: #{_forward_core.3} parent=1 // pred_check
      _
    $region135: #{_forward_core.3} parent=1 // pred_check_branch
      %415 = sbr.rel (0) target = $region137
    $region136: #{_forward_core.3} parent=1 // pred_region
      _
    $region137: #{_forward_core.3} parent=1 // pred_fallthru
      _
    // Predicated region
    $region138: #{_forward_core.3} parent=1 // pred_check
      _
    $region139: #{_forward_core.3} parent=1 // pred_check_branch
      %417 = sbr.rel (0) target = $region141
    $region140: #{_forward_core.3} parent=1 // pred_region
      %s419 = ssub.s32 16, 16
      %420 = vsyncadd [#allocation36], %s419
      %s422 = sshll.u32 [#allocation37], 4
      %s423 = int_to_ptr.vmem [resolvable:$true] %s422
      %425 = dma.hbm_to_vmem [thread:$0]  %s69, 16, %s423, [#allocation36]
    $region141: #{_forward_core.3} parent=1 // pred_fallthru
      _
    // Predicated region
    $region142: #{_forward_core.3} parent=1 // pred_check
      _
    $region143: #{_forward_core.3} parent=1 // pred_check_branch
      %427 = sbr.rel (0) target = $region145
    $region144: #{_forward_core.3} parent=1 // pred_region
      %s429 = ssub.s32 256, 256
      %430 = vsyncadd [#allocation39], %s429
      %s431 = sshll.u32 [#allocation38], 4
      %s432 = int_to_ptr.vmem [resolvable:$true] %s431
      %437 = dma.hbm_to_vmem [thread:$0]  %s71, 256, %s432, [#allocation39], 128, 128, 8
    $region145: #{_forward_core.3} parent=1 // pred_fallthru
      _
    // Predicated region
    $region146: #{_forward_core.3} parent=1 // pred_check
      _
    $region147: #{_forward_core.3} parent=1 // pred_check_branch
      %439 = sbr.rel (0) target = $region149
    $region148: #{_forward_core.3} parent=1 // pred_region
      %s441 = ssub.s32 16, 16
      %442 = vsyncadd [#allocation39], %s441
      %s444 = sshll.u32 [#allocation40], 4
      %s445 = int_to_ptr.vmem [resolvable:$true] %s444
      %447 = dma.hbm_to_vmem [thread:$0]  %s73, 16, %s445, [#allocation39]
    $region149: #{_forward_core.3} parent=1 // pred_fallthru
      _
    // Predicated region
    $region150: #{_forward_core.3} parent=1 // pred_check
      _
    $region151: #{_forward_core.3} parent=1 // pred_check_branch
      %449 = sbr.rel (0) target = $region153
    $region152: #{_forward_core.3} parent=1 // pred_region
      _
    $region153: #{_forward_core.3} parent=1 // pred_fallthru
      _
    // Predicated region
    $region154: #{_forward_core.3} parent=1 // pred_check
      _
    $region155: #{_forward_core.3} parent=1 // pred_check_branch
      %451 = sbr.rel (0) target = $region157
    $region156: #{_forward_core.3} parent=1 // pred_region
      %s453 = ssub.s32 16, 16
      %454 = vsyncadd [#allocation42], %s453
      %s456 = sshll.u32 [#allocation41], 4
      %s457 = int_to_ptr.vmem [resolvable:$true] %s456
      %459 = dma.hbm_to_vmem [thread:$0]  %s77, 16, %s457, [#allocation42]
    $region157: #{_forward_core.3} parent=1 // pred_fallthru
      _
    // Predicated region
    $region158: #{_forward_core.3} parent=1 // pred_check
      _
    $region159: #{_forward_core.3} parent=1 // pred_check_branch
      %461 = sbr.rel (0) target = $region161
    $region160: #{_forward_core.3} parent=1 // pred_region
      %s463 = ssub.s32 256, 256
      %464 = vsyncadd [#allocation42], %s463
      %s465 = sshll.u32 [#allocation43], 4
      %s466 = int_to_ptr.vmem [resolvable:$true] %s465
      %471 = dma.hbm_to_vmem [thread:$0]  %s79, 256, %s466, [#allocation42], 128, 128, 8
    $region161: #{_forward_core.3} parent=1 // pred_fallthru
      _
    // Predicated region
    $region162: #{_forward_core.3} parent=1 // pred_check
      _
    $region163: #{_forward_core.3} parent=1 // pred_check_branch
      %473 = sbr.rel (0) target = $region165
    $region164: #{_forward_core.3} parent=1 // pred_region
      %s475 = ssub.s32 16, 16
      %476 = vsyncadd [#allocation45], %s475
      %s478 = sshll.u32 [#allocation44], 4
      %s479 = int_to_ptr.vmem [resolvable:$true] %s478
      %481 = dma.hbm_to_vmem [thread:$0]  %s81, 16, %s479, [#allocation45]
    $region165: #{_forward_core.3} parent=1 // pred_fallthru
      _
    // Predicated region
    $region166: #{_forward_core.3} parent=1 // pred_check
      _
    $region167: #{_forward_core.3} parent=1 // pred_check_branch
      %483 = sbr.rel (0) target = $region169
    $region168: #{_forward_core.3} parent=1 // pred_region
      %s485 = ssub.s32 256, 256
      %486 = vsyncadd [#allocation45], %s485
      %s487 = sshll.u32 [#allocation46], 4
      %s488 = int_to_ptr.vmem [resolvable:$true] %s487
      %493 = dma.hbm_to_vmem [thread:$0]  %s83, 256, %s488, [#allocation45], 128, 128, 8
    $region169: #{_forward_core.3} parent=1 // pred_fallthru
      _
    // Predicated region
    $region170: #{_forward_core.3} parent=1 // pred_check
      _
    $region171: #{_forward_core.3} parent=1 // pred_check_branch
      %495 = sbr.rel (0) target = $region173
    $region172: #{_forward_core.3} parent=1 // pred_region
      %s497 = ssub.s32 16, 16
      %498 = vsyncadd [#allocation48], %s497
      %s500 = sshll.u32 [#allocation47], 4
      %s501 = int_to_ptr.vmem [resolvable:$true] %s500
      %503 = dma.hbm_to_vmem [thread:$0]  %s85, 16, %s501, [#allocation48]
    $region173: #{_forward_core.3} parent=1 // pred_fallthru
      _
    // Predicated region
    $region174: #{_forward_core.3} parent=1 // pred_check
      _
    $region175: #{_forward_core.3} parent=1 // pred_check_branch
      %505 = sbr.rel (0) target = $region177
    $region176: #{_forward_core.3} parent=1 // pred_region
      %s507 = ssub.s32 256, 256
      %508 = vsyncadd [#allocation48], %s507
      %s509 = sshll.u32 [#allocation49], 4
      %s510 = int_to_ptr.vmem [resolvable:$true] %s509
      %515 = dma.hbm_to_vmem [thread:$0]  %s87, 256, %s510, [#allocation48], 128, 128, 8
    $region177: #{_forward_core.3} parent=1 // pred_fallthru
      _
    // Predicated region
    $region178: #{_forward_core.3} parent=1 // pred_check
      _
    $region179: #{_forward_core.3} parent=1 // pred_check_branch
      %517 = sbr.rel (0) target = $region181
    $region180: #{_forward_core.3} parent=1 // pred_region
      %s519 = ssub.s32 16, 16
      %520 = vsyncadd [#allocation51], %s519
      %s522 = sshll.u32 [#allocation50], 4
      %s523 = int_to_ptr.vmem [resolvable:$true] %s522
      %525 = dma.hbm_to_vmem [thread:$0]  %s89, 16, %s523, [#allocation51]
    $region181: #{_forward_core.3} parent=1 // pred_fallthru
      _
    // Predicated region
    $region182: #{_forward_core.3} parent=1 // pred_check
      _
    $region183: #{_forward_core.3} parent=1 // pred_check_branch
      %527 = sbr.rel (0) target = $region185
    $region184: #{_forward_core.3} parent=1 // pred_region
      %s529 = ssub.s32 256, 256
      %530 = vsyncadd [#allocation51], %s529
      %s531 = sshll.u32 [#allocation52], 4
      %s532 = int_to_ptr.vmem [resolvable:$true] %s531
      %537 = dma.hbm_to_vmem [thread:$0]  %s91, 256, %s532, [#allocation51], 128, 128, 8
    $region185: #{_forward_core.3} parent=1 // pred_fallthru
      _
    // Predicated region
    $region186: #{_forward_core.3} parent=1 // pred_check
      _
    $region187: #{_forward_core.3} parent=1 // pred_check_branch
      %539 = sbr.rel (0) target = $region189
    $region188: #{_forward_core.3} parent=1 // pred_region
      %s541 = ssub.s32 16, 16
      %542 = vsyncadd [#allocation54], %s541
      %s544 = sshll.u32 [#allocation53], 4
      %s545 = int_to_ptr.vmem [resolvable:$true] %s544
      %547 = dma.hbm_to_vmem [thread:$0]  %s93, 16, %s545, [#allocation54]
    $region189: #{_forward_core.3} parent=1 // pred_fallthru
      _
    // Predicated region
    $region190: #{_forward_core.3} parent=1 // pred_check
      _
    $region191: #{_forward_core.3} parent=1 // pred_check_branch
      %549 = sbr.rel (0) target = $region193
    $region192: #{_forward_core.3} parent=1 // pred_region
      _
    $region193: #{_forward_core.3} parent=1 // pred_fallthru
      _
    // Predicated region
    $region194: #{_forward_core.3} parent=1 // pred_check
      _
    $region195: #{_forward_core.3} parent=1 // pred_check_branch
      %551 = sbr.rel (0) target = $region197
    $region196: #{_forward_core.3} parent=1 // pred_region
      _
    $region197: #{_forward_core.3} parent=1 // pred_fallthru
      _
    // Predicated region
    $region198: #{_forward_core.3} parent=1 // pred_check
      _
    $region199: #{_forward_core.3} parent=1 // pred_check_branch
      %553 = sbr.rel (0) target = $region201
    $region200: #{_forward_core.3} parent=1 // pred_region
      _
    $region201: #{_forward_core.3} parent=1 // pred_fallthru
      _
    // Predicated region
    $region202: #{_forward_core.3} parent=1 // pred_check
      _
    $region203: #{_forward_core.3} parent=1 // pred_check_branch
      %555 = sbr.rel (0) target = $region205
    $region204: #{_forward_core.3} parent=1 // pred_region
      _
    $region205: #{_forward_core.3} parent=1 // pred_fallthru
      _
    // Predicated region
    $region206: #{_forward_core.3} parent=1 // pred_check
      _
    $region207: #{_forward_core.3} parent=1 // pred_check_branch
      %557 = sbr.rel (0) target = $region209
    $region208: #{_forward_core.3} parent=1 // pred_region
      _
    $region209: #{_forward_core.3} parent=1 // pred_fallthru
      _
    // Predicated region
    $region210: #{_forward_core.3} parent=1 // pred_check
      _
    $region211: #{_forward_core.3} parent=1 // pred_check_branch
      %559 = sbr.rel (0) target = $region213
    $region212: #{_forward_core.3} parent=1 // pred_region
      _
    $region213: #{_forward_core.3} parent=1 // pred_fallthru
      _
    // Predicated region
    $region214: #{_forward_core.3} parent=1 // pred_check
      _
    $region215: #{_forward_core.3} parent=1 // pred_check_branch
      %561 = sbr.rel (0) target = $region217
    $region216: #{_forward_core.3} parent=1 // pred_region
      %s563 = ssub.s32 1024, 1024
      %564 = vsyncadd [#allocation54], %s563
      %s565 = sshll.u32 [#allocation55], 4
      %s566 = int_to_ptr.vmem [resolvable:$true] %s565
      %571 = dma.hbm_to_vmem [thread:$0]  %s107, 1024, %s566, [#allocation54], 128, 128, 8
    $region217: #{_forward_core.3} parent=1 // pred_fallthru
      _
    // Predicated region
    $region218: #{_forward_core.3} parent=1 // pred_check
      _
    $region219: #{_forward_core.3} parent=1 // pred_check_branch
      %573 = sbr.rel (0) target = $region221
    $region220: #{_forward_core.3} parent=1 // pred_region
      _
    $region221: #{_forward_core.3} parent=1 // pred_fallthru
      _
    // Predicated region
    $region222: #{_forward_core.3} parent=1 // pred_check
      _
    $region223: #{_forward_core.3} parent=1 // pred_check_branch
      %575 = sbr.rel (0) target = $region225
    $region224: #{_forward_core.3} parent=1 // pred_region
      %s577 = ssub.s32 1024, 1024
      %578 = vsyncadd [#allocation57], %s577
      %s579 = sshll.u32 [#allocation56], 4
      %s580 = int_to_ptr.vmem [resolvable:$true] %s579
      %585 = dma.hbm_to_vmem [thread:$0]  %s111, 1024, %s580, [#allocation57], 128, 128, 8
    $region225: #{_forward_core.3} parent=1 // pred_fallthru
      _
    // Predicated region
    $region226: #{_forward_core.3} parent=1 // pred_check
      _
    $region227: #{_forward_core.3} parent=1 // pred_check_branch
      %587 = sbr.rel (0) target = $region229
    $region228: #{_forward_core.3} parent=1 // pred_region
      _
    $region229: #{_forward_core.3} parent=1 // pred_fallthru
      _
    // Predicated region
    $region230: #{_forward_core.3} parent=1 // pred_check
      _
    $region231: #{_forward_core.3} parent=1 // pred_check_branch
      %589 = sbr.rel (0) target = $region233
    $region232: #{_forward_core.3} parent=1 // pred_region
      %s591 = ssub.s32 1024, 1024
      %592 = vsyncadd [#allocation57], %s591
      %s593 = sshll.u32 [#allocation58], 4
      %s594 = int_to_ptr.vmem [resolvable:$true] %s593
      %599 = dma.hbm_to_vmem [thread:$0]  %s115, 1024, %s594, [#allocation57], 128, 128, 8
    $region233: #{_forward_core.3} parent=1 // pred_fallthru
      _
    // Predicated region
    $region234: #{_forward_core.3} parent=1 // pred_check
      _
    $region235: #{_forward_core.3} parent=1 // pred_check_branch
      %601 = sbr.rel (0) target = $region237
    $region236: #{_forward_core.3} parent=1 // pred_region
      _
    $region237: #{_forward_core.3} parent=1 // pred_fallthru
      _
    // Predicated region
    $region238: #{_forward_core.3} parent=1 // pred_check
      _
    $region239: #{_forward_core.3} parent=1 // pred_check_branch
      %603 = sbr.rel (0) target = $region241
    $region240: #{_forward_core.3} parent=1 // pred_region
      _
    $region241: #{_forward_core.3} parent=1 // pred_fallthru
      _
    // Predicated region
    $region242: #{_forward_core.3} parent=1 // pred_check
      _
    $region243: #{_forward_core.3} parent=1 // pred_check_branch
      %605 = sbr.rel (0) target = $region245
    $region244: #{_forward_core.3} parent=1 // pred_region
      _
    $region245: #{_forward_core.3} parent=1 // pred_fallthru
      _
    // Predicated region
    $region246: #{_forward_core.3} parent=1 // pred_check
      _
    $region247: #{_forward_core.3} parent=1 // pred_check_branch
      %607 = sbr.rel (0) target = $region249
    $region248: #{_forward_core.3} parent=1 // pred_region
      _
    $region249: #{_forward_core.3} parent=1 // pred_fallthru
      _
    // Predicated region
    $region250: #{_forward_core.3} parent=1 // pred_check
      _
    $region251: #{_forward_core.3} parent=1 // pred_check_branch
      %609 = sbr.rel (0) target = $region253
    $region252: #{_forward_core.3} parent=1 // pred_region
      %610 = dma.done [#allocation4], 128
    $region253: #{_forward_core.3} parent=1 // pred_fallthru
      _
    // Predicated region
    $region254: #{_forward_core.3} parent=1 // pred_check
      _
    $region255: #{_forward_core.3} parent=1 // pred_check_branch
      %612 = sbr.rel (0) target = $region257
    $region256: #{_forward_core.3} parent=1 // pred_region
      %613 = dma.done [#allocation6], 128
    $region257: #{_forward_core.3} parent=1 // pred_fallthru
      _
    // Predicated region
    $region258: #{_forward_core.3} parent=1 // pred_check
      _
    $region259: #{_forward_core.3} parent=1 // pred_check_branch
      %615 = sbr.rel (0) target = $region261
    $region260: #{_forward_core.3} parent=1 // pred_region
      %616 = dma.done [#allocation6], 1024
    $region261: #{_forward_core.3} parent=1 // pred_fallthru
      _
    // Predicated region
    $region262: #{_forward_core.3} parent=1 // pred_check
      _
    $region263: #{_forward_core.3} parent=1 // pred_check_branch
      %618 = sbr.rel (0) target = $region265
    $region264: #{_forward_core.3} parent=1 // pred_region
      %619 = dma.done [#allocation9], 32
    $region265: #{_forward_core.3} parent=1 // pred_fallthru
      _
    // Predicated region
    $region266: #{_forward_core.3} parent=1 // pred_check
      _
    $region267: #{_forward_core.3} parent=1 // pred_check_branch
      %621 = sbr.rel (0) target = $region269
    $region268: #{_forward_core.3} parent=1 // pred_region
      %622 = dma.done [#allocation9], 16
    $region269: #{_forward_core.3} parent=1 // pred_fallthru
      _
    // Predicated region
    $region270: #{_forward_core.3} parent=1 // pred_check
      _
    $region271: #{_forward_core.3} parent=1 // pred_check_branch
      %624 = sbr.rel (0) target = $region273
    $region272: #{_forward_core.3} parent=1 // pred_region
      %625 = dma.done [#allocation12], 2048
    $region273: #{_forward_core.3} parent=1 // pred_fallthru
      _
    // Predicated region
    $region274: #{_forward_core.3} parent=1 // pred_check
      _
    $region275: #{_forward_core.3} parent=1 // pred_check_branch
      %627 = sbr.rel (0) target = $region277
    $region276: #{_forward_core.3} parent=1 // pred_region
      %628 = dma.done [#allocation12], 16
    $region277: #{_forward_core.3} parent=1 // pred_fallthru
      _
    // Predicated region
    $region278: #{_forward_core.3} parent=1 // pred_check
      _
    $region279: #{_forward_core.3} parent=1 // pred_check_branch
      %630 = sbr.rel (0) target = $region281
    $region280: #{_forward_core.3} parent=1 // pred_region
      %631 = dma.done [#allocation15], 16
    $region281: #{_forward_core.3} parent=1 // pred_fallthru
      _
    // Predicated region
    $region282: #{_forward_core.3} parent=1 // pred_check
      _
    $region283: #{_forward_core.3} parent=1 // pred_check_branch
      %633 = sbr.rel (0) target = $region285
    $region284: #{_forward_core.3} parent=1 // pred_region
      %634 = dma.done [#allocation15], 2048
    $region285: #{_forward_core.3} parent=1 // pred_fallthru
      _
    // Predicated region
    $region286: #{_forward_core.3} parent=1 // pred_check
      _
    $region287: #{_forward_core.3} parent=1 // pred_check_branch
      %636 = sbr.rel (0) target = $region289
    $region288: #{_forward_core.3} parent=1 // pred_region
      %637 = dma.done [#allocation18], 32
    $region289: #{_forward_core.3} parent=1 // pred_fallthru
      _
    // Predicated region
    $region290: #{_forward_core.3} parent=1 // pred_check
      _
    $region291: #{_forward_core.3} parent=1 // pred_check_branch
      %639 = sbr.rel (0) target = $region293
    $region292: #{_forward_core.3} parent=1 // pred_region
      %640 = dma.done [#allocation18], 16
    $region293: #{_forward_core.3} parent=1 // pred_fallthru
      _
    // Predicated region
    $region294: #{_forward_core.3} parent=1 // pred_check
      _
    $region295: #{_forward_core.3} parent=1 // pred_check_branch
      %642 = sbr.rel (0) target = $region297
    $region296: #{_forward_core.3} parent=1 // pred_region
      %643 = dma.done [#allocation21], 2048
    $region297: #{_forward_core.3} parent=1 // pred_fallthru
      _
    // Predicated region
    $region298: #{_forward_core.3} parent=1 // pred_check
      _
    $region299: #{_forward_core.3} parent=1 // pred_check_branch
      %645 = sbr.rel (0) target = $region301
    $region300: #{_forward_core.3} parent=1 // pred_region
      %646 = dma.done [#allocation21], 16
    $region301: #{_forward_core.3} parent=1 // pred_fallthru
      _
    // Predicated region
    $region302: #{_forward_core.3} parent=1 // pred_check
      _
    $region303: #{_forward_core.3} parent=1 // pred_check_branch
      %648 = sbr.rel (0) target = $region305
    $region304: #{_forward_core.3} parent=1 // pred_region
      %649 = dma.done [#allocation24], 16
    $region305: #{_forward_core.3} parent=1 // pred_fallthru
      _
    // Predicated region
    $region306: #{_forward_core.3} parent=1 // pred_check
      _
    $region307: #{_forward_core.3} parent=1 // pred_check_branch
      %651 = sbr.rel (0) target = $region309
    $region308: #{_forward_core.3} parent=1 // pred_region
      %652 = dma.done [#allocation24], 2048
    $region309: #{_forward_core.3} parent=1 // pred_fallthru
      _
    // Predicated region
    $region310: #{_forward_core.3} parent=1 // pred_check
      _
    $region311: #{_forward_core.3} parent=1 // pred_check_branch
      %654 = sbr.rel (0) target = $region313
    $region312: #{_forward_core.3} parent=1 // pred_region
      %655 = dma.done [#allocation27], 16
    $region313: #{_forward_core.3} parent=1 // pred_fallthru
      _
    // Predicated region
    $region314: #{_forward_core.3} parent=1 // pred_check
      _
    $region315: #{_forward_core.3} parent=1 // pred_check_branch
      %657 = sbr.rel (0) target = $region317
    $region316: #{_forward_core.3} parent=1 // pred_region
      %658 = dma.done [#allocation27], 16
    $region317: #{_forward_core.3} parent=1 // pred_fallthru
      _
    // Predicated region
    $region318: #{_forward_core.3} parent=1 // pred_check
      _
    $region319: #{_forward_core.3} parent=1 // pred_check_branch
      %660 = sbr.rel (0) target = $region321
    $region320: #{_forward_core.3} parent=1 // pred_region
      %661 = dma.done [#allocation30], 32
    $region321: #{_forward_core.3} parent=1 // pred_fallthru
      _
    // Predicated region
    $region322: #{_forward_core.3} parent=1 // pred_check
      _
    $region323: #{_forward_core.3} parent=1 // pred_check_branch
      %663 = sbr.rel (0) target = $region325
    $region324: #{_forward_core.3} parent=1 // pred_region
      %664 = dma.done [#allocation30], 16
    $region325: #{_forward_core.3} parent=1 // pred_fallthru
      _
    // Predicated region
    $region326: #{_forward_core.3} parent=1 // pred_check
      _
    $region327: #{_forward_core.3} parent=1 // pred_check_branch
      %666 = sbr.rel (0) target = $region329
    $region328: #{_forward_core.3} parent=1 // pred_region
      %667 = dma.done [#allocation33], 1024
    $region329: #{_forward_core.3} parent=1 // pred_fallthru
      _
    // Predicated region
    $region330: #{_forward_core.3} parent=1 // pred_check
      _
    $region331: #{_forward_core.3} parent=1 // pred_check_branch
      %669 = sbr.rel (0) target = $region333
    $region332: #{_forward_core.3} parent=1 // pred_region
      %670 = dma.done [#allocation33], 16
    $region333: #{_forward_core.3} parent=1 // pred_fallthru
      _
    // Predicated region
    $region334: #{_forward_core.3} parent=1 // pred_check
      _
    $region335: #{_forward_core.3} parent=1 // pred_check_branch
      %672 = sbr.rel (0) target = $region337
    $region336: #{_forward_core.3} parent=1 // pred_region
      %673 = dma.done [#allocation36], 16
    $region337: #{_forward_core.3} parent=1 // pred_fallthru
      _
    // Predicated region
    $region338: #{_forward_core.3} parent=1 // pred_check
      _
    $region339: #{_forward_core.3} parent=1 // pred_check_branch
      %675 = sbr.rel (0) target = $region341
    $region340: #{_forward_core.3} parent=1 // pred_region
      %676 = dma.done [#allocation36], 16
    $region341: #{_forward_core.3} parent=1 // pred_fallthru
      _
    // Predicated region
    $region342: #{_forward_core.3} parent=1 // pred_check
      _
    $region343: #{_forward_core.3} parent=1 // pred_check_branch
      %678 = sbr.rel (0) target = $region345
    $region344: #{_forward_core.3} parent=1 // pred_region
      %679 = dma.done [#allocation39], 256
    $region345: #{_forward_core.3} parent=1 // pred_fallthru
      _
    // Predicated region
    $region346: #{_forward_core.3} parent=1 // pred_check
      _
    $region347: #{_forward_core.3} parent=1 // pred_check_branch
      %681 = sbr.rel (0) target = $region349
    $region348: #{_forward_core.3} parent=1 // pred_region
      %682 = dma.done [#allocation39], 16
    $region349: #{_forward_core.3} parent=1 // pred_fallthru
      _
    // Predicated region
    $region350: #{_forward_core.3} parent=1 // pred_check
      _
    $region351: #{_forward_core.3} parent=1 // pred_check_branch
      %684 = sbr.rel (0) target = $region353
    $region352: #{_forward_core.3} parent=1 // pred_region
      %685 = dma.done [#allocation42], 16
    $region353: #{_forward_core.3} parent=1 // pred_fallthru
      _
    // Predicated region
    $region354: #{_forward_core.3} parent=1 // pred_check
      _
    $region355: #{_forward_core.3} parent=1 // pred_check_branch
      %687 = sbr.rel (0) target = $region357
    $region356: #{_forward_core.3} parent=1 // pred_region
      %688 = dma.done [#allocation42], 256
    $region357: #{_forward_core.3} parent=1 // pred_fallthru
      _
    // Predicated region
    $region358: #{_forward_core.3} parent=1 // pred_check
      _
    $region359: #{_forward_core.3} parent=1 // pred_check_branch
      %690 = sbr.rel (0) target = $region361
    $region360: #{_forward_core.3} parent=1 // pred_region
      %691 = dma.done [#allocation45], 16
    $region361: #{_forward_core.3} parent=1 // pred_fallthru
      _
    // Predicated region
    $region362: #{_forward_core.3} parent=1 // pred_check
      _
    $region363: #{_forward_core.3} parent=1 // pred_check_branch
      %693 = sbr.rel (0) target = $region365
    $region364: #{_forward_core.3} parent=1 // pred_region
      %694 = dma.done [#allocation45], 256
    $region365: #{_forward_core.3} parent=1 // pred_fallthru
      _
    // Predicated region
    $region366: #{_forward_core.3} parent=1 // pred_check
      _
    $region367: #{_forward_core.3} parent=1 // pred_check_branch
      %696 = sbr.rel (0) target = $region369
    $region368: #{_forward_core.3} parent=1 // pred_region
      %697 = dma.done [#allocation48], 16
    $region369: #{_forward_core.3} parent=1 // pred_fallthru
      _
    // Predicated region
    $region370: #{_forward_core.3} parent=1 // pred_check
      _
    $region371: #{_forward_core.3} parent=1 // pred_check_branch
      %699 = sbr.rel (0) target = $region373
    $region372: #{_forward_core.3} parent=1 // pred_region
      %700 = dma.done [#allocation48], 256
    $region373: #{_forward_core.3} parent=1 // pred_fallthru
      _
    // Predicated region
    $region374: #{_forward_core.3} parent=1 // pred_check
      _
    $region375: #{_forward_core.3} parent=1 // pred_check_branch
      %702 = sbr.rel (0) target = $region377
    $region376: #{_forward_core.3} parent=1 // pred_region
      %703 = dma.done [#allocation51], 16
    $region377: #{_forward_core.3} parent=1 // pred_fallthru
      _
    // Predicated region
    $region378: #{_forward_core.3} parent=1 // pred_check
      _
    $region379: #{_forward_core.3} parent=1 // pred_check_branch
      %705 = sbr.rel (0) target = $region381
    $region380: #{_forward_core.3} parent=1 // pred_region
      %706 = dma.done [#allocation51], 256
    $region381: #{_forward_core.3} parent=1 // pred_fallthru
      _
    // Predicated region
    $region382: #{_forward_core.3} parent=1 // pred_check
      _
    $region383: #{_forward_core.3} parent=1 // pred_check_branch
      %708 = sbr.rel (0) target = $region385
    $region384: #{_forward_core.3} parent=1 // pred_region
      %709 = dma.done [#allocation54], 16
    $region385: #{_forward_core.3} parent=1 // pred_fallthru
      _
    // Predicated region
    $region386: #{_forward_core.3} parent=1 // pred_check
      _
    $region387: #{_forward_core.3} parent=1 // pred_check_branch
      %711 = sbr.rel (0) target = $region389
    $region388: #{_forward_core.3} parent=1 // pred_region
      %712 = dma.done [#allocation54], 1024
    $region389: #{_forward_core.3} parent=1 // pred_fallthru
      _
    // Predicated region
    $region390: #{_forward_core.3} parent=1 // pred_check
      _
    $region391: #{_forward_core.3} parent=1 // pred_check_branch
      %714 = sbr.rel (0) target = $region393
    $region392: #{_forward_core.3} parent=1 // pred_region
      %715 = dma.done [#allocation57], 1024
    $region393: #{_forward_core.3} parent=1 // pred_fallthru
      _
    // Predicated region
    $region394: #{_forward_core.3} parent=1 // pred_check
      _
    $region395: #{_forward_core.3} parent=1 // pred_check_branch
      %717 = sbr.rel (0) target = $region397
    $region396: #{_forward_core.3} parent=1 // pred_region
      %718 = dma.done [#allocation57], 1024
    $region397: #{_forward_core.3} parent=1 // pred_fallthru
      _
    %v719 = vld [vmem:[#allocation3] sm:$0xff]
    %v720 = vld [vmem:[#allocation7] sm:$0xff]
    %v721 = vld [vmem:[#allocation7 + $0x8] sm:$0xff]
    %v722 = vld [vmem:[#allocation7 + $0x10] sm:$0xff]
    %v723 = vld [vmem:[#allocation7 + $0x18] sm:$0xff]
    %v724 = vld [vmem:[#allocation7 + $0x20] sm:$0xff]
    %v725 = vld [vmem:[#allocation7 + $0x28] sm:$0xff]
    %v726 = vld [vmem:[#allocation7 + $0x30] sm:$0xff]
    %v727 = vld [vmem:[#allocation7 + $0x38] sm:$0xff]
    %v728 = vld [vmem:[#allocation8] sm:$0x3]
    %v730 = vlaneseq
    %v731 = vshrl.u32 %v730, 7
    %v732 = vsub.s32 0, %v731
    %v733 = vrot.slane %v728, %v732
    %v734 = vlaneseq
    %v735 = vshrl.u32 %v734, 7
    %v736 = vsub.s32 1, %v735
    %v737 = vrot.slane %v728, %v736
    %vm740 = vcmask 261120
    %v742 = vsel %vm740, %v719, 0
    %744 = vmatprep.subr.mxu0 %v721
    %745 = vmatpush1.msra.mxu0 %v720
    %746 = vmatprep.subr.mxu0 %v723
    %747 = vmatpush1.msra.mxu0 %v722
    %748 = vmatprep.subr.mxu0 %v725
    %749 = vmatpush1.msra.mxu0 %v724
    %750 = vmatprep.subr.mxu0 %v727
    %751 = vmatpush1.msra.mxu0 %v726
    %752 = vmatprep.subr.mxu0 0.0
    %753 = vmatpush1.msra.mxu0 0.0
    %754 = vmatprep.subr.mxu0 0.0
    %755 = vmatpush1.msra.mxu0 0.0
    %756 = vmatprep.subr.mxu0 0.0
    %757 = vmatpush1.msra.mxu0 0.0
    %758 = vmatprep.subr.mxu0 0.0
    %759 = vmatpush1.msra.mxu0 0.0
    %760 = vmatprep.subr.mxu0 0.0
    %761 = vmatpush1.msra.mxu0 0.0
    %762 = vmatprep.subr.mxu0 0.0
    %763 = vmatpush1.msra.mxu0 0.0
    %764 = vmatprep.subr.mxu0 0.0
    %765 = vmatpush1.msra.mxu0 0.0
    %766 = vmatprep.subr.mxu0 0.0
    %767 = vmatpush1.msra.mxu0 0.0
    %768 = vmatprep.subr.mxu0 0.0
    %769 = vmatpush1.msra.mxu0 0.0
    %770 = vmatprep.subr.mxu0 0.0
    %771 = vmatpush1.msra.mxu0 0.0
    %772 = vmatprep.subr.mxu0 0.0
    %773 = vmatpush1.msra.mxu0 0.0
    %774 = vmatprep.subr.mxu0 0.0
    %775 = vmatpush1.msra.mxu0 0.0
    %776 = vmatprep.subr.mxu0 0.0
    %777 = vmatpush1.msra.mxu0 0.0
    %778 = vmatprep.subr.mxu0 0.0
    %779 = vmatpush1.msra.mxu0 0.0
    %780 = vmatprep.subr.mxu0 0.0
    %781 = vmatpush1.msra.mxu0 0.0
    %782 = vmatprep.subr.mxu0 0.0
    %783 = vmatpush1.msra.mxu0 0.0
    %784 = vmatprep.subr.mxu0 0.0
    %785 = vmatpush1.msra.mxu0 0.0
    %786 = vmatprep.subr.mxu0 0.0
    %787 = vmatpush1.msra.mxu0 0.0
    %788 = vmatprep.subr.mxu0 0.0
    %789 = vmatpush1.msra.mxu0 0.0
    %790 = vmatprep.subr.mxu0 0.0
    %791 = vmatpush1.msra.mxu0 0.0
    %792 = vmatprep.subr.mxu0 0.0
    %793 = vmatpush1.msra.mxu0 0.0
    %794 = vmatprep.subr.mxu0 0.0
    %795 = vmatpush1.msra.mxu0 0.0
    %796 = vmatprep.subr.mxu0 0.0
    %797 = vmatpush1.msra.mxu0 0.0
    %798 = vmatprep.subr.mxu0 0.0
    %799 = vmatpush1.msra.mxu0 0.0
    %800 = vmatprep.subr.mxu0 0.0
    %801 = vmatpush1.msra.mxu0 0.0
    %802 = vmatprep.subr.mxu0 0.0
    %803 = vmatpush1.msra.mxu0 0.0
    %804 = vmatprep.subr.mxu0 0.0
    %805 = vmatpush1.msra.mxu0 0.0
    %806 = vmatprep.subr.mxu0 0.0
    %807 = vmatpush1.msra.mxu0 0.0
    %808 = vmatprep.mubr.f32.mxu0 0.0
    %809 = vmatmul.mubr.f32.gmra.mrb[0].mxu0 %v742
    %v810 = vpop.f32.mrb[0].mxu0
    %v811 = vadd.f32 %v733, %v810
    %v812 = vpop.f32.mrb[0].mxu0
    %v813 = vadd.f32 %v737, %v812
    %814 = vdwg.mxu0
    %v815 = vmax.f32 %v811, 0.0
    %v816 = vmax.f32 %v813, 0.0
    %v817 = vld [vmem:[%s15] sm:$0xff]
    %v818 = vld [vmem:[%s15 + $0x8] sm:$0xff]
    %v819 = vld [vmem:[%s15 + $0x10] sm:$0xff]
    %v820 = vld [vmem:[%s15 + $0x18] sm:$0xff]
    %v821 = vld [vmem:[%s15 + $0x20] sm:$0xff]
    %v822 = vld [vmem:[%s15 + $0x28] sm:$0xff]
    %v823 = vld [vmem:[%s15 + $0x30] sm:$0xff]
    %v824 = vld [vmem:[%s15 + $0x38] sm:$0xff]
    %v825 = vld [vmem:[%s15 + $0x40] sm:$0xff]
    %v826 = vld [vmem:[%s15 + $0x48] sm:$0xff]
    %v827 = vld [vmem:[%s15 + $0x50] sm:$0xff]
    %v828 = vld [vmem:[%s15 + $0x58] sm:$0xff]
    %v829 = vld [vmem:[%s15 + $0x60] sm:$0xff]
    %v830 = vld [vmem:[%s15 + $0x68] sm:$0xff]
    %v831 = vld [vmem:[%s15 + $0x70] sm:$0xff]
    %v832 = vld [vmem:[%s15 + $0x78] sm:$0xff]
    %v833 = vld [vmem:[%s15 + $0x80] sm:$0xff]
    %v834 = vld [vmem:[%s15 + $0x88] sm:$0xff]
    %v835 = vld [vmem:[%s15 + $0x90] sm:$0xff]
    %v836 = vld [vmem:[%s15 + $0x98] sm:$0xff]
    %v837 = vld [vmem:[%s15 + $0xa0] sm:$0xff]
    %v838 = vld [vmem:[%s15 + $0xa8] sm:$0xff]
    %v839 = vld [vmem:[%s15 + $0xb0] sm:$0xff]
    %v840 = vld [vmem:[%s15 + $0xb8] sm:$0xff]
    %v841 = vld [vmem:[%s15 + $0xc0] sm:$0xff]
    %v842 = vld [vmem:[%s15 + $0xc8] sm:$0xff]
    %v843 = vld [vmem:[%s15 + $0xd0] sm:$0xff]
    %v844 = vld [vmem:[%s15 + $0xd8] sm:$0xff]
    %v845 = vld [vmem:[%s15 + $0xe0] sm:$0xff]
    %v846 = vld [vmem:[%s15 + $0xe8] sm:$0xff]
    %v847 = vld [vmem:[%s15 + $0xf0] sm:$0xff]
    %v848 = vld [vmem:[%s15 + $0xf8] sm:$0xff]
    %v849 = vld [vmem:[#allocation10] sm:$0x1]
    %v851 = vlaneseq
    %v852 = vshrl.u32 %v851, 7
    %v853 = vsub.s32 0, %v852
    %v854 = vrot.slane %v849, %v853
    %856 = vmatprep.subr.mxu0 0.0
    %857 = vmatpush1.msra.mxu0 %v817
    %858 = vmatprep.subr.mxu0 0.0
    %859 = vmatpush1.msra.mxu0 %v818
    %860 = vmatprep.subr.mxu0 0.0
    %861 = vmatpush1.msra.mxu0 %v819
    %862 = vmatprep.subr.mxu0 0.0
    %863 = vmatpush1.msra.mxu0 %v820
    %864 = vmatprep.subr.mxu0 0.0
    %865 = vmatpush1.msra.mxu0 %v821
    %866 = vmatprep.subr.mxu0 0.0
    %867 = vmatpush1.msra.mxu0 %v822
    %868 = vmatprep.subr.mxu0 0.0
    %869 = vmatpush1.msra.mxu0 %v823
    %870 = vmatprep.subr.mxu0 0.0
    %871 = vmatpush1.msra.mxu0 %v824
    %872 = vmatprep.subr.mxu0 0.0
    %873 = vmatpush1.msra.mxu0 %v825
    %874 = vmatprep.subr.mxu0 0.0
    %875 = vmatpush1.msra.mxu0 %v826
    %876 = vmatprep.subr.mxu0 0.0
    %877 = vmatpush1.msra.mxu0 %v827
    %878 = vmatprep.subr.mxu0 0.0
    %879 = vmatpush1.msra.mxu0 %v828
    %880 = vmatprep.subr.mxu0 0.0
    %881 = vmatpush1.msra.mxu0 %v829
    %882 = vmatprep.subr.mxu0 0.0
    %883 = vmatpush1.msra.mxu0 %v830
    %884 = vmatprep.subr.mxu0 0.0
    %885 = vmatpush1.msra.mxu0 %v831
    %886 = vmatprep.subr.mxu0 0.0
    %887 = vmatpush1.msra.mxu0 %v832
    %888 = vmatprep.subr.mxu0 0.0
    %889 = vmatpush1.msra.mxu0 %v833
    %890 = vmatprep.subr.mxu0 0.0
    %891 = vmatpush1.msra.mxu0 %v834
    %892 = vmatprep.subr.mxu0 0.0
    %893 = vmatpush1.msra.mxu0 %v835
    %894 = vmatprep.subr.mxu0 0.0
    %895 = vmatpush1.msra.mxu0 %v836
    %896 = vmatprep.subr.mxu0 0.0
    %897 = vmatpush1.msra.mxu0 %v837
    %898 = vmatprep.subr.mxu0 0.0
    %899 = vmatpush1.msra.mxu0 %v838
    %900 = vmatprep.subr.mxu0 0.0
    %901 = vmatpush1.msra.mxu0 %v839
    %902 = vmatprep.subr.mxu0 0.0
    %903 = vmatpush1.msra.mxu0 %v840
    %904 = vmatprep.subr.mxu0 0.0
    %905 = vmatpush1.msra.mxu0 %v841
    %906 = vmatprep.subr.mxu0 0.0
    %907 = vmatpush1.msra.mxu0 %v842
    %908 = vmatprep.subr.mxu0 0.0
    %909 = vmatpush1.msra.mxu0 %v843
    %910 = vmatprep.subr.mxu0 0.0
    %911 = vmatpush1.msra.mxu0 %v844
    %912 = vmatprep.subr.mxu0 0.0
    %913 = vmatpush1.msra.mxu0 %v845
    %914 = vmatprep.subr.mxu0 0.0
    %915 = vmatpush1.msra.mxu0 %v846
    %916 = vmatprep.subr.mxu0 0.0
    %917 = vmatpush1.msra.mxu0 %v847
    %918 = vmatprep.subr.mxu0 0.0
    %919 = vmatpush1.msra.mxu0 %v848
    %920 = vmatprep.mubr.f32.mxu0 %v816
    %921 = vmatmul.mubr.f32.gmra.mrb[0].mxu0 %v815
    %v922 = vpop.f32.mrb[0].mxu0
    %v923 = vadd.f32 %v854, %v922
    %v924 = vpop.f32.mrb[0].mxu0
    %925 = vdwg.mxu0
    %v926 = vmax.f32 %v923, 0.0
    %v927 = vld [vmem:[#allocation11] sm:$0xff]
    %v928 = vld [vmem:[#allocation11 + $0x8] sm:$0xff]
    %v929 = vld [vmem:[#allocation11 + $0x10] sm:$0xff]
    %v930 = vld [vmem:[#allocation11 + $0x18] sm:$0xff]
    %v931 = vld [vmem:[#allocation11 + $0x20] sm:$0xff]
    %v932 = vld [vmem:[#allocation11 + $0x28] sm:$0xff]
    %v933 = vld [vmem:[#allocation11 + $0x30] sm:$0xff]
    %v934 = vld [vmem:[#allocation11 + $0x38] sm:$0xff]
    %v935 = vld [vmem:[#allocation11 + $0x40] sm:$0xff]
    %v936 = vld [vmem:[#allocation11 + $0x48] sm:$0xff]
    %v937 = vld [vmem:[#allocation11 + $0x50] sm:$0xff]
    %v938 = vld [vmem:[#allocation11 + $0x58] sm:$0xff]
    %v939 = vld [vmem:[#allocation11 + $0x60] sm:$0xff]
    %v940 = vld [vmem:[#allocation11 + $0x68] sm:$0xff]
    %v941 = vld [vmem:[#allocation11 + $0x70] sm:$0xff]
    %v942 = vld [vmem:[#allocation11 + $0x78] sm:$0xff]
    %v943 = vld [vmem:[#allocation13] sm:$0x1]
    %v945 = vlaneseq
    %v946 = vshrl.u32 %v945, 7
    %v947 = vsub.s32 0, %v946
    %v948 = vrot.slane %v943, %v947
    %950 = vmatprep.subr.mxu0 0.0
    %951 = vmatpush1.msra.mxu0 %v927
    %952 = vmatprep.subr.mxu0 0.0
    %953 = vmatpush1.msra.mxu0 %v928
    %954 = vmatprep.subr.mxu0 0.0
    %955 = vmatpush1.msra.mxu0 %v929
    %956 = vmatprep.subr.mxu0 0.0
    %957 = vmatpush1.msra.mxu0 %v930
    %958 = vmatprep.subr.mxu0 0.0
    %959 = vmatpush1.msra.mxu0 %v931
    %960 = vmatprep.subr.mxu0 0.0
    %961 = vmatpush1.msra.mxu0 %v932
    %962 = vmatprep.subr.mxu0 0.0
    %963 = vmatpush1.msra.mxu0 %v933
    %964 = vmatprep.subr.mxu0 0.0
    %965 = vmatpush1.msra.mxu0 %v934
    %966 = vmatprep.subr.mxu0 0.0
    %967 = vmatpush1.msra.mxu0 %v935
    %968 = vmatprep.subr.mxu0 0.0
    %969 = vmatpush1.msra.mxu0 %v936
    %970 = vmatprep.subr.mxu0 0.0
    %971 = vmatpush1.msra.mxu0 %v937
    %972 = vmatprep.subr.mxu0 0.0
    %973 = vmatpush1.msra.mxu0 %v938
    %974 = vmatprep.subr.mxu0 0.0
    %975 = vmatpush1.msra.mxu0 %v939
    %976 = vmatprep.subr.mxu0 0.0
    %977 = vmatpush1.msra.mxu0 %v940
    %978 = vmatprep.subr.mxu0 0.0
    %979 = vmatpush1.msra.mxu0 %v941
    %980 = vmatprep.subr.mxu0 0.0
    %981 = vmatpush1.msra.mxu0 %v942
    %982 = vmatprep.subr.mxu0 0.0
    %983 = vmatpush1.msra.mxu0 0.0
    %984 = vmatprep.subr.mxu0 0.0
    %985 = vmatpush1.msra.mxu0 0.0
    %986 = vmatprep.subr.mxu0 0.0
    %987 = vmatpush1.msra.mxu0 0.0
    %988 = vmatprep.subr.mxu0 0.0
    %989 = vmatpush1.msra.mxu0 0.0
    %990 = vmatprep.subr.mxu0 0.0
    %991 = vmatpush1.msra.mxu0 0.0
    %992 = vmatprep.subr.mxu0 0.0
    %993 = vmatpush1.msra.mxu0 0.0
    %994 = vmatprep.subr.mxu0 0.0
    %995 = vmatpush1.msra.mxu0 0.0
    %996 = vmatprep.subr.mxu0 0.0
    %997 = vmatpush1.msra.mxu0 0.0
    %998 = vmatprep.subr.mxu0 0.0
    %999 = vmatpush1.msra.mxu0 0.0
    %1000 = vmatprep.subr.mxu0 0.0
    %1001 = vmatpush1.msra.mxu0 0.0
    %1002 = vmatprep.subr.mxu0 0.0
    %1003 = vmatpush1.msra.mxu0 0.0
    %1004 = vmatprep.subr.mxu0 0.0
    %1005 = vmatpush1.msra.mxu0 0.0
    %1006 = vmatprep.subr.mxu0 0.0
    %1007 = vmatpush1.msra.mxu0 0.0
    %1008 = vmatprep.subr.mxu0 0.0
    %1009 = vmatpush1.msra.mxu0 0.0
    %1010 = vmatprep.subr.mxu0 0.0
    %1011 = vmatpush1.msra.mxu0 0.0
    %1012 = vmatprep.subr.mxu0 0.0
    %1013 = vmatpush1.msra.mxu0 0.0
    %1014 = vmatprep.mubr.f32.mxu0 0.0
    %1015 = vmatmul.mubr.f32.gmra.mrb[0].mxu0 %v926
    %v1016 = vpop.f32.mrb[0].mxu0
    %v1017 = vadd.f32 %v948, %v1016
    %v1018 = vpop.f32.mrb[0].mxu0
    %1019 = vdwg.mxu0
    %v1020 = vmax.f32 %v1017, 0.0
    %v1021 = vld [vmem:[%s23] sm:$0xff]
    %v1022 = vld [vmem:[%s23 + $0x8] sm:$0xff]
    %v1023 = vld [vmem:[%s23 + $0x10] sm:$0xff]
    %v1024 = vld [vmem:[%s23 + $0x18] sm:$0xff]
    %v1025 = vld [vmem:[%s23 + $0x20] sm:$0xff]
    %v1026 = vld [vmem:[%s23 + $0x28] sm:$0xff]
    %v1027 = vld [vmem:[%s23 + $0x30] sm:$0xff]
    %v1028 = vld [vmem:[%s23 + $0x38] sm:$0xff]
    %v1029 = vld [vmem:[%s23 + $0x40] sm:$0xff]
    %v1030 = vld [vmem:[%s23 + $0x48] sm:$0xff]
    %v1031 = vld [vmem:[%s23 + $0x50] sm:$0xff]
    %v1032 = vld [vmem:[%s23 + $0x58] sm:$0xff]
    %v1033 = vld [vmem:[%s23 + $0x60] sm:$0xff]
    %v1034 = vld [vmem:[%s23 + $0x68] sm:$0xff]
    %v1035 = vld [vmem:[%s23 + $0x70] sm:$0xff]
    %v1036 = vld [vmem:[%s23 + $0x78] sm:$0xff]
    %v1037 = vld [vmem:[#allocation14] sm:$0x1]
    %v1039 = vlaneseq
    %v1040 = vshrl.u32 %v1039, 7
    %v1041 = vsub.s32 0, %v1040
    %v1042 = vrot.slane %v1037, %v1041
    %1044 = vmatprep.subr.mxu0 0.0
    %1045 = vmatpush1.msra.mxu0 %v1021
    %1046 = vmatprep.subr.mxu0 0.0
    %1047 = vmatpush1.msra.mxu0 %v1022
    %1048 = vmatprep.subr.mxu0 0.0
    %1049 = vmatpush1.msra.mxu0 %v1023
    %1050 = vmatprep.subr.mxu0 0.0
    %1051 = vmatpush1.msra.mxu0 %v1024
    %1052 = vmatprep.subr.mxu0 0.0
    %1053 = vmatpush1.msra.mxu0 %v1025
    %1054 = vmatprep.subr.mxu0 0.0
    %1055 = vmatpush1.msra.mxu0 %v1026
    %1056 = vmatprep.subr.mxu0 0.0
    %1057 = vmatpush1.msra.mxu0 %v1027
    %1058 = vmatprep.subr.mxu0 0.0
    %1059 = vmatpush1.msra.mxu0 %v1028
    %1060 = vmatprep.subr.mxu0 0.0
    %1061 = vmatpush1.msra.mxu0 %v1029
    %1062 = vmatprep.subr.mxu0 0.0
    %1063 = vmatpush1.msra.mxu0 %v1030
    %1064 = vmatprep.subr.mxu0 0.0
    %1065 = vmatpush1.msra.mxu0 %v1031
    %1066 = vmatprep.subr.mxu0 0.0
    %1067 = vmatpush1.msra.mxu0 %v1032
    %1068 = vmatprep.subr.mxu0 0.0
    %1069 = vmatpush1.msra.mxu0 %v1033
    %1070 = vmatprep.subr.mxu0 0.0
    %1071 = vmatpush1.msra.mxu0 %v1034
    %1072 = vmatprep.subr.mxu0 0.0
    %1073 = vmatpush1.msra.mxu0 %v1035
    %1074 = vmatprep.subr.mxu0 0.0
    %1075 = vmatpush1.msra.mxu0 %v1036
    %1076 = vmatprep.subr.mxu0 0.0
    %1077 = vmatpush1.msra.mxu0 0.0
    %1078 = vmatprep.subr.mxu0 0.0
    %1079 = vmatpush1.msra.mxu0 0.0
    %1080 = vmatprep.subr.mxu0 0.0
    %1081 = vmatpush1.msra.mxu0 0.0
    %1082 = vmatprep.subr.mxu0 0.0
    %1083 = vmatpush1.msra.mxu0 0.0
    %1084 = vmatprep.subr.mxu0 0.0
    %1085 = vmatpush1.msra.mxu0 0.0
    %1086 = vmatprep.subr.mxu0 0.0
    %1087 = vmatpush1.msra.mxu0 0.0
    %1088 = vmatprep.subr.mxu0 0.0
    %1089 = vmatpush1.msra.mxu0 0.0
    %1090 = vmatprep.subr.mxu0 0.0
    %1091 = vmatpush1.msra.mxu0 0.0
    %1092 = vmatprep.subr.mxu0 0.0
    %1093 = vmatpush1.msra.mxu0 0.0
    %1094 = vmatprep.subr.mxu0 0.0
    %1095 = vmatpush1.msra.mxu0 0.0
    %1096 = vmatprep.subr.mxu0 0.0
    %1097 = vmatpush1.msra.mxu0 0.0
    %1098 = vmatprep.subr.mxu0 0.0
    %1099 = vmatpush1.msra.mxu0 0.0
    %1100 = vmatprep.subr.mxu0 0.0
    %1101 = vmatpush1.msra.mxu0 0.0
    %1102 = vmatprep.subr.mxu0 0.0
    %1103 = vmatpush1.msra.mxu0 0.0
    %1104 = vmatprep.subr.mxu0 0.0
    %1105 = vmatpush1.msra.mxu0 0.0
    %1106 = vmatprep.subr.mxu0 0.0
    %1107 = vmatpush1.msra.mxu0 0.0
    %1108 = vmatprep.mubr.f32.mxu0 0.0
    %1109 = vmatmul.mubr.f32.gmra.mrb[0].mxu0 %v1020
    %v1110 = vpop.f32.mrb[0].mxu0
    %v1111 = vadd.f32 %v1042, %v1110
    %v1112 = vpop.f32.mrb[0].mxu0
    %1113 = vdwg.mxu0
    %v1114 = vmax.f32 %v1111, 0.0
    %v1115 = vld [vmem:[#allocation5] sm:$0xff]
    %v1116 = vld [vmem:[#allocation16] sm:$0xff]
    %v1117 = vld [vmem:[#allocation16 + $0x8] sm:$0xff]
    %v1118 = vld [vmem:[#allocation16 + $0x10] sm:$0xff]
    %v1119 = vld [vmem:[#allocation16 + $0x18] sm:$0xff]
    %v1120 = vld [vmem:[#allocation16 + $0x20] sm:$0xff]
    %v1121 = vld [vmem:[#allocation16 + $0x28] sm:$0xff]
    %v1122 = vld [vmem:[#allocation16 + $0x30] sm:$0xff]
    %v1123 = vld [vmem:[#allocation16 + $0x38] sm:$0xff]
    %v1124 = vld [vmem:[#allocation16 + $0x40] sm:$0xff]
    %v1125 = vld [vmem:[#allocation16 + $0x48] sm:$0xff]
    %v1126 = vld [vmem:[#allocation16 + $0x50] sm:$0xff]
    %v1127 = vld [vmem:[#allocation16 + $0x58] sm:$0xff]
    %v1128 = vld [vmem:[#allocation16 + $0x60] sm:$0xff]
    %v1129 = vld [vmem:[#allocation16 + $0x68] sm:$0xff]
    %v1130 = vld [vmem:[#allocation16 + $0x70] sm:$0xff]
    %v1131 = vld [vmem:[#allocation16 + $0x78] sm:$0xff]
    %v1132 = vld [vmem:[#allocation17] sm:$0x3]
    %v1134 = vlaneseq
    %v1135 = vshrl.u32 %v1134, 7
    %v1136 = vsub.s32 0, %v1135
    %v1137 = vrot.slane %v1132, %v1136
    %v1138 = vlaneseq
    %v1139 = vshrl.u32 %v1138, 7
    %v1140 = vsub.s32 1, %v1139
    %v1141 = vrot.slane %v1132, %v1140
    %vm1144 = vcmask 523264
    %v1146 = vsel %vm1144, %v1115, 0
    %1148 = vmatprep.subr.mxu0 %v1117
    %1149 = vmatpush1.msra.mxu0 %v1116
    %1150 = vmatprep.subr.mxu0 %v1119
    %1151 = vmatpush1.msra.mxu0 %v1118
    %1152 = vmatprep.subr.mxu0 %v1121
    %1153 = vmatpush1.msra.mxu0 %v1120
    %1154 = vmatprep.subr.mxu0 %v1123
    %1155 = vmatpush1.msra.mxu0 %v1122
    %1156 = vmatprep.subr.mxu0 %v1125
    %1157 = vmatpush1.msra.mxu0 %v1124
    %1158 = vmatprep.subr.mxu0 %v1127
    %1159 = vmatpush1.msra.mxu0 %v1126
    %1160 = vmatprep.subr.mxu0 %v1129
    %1161 = vmatpush1.msra.mxu0 %v1128
    %1162 = vmatprep.subr.mxu0 %v1131
    %1163 = vmatpush1.msra.mxu0 %v1130
    %1164 = vmatprep.subr.mxu0 0.0
    %1165 = vmatpush1.msra.mxu0 0.0
    %1166 = vmatprep.subr.mxu0 0.0
    %1167 = vmatpush1.msra.mxu0 0.0
    %1168 = vmatprep.subr.mxu0 0.0
    %1169 = vmatpush1.msra.mxu0 0.0
    %1170 = vmatprep.subr.mxu0 0.0
    %1171 = vmatpush1.msra.mxu0 0.0
    %1172 = vmatprep.subr.mxu0 0.0
    %1173 = vmatpush1.msra.mxu0 0.0
    %1174 = vmatprep.subr.mxu0 0.0
    %1175 = vmatpush1.msra.mxu0 0.0
    %1176 = vmatprep.subr.mxu0 0.0
    %1177 = vmatpush1.msra.mxu0 0.0
    %1178 = vmatprep.subr.mxu0 0.0
    %1179 = vmatpush1.msra.mxu0 0.0
    %1180 = vmatprep.subr.mxu0 0.0
    %1181 = vmatpush1.msra.mxu0 0.0
    %1182 = vmatprep.subr.mxu0 0.0
    %1183 = vmatpush1.msra.mxu0 0.0
    %1184 = vmatprep.subr.mxu0 0.0
    %1185 = vmatpush1.msra.mxu0 0.0
    %1186 = vmatprep.subr.mxu0 0.0
    %1187 = vmatpush1.msra.mxu0 0.0
    %1188 = vmatprep.subr.mxu0 0.0
    %1189 = vmatpush1.msra.mxu0 0.0
    %1190 = vmatprep.subr.mxu0 0.0
    %1191 = vmatpush1.msra.mxu0 0.0
    %1192 = vmatprep.subr.mxu0 0.0
    %1193 = vmatpush1.msra.mxu0 0.0
    %1194 = vmatprep.subr.mxu0 0.0
    %1195 = vmatpush1.msra.mxu0 0.0
    %1196 = vmatprep.subr.mxu0 0.0
    %1197 = vmatpush1.msra.mxu0 0.0
    %1198 = vmatprep.subr.mxu0 0.0
    %1199 = vmatpush1.msra.mxu0 0.0
    %1200 = vmatprep.subr.mxu0 0.0
    %1201 = vmatpush1.msra.mxu0 0.0
    %1202 = vmatprep.subr.mxu0 0.0
    %1203 = vmatpush1.msra.mxu0 0.0
    %1204 = vmatprep.subr.mxu0 0.0
    %1205 = vmatpush1.msra.mxu0 0.0
    %1206 = vmatprep.subr.mxu0 0.0
    %1207 = vmatpush1.msra.mxu0 0.0
    %1208 = vmatprep.subr.mxu0 0.0
    %1209 = vmatpush1.msra.mxu0 0.0
    %1210 = vmatprep.subr.mxu0 0.0
    %1211 = vmatpush1.msra.mxu0 0.0
    %1212 = vmatprep.mubr.f32.mxu0 0.0
    %1213 = vmatmul.mubr.f32.gmra.mrb[0].mxu0 %v1146
    %v1214 = vpop.f32.mrb[0].mxu0
    %v1215 = vadd.f32 %v1137, %v1214
    %v1216 = vpop.f32.mrb[0].mxu0
    %v1217 = vadd.f32 %v1141, %v1216
    %1218 = vdwg.mxu0
    %v1219 = vmax.f32 %v1215, 0.0
    %v1220 = vmax.f32 %v1217, 0.0
    %v1221 = vld [vmem:[%s31] sm:$0xff]
    %v1222 = vld [vmem:[%s31 + $0x8] sm:$0xff]
    %v1223 = vld [vmem:[%s31 + $0x10] sm:$0xff]
    %v1224 = vld [vmem:[%s31 + $0x18] sm:$0xff]
    %v1225 = vld [vmem:[%s31 + $0x20] sm:$0xff]
    %v1226 = vld [vmem:[%s31 + $0x28] sm:$0xff]
    %v1227 = vld [vmem:[%s31 + $0x30] sm:$0xff]
    %v1228 = vld [vmem:[%s31 + $0x38] sm:$0xff]
    %v1229 = vld [vmem:[%s31 + $0x40] sm:$0xff]
    %v1230 = vld [vmem:[%s31 + $0x48] sm:$0xff]
    %v1231 = vld [vmem:[%s31 + $0x50] sm:$0xff]
    %v1232 = vld [vmem:[%s31 + $0x58] sm:$0xff]
    %v1233 = vld [vmem:[%s31 + $0x60] sm:$0xff]
    %v1234 = vld [vmem:[%s31 + $0x68] sm:$0xff]
    %v1235 = vld [vmem:[%s31 + $0x70] sm:$0xff]
    %v1236 = vld [vmem:[%s31 + $0x78] sm:$0xff]
    %v1237 = vld [vmem:[%s31 + $0x80] sm:$0xff]
    %v1238 = vld [vmem:[%s31 + $0x88] sm:$0xff]
    %v1239 = vld [vmem:[%s31 + $0x90] sm:$0xff]
    %v1240 = vld [vmem:[%s31 + $0x98] sm:$0xff]
    %v1241 = vld [vmem:[%s31 + $0xa0] sm:$0xff]
    %v1242 = vld [vmem:[%s31 + $0xa8] sm:$0xff]
    %v1243 = vld [vmem:[%s31 + $0xb0] sm:$0xff]
    %v1244 = vld [vmem:[%s31 + $0xb8] sm:$0xff]
    %v1245 = vld [vmem:[%s31 + $0xc0] sm:$0xff]
    %v1246 = vld [vmem:[%s31 + $0xc8] sm:$0xff]
    %v1247 = vld [vmem:[%s31 + $0xd0] sm:$0xff]
    %v1248 = vld [vmem:[%s31 + $0xd8] sm:$0xff]
    %v1249 = vld [vmem:[%s31 + $0xe0] sm:$0xff]
    %v1250 = vld [vmem:[%s31 + $0xe8] sm:$0xff]
    %v1251 = vld [vmem:[%s31 + $0xf0] sm:$0xff]
    %v1252 = vld [vmem:[%s31 + $0xf8] sm:$0xff]
    %v1253 = vld [vmem:[#allocation19] sm:$0x1]
    %v1255 = vlaneseq
    %v1256 = vshrl.u32 %v1255, 7
    %v1257 = vsub.s32 0, %v1256
    %v1258 = vrot.slane %v1253, %v1257
    %1260 = vmatprep.subr.mxu0 0.0
    %1261 = vmatpush1.msra.mxu0 %v1221
    %1262 = vmatprep.subr.mxu0 0.0
    %1263 = vmatpush1.msra.mxu0 %v1222
    %1264 = vmatprep.subr.mxu0 0.0
    %1265 = vmatpush1.msra.mxu0 %v1223
    %1266 = vmatprep.subr.mxu0 0.0
    %1267 = vmatpush1.msra.mxu0 %v1224
    %1268 = vmatprep.subr.mxu0 0.0
    %1269 = vmatpush1.msra.mxu0 %v1225
    %1270 = vmatprep.subr.mxu0 0.0
    %1271 = vmatpush1.msra.mxu0 %v1226
    %1272 = vmatprep.subr.mxu0 0.0
    %1273 = vmatpush1.msra.mxu0 %v1227
    %1274 = vmatprep.subr.mxu0 0.0
    %1275 = vmatpush1.msra.mxu0 %v1228
    %1276 = vmatprep.subr.mxu0 0.0
    %1277 = vmatpush1.msra.mxu0 %v1229
    %1278 = vmatprep.subr.mxu0 0.0
    %1279 = vmatpush1.msra.mxu0 %v1230
    %1280 = vmatprep.subr.mxu0 0.0
    %1281 = vmatpush1.msra.mxu0 %v1231
    %1282 = vmatprep.subr.mxu0 0.0
    %1283 = vmatpush1.msra.mxu0 %v1232
    %1284 = vmatprep.subr.mxu0 0.0
    %1285 = vmatpush1.msra.mxu0 %v1233
    %1286 = vmatprep.subr.mxu0 0.0
    %1287 = vmatpush1.msra.mxu0 %v1234
    %1288 = vmatprep.subr.mxu0 0.0
    %1289 = vmatpush1.msra.mxu0 %v1235
    %1290 = vmatprep.subr.mxu0 0.0
    %1291 = vmatpush1.msra.mxu0 %v1236
    %1292 = vmatprep.subr.mxu0 0.0
    %1293 = vmatpush1.msra.mxu0 %v1237
    %1294 = vmatprep.subr.mxu0 0.0
    %1295 = vmatpush1.msra.mxu0 %v1238
    %1296 = vmatprep.subr.mxu0 0.0
    %1297 = vmatpush1.msra.mxu0 %v1239
    %1298 = vmatprep.subr.mxu0 0.0
    %1299 = vmatpush1.msra.mxu0 %v1240
    %1300 = vmatprep.subr.mxu0 0.0
    %1301 = vmatpush1.msra.mxu0 %v1241
    %1302 = vmatprep.subr.mxu0 0.0
    %1303 = vmatpush1.msra.mxu0 %v1242
    %1304 = vmatprep.subr.mxu0 0.0
    %1305 = vmatpush1.msra.mxu0 %v1243
    %1306 = vmatprep.subr.mxu0 0.0
    %1307 = vmatpush1.msra.mxu0 %v1244
    %1308 = vmatprep.subr.mxu0 0.0
    %1309 = vmatpush1.msra.mxu0 %v1245
    %1310 = vmatprep.subr.mxu0 0.0
    %1311 = vmatpush1.msra.mxu0 %v1246
    %1312 = vmatprep.subr.mxu0 0.0
    %1313 = vmatpush1.msra.mxu0 %v1247
    %1314 = vmatprep.subr.mxu0 0.0
    %1315 = vmatpush1.msra.mxu0 %v1248
    %1316 = vmatprep.subr.mxu0 0.0
    %1317 = vmatpush1.msra.mxu0 %v1249
    %1318 = vmatprep.subr.mxu0 0.0
    %1319 = vmatpush1.msra.mxu0 %v1250
    %1320 = vmatprep.subr.mxu0 0.0
    %1321 = vmatpush1.msra.mxu0 %v1251
    %1322 = vmatprep.subr.mxu0 0.0
    %1323 = vmatpush1.msra.mxu0 %v1252
    %1324 = vmatprep.mubr.f32.mxu0 %v1220
    %1325 = vmatmul.mubr.f32.gmra.mrb[0].mxu0 %v1219
    %v1326 = vpop.f32.mrb[0].mxu0
    %v1327 = vadd.f32 %v1258, %v1326
    %v1328 = vpop.f32.mrb[0].mxu0
    %1329 = vdwg.mxu0
    %v1330 = vmax.f32 %v1327, 0.0
    %v1331 = vld [vmem:[#allocation20] sm:$0xff]
    %v1332 = vld [vmem:[#allocation20 + $0x8] sm:$0xff]
    %v1333 = vld [vmem:[#allocation20 + $0x10] sm:$0xff]
    %v1334 = vld [vmem:[#allocation20 + $0x18] sm:$0xff]
    %v1335 = vld [vmem:[#allocation20 + $0x20] sm:$0xff]
    %v1336 = vld [vmem:[#allocation20 + $0x28] sm:$0xff]
    %v1337 = vld [vmem:[#allocation20 + $0x30] sm:$0xff]
    %v1338 = vld [vmem:[#allocation20 + $0x38] sm:$0xff]
    %v1339 = vld [vmem:[#allocation20 + $0x40] sm:$0xff]
    %v1340 = vld [vmem:[#allocation20 + $0x48] sm:$0xff]
    %v1341 = vld [vmem:[#allocation20 + $0x50] sm:$0xff]
    %v1342 = vld [vmem:[#allocation20 + $0x58] sm:$0xff]
    %v1343 = vld [vmem:[#allocation20 + $0x60] sm:$0xff]
    %v1344 = vld [vmem:[#allocation20 + $0x68] sm:$0xff]
    %v1345 = vld [vmem:[#allocation20 + $0x70] sm:$0xff]
    %v1346 = vld [vmem:[#allocation20 + $0x78] sm:$0xff]
    %v1347 = vld [vmem:[#allocation22] sm:$0x1]
    %v1349 = vlaneseq
    %v1350 = vshrl.u32 %v1349, 7
    %v1351 = vsub.s32 0, %v1350
    %v1352 = vrot.slane %v1347, %v1351
    %1354 = vmatprep.subr.mxu0 0.0
    %1355 = vmatpush1.msra.mxu0 %v1331
    %1356 = vmatprep.subr.mxu0 0.0
    %1357 = vmatpush1.msra.mxu0 %v1332
    %1358 = vmatprep.subr.mxu0 0.0
    %1359 = vmatpush1.msra.mxu0 %v1333
    %1360 = vmatprep.subr.mxu0 0.0
    %1361 = vmatpush1.msra.mxu0 %v1334
    %1362 = vmatprep.subr.mxu0 0.0
    %1363 = vmatpush1.msra.mxu0 %v1335
    %1364 = vmatprep.subr.mxu0 0.0
    %1365 = vmatpush1.msra.mxu0 %v1336
    %1366 = vmatprep.subr.mxu0 0.0
    %1367 = vmatpush1.msra.mxu0 %v1337
    %1368 = vmatprep.subr.mxu0 0.0
    %1369 = vmatpush1.msra.mxu0 %v1338
    %1370 = vmatprep.subr.mxu0 0.0
    %1371 = vmatpush1.msra.mxu0 %v1339
    %1372 = vmatprep.subr.mxu0 0.0
    %1373 = vmatpush1.msra.mxu0 %v1340
    %1374 = vmatprep.subr.mxu0 0.0
    %1375 = vmatpush1.msra.mxu0 %v1341
    %1376 = vmatprep.subr.mxu0 0.0
    %1377 = vmatpush1.msra.mxu0 %v1342
    %1378 = vmatprep.subr.mxu0 0.0
    %1379 = vmatpush1.msra.mxu0 %v1343
    %1380 = vmatprep.subr.mxu0 0.0
    %1381 = vmatpush1.msra.mxu0 %v1344
    %1382 = vmatprep.subr.mxu0 0.0
    %1383 = vmatpush1.msra.mxu0 %v1345
    %1384 = vmatprep.subr.mxu0 0.0
    %1385 = vmatpush1.msra.mxu0 %v1346
    %1386 = vmatprep.subr.mxu0 0.0
    %1387 = vmatpush1.msra.mxu0 0.0
    %1388 = vmatprep.subr.mxu0 0.0
    %1389 = vmatpush1.msra.mxu0 0.0
    %1390 = vmatprep.subr.mxu0 0.0
    %1391 = vmatpush1.msra.mxu0 0.0
    %1392 = vmatprep.subr.mxu0 0.0
    %1393 = vmatpush1.msra.mxu0 0.0
    %1394 = vmatprep.subr.mxu0 0.0
    %1395 = vmatpush1.msra.mxu0 0.0
    %1396 = vmatprep.subr.mxu0 0.0
    %1397 = vmatpush1.msra.mxu0 0.0
    %1398 = vmatprep.subr.mxu0 0.0
    %1399 = vmatpush1.msra.mxu0 0.0
    %1400 = vmatprep.subr.mxu0 0.0
    %1401 = vmatpush1.msra.mxu0 0.0
    %1402 = vmatprep.subr.mxu0 0.0
    %1403 = vmatpush1.msra.mxu0 0.0
    %1404 = vmatprep.subr.mxu0 0.0
    %1405 = vmatpush1.msra.mxu0 0.0
    %1406 = vmatprep.subr.mxu0 0.0
    %1407 = vmatpush1.msra.mxu0 0.0
    %1408 = vmatprep.subr.mxu0 0.0
    %1409 = vmatpush1.msra.mxu0 0.0
    %1410 = vmatprep.subr.mxu0 0.0
    %1411 = vmatpush1.msra.mxu0 0.0
    %1412 = vmatprep.subr.mxu0 0.0
    %1413 = vmatpush1.msra.mxu0 0.0
    %1414 = vmatprep.subr.mxu0 0.0
    %1415 = vmatpush1.msra.mxu0 0.0
    %1416 = vmatprep.subr.mxu0 0.0
    %1417 = vmatpush1.msra.mxu0 0.0
    %1418 = vmatprep.mubr.f32.mxu0 0.0
    %1419 = vmatmul.mubr.f32.gmra.mrb[0].mxu0 %v1330
    %v1420 = vpop.f32.mrb[0].mxu0
    %v1421 = vadd.f32 %v1352, %v1420
    %v1422 = vpop.f32.mrb[0].mxu0
    %1423 = vdwg.mxu0
    %v1424 = vmax.f32 %v1421, 0.0
    %v1425 = vld [vmem:[%s39] sm:$0xff]
    %v1426 = vld [vmem:[%s39 + $0x8] sm:$0xff]
    %v1427 = vld [vmem:[%s39 + $0x10] sm:$0xff]
    %v1428 = vld [vmem:[%s39 + $0x18] sm:$0xff]
    %v1429 = vld [vmem:[%s39 + $0x20] sm:$0xff]
    %v1430 = vld [vmem:[%s39 + $0x28] sm:$0xff]
    %v1431 = vld [vmem:[%s39 + $0x30] sm:$0xff]
    %v1432 = vld [vmem:[%s39 + $0x38] sm:$0xff]
    %v1433 = vld [vmem:[%s39 + $0x40] sm:$0xff]
    %v1434 = vld [vmem:[%s39 + $0x48] sm:$0xff]
    %v1435 = vld [vmem:[%s39 + $0x50] sm:$0xff]
    %v1436 = vld [vmem:[%s39 + $0x58] sm:$0xff]
    %v1437 = vld [vmem:[%s39 + $0x60] sm:$0xff]
    %v1438 = vld [vmem:[%s39 + $0x68] sm:$0xff]
    %v1439 = vld [vmem:[%s39 + $0x70] sm:$0xff]
    %v1440 = vld [vmem:[%s39 + $0x78] sm:$0xff]
    %v1441 = vld [vmem:[#allocation23] sm:$0x1]
    %v1443 = vlaneseq
    %v1444 = vshrl.u32 %v1443, 7
    %v1445 = vsub.s32 0, %v1444
    %v1446 = vrot.slane %v1441, %v1445
    %1448 = vmatprep.subr.mxu0 0.0
    %1449 = vmatpush1.msra.mxu0 %v1425
    %1450 = vmatprep.subr.mxu0 0.0
    %1451 = vmatpush1.msra.mxu0 %v1426
    %1452 = vmatprep.subr.mxu0 0.0
    %1453 = vmatpush1.msra.mxu0 %v1427
    %1454 = vmatprep.subr.mxu0 0.0
    %1455 = vmatpush1.msra.mxu0 %v1428
    %1456 = vmatprep.subr.mxu0 0.0
    %1457 = vmatpush1.msra.mxu0 %v1429
    %1458 = vmatprep.subr.mxu0 0.0
    %1459 = vmatpush1.msra.mxu0 %v1430
    %1460 = vmatprep.subr.mxu0 0.0
    %1461 = vmatpush1.msra.mxu0 %v1431
    %1462 = vmatprep.subr.mxu0 0.0
    %1463 = vmatpush1.msra.mxu0 %v1432
    %1464 = vmatprep.subr.mxu0 0.0
    %1465 = vmatpush1.msra.mxu0 %v1433
    %1466 = vmatprep.subr.mxu0 0.0
    %1467 = vmatpush1.msra.mxu0 %v1434
    %1468 = vmatprep.subr.mxu0 0.0
    %1469 = vmatpush1.msra.mxu0 %v1435
    %1470 = vmatprep.subr.mxu0 0.0
    %1471 = vmatpush1.msra.mxu0 %v1436
    %1472 = vmatprep.subr.mxu0 0.0
    %1473 = vmatpush1.msra.mxu0 %v1437
    %1474 = vmatprep.subr.mxu0 0.0
    %1475 = vmatpush1.msra.mxu0 %v1438
    %1476 = vmatprep.subr.mxu0 0.0
    %1477 = vmatpush1.msra.mxu0 %v1439
    %1478 = vmatprep.subr.mxu0 0.0
    %1479 = vmatpush1.msra.mxu0 %v1440
    %1480 = vmatprep.subr.mxu0 0.0
    %1481 = vmatpush1.msra.mxu0 0.0
    %1482 = vmatprep.subr.mxu0 0.0
    %1483 = vmatpush1.msra.mxu0 0.0
    %1484 = vmatprep.subr.mxu0 0.0
    %1485 = vmatpush1.msra.mxu0 0.0
    %1486 = vmatprep.subr.mxu0 0.0
    %1487 = vmatpush1.msra.mxu0 0.0
    %1488 = vmatprep.subr.mxu0 0.0
    %1489 = vmatpush1.msra.mxu0 0.0
    %1490 = vmatprep.subr.mxu0 0.0
    %1491 = vmatpush1.msra.mxu0 0.0
    %1492 = vmatprep.subr.mxu0 0.0
    %1493 = vmatpush1.msra.mxu0 0.0
    %1494 = vmatprep.subr.mxu0 0.0
    %1495 = vmatpush1.msra.mxu0 0.0
    %1496 = vmatprep.subr.mxu0 0.0
    %1497 = vmatpush1.msra.mxu0 0.0
    %1498 = vmatprep.subr.mxu0 0.0
    %1499 = vmatpush1.msra.mxu0 0.0
    %1500 = vmatprep.subr.mxu0 0.0
    %1501 = vmatpush1.msra.mxu0 0.0
    %1502 = vmatprep.subr.mxu0 0.0
    %1503 = vmatpush1.msra.mxu0 0.0
    %1504 = vmatprep.subr.mxu0 0.0
    %1505 = vmatpush1.msra.mxu0 0.0
    %1506 = vmatprep.subr.mxu0 0.0
    %1507 = vmatpush1.msra.mxu0 0.0
    %1508 = vmatprep.subr.mxu0 0.0
    %1509 = vmatpush1.msra.mxu0 0.0
    %1510 = vmatprep.subr.mxu0 0.0
    %1511 = vmatpush1.msra.mxu0 0.0
    %1512 = vmatprep.mubr.f32.mxu0 0.0
    %1513 = vmatmul.mubr.f32.gmra.mrb[0].mxu0 %v1424
    %v1514 = vpop.f32.mrb[0].mxu0
    %v1515 = vadd.f32 %v1446, %v1514
    %v1516 = vpop.f32.mrb[0].mxu0
    %1517 = vdwg.mxu0
    %v1518 = vmax.f32 %v1515, 0.0
    %v1519 = vld [vmem:[#allocation25] sm:$0xff]
    %v1520 = vld [vmem:[#allocation25 + $0x8] sm:$0xff]
    %v1521 = vld [vmem:[#allocation25 + $0x10] sm:$0xff]
    %v1522 = vld [vmem:[#allocation25 + $0x18] sm:$0xff]
    %v1523 = vld [vmem:[#allocation25 + $0x20] sm:$0xff]
    %v1524 = vld [vmem:[#allocation25 + $0x28] sm:$0xff]
    %v1525 = vld [vmem:[#allocation25 + $0x30] sm:$0xff]
    %v1526 = vld [vmem:[#allocation25 + $0x38] sm:$0xff]
    %v1527 = vld [vmem:[#allocation25 + $0x40] sm:$0xff]
    %v1528 = vld [vmem:[#allocation25 + $0x48] sm:$0xff]
    %v1529 = vld [vmem:[#allocation25 + $0x50] sm:$0xff]
    %v1530 = vld [vmem:[#allocation25 + $0x58] sm:$0xff]
    %v1531 = vld [vmem:[#allocation25 + $0x60] sm:$0xff]
    %v1532 = vld [vmem:[#allocation25 + $0x68] sm:$0xff]
    %v1533 = vld [vmem:[#allocation25 + $0x70] sm:$0xff]
    %v1534 = vld [vmem:[#allocation25 + $0x78] sm:$0xff]
    %v1536 = vsel %vm1144, %v1114, 0
    %1538 = vmatprep.subr.mxu0 0.0
    %1539 = vmatpush1.msra.mxu0 %v1527
    %1540 = vmatprep.subr.mxu0 0.0
    %1541 = vmatpush1.msra.mxu0 %v1528
    %1542 = vmatprep.subr.mxu0 0.0
    %1543 = vmatpush1.msra.mxu0 %v1529
    %1544 = vmatprep.subr.mxu0 0.0
    %1545 = vmatpush1.msra.mxu0 %v1530
    %1546 = vmatprep.subr.mxu0 0.0
    %1547 = vmatpush1.msra.mxu0 %v1531
    %1548 = vmatprep.subr.mxu0 0.0
    %1549 = vmatpush1.msra.mxu0 %v1532
    %1550 = vmatprep.subr.mxu0 0.0
    %1551 = vmatpush1.msra.mxu0 %v1533
    %1552 = vmatprep.subr.mxu0 0.0
    %1553 = vmatpush1.msra.mxu0 %v1534
    %1554 = vmatprep.subr.mxu0 0.0
    %1555 = vmatpush1.msra.mxu0 0.0
    %1556 = vmatprep.subr.mxu0 0.0
    %1557 = vmatpush1.msra.mxu0 0.0
    %1558 = vmatprep.subr.mxu0 0.0
    %1559 = vmatpush1.msra.mxu0 0.0
    %1560 = vmatprep.subr.mxu0 0.0
    %1561 = vmatpush1.msra.mxu0 0.0
    %1562 = vmatprep.subr.mxu0 0.0
    %1563 = vmatpush1.msra.mxu0 0.0
    %1564 = vmatprep.subr.mxu0 0.0
    %1565 = vmatpush1.msra.mxu0 0.0
    %1566 = vmatprep.subr.mxu0 0.0
    %1567 = vmatpush1.msra.mxu0 0.0
    %1568 = vmatprep.subr.mxu0 0.0
    %1569 = vmatpush1.msra.mxu0 0.0
    %1570 = vmatprep.subr.mxu0 0.0
    %1571 = vmatpush1.msra.mxu0 0.0
    %1572 = vmatprep.subr.mxu0 0.0
    %1573 = vmatpush1.msra.mxu0 0.0
    %1574 = vmatprep.subr.mxu0 0.0
    %1575 = vmatpush1.msra.mxu0 0.0
    %1576 = vmatprep.subr.mxu0 0.0
    %1577 = vmatpush1.msra.mxu0 0.0
    %1578 = vmatprep.subr.mxu0 0.0
    %1579 = vmatpush1.msra.mxu0 0.0
    %1580 = vmatprep.subr.mxu0 0.0
    %1581 = vmatpush1.msra.mxu0 0.0
    %1582 = vmatprep.subr.mxu0 0.0
    %1583 = vmatpush1.msra.mxu0 0.0
    %1584 = vmatprep.subr.mxu0 0.0
    %1585 = vmatpush1.msra.mxu0 0.0
    %1586 = vmatprep.subr.mxu0 0.0
    %1587 = vmatpush1.msra.mxu0 0.0
    %1588 = vmatprep.subr.mxu0 0.0
    %1589 = vmatpush1.msra.mxu0 0.0
    %1590 = vmatprep.subr.mxu0 0.0
    %1591 = vmatpush1.msra.mxu0 0.0
    %1592 = vmatprep.subr.mxu0 0.0
    %1593 = vmatpush1.msra.mxu0 0.0
    %1594 = vmatprep.subr.mxu0 0.0
    %1595 = vmatpush1.msra.mxu0 0.0
    %1596 = vmatprep.subr.mxu0 0.0
    %1597 = vmatpush1.msra.mxu0 0.0
    %1598 = vmatprep.subr.mxu0 0.0
    %1599 = vmatpush1.msra.mxu0 0.0
    %1600 = vmatprep.subr.mxu0 0.0
    %1601 = vmatpush1.msra.mxu0 0.0
    %1602 = vmatprep.mubr.f32.mxu0 0.0
    %1603 = vmatmul.mubr.f32.gmra.mrb[0].mxu0 %v1536
    %v1604 = vpop.f32.mrb[0].mxu0
    %v1605 = vadd.f32 0.0, %v1604
    %v1606 = vpop.f32.mrb[0].mxu0
    %1607 = vdwg.mxu0
    %v1609 = vsel %vm1144, %v1518, 0
    %1611 = vmatprep.subr.mxu0 0.0
    %1612 = vmatpush1.msra.mxu0 %v1519
    %1613 = vmatprep.subr.mxu0 0.0
    %1614 = vmatpush1.msra.mxu0 %v1520
    %1615 = vmatprep.subr.mxu0 0.0
    %1616 = vmatpush1.msra.mxu0 %v1521
    %1617 = vmatprep.subr.mxu0 0.0
    %1618 = vmatpush1.msra.mxu0 %v1522
    %1619 = vmatprep.subr.mxu0 0.0
    %1620 = vmatpush1.msra.mxu0 %v1523
    %1621 = vmatprep.subr.mxu0 0.0
    %1622 = vmatpush1.msra.mxu0 %v1524
    %1623 = vmatprep.subr.mxu0 0.0
    %1624 = vmatpush1.msra.mxu0 %v1525
    %1625 = vmatprep.subr.mxu0 0.0
    %1626 = vmatpush1.msra.mxu0 %v1526
    %1627 = vmatprep.subr.mxu0 0.0
    %1628 = vmatpush1.msra.mxu0 0.0
    %1629 = vmatprep.subr.mxu0 0.0
    %1630 = vmatpush1.msra.mxu0 0.0
    %1631 = vmatprep.subr.mxu0 0.0
    %1632 = vmatpush1.msra.mxu0 0.0
    %1633 = vmatprep.subr.mxu0 0.0
    %1634 = vmatpush1.msra.mxu0 0.0
    %1635 = vmatprep.subr.mxu0 0.0
    %1636 = vmatpush1.msra.mxu0 0.0
    %1637 = vmatprep.subr.mxu0 0.0
    %1638 = vmatpush1.msra.mxu0 0.0
    %1639 = vmatprep.subr.mxu0 0.0
    %1640 = vmatpush1.msra.mxu0 0.0
    %1641 = vmatprep.subr.mxu0 0.0
    %1642 = vmatpush1.msra.mxu0 0.0
    %1643 = vmatprep.subr.mxu0 0.0
    %1644 = vmatpush1.msra.mxu0 0.0
    %1645 = vmatprep.subr.mxu0 0.0
    %1646 = vmatpush1.msra.mxu0 0.0
    %1647 = vmatprep.subr.mxu0 0.0
    %1648 = vmatpush1.msra.mxu0 0.0
    %1649 = vmatprep.subr.mxu0 0.0
    %1650 = vmatpush1.msra.mxu0 0.0
    %1651 = vmatprep.subr.mxu0 0.0
    %1652 = vmatpush1.msra.mxu0 0.0
    %1653 = vmatprep.subr.mxu0 0.0
    %1654 = vmatpush1.msra.mxu0 0.0
    %1655 = vmatprep.subr.mxu0 0.0
    %1656 = vmatpush1.msra.mxu0 0.0
    %1657 = vmatprep.subr.mxu0 0.0
    %1658 = vmatpush1.msra.mxu0 0.0
    %1659 = vmatprep.subr.mxu0 0.0
    %1660 = vmatpush1.msra.mxu0 0.0
    %1661 = vmatprep.subr.mxu0 0.0
    %1662 = vmatpush1.msra.mxu0 0.0
    %1663 = vmatprep.subr.mxu0 0.0
    %1664 = vmatpush1.msra.mxu0 0.0
    %1665 = vmatprep.subr.mxu0 0.0
    %1666 = vmatpush1.msra.mxu0 0.0
    %1667 = vmatprep.subr.mxu0 0.0
    %1668 = vmatpush1.msra.mxu0 0.0
    %1669 = vmatprep.subr.mxu0 0.0
    %1670 = vmatpush1.msra.mxu0 0.0
    %1671 = vmatprep.subr.mxu0 0.0
    %1672 = vmatpush1.msra.mxu0 0.0
    %1673 = vmatprep.subr.mxu0 0.0
    %1674 = vmatpush1.msra.mxu0 0.0
    %1675 = vmatprep.mubr.f32.mxu0 0.0
    %1676 = vmatmul.mubr.f32.gmra.mrb[0].mxu0 %v1609
    %v1677 = vpop.f32.mrb[0].mxu0
    %v1678 = vadd.f32 %v1605, %v1677
    %v1679 = vpop.f32.mrb[0].mxu0
    %1680 = vdwg.mxu0
    %v1681 = vld [vmem:[#allocation26] sm:$0x1]
    %v1683 = vlaneseq
    %v1684 = vshrl.u32 %v1683, 7
    %v1685 = vsub.s32 0, %v1684
    %v1686 = vrot.slane %v1681, %v1685
    %v1688 = vadd.f32 %v1678, %v1686
    %v1689 = vmax.f32 %v1688, 0.0
    %v1690 = vld [vmem:[%s47] sm:$0xff]
    %v1691 = vld [vmem:[%s47 + $0x8] sm:$0xff]
    %v1692 = vld [vmem:[%s47 + $0x10] sm:$0xff]
    %v1693 = vld [vmem:[%s47 + $0x18] sm:$0xff]
    %v1694 = vld [vmem:[%s47 + $0x20] sm:$0xff]
    %v1695 = vld [vmem:[%s47 + $0x28] sm:$0xff]
    %v1696 = vld [vmem:[%s47 + $0x30] sm:$0xff]
    %v1697 = vld [vmem:[%s47 + $0x38] sm:$0xff]
    %v1698 = vld [vmem:[%s47 + $0x40] sm:$0xff]
    %v1699 = vld [vmem:[%s47 + $0x48] sm:$0xff]
    %v1700 = vld [vmem:[%s47 + $0x50] sm:$0xff]
    %v1701 = vld [vmem:[%s47 + $0x58] sm:$0xff]
    %v1702 = vld [vmem:[%s47 + $0x60] sm:$0xff]
    %v1703 = vld [vmem:[%s47 + $0x68] sm:$0xff]
    %v1704 = vld [vmem:[%s47 + $0x70] sm:$0xff]
    %v1705 = vld [vmem:[%s47 + $0x78] sm:$0xff]
    %v1706 = vld [vmem:[#allocation28] sm:$0x1]
    %v1708 = vlaneseq
    %v1709 = vshrl.u32 %v1708, 7
    %v1710 = vsub.s32 0, %v1709
    %v1711 = vrot.slane %v1706, %v1710
    %1713 = vmatprep.subr.mxu0 0.0
    %1714 = vmatpush1.msra.mxu0 %v1690
    %1715 = vmatprep.subr.mxu0 0.0
    %1716 = vmatpush1.msra.mxu0 %v1691
    %1717 = vmatprep.subr.mxu0 0.0
    %1718 = vmatpush1.msra.mxu0 %v1692
    %1719 = vmatprep.subr.mxu0 0.0
    %1720 = vmatpush1.msra.mxu0 %v1693
    %1721 = vmatprep.subr.mxu0 0.0
    %1722 = vmatpush1.msra.mxu0 %v1694
    %1723 = vmatprep.subr.mxu0 0.0
    %1724 = vmatpush1.msra.mxu0 %v1695
    %1725 = vmatprep.subr.mxu0 0.0
    %1726 = vmatpush1.msra.mxu0 %v1696
    %1727 = vmatprep.subr.mxu0 0.0
    %1728 = vmatpush1.msra.mxu0 %v1697
    %1729 = vmatprep.subr.mxu0 0.0
    %1730 = vmatpush1.msra.mxu0 %v1698
    %1731 = vmatprep.subr.mxu0 0.0
    %1732 = vmatpush1.msra.mxu0 %v1699
    %1733 = vmatprep.subr.mxu0 0.0
    %1734 = vmatpush1.msra.mxu0 %v1700
    %1735 = vmatprep.subr.mxu0 0.0
    %1736 = vmatpush1.msra.mxu0 %v1701
    %1737 = vmatprep.subr.mxu0 0.0
    %1738 = vmatpush1.msra.mxu0 %v1702
    %1739 = vmatprep.subr.mxu0 0.0
    %1740 = vmatpush1.msra.mxu0 %v1703
    %1741 = vmatprep.subr.mxu0 0.0
    %1742 = vmatpush1.msra.mxu0 %v1704
    %1743 = vmatprep.subr.mxu0 0.0
    %1744 = vmatpush1.msra.mxu0 %v1705
    %1745 = vmatprep.subr.mxu0 0.0
    %1746 = vmatpush1.msra.mxu0 0.0
    %1747 = vmatprep.subr.mxu0 0.0
    %1748 = vmatpush1.msra.mxu0 0.0
    %1749 = vmatprep.subr.mxu0 0.0
    %1750 = vmatpush1.msra.mxu0 0.0
    %1751 = vmatprep.subr.mxu0 0.0
    %1752 = vmatpush1.msra.mxu0 0.0
    %1753 = vmatprep.subr.mxu0 0.0
    %1754 = vmatpush1.msra.mxu0 0.0
    %1755 = vmatprep.subr.mxu0 0.0
    %1756 = vmatpush1.msra.mxu0 0.0
    %1757 = vmatprep.subr.mxu0 0.0
    %1758 = vmatpush1.msra.mxu0 0.0
    %1759 = vmatprep.subr.mxu0 0.0
    %1760 = vmatpush1.msra.mxu0 0.0
    %1761 = vmatprep.subr.mxu0 0.0
    %1762 = vmatpush1.msra.mxu0 0.0
    %1763 = vmatprep.subr.mxu0 0.0
    %1764 = vmatpush1.msra.mxu0 0.0
    %1765 = vmatprep.subr.mxu0 0.0
    %1766 = vmatpush1.msra.mxu0 0.0
    %1767 = vmatprep.subr.mxu0 0.0
    %1768 = vmatpush1.msra.mxu0 0.0
    %1769 = vmatprep.subr.mxu0 0.0
    %1770 = vmatpush1.msra.mxu0 0.0
    %1771 = vmatprep.subr.mxu0 0.0
    %1772 = vmatpush1.msra.mxu0 0.0
    %1773 = vmatprep.subr.mxu0 0.0
    %1774 = vmatpush1.msra.mxu0 0.0
    %1775 = vmatprep.subr.mxu0 0.0
    %1776 = vmatpush1.msra.mxu0 0.0
    %1777 = vmatprep.mubr.f32.mxu0 0.0
    %1778 = vmatmul.mubr.f32.gmra.mrb[0].mxu0 %v1689
    %v1779 = vpop.f32.mrb[0].mxu0
    %v1780 = vadd.f32 %v1711, %v1779
    %v1781 = vpop.f32.mrb[0].mxu0
    %1782 = vdwg.mxu0
    %v1783 = vmax.f32 %v1780, 0.0
    %1784 = vrot.lane.b32.xlu0 %v1114, 64
    %v1785 = vpop.permute.xlu0 %1784
    %v1787 = vsel %vm1144, %v1783, %v1785
    %v1788 = vld [vmem:[%s51] sm:$0xff]
    %v1789 = vld [vmem:[%s51 + $0x8] sm:$0xff]
    %v1790 = vld [vmem:[%s51 + $0x10] sm:$0xff]
    %v1791 = vld [vmem:[%s51 + $0x18] sm:$0xff]
    %v1792 = vld [vmem:[%s51 + $0x20] sm:$0xff]
    %v1793 = vld [vmem:[%s51 + $0x28] sm:$0xff]
    %v1794 = vld [vmem:[%s51 + $0x30] sm:$0xff]
    %v1795 = vld [vmem:[%s51 + $0x38] sm:$0xff]
    %v1796 = vld [vmem:[%s51 + $0x40] sm:$0xff]
    %v1797 = vld [vmem:[%s51 + $0x48] sm:$0xff]
    %v1798 = vld [vmem:[%s51 + $0x50] sm:$0xff]
    %v1799 = vld [vmem:[%s51 + $0x58] sm:$0xff]
    %v1800 = vld [vmem:[%s51 + $0x60] sm:$0xff]
    %v1801 = vld [vmem:[%s51 + $0x68] sm:$0xff]
    %v1802 = vld [vmem:[%s51 + $0x70] sm:$0xff]
    %v1803 = vld [vmem:[%s51 + $0x78] sm:$0xff]
    %v1804 = vld [vmem:[%s51 + $0x80] sm:$0xff]
    %v1805 = vld [vmem:[%s51 + $0x88] sm:$0xff]
    %v1806 = vld [vmem:[%s51 + $0x90] sm:$0xff]
    %v1807 = vld [vmem:[%s51 + $0x98] sm:$0xff]
    %v1808 = vld [vmem:[%s51 + $0xa0] sm:$0xff]
    %v1809 = vld [vmem:[%s51 + $0xa8] sm:$0xff]
    %v1810 = vld [vmem:[%s51 + $0xb0] sm:$0xff]
    %v1811 = vld [vmem:[%s51 + $0xb8] sm:$0xff]
    %v1812 = vld [vmem:[%s51 + $0xc0] sm:$0xff]
    %v1813 = vld [vmem:[%s51 + $0xc8] sm:$0xff]
    %v1814 = vld [vmem:[%s51 + $0xd0] sm:$0xff]
    %v1815 = vld [vmem:[%s51 + $0xd8] sm:$0xff]
    %v1816 = vld [vmem:[%s51 + $0xe0] sm:$0xff]
    %v1817 = vld [vmem:[%s51 + $0xe8] sm:$0xff]
    %v1818 = vld [vmem:[%s51 + $0xf0] sm:$0xff]
    %v1819 = vld [vmem:[%s51 + $0xf8] sm:$0xff]
    %v1820 = vld [vmem:[%s51 + $0x100] sm:$0xff]
    %v1821 = vld [vmem:[%s51 + $0x108] sm:$0xff]
    %v1822 = vld [vmem:[%s51 + $0x110] sm:$0xff]
    %v1823 = vld [vmem:[%s51 + $0x118] sm:$0xff]
    %v1824 = vld [vmem:[%s51 + $0x120] sm:$0xff]
    %v1825 = vld [vmem:[%s51 + $0x128] sm:$0xff]
    %v1826 = vld [vmem:[%s51 + $0x130] sm:$0xff]
    %v1827 = vld [vmem:[%s51 + $0x138] sm:$0xff]
    %v1828 = vld [vmem:[%s51 + $0x140] sm:$0xff]
    %v1829 = vld [vmem:[%s51 + $0x148] sm:$0xff]
    %v1830 = vld [vmem:[%s51 + $0x150] sm:$0xff]
    %v1831 = vld [vmem:[%s51 + $0x158] sm:$0xff]
    %v1832 = vld [vmem:[%s51 + $0x160] sm:$0xff]
    %v1833 = vld [vmem:[%s51 + $0x168] sm:$0xff]
    %v1834 = vld [vmem:[%s51 + $0x170] sm:$0xff]
    %v1835 = vld [vmem:[%s51 + $0x178] sm:$0xff]
    %v1836 = vld [vmem:[#allocation29] sm:$0x3]
    %v1838 = vlaneseq
    %v1839 = vshrl.u32 %v1838, 7
    %v1840 = vsub.s32 0, %v1839
    %v1841 = vrot.slane %v1836, %v1840
    %v1842 = vlaneseq
    %v1843 = vshrl.u32 %v1842, 7
    %v1844 = vsub.s32 1, %v1843
    %v1845 = vrot.slane %v1836, %v1844
    %1848 = vmatprep.subr.mxu0 %v1789
    %1849 = vmatpush1.msra.mxu0 %v1788
    %1850 = vmatprep.subr.mxu0 %v1791
    %1851 = vmatpush1.msra.mxu0 %v1790
    %1852 = vmatprep.subr.mxu0 %v1793
    %1853 = vmatpush1.msra.mxu0 %v1792
    %1854 = vmatprep.subr.mxu0 %v1795
    %1855 = vmatpush1.msra.mxu0 %v1794
    %1856 = vmatprep.subr.mxu0 %v1797
    %1857 = vmatpush1.msra.mxu0 %v1796
    %1858 = vmatprep.subr.mxu0 %v1799
    %1859 = vmatpush1.msra.mxu0 %v1798
    %1860 = vmatprep.subr.mxu0 %v1801
    %1861 = vmatpush1.msra.mxu0 %v1800
    %1862 = vmatprep.subr.mxu0 %v1803
    %1863 = vmatpush1.msra.mxu0 %v1802
    %1864 = vmatprep.subr.mxu0 %v1805
    %1865 = vmatpush1.msra.mxu0 %v1804
    %1866 = vmatprep.subr.mxu0 %v1807
    %1867 = vmatpush1.msra.mxu0 %v1806
    %1868 = vmatprep.subr.mxu0 %v1809
    %1869 = vmatpush1.msra.mxu0 %v1808
    %1870 = vmatprep.subr.mxu0 %v1811
    %1871 = vmatpush1.msra.mxu0 %v1810
    %1872 = vmatprep.subr.mxu0 %v1813
    %1873 = vmatpush1.msra.mxu0 %v1812
    %1874 = vmatprep.subr.mxu0 %v1815
    %1875 = vmatpush1.msra.mxu0 %v1814
    %1876 = vmatprep.subr.mxu0 %v1817
    %1877 = vmatpush1.msra.mxu0 %v1816
    %1878 = vmatprep.subr.mxu0 %v1819
    %1879 = vmatpush1.msra.mxu0 %v1818
    %1880 = vmatprep.subr.mxu0 %v1821
    %1881 = vmatpush1.msra.mxu0 %v1820
    %1882 = vmatprep.subr.mxu0 %v1823
    %1883 = vmatpush1.msra.mxu0 %v1822
    %1884 = vmatprep.subr.mxu0 %v1825
    %1885 = vmatpush1.msra.mxu0 %v1824
    %1886 = vmatprep.subr.mxu0 %v1827
    %1887 = vmatpush1.msra.mxu0 %v1826
    %1888 = vmatprep.subr.mxu0 %v1829
    %1889 = vmatpush1.msra.mxu0 %v1828
    %1890 = vmatprep.subr.mxu0 %v1831
    %1891 = vmatpush1.msra.mxu0 %v1830
    %1892 = vmatprep.subr.mxu0 %v1833
    %1893 = vmatpush1.msra.mxu0 %v1832
    %1894 = vmatprep.subr.mxu0 %v1835
    %1895 = vmatpush1.msra.mxu0 %v1834
    %1896 = vmatprep.subr.mxu0 0.0
    %1897 = vmatpush1.msra.mxu0 0.0
    %1898 = vmatprep.subr.mxu0 0.0
    %1899 = vmatpush1.msra.mxu0 0.0
    %1900 = vmatprep.subr.mxu0 0.0
    %1901 = vmatpush1.msra.mxu0 0.0
    %1902 = vmatprep.subr.mxu0 0.0
    %1903 = vmatpush1.msra.mxu0 0.0
    %1904 = vmatprep.subr.mxu0 0.0
    %1905 = vmatpush1.msra.mxu0 0.0
    %1906 = vmatprep.subr.mxu0 0.0
    %1907 = vmatpush1.msra.mxu0 0.0
    %1908 = vmatprep.subr.mxu0 0.0
    %1909 = vmatpush1.msra.mxu0 0.0
    %1910 = vmatprep.subr.mxu0 0.0
    %1911 = vmatpush1.msra.mxu0 0.0
    %1912 = vmatprep.mubr.f32.mxu0 %v1609
    %1913 = vmatmul.mubr.f32.gmra.mrb[0].mxu0 %v1787
    %v1914 = vpop.f32.mrb[0].mxu0
    %v1915 = vadd.f32 %v1841, %v1914
    %v1916 = vpop.f32.mrb[0].mxu0
    %v1917 = vadd.f32 %v1845, %v1916
    %1918 = vdwg.mxu0
    %v1919 = vmax.f32 %v1915, 0.0
    %v1920 = vmax.f32 %v1917, 0.0
    %v1921 = vld [vmem:[%s55] sm:$0xff]
    %v1922 = vld [vmem:[%s55 + $0x8] sm:$0xff]
    %v1923 = vld [vmem:[%s55 + $0x10] sm:$0xff]
    %v1924 = vld [vmem:[%s55 + $0x18] sm:$0xff]
    %v1925 = vld [vmem:[%s55 + $0x20] sm:$0xff]
    %v1926 = vld [vmem:[%s55 + $0x28] sm:$0xff]
    %v1927 = vld [vmem:[%s55 + $0x30] sm:$0xff]
    %v1928 = vld [vmem:[%s55 + $0x38] sm:$0xff]
    %v1929 = vld [vmem:[%s55 + $0x40] sm:$0xff]
    %v1930 = vld [vmem:[%s55 + $0x48] sm:$0xff]
    %v1931 = vld [vmem:[%s55 + $0x50] sm:$0xff]
    %v1932 = vld [vmem:[%s55 + $0x58] sm:$0xff]
    %v1933 = vld [vmem:[%s55 + $0x60] sm:$0xff]
    %v1934 = vld [vmem:[%s55 + $0x68] sm:$0xff]
    %v1935 = vld [vmem:[%s55 + $0x70] sm:$0xff]
    %v1936 = vld [vmem:[%s55 + $0x78] sm:$0xff]
    %v1937 = vld [vmem:[%s55 + $0x80] sm:$0xff]
    %v1938 = vld [vmem:[%s55 + $0x88] sm:$0xff]
    %v1939 = vld [vmem:[%s55 + $0x90] sm:$0xff]
    %v1940 = vld [vmem:[%s55 + $0x98] sm:$0xff]
    %v1941 = vld [vmem:[%s55 + $0xa0] sm:$0xff]
    %v1942 = vld [vmem:[%s55 + $0xa8] sm:$0xff]
    %v1943 = vld [vmem:[%s55 + $0xb0] sm:$0xff]
    %v1944 = vld [vmem:[%s55 + $0xb8] sm:$0xff]
    %v1945 = vld [vmem:[#allocation31] sm:$0x1]
    %v1947 = vlaneseq
    %v1948 = vshrl.u32 %v1947, 7
    %v1949 = vsub.s32 0, %v1948
    %v1950 = vrot.slane %v1945, %v1949
    %v1953 = vsel %vm1144, %v1920, 0
    %1955 = vmatprep.subr.mxu0 0.0
    %1956 = vmatpush1.msra.mxu0 %v1921
    %1957 = vmatprep.subr.mxu0 0.0
    %1958 = vmatpush1.msra.mxu0 %v1922
    %1959 = vmatprep.subr.mxu0 0.0
    %1960 = vmatpush1.msra.mxu0 %v1923
    %1961 = vmatprep.subr.mxu0 0.0
    %1962 = vmatpush1.msra.mxu0 %v1924
    %1963 = vmatprep.subr.mxu0 0.0
    %1964 = vmatpush1.msra.mxu0 %v1925
    %1965 = vmatprep.subr.mxu0 0.0
    %1966 = vmatpush1.msra.mxu0 %v1926
    %1967 = vmatprep.subr.mxu0 0.0
    %1968 = vmatpush1.msra.mxu0 %v1927
    %1969 = vmatprep.subr.mxu0 0.0
    %1970 = vmatpush1.msra.mxu0 %v1928
    %1971 = vmatprep.subr.mxu0 0.0
    %1972 = vmatpush1.msra.mxu0 %v1929
    %1973 = vmatprep.subr.mxu0 0.0
    %1974 = vmatpush1.msra.mxu0 %v1930
    %1975 = vmatprep.subr.mxu0 0.0
    %1976 = vmatpush1.msra.mxu0 %v1931
    %1977 = vmatprep.subr.mxu0 0.0
    %1978 = vmatpush1.msra.mxu0 %v1932
    %1979 = vmatprep.subr.mxu0 0.0
    %1980 = vmatpush1.msra.mxu0 %v1933
    %1981 = vmatprep.subr.mxu0 0.0
    %1982 = vmatpush1.msra.mxu0 %v1934
    %1983 = vmatprep.subr.mxu0 0.0
    %1984 = vmatpush1.msra.mxu0 %v1935
    %1985 = vmatprep.subr.mxu0 0.0
    %1986 = vmatpush1.msra.mxu0 %v1936
    %1987 = vmatprep.subr.mxu0 0.0
    %1988 = vmatpush1.msra.mxu0 %v1937
    %1989 = vmatprep.subr.mxu0 0.0
    %1990 = vmatpush1.msra.mxu0 %v1938
    %1991 = vmatprep.subr.mxu0 0.0
    %1992 = vmatpush1.msra.mxu0 %v1939
    %1993 = vmatprep.subr.mxu0 0.0
    %1994 = vmatpush1.msra.mxu0 %v1940
    %1995 = vmatprep.subr.mxu0 0.0
    %1996 = vmatpush1.msra.mxu0 %v1941
    %1997 = vmatprep.subr.mxu0 0.0
    %1998 = vmatpush1.msra.mxu0 %v1942
    %1999 = vmatprep.subr.mxu0 0.0
    %2000 = vmatpush1.msra.mxu0 %v1943
    %2001 = vmatprep.subr.mxu0 0.0
    %2002 = vmatpush1.msra.mxu0 %v1944
    %2003 = vmatprep.subr.mxu0 0.0
    %2004 = vmatpush1.msra.mxu0 0.0
    %2005 = vmatprep.subr.mxu0 0.0
    %2006 = vmatpush1.msra.mxu0 0.0
    %2007 = vmatprep.subr.mxu0 0.0
    %2008 = vmatpush1.msra.mxu0 0.0
    %2009 = vmatprep.subr.mxu0 0.0
    %2010 = vmatpush1.msra.mxu0 0.0
    %2011 = vmatprep.subr.mxu0 0.0
    %2012 = vmatpush1.msra.mxu0 0.0
    %2013 = vmatprep.subr.mxu0 0.0
    %2014 = vmatpush1.msra.mxu0 0.0
    %2015 = vmatprep.subr.mxu0 0.0
    %2016 = vmatpush1.msra.mxu0 0.0
    %2017 = vmatprep.subr.mxu0 0.0
    %2018 = vmatpush1.msra.mxu0 0.0
    %2019 = vmatprep.mubr.f32.mxu0 %v1953
    %2020 = vmatmul.mubr.f32.gmra.mrb[0].mxu0 %v1919
    %v2021 = vpop.f32.mrb[0].mxu0
    %v2022 = vadd.f32 %v1950, %v2021
    %v2023 = vpop.f32.mrb[0].mxu0
    %2024 = vdwg.mxu0
    %v2025 = vmax.f32 %v2022, 0.0
    %v2026 = vld [vmem:[%s5] sm:$0xff]
    %vm2027 = vcmask 7168
    %v2028 = vsel %vm2027, %v2026, 0.0
    %2029 = vadd.xlane.f32.xlu0 %v2028
    %v2030 = vpop.xlane.xlu0 %2029
    %v2031 = vrot.slane %v2030, 4
    %v2032 = vadd.f32 %v2030, %v2031
    %v2033 = vrot.slane %v2032, 2
    %v2034 = vadd.f32 %v2032, %v2033
    %v2035 = vrot.slane %v2034, 1
    %v2036 = vadd.f32 %v2034, %v2035
    %s2037 = vtos %v2036
    %v2038 = vstv %s2037
    %2040 = vset.pattern.permute.xlu0 0
    %2041 = vperm.xlu0 %2040, %v2026
    %v2042 = vpop.permute.xlu0 %2041
    %v2044 = vmul.f32 %v2025, %v2042
    %vm2045 = vcmask 785408
    %v2046 = vsel %vm2045, %v2044, 0.0
    %v2047 = vrot.slane %v2046, 4
    %v2048 = vadd.f32 %v2046, %v2047
    %v2049 = vrot.slane %v2048, 2
    %v2050 = vadd.f32 %v2048, %v2049
    %v2051 = vrot.slane %v2050, 1
    %v2052 = vadd.f32 %v2050, %v2051
    %v2053 = vrcp.pop %v2038
    %v2054 = vmul.f32 %v2052, %v2053
    %v2055 = vsub.f32 %v2025, %v2054
    %v2056 = vmul.f32 %v2055, %v2042
    %2057 = vxpose.xlu0.b32.start [1/16] %v2056, 128
    %2058 = vxpose.xlu0.b32.cont [2/16] 0.0, 128
    %2059 = vxpose.xlu0.b32.cont [3/16] 0.0, 128
    %2060 = vxpose.xlu0.b32.cont [4/16] 0.0, 128
    %2061 = vxpose.xlu0.b32.cont [5/16] 0.0, 128
    %2062 = vxpose.xlu0.b32.cont [6/16] 0.0, 128
    %2063 = vxpose.xlu0.b32.cont [7/16] 0.0, 128
    %2064 = vxpose.xlu0.b32.cont [8/16] 0.0, 128
    %2065 = vxpose.xlu0.b32.cont [9/16] 0.0, 128
    %2066 = vxpose.xlu0.b32.cont [10/16] 0.0, 128
    %2067 = vxpose.xlu0.b32.cont [11/16] 0.0, 128
    %2068 = vxpose.xlu0.b32.cont [12/16] 0.0, 128
    %2069 = vxpose.xlu0.b32.cont [13/16] 0.0, 128
    %2070 = vxpose.xlu0.b32.cont [14/16] 0.0, 128
    %2071 = vxpose.xlu0.b32.cont [15/16] 0.0, 128
    %2072 = vxpose.xlu0.b32.end [16/16] 0.0, 128
    %v2073 = vpop.trf.xlu0
    %v2074 = vpop.trf.xlu0
    %v2075 = vpop.trf.xlu0
    %v2076 = vpop.trf.xlu0
    %v2077 = vpop.trf.xlu0
    %v2078 = vpop.trf.xlu0
    %v2079 = vpop.trf.xlu0
    %v2080 = vpop.trf.xlu0
    %v2081 = vpop.trf.xlu0
    %v2082 = vpop.trf.xlu0
    %v2083 = vpop.trf.xlu0
    %v2084 = vpop.trf.xlu0
    %v2085 = vpop.trf.xlu0
    %v2086 = vpop.trf.xlu0
    %v2087 = vpop.trf.xlu0
    %v2088 = vpop.trf.xlu0
    %vm2089 = vcmask 64512
    %v2091 = vsel %vm2089, %v2073, 0
    %v2094 = vsel %vm2089, %v2074, 0
    %v2097 = vsel %vm2089, %v2075, 0
    %v2100 = vsel %vm2089, %v2076, 0
    %v2103 = vsel %vm2089, %v2077, 0
    %v2106 = vsel %vm2089, %v2078, 0
    %v2109 = vsel %vm2089, %v2079, 0
    %v2112 = vsel %vm2089, %v2080, 0
    %v2115 = vsel %vm2089, %v2081, 0
    %v2118 = vsel %vm2089, %v2082, 0
    %v2121 = vsel %vm2089, %v2083, 0
    %v2124 = vsel %vm2089, %v2084, 0
    %2126 = vmatprep.subr.mxu0 0.0
    %2127 = vmatpush1.msra.mxu0 %v2056
    %2128 = vmatprep.subr.mxu0 0.0
    %2129 = vmatpush1.msra.mxu0 0.0
    %2130 = vmatprep.subr.mxu0 0.0
    %2131 = vmatpush1.msra.mxu0 0.0
    %2132 = vmatprep.subr.mxu0 0.0
    %2133 = vmatpush1.msra.mxu0 0.0
    %2134 = vmatprep.subr.mxu0 0.0
    %2135 = vmatpush1.msra.mxu0 0.0
    %2136 = vmatprep.subr.mxu0 0.0
    %2137 = vmatpush1.msra.mxu0 0.0
    %2138 = vmatprep.subr.mxu0 0.0
    %2139 = vmatpush1.msra.mxu0 0.0
    %2140 = vmatprep.subr.mxu0 0.0
    %2141 = vmatpush1.msra.mxu0 0.0
    %2142 = vmatprep.subr.mxu0 0.0
    %2143 = vmatpush1.msra.mxu0 0.0
    %2144 = vmatprep.subr.mxu0 0.0
    %2145 = vmatpush1.msra.mxu0 0.0
    %2146 = vmatprep.subr.mxu0 0.0
    %2147 = vmatpush1.msra.mxu0 0.0
    %2148 = vmatprep.subr.mxu0 0.0
    %2149 = vmatpush1.msra.mxu0 0.0
    %2150 = vmatprep.subr.mxu0 0.0
    %2151 = vmatpush1.msra.mxu0 0.0
    %2152 = vmatprep.subr.mxu0 0.0
    %2153 = vmatpush1.msra.mxu0 0.0
    %2154 = vmatprep.subr.mxu0 0.0
    %2155 = vmatpush1.msra.mxu0 0.0
    %2156 = vmatprep.subr.mxu0 0.0
    %2157 = vmatpush1.msra.mxu0 0.0
    %2158 = vmatprep.subr.mxu0 0.0
    %2159 = vmatpush1.msra.mxu0 0.0
    %2160 = vmatprep.subr.mxu0 0.0
    %2161 = vmatpush1.msra.mxu0 0.0
    %2162 = vmatprep.subr.mxu0 0.0
    %2163 = vmatpush1.msra.mxu0 0.0
    %2164 = vmatprep.subr.mxu0 0.0
    %2165 = vmatpush1.msra.mxu0 0.0
    %2166 = vmatprep.subr.mxu0 0.0
    %2167 = vmatpush1.msra.mxu0 0.0
    %2168 = vmatprep.subr.mxu0 0.0
    %2169 = vmatpush1.msra.mxu0 0.0
    %2170 = vmatprep.subr.mxu0 0.0
    %2171 = vmatpush1.msra.mxu0 0.0
    %2172 = vmatprep.subr.mxu0 0.0
    %2173 = vmatpush1.msra.mxu0 0.0
    %2174 = vmatprep.subr.mxu0 0.0
    %2175 = vmatpush1.msra.mxu0 0.0
    %2176 = vmatprep.subr.mxu0 0.0
    %2177 = vmatpush1.msra.mxu0 0.0
    %2178 = vmatprep.subr.mxu0 0.0
    %2179 = vmatpush1.msra.mxu0 0.0
    %2180 = vmatprep.subr.mxu0 0.0
    %2181 = vmatpush1.msra.mxu0 0.0
    %2182 = vmatprep.subr.mxu0 0.0
    %2183 = vmatpush1.msra.mxu0 0.0
    %2184 = vmatprep.subr.mxu0 0.0
    %2185 = vmatpush1.msra.mxu0 0.0
    %2186 = vmatprep.subr.mxu0 0.0
    %2187 = vmatpush1.msra.mxu0 0.0
    %2188 = vmatprep.subr.mxu0 0.0
    %2189 = vmatpush1.msra.mxu0 0.0
    %2190 = vmatprep.mubr.f32.mxu0 0.0
    %2191 = vmatmul.mubr.f32.gmra.mrb[0].mxu0 %v2091
    %v2192 = vpop.f32.mrb[0].mxu0
    %v2193 = vadd.f32 0.0, %v2192
    %v2194 = vpop.f32.mrb[0].mxu0
    %2195 = vmatprep.mubr.f32.mxu0 0.0
    %2196 = vmatmul.mubr.f32.gmra.mrb[0].mxu0 %v2094
    %v2197 = vpop.f32.mrb[0].mxu0
    %v2198 = vadd.f32 0.0, %v2197
    %v2199 = vpop.f32.mrb[0].mxu0
    %2200 = vmatprep.mubr.f32.mxu0 0.0
    %2201 = vmatmul.mubr.f32.gmra.mrb[0].mxu0 %v2097
    %v2202 = vpop.f32.mrb[0].mxu0
    %v2203 = vadd.f32 0.0, %v2202
    %v2204 = vpop.f32.mrb[0].mxu0
    %2205 = vmatprep.mubr.f32.mxu0 0.0
    %2206 = vmatmul.mubr.f32.gmra.mrb[0].mxu0 %v2100
    %v2207 = vpop.f32.mrb[0].mxu0
    %v2208 = vadd.f32 0.0, %v2207
    %v2209 = vpop.f32.mrb[0].mxu0
    %2210 = vmatprep.mubr.f32.mxu0 0.0
    %2211 = vmatmul.mubr.f32.gmra.mrb[0].mxu0 %v2103
    %v2212 = vpop.f32.mrb[0].mxu0
    %v2213 = vadd.f32 0.0, %v2212
    %v2214 = vpop.f32.mrb[0].mxu0
    %2215 = vmatprep.mubr.f32.mxu0 0.0
    %2216 = vmatmul.mubr.f32.gmra.mrb[0].mxu0 %v2106
    %v2217 = vpop.f32.mrb[0].mxu0
    %v2218 = vadd.f32 0.0, %v2217
    %v2219 = vpop.f32.mrb[0].mxu0
    %2220 = vmatprep.mubr.f32.mxu0 0.0
    %2221 = vmatmul.mubr.f32.gmra.mrb[0].mxu0 %v2109
    %v2222 = vpop.f32.mrb[0].mxu0
    %v2223 = vadd.f32 0.0, %v2222
    %v2224 = vpop.f32.mrb[0].mxu0
    %2225 = vmatprep.mubr.f32.mxu0 0.0
    %2226 = vmatmul.mubr.f32.gmra.mrb[0].mxu0 %v2112
    %v2227 = vpop.f32.mrb[0].mxu0
    %v2228 = vadd.f32 0.0, %v2227
    %v2229 = vpop.f32.mrb[0].mxu0
    %2230 = vmatprep.mubr.f32.mxu0 0.0
    %2231 = vmatmul.mubr.f32.gmra.mrb[0].mxu0 %v2115
    %v2232 = vpop.f32.mrb[0].mxu0
    %v2233 = vadd.f32 0.0, %v2232
    %v2234 = vpop.f32.mrb[0].mxu0
    %2235 = vmatprep.mubr.f32.mxu0 0.0
    %2236 = vmatmul.mubr.f32.gmra.mrb[0].mxu0 %v2118
    %v2237 = vpop.f32.mrb[0].mxu0
    %v2238 = vadd.f32 0.0, %v2237
    %v2239 = vpop.f32.mrb[0].mxu0
    %2240 = vmatprep.mubr.f32.mxu0 0.0
    %2241 = vmatmul.mubr.f32.gmra.mrb[0].mxu0 %v2121
    %v2242 = vpop.f32.mrb[0].mxu0
    %v2243 = vadd.f32 0.0, %v2242
    %v2244 = vpop.f32.mrb[0].mxu0
    %2245 = vmatprep.mubr.f32.mxu0 0.0
    %2246 = vmatmul.mubr.f32.gmra.mrb[0].mxu0 %v2124
    %v2247 = vpop.f32.mrb[0].mxu0
    %v2248 = vadd.f32 0.0, %v2247
    %v2249 = vpop.f32.mrb[0].mxu0
    %2250 = vdwg.mxu0
    %v2251 = vsub.f32 %v2038, 1.0
    %v2252 = vrcp.pop %v2251
    %v2253 = vmul.f32 %v2193, %v2252
    %v2254 = vmul.f32 %v2198, %v2252
    %v2255 = vmul.f32 %v2203, %v2252
    %v2256 = vmul.f32 %v2208, %v2252
    %v2257 = vmul.f32 %v2213, %v2252
    %v2258 = vmul.f32 %v2218, %v2252
    %v2259 = vmul.f32 %v2223, %v2252
    %v2260 = vmul.f32 %v2228, %v2252
    %v2261 = vmul.f32 %v2233, %v2252
    %v2262 = vmul.f32 %v2238, %v2252
    %v2263 = vmul.f32 %v2243, %v2252
    %v2264 = vmul.f32 %v2248, %v2252
    %2266 = vrot.lane.b32.xlu0 %v2054, 96
    %v2267 = vpop.permute.xlu0 %2266
    %v2269 = vadd.f32 %v2054, %v2267
    %2270 = vrot.lane.b32.xlu0 %v2054, 64
    %v2271 = vpop.permute.xlu0 %2270
    %v2273 = vadd.f32 %v2269, %v2271
    %v2274 = vrcp.pop 3.0
    %v2275 = vmul.f32 %v2273, %v2274
    %2277 = vrot.lane.b32.xlu0 %v2275, 32
    %v2278 = vpop.permute.xlu0 %2277
    %2280 = vrot.lane.b32.xlu0 %v2275, 64
    %v2281 = vpop.permute.xlu0 %2280
    %v2283 = vsel %vm740, %v2275, %v2278
    %v2284 = vsel %vm1144, %v2283, %v2281
    %v2285 = vsub.f32 %v2054, %v2284
    %2286 = vxpose.xlu0.b32.start [1/16] %v2285, 128
    %2287 = vxpose.xlu0.b32.cont [2/16] 0.0, 128
    %2288 = vxpose.xlu0.b32.cont [3/16] 0.0, 128
    %2289 = vxpose.xlu0.b32.cont [4/16] 0.0, 128
    %2290 = vxpose.xlu0.b32.cont [5/16] 0.0, 128
    %2291 = vxpose.xlu0.b32.cont [6/16] 0.0, 128
    %2292 = vxpose.xlu0.b32.cont [7/16] 0.0, 128
    %2293 = vxpose.xlu0.b32.cont [8/16] 0.0, 128
    %2294 = vxpose.xlu0.b32.cont [9/16] 0.0, 128
    %2295 = vxpose.xlu0.b32.cont [10/16] 0.0, 128
    %2296 = vxpose.xlu0.b32.cont [11/16] 0.0, 128
    %2297 = vxpose.xlu0.b32.cont [12/16] 0.0, 128
    %2298 = vxpose.xlu0.b32.cont [13/16] 0.0, 128
    %2299 = vxpose.xlu0.b32.cont [14/16] 0.0, 128
    %2300 = vxpose.xlu0.b32.cont [15/16] 0.0, 128
    %2301 = vxpose.xlu0.b32.end [16/16] 0.0, 128
    %v2302 = vpop.trf.xlu0
    %v2303 = vpop.trf.xlu0
    %v2304 = vpop.trf.xlu0
    %v2305 = vpop.trf.xlu0
    %v2306 = vpop.trf.xlu0
    %v2307 = vpop.trf.xlu0
    %v2308 = vpop.trf.xlu0
    %v2309 = vpop.trf.xlu0
    %v2310 = vpop.trf.xlu0
    %v2311 = vpop.trf.xlu0
    %v2312 = vpop.trf.xlu0
    %v2313 = vpop.trf.xlu0
    %v2314 = vpop.trf.xlu0
    %v2315 = vpop.trf.xlu0
    %v2316 = vpop.trf.xlu0
    %v2317 = vpop.trf.xlu0
    %v2319 = vsel %vm2027, %v2302, 0
    %v2322 = vsel %vm2027, %v2303, 0
    %v2325 = vsel %vm2027, %v2304, 0
    %v2328 = vsel %vm2027, %v2305, 0
    %v2331 = vsel %vm2027, %v2306, 0
    %v2334 = vsel %vm2027, %v2307, 0
    %v2337 = vsel %vm2027, %v2308, 0
    %v2340 = vsel %vm2027, %v2309, 0
    %v2343 = vsel %vm2027, %v2310, 0
    %v2346 = vsel %vm2027, %v2311, 0
    %v2349 = vsel %vm2027, %v2312, 0
    %v2352 = vsel %vm2027, %v2313, 0
    %vm2354 = vcmask 1040384
    %v2356 = vsel %vm2354, %v2285, 0
    %2358 = vmatprep.subr.mxu0 0.0
    %2359 = vmatpush1.msra.mxu0 %v2356
    %2360 = vmatprep.subr.mxu0 0.0
    %2361 = vmatpush1.msra.mxu0 0.0
    %2362 = vmatprep.subr.mxu0 0.0
    %2363 = vmatpush1.msra.mxu0 0.0
    %2364 = vmatprep.subr.mxu0 0.0
    %2365 = vmatpush1.msra.mxu0 0.0
    %2366 = vmatprep.subr.mxu0 0.0
    %2367 = vmatpush1.msra.mxu0 0.0
    %2368 = vmatprep.subr.mxu0 0.0
    %2369 = vmatpush1.msra.mxu0 0.0
    %2370 = vmatprep.subr.mxu0 0.0
    %2371 = vmatpush1.msra.mxu0 0.0
    %2372 = vmatprep.subr.mxu0 0.0
    %2373 = vmatpush1.msra.mxu0 0.0
    %2374 = vmatprep.subr.mxu0 0.0
    %2375 = vmatpush1.msra.mxu0 0.0
    %2376 = vmatprep.subr.mxu0 0.0
    %2377 = vmatpush1.msra.mxu0 0.0
    %2378 = vmatprep.subr.mxu0 0.0
    %2379 = vmatpush1.msra.mxu0 0.0
    %2380 = vmatprep.subr.mxu0 0.0
    %2381 = vmatpush1.msra.mxu0 0.0
    %2382 = vmatprep.subr.mxu0 0.0
    %2383 = vmatpush1.msra.mxu0 0.0
    %2384 = vmatprep.subr.mxu0 0.0
    %2385 = vmatpush1.msra.mxu0 0.0
    %2386 = vmatprep.subr.mxu0 0.0
    %2387 = vmatpush1.msra.mxu0 0.0
    %2388 = vmatprep.subr.mxu0 0.0
    %2389 = vmatpush1.msra.mxu0 0.0
    %2390 = vmatprep.subr.mxu0 0.0
    %2391 = vmatpush1.msra.mxu0 0.0
    %2392 = vmatprep.subr.mxu0 0.0
    %2393 = vmatpush1.msra.mxu0 0.0
    %2394 = vmatprep.subr.mxu0 0.0
    %2395 = vmatpush1.msra.mxu0 0.0
    %2396 = vmatprep.subr.mxu0 0.0
    %2397 = vmatpush1.msra.mxu0 0.0
    %2398 = vmatprep.subr.mxu0 0.0
    %2399 = vmatpush1.msra.mxu0 0.0
    %2400 = vmatprep.subr.mxu0 0.0
    %2401 = vmatpush1.msra.mxu0 0.0
    %2402 = vmatprep.subr.mxu0 0.0
    %2403 = vmatpush1.msra.mxu0 0.0
    %2404 = vmatprep.subr.mxu0 0.0
    %2405 = vmatpush1.msra.mxu0 0.0
    %2406 = vmatprep.subr.mxu0 0.0
    %2407 = vmatpush1.msra.mxu0 0.0
    %2408 = vmatprep.subr.mxu0 0.0
    %2409 = vmatpush1.msra.mxu0 0.0
    %2410 = vmatprep.subr.mxu0 0.0
    %2411 = vmatpush1.msra.mxu0 0.0
    %2412 = vmatprep.subr.mxu0 0.0
    %2413 = vmatpush1.msra.mxu0 0.0
    %2414 = vmatprep.subr.mxu0 0.0
    %2415 = vmatpush1.msra.mxu0 0.0
    %2416 = vmatprep.subr.mxu0 0.0
    %2417 = vmatpush1.msra.mxu0 0.0
    %2418 = vmatprep.subr.mxu0 0.0
    %2419 = vmatpush1.msra.mxu0 0.0
    %2420 = vmatprep.subr.mxu0 0.0
    %2421 = vmatpush1.msra.mxu0 0.0
    %2422 = vmatprep.mubr.f32.mxu0 0.0
    %2423 = vmatmul.mubr.f32.gmra.mrb[0].mxu0 %v2319
    %v2424 = vpop.f32.mrb[0].mxu0
    %v2425 = vadd.f32 0.0, %v2424
    %v2426 = vpop.f32.mrb[0].mxu0
    %2427 = vmatprep.mubr.f32.mxu0 0.0
    %2428 = vmatmul.mubr.f32.gmra.mrb[0].mxu0 %v2322
    %v2429 = vpop.f32.mrb[0].mxu0
    %v2430 = vadd.f32 0.0, %v2429
    %v2431 = vpop.f32.mrb[0].mxu0
    %2432 = vmatprep.mubr.f32.mxu0 0.0
    %2433 = vmatmul.mubr.f32.gmra.mrb[0].mxu0 %v2325
    %v2434 = vpop.f32.mrb[0].mxu0
    %v2435 = vadd.f32 0.0, %v2434
    %v2436 = vpop.f32.mrb[0].mxu0
    %2437 = vmatprep.mubr.f32.mxu0 0.0
    %2438 = vmatmul.mubr.f32.gmra.mrb[0].mxu0 %v2328
    %v2439 = vpop.f32.mrb[0].mxu0
    %v2440 = vadd.f32 0.0, %v2439
    %v2441 = vpop.f32.mrb[0].mxu0
    %2442 = vmatprep.mubr.f32.mxu0 0.0
    %2443 = vmatmul.mubr.f32.gmra.mrb[0].mxu0 %v2331
    %v2444 = vpop.f32.mrb[0].mxu0
    %v2445 = vadd.f32 0.0, %v2444
    %v2446 = vpop.f32.mrb[0].mxu0
    %2447 = vmatprep.mubr.f32.mxu0 0.0
    %2448 = vmatmul.mubr.f32.gmra.mrb[0].mxu0 %v2334
    %v2449 = vpop.f32.mrb[0].mxu0
    %v2450 = vadd.f32 0.0, %v2449
    %v2451 = vpop.f32.mrb[0].mxu0
    %2452 = vmatprep.mubr.f32.mxu0 0.0
    %2453 = vmatmul.mubr.f32.gmra.mrb[0].mxu0 %v2337
    %v2454 = vpop.f32.mrb[0].mxu0
    %v2455 = vadd.f32 0.0, %v2454
    %v2456 = vpop.f32.mrb[0].mxu0
    %2457 = vmatprep.mubr.f32.mxu0 0.0
    %2458 = vmatmul.mubr.f32.gmra.mrb[0].mxu0 %v2340
    %v2459 = vpop.f32.mrb[0].mxu0
    %v2460 = vadd.f32 0.0, %v2459
    %v2461 = vpop.f32.mrb[0].mxu0
    %2462 = vmatprep.mubr.f32.mxu0 0.0
    %2463 = vmatmul.mubr.f32.gmra.mrb[0].mxu0 %v2343
    %v2464 = vpop.f32.mrb[0].mxu0
    %v2465 = vadd.f32 0.0, %v2464
    %v2466 = vpop.f32.mrb[0].mxu0
    %2467 = vmatprep.mubr.f32.mxu0 0.0
    %2468 = vmatmul.mubr.f32.gmra.mrb[0].mxu0 %v2346
    %v2469 = vpop.f32.mrb[0].mxu0
    %v2470 = vadd.f32 0.0, %v2469
    %v2471 = vpop.f32.mrb[0].mxu0
    %2472 = vmatprep.mubr.f32.mxu0 0.0
    %2473 = vmatmul.mubr.f32.gmra.mrb[0].mxu0 %v2349
    %v2474 = vpop.f32.mrb[0].mxu0
    %v2475 = vadd.f32 0.0, %v2474
    %v2476 = vpop.f32.mrb[0].mxu0
    %2477 = vmatprep.mubr.f32.mxu0 0.0
    %2478 = vmatmul.mubr.f32.gmra.mrb[0].mxu0 %v2352
    %v2479 = vpop.f32.mrb[0].mxu0
    %v2480 = vadd.f32 0.0, %v2479
    %v2481 = vpop.f32.mrb[0].mxu0
    %2482 = vdwg.mxu0
    %v2483 = vadd.f32 %v2253, %v2425
    %v2484 = vadd.f32 %v2254, %v2430
    %v2485 = vadd.f32 %v2255, %v2435
    %v2486 = vadd.f32 %v2256, %v2440
    %v2487 = vadd.f32 %v2257, %v2445
    %v2488 = vadd.f32 %v2258, %v2450
    %v2489 = vadd.f32 %v2259, %v2455
    %v2490 = vadd.f32 %v2260, %v2460
    %v2491 = vadd.f32 %v2261, %v2465
    %v2492 = vadd.f32 %v2262, %v2470
    %v2493 = vadd.f32 %v2263, %v2475
    %v2494 = vadd.f32 %v2264, %v2480
    %2499 = vrot.lane.b32.xlu0 %v2487, 96
    %v2500 = vpop.permute.xlu0 %2499
    %2501 = vrot.lane.b32.xlu0 %v2488, 96
    %v2502 = vpop.permute.xlu0 %2501
    %2503 = vrot.lane.b32.xlu0 %v2489, 96
    %v2504 = vpop.permute.xlu0 %2503
    %2505 = vrot.lane.b32.xlu0 %v2490, 96
    %v2506 = vpop.permute.xlu0 %2505
    %v2511 = vadd.f32 %v2483, %v2500
    %v2512 = vadd.f32 %v2484, %v2502
    %v2513 = vadd.f32 %v2485, %v2504
    %v2514 = vadd.f32 %v2486, %v2506
    %2519 = vrot.lane.b32.xlu0 %v2491, 64
    %v2520 = vpop.permute.xlu0 %2519
    %2521 = vrot.lane.b32.xlu0 %v2492, 64
    %v2522 = vpop.permute.xlu0 %2521
    %2523 = vrot.lane.b32.xlu0 %v2493, 64
    %v2524 = vpop.permute.xlu0 %2523
    %2525 = vrot.lane.b32.xlu0 %v2494, 64
    %v2526 = vpop.permute.xlu0 %2525
    %v2531 = vadd.f32 %v2511, %v2520
    %v2532 = vadd.f32 %v2512, %v2522
    %v2533 = vadd.f32 %v2513, %v2524
    %v2534 = vadd.f32 %v2514, %v2526
    %v2535 = vmul.f32 %v2531, %v2274
    %v2536 = vmul.f32 %v2532, %v2274
    %v2537 = vmul.f32 %v2533, %v2274
    %v2538 = vmul.f32 %v2534, %v2274
    %2539 = vrot.lane.b32.xlu0 %v2026, 127
    %v2540 = vpop.permute.xlu0 %2539
    %v2542 = vsel %vm2027, %v2540, 0.0
    %2543 = vadd.xlane.f32.xlu0 %v2542
    %v2544 = vpop.xlane.xlu0 %2543
    %v2545 = vrot.slane %v2544, 4
    %v2546 = vadd.f32 %v2544, %v2545
    %v2547 = vrot.slane %v2546, 2
    %v2548 = vadd.f32 %v2546, %v2547
    %v2549 = vrot.slane %v2548, 1
    %v2550 = vadd.f32 %v2548, %v2549
    %s2551 = vtos %v2550
    %v2552 = vstv %s2551
    %2553 = vset.pattern.permute.xlu0 1
    %2554 = vperm.xlu0 %2553, %v2026
    %v2555 = vpop.permute.xlu0 %2554
    %v2557 = vmul.f32 %v2025, %v2555
    %v2558 = vsel %vm2045, %v2557, 0.0
    %v2559 = vrot.slane %v2558, 4
    %v2560 = vadd.f32 %v2558, %v2559
    %v2561 = vrot.slane %v2560, 2
    %v2562 = vadd.f32 %v2560, %v2561
    %v2563 = vrot.slane %v2562, 1
    %v2564 = vadd.f32 %v2562, %v2563
    %v2565 = vrcp.pop %v2552
    %v2566 = vmul.f32 %v2564, %v2565
    %v2567 = vsub.f32 %v2025, %v2566
    %v2568 = vmul.f32 %v2567, %v2555
    %2569 = vxpose.xlu0.b32.start [1/16] %v2568, 128
    %2570 = vxpose.xlu0.b32.cont [2/16] 0.0, 128
    %2571 = vxpose.xlu0.b32.cont [3/16] 0.0, 128
    %2572 = vxpose.xlu0.b32.cont [4/16] 0.0, 128
    %2573 = vxpose.xlu0.b32.cont [5/16] 0.0, 128
    %2574 = vxpose.xlu0.b32.cont [6/16] 0.0, 128
    %2575 = vxpose.xlu0.b32.cont [7/16] 0.0, 128
    %2576 = vxpose.xlu0.b32.cont [8/16] 0.0, 128
    %2577 = vxpose.xlu0.b32.cont [9/16] 0.0, 128
    %2578 = vxpose.xlu0.b32.cont [10/16] 0.0, 128
    %2579 = vxpose.xlu0.b32.cont [11/16] 0.0, 128
    %2580 = vxpose.xlu0.b32.cont [12/16] 0.0, 128
    %2581 = vxpose.xlu0.b32.cont [13/16] 0.0, 128
    %2582 = vxpose.xlu0.b32.cont [14/16] 0.0, 128
    %2583 = vxpose.xlu0.b32.cont [15/16] 0.0, 128
    %2584 = vxpose.xlu0.b32.end [16/16] 0.0, 128
    %v2585 = vpop.trf.xlu0
    %v2586 = vpop.trf.xlu0
    %v2587 = vpop.trf.xlu0
    %v2588 = vpop.trf.xlu0
    %v2589 = vpop.trf.xlu0
    %v2590 = vpop.trf.xlu0
    %v2591 = vpop.trf.xlu0
    %v2592 = vpop.trf.xlu0
    %v2593 = vpop.trf.xlu0
    %v2594 = vpop.trf.xlu0
    %v2595 = vpop.trf.xlu0
    %v2596 = vpop.trf.xlu0
    %v2597 = vpop.trf.xlu0
    %v2598 = vpop.trf.xlu0
    %v2599 = vpop.trf.xlu0
    %v2600 = vpop.trf.xlu0
    %v2602 = vsel %vm2089, %v2585, 0
    %v2605 = vsel %vm2089, %v2586, 0
    %v2608 = vsel %vm2089, %v2587, 0
    %v2611 = vsel %vm2089, %v2588, 0
    %v2614 = vsel %vm2089, %v2589, 0
    %v2617 = vsel %vm2089, %v2590, 0
    %v2620 = vsel %vm2089, %v2591, 0
    %v2623 = vsel %vm2089, %v2592, 0
    %v2626 = vsel %vm2089, %v2593, 0
    %v2629 = vsel %vm2089, %v2594, 0
    %v2632 = vsel %vm2089, %v2595, 0
    %v2635 = vsel %vm2089, %v2596, 0
    %2637 = vmatprep.subr.mxu0 0.0
    %2638 = vmatpush1.msra.mxu0 %v2568
    %2639 = vmatprep.subr.mxu0 0.0
    %2640 = vmatpush1.msra.mxu0 0.0
    %2641 = vmatprep.subr.mxu0 0.0
    %2642 = vmatpush1.msra.mxu0 0.0
    %2643 = vmatprep.subr.mxu0 0.0
    %2644 = vmatpush1.msra.mxu0 0.0
    %2645 = vmatprep.subr.mxu0 0.0
    %2646 = vmatpush1.msra.mxu0 0.0
    %2647 = vmatprep.subr.mxu0 0.0
    %2648 = vmatpush1.msra.mxu0 0.0
    %2649 = vmatprep.subr.mxu0 0.0
    %2650 = vmatpush1.msra.mxu0 0.0
    %2651 = vmatprep.subr.mxu0 0.0
    %2652 = vmatpush1.msra.mxu0 0.0
    %2653 = vmatprep.subr.mxu0 0.0
    %2654 = vmatpush1.msra.mxu0 0.0
    %2655 = vmatprep.subr.mxu0 0.0
    %2656 = vmatpush1.msra.mxu0 0.0
    %2657 = vmatprep.subr.mxu0 0.0
    %2658 = vmatpush1.msra.mxu0 0.0
    %2659 = vmatprep.subr.mxu0 0.0
    %2660 = vmatpush1.msra.mxu0 0.0
    %2661 = vmatprep.subr.mxu0 0.0
    %2662 = vmatpush1.msra.mxu0 0.0
    %2663 = vmatprep.subr.mxu0 0.0
    %2664 = vmatpush1.msra.mxu0 0.0
    %2665 = vmatprep.subr.mxu0 0.0
    %2666 = vmatpush1.msra.mxu0 0.0
    %2667 = vmatprep.subr.mxu0 0.0
    %2668 = vmatpush1.msra.mxu0 0.0
    %2669 = vmatprep.subr.mxu0 0.0
    %2670 = vmatpush1.msra.mxu0 0.0
    %2671 = vmatprep.subr.mxu0 0.0
    %2672 = vmatpush1.msra.mxu0 0.0
    %2673 = vmatprep.subr.mxu0 0.0
    %2674 = vmatpush1.msra.mxu0 0.0
    %2675 = vmatprep.subr.mxu0 0.0
    %2676 = vmatpush1.msra.mxu0 0.0
    %2677 = vmatprep.subr.mxu0 0.0
    %2678 = vmatpush1.msra.mxu0 0.0
    %2679 = vmatprep.subr.mxu0 0.0
    %2680 = vmatpush1.msra.mxu0 0.0
    %2681 = vmatprep.subr.mxu0 0.0
    %2682 = vmatpush1.msra.mxu0 0.0
    %2683 = vmatprep.subr.mxu0 0.0
    %2684 = vmatpush1.msra.mxu0 0.0
    %2685 = vmatprep.subr.mxu0 0.0
    %2686 = vmatpush1.msra.mxu0 0.0
    %2687 = vmatprep.subr.mxu0 0.0
    %2688 = vmatpush1.msra.mxu0 0.0
    %2689 = vmatprep.subr.mxu0 0.0
    %2690 = vmatpush1.msra.mxu0 0.0
    %2691 = vmatprep.subr.mxu0 0.0
    %2692 = vmatpush1.msra.mxu0 0.0
    %2693 = vmatprep.subr.mxu0 0.0
    %2694 = vmatpush1.msra.mxu0 0.0
    %2695 = vmatprep.subr.mxu0 0.0
    %2696 = vmatpush1.msra.mxu0 0.0
    %2697 = vmatprep.subr.mxu0 0.0
    %2698 = vmatpush1.msra.mxu0 0.0
    %2699 = vmatprep.subr.mxu0 0.0
    %2700 = vmatpush1.msra.mxu0 0.0
    %2701 = vmatprep.mubr.f32.mxu0 0.0
    %2702 = vmatmul.mubr.f32.gmra.mrb[0].mxu0 %v2602
    %v2703 = vpop.f32.mrb[0].mxu0
    %v2704 = vadd.f32 0.0, %v2703
    %v2705 = vpop.f32.mrb[0].mxu0
    %2706 = vmatprep.mubr.f32.mxu0 0.0
    %2707 = vmatmul.mubr.f32.gmra.mrb[0].mxu0 %v2605
    %v2708 = vpop.f32.mrb[0].mxu0
    %v2709 = vadd.f32 0.0, %v2708
    %v2710 = vpop.f32.mrb[0].mxu0
    %2711 = vmatprep.mubr.f32.mxu0 0.0
    %2712 = vmatmul.mubr.f32.gmra.mrb[0].mxu0 %v2608
    %v2713 = vpop.f32.mrb[0].mxu0
    %v2714 = vadd.f32 0.0, %v2713
    %v2715 = vpop.f32.mrb[0].mxu0
    %2716 = vmatprep.mubr.f32.mxu0 0.0
    %2717 = vmatmul.mubr.f32.gmra.mrb[0].mxu0 %v2611
    %v2718 = vpop.f32.mrb[0].mxu0
    %v2719 = vadd.f32 0.0, %v2718
    %v2720 = vpop.f32.mrb[0].mxu0
    %2721 = vmatprep.mubr.f32.mxu0 0.0
    %2722 = vmatmul.mubr.f32.gmra.mrb[0].mxu0 %v2614
    %v2723 = vpop.f32.mrb[0].mxu0
    %v2724 = vadd.f32 0.0, %v2723
    %v2725 = vpop.f32.mrb[0].mxu0
    %2726 = vmatprep.mubr.f32.mxu0 0.0
    %2727 = vmatmul.mubr.f32.gmra.mrb[0].mxu0 %v2617
    %v2728 = vpop.f32.mrb[0].mxu0
    %v2729 = vadd.f32 0.0, %v2728
    %v2730 = vpop.f32.mrb[0].mxu0
    %2731 = vmatprep.mubr.f32.mxu0 0.0
    %2732 = vmatmul.mubr.f32.gmra.mrb[0].mxu0 %v2620
    %v2733 = vpop.f32.mrb[0].mxu0
    %v2734 = vadd.f32 0.0, %v2733
    %v2735 = vpop.f32.mrb[0].mxu0
    %2736 = vmatprep.mubr.f32.mxu0 0.0
    %2737 = vmatmul.mubr.f32.gmra.mrb[0].mxu0 %v2623
    %v2738 = vpop.f32.mrb[0].mxu0
    %v2739 = vadd.f32 0.0, %v2738
    %v2740 = vpop.f32.mrb[0].mxu0
    %2741 = vmatprep.mubr.f32.mxu0 0.0
    %2742 = vmatmul.mubr.f32.gmra.mrb[0].mxu0 %v2626
    %v2743 = vpop.f32.mrb[0].mxu0
    %v2744 = vadd.f32 0.0, %v2743
    %v2745 = vpop.f32.mrb[0].mxu0
    %2746 = vmatprep.mubr.f32.mxu0 0.0
    %2747 = vmatmul.mubr.f32.gmra.mrb[0].mxu0 %v2629
    %v2748 = vpop.f32.mrb[0].mxu0
    %v2749 = vadd.f32 0.0, %v2748
    %v2750 = vpop.f32.mrb[0].mxu0
    %2751 = vmatprep.mubr.f32.mxu0 0.0
    %2752 = vmatmul.mubr.f32.gmra.mrb[0].mxu0 %v2632
    %v2753 = vpop.f32.mrb[0].mxu0
    %v2754 = vadd.f32 0.0, %v2753
    %v2755 = vpop.f32.mrb[0].mxu0
    %2756 = vmatprep.mubr.f32.mxu0 0.0
    %2757 = vmatmul.mubr.f32.gmra.mrb[0].mxu0 %v2635
    %v2758 = vpop.f32.mrb[0].mxu0
    %v2759 = vadd.f32 0.0, %v2758
    %v2760 = vpop.f32.mrb[0].mxu0
    %2761 = vdwg.mxu0
    %v2762 = vsub.f32 %v2552, 1.0
    %v2763 = vrcp.pop %v2762
    %v2764 = vmul.f32 %v2704, %v2763
    %v2765 = vmul.f32 %v2709, %v2763
    %v2766 = vmul.f32 %v2714, %v2763
    %v2767 = vmul.f32 %v2719, %v2763
    %v2768 = vmul.f32 %v2724, %v2763
    %v2769 = vmul.f32 %v2729, %v2763
    %v2770 = vmul.f32 %v2734, %v2763
    %v2771 = vmul.f32 %v2739, %v2763
    %v2772 = vmul.f32 %v2744, %v2763
    %v2773 = vmul.f32 %v2749, %v2763
    %v2774 = vmul.f32 %v2754, %v2763
    %v2775 = vmul.f32 %v2759, %v2763
    %2777 = vrot.lane.b32.xlu0 %v2566, 96
    %v2778 = vpop.permute.xlu0 %2777
    %v2780 = vadd.f32 %v2566, %v2778
    %2781 = vrot.lane.b32.xlu0 %v2566, 64
    %v2782 = vpop.permute.xlu0 %2781
    %v2784 = vadd.f32 %v2780, %v2782
    %v2785 = vmul.f32 %v2784, %v2274
    %2787 = vrot.lane.b32.xlu0 %v2785, 32
    %v2788 = vpop.permute.xlu0 %2787
    %2790 = vrot.lane.b32.xlu0 %v2785, 64
    %v2791 = vpop.permute.xlu0 %2790
    %v2793 = vsel %vm740, %v2785, %v2788
    %v2794 = vsel %vm1144, %v2793, %v2791
    %v2795 = vsub.f32 %v2566, %v2794
    %2796 = vxpose.xlu0.b32.start [1/16] %v2795, 128
    %2797 = vxpose.xlu0.b32.cont [2/16] 0.0, 128
    %2798 = vxpose.xlu0.b32.cont [3/16] 0.0, 128
    %2799 = vxpose.xlu0.b32.cont [4/16] 0.0, 128
    %2800 = vxpose.xlu0.b32.cont [5/16] 0.0, 128
    %2801 = vxpose.xlu0.b32.cont [6/16] 0.0, 128
    %2802 = vxpose.xlu0.b32.cont [7/16] 0.0, 128
    %2803 = vxpose.xlu0.b32.cont [8/16] 0.0, 128
    %2804 = vxpose.xlu0.b32.cont [9/16] 0.0, 128
    %2805 = vxpose.xlu0.b32.cont [10/16] 0.0, 128
    %2806 = vxpose.xlu0.b32.cont [11/16] 0.0, 128
    %2807 = vxpose.xlu0.b32.cont [12/16] 0.0, 128
    %2808 = vxpose.xlu0.b32.cont [13/16] 0.0, 128
    %2809 = vxpose.xlu0.b32.cont [14/16] 0.0, 128
    %2810 = vxpose.xlu0.b32.cont [15/16] 0.0, 128
    %2811 = vxpose.xlu0.b32.end [16/16] 0.0, 128
    %v2812 = vpop.trf.xlu0
    %v2813 = vpop.trf.xlu0
    %v2814 = vpop.trf.xlu0
    %v2815 = vpop.trf.xlu0
    %v2816 = vpop.trf.xlu0
    %v2817 = vpop.trf.xlu0
    %v2818 = vpop.trf.xlu0
    %v2819 = vpop.trf.xlu0
    %v2820 = vpop.trf.xlu0
    %v2821 = vpop.trf.xlu0
    %v2822 = vpop.trf.xlu0
    %v2823 = vpop.trf.xlu0
    %v2824 = vpop.trf.xlu0
    %v2825 = vpop.trf.xlu0
    %v2826 = vpop.trf.xlu0
    %v2827 = vpop.trf.xlu0
    %v2829 = vsel %vm2027, %v2812, 0
    %v2832 = vsel %vm2027, %v2813, 0
    %v2835 = vsel %vm2027, %v2814, 0
    %v2838 = vsel %vm2027, %v2815, 0
    %v2841 = vsel %vm2027, %v2816, 0
    %v2844 = vsel %vm2027, %v2817, 0
    %v2847 = vsel %vm2027, %v2818, 0
    %v2850 = vsel %vm2027, %v2819, 0
    %v2853 = vsel %vm2027, %v2820, 0
    %v2856 = vsel %vm2027, %v2821, 0
    %v2859 = vsel %vm2027, %v2822, 0
    %v2862 = vsel %vm2027, %v2823, 0
    %v2865 = vsel %vm2354, %v2795, 0
    %2867 = vmatprep.subr.mxu0 0.0
    %2868 = vmatpush1.msra.mxu0 %v2865
    %2869 = vmatprep.subr.mxu0 0.0
    %2870 = vmatpush1.msra.mxu0 0.0
    %2871 = vmatprep.subr.mxu0 0.0
    %2872 = vmatpush1.msra.mxu0 0.0
    %2873 = vmatprep.subr.mxu0 0.0
    %2874 = vmatpush1.msra.mxu0 0.0
    %2875 = vmatprep.subr.mxu0 0.0
    %2876 = vmatpush1.msra.mxu0 0.0
    %2877 = vmatprep.subr.mxu0 0.0
    %2878 = vmatpush1.msra.mxu0 0.0
    %2879 = vmatprep.subr.mxu0 0.0
    %2880 = vmatpush1.msra.mxu0 0.0
    %2881 = vmatprep.subr.mxu0 0.0
    %2882 = vmatpush1.msra.mxu0 0.0
    %2883 = vmatprep.subr.mxu0 0.0
    %2884 = vmatpush1.msra.mxu0 0.0
    %2885 = vmatprep.subr.mxu0 0.0
    %2886 = vmatpush1.msra.mxu0 0.0
    %2887 = vmatprep.subr.mxu0 0.0
    %2888 = vmatpush1.msra.mxu0 0.0
    %2889 = vmatprep.subr.mxu0 0.0
    %2890 = vmatpush1.msra.mxu0 0.0
    %2891 = vmatprep.subr.mxu0 0.0
    %2892 = vmatpush1.msra.mxu0 0.0
    %2893 = vmatprep.subr.mxu0 0.0
    %2894 = vmatpush1.msra.mxu0 0.0
    %2895 = vmatprep.subr.mxu0 0.0
    %2896 = vmatpush1.msra.mxu0 0.0
    %2897 = vmatprep.subr.mxu0 0.0
    %2898 = vmatpush1.msra.mxu0 0.0
    %2899 = vmatprep.subr.mxu0 0.0
    %2900 = vmatpush1.msra.mxu0 0.0
    %2901 = vmatprep.subr.mxu0 0.0
    %2902 = vmatpush1.msra.mxu0 0.0
    %2903 = vmatprep.subr.mxu0 0.0
    %2904 = vmatpush1.msra.mxu0 0.0
    %2905 = vmatprep.subr.mxu0 0.0
    %2906 = vmatpush1.msra.mxu0 0.0
    %2907 = vmatprep.subr.mxu0 0.0
    %2908 = vmatpush1.msra.mxu0 0.0
    %2909 = vmatprep.subr.mxu0 0.0
    %2910 = vmatpush1.msra.mxu0 0.0
    %2911 = vmatprep.subr.mxu0 0.0
    %2912 = vmatpush1.msra.mxu0 0.0
    %2913 = vmatprep.subr.mxu0 0.0
    %2914 = vmatpush1.msra.mxu0 0.0
    %2915 = vmatprep.subr.mxu0 0.0
    %2916 = vmatpush1.msra.mxu0 0.0
    %2917 = vmatprep.subr.mxu0 0.0
    %2918 = vmatpush1.msra.mxu0 0.0
    %2919 = vmatprep.subr.mxu0 0.0
    %2920 = vmatpush1.msra.mxu0 0.0
    %2921 = vmatprep.subr.mxu0 0.0
    %2922 = vmatpush1.msra.mxu0 0.0
    %2923 = vmatprep.subr.mxu0 0.0
    %2924 = vmatpush1.msra.mxu0 0.0
    %2925 = vmatprep.subr.mxu0 0.0
    %2926 = vmatpush1.msra.mxu0 0.0
    %2927 = vmatprep.subr.mxu0 0.0
    %2928 = vmatpush1.msra.mxu0 0.0
    %2929 = vmatprep.subr.mxu0 0.0
    %2930 = vmatpush1.msra.mxu0 0.0
    %2931 = vmatprep.mubr.f32.mxu0 0.0
    %2932 = vmatmul.mubr.f32.gmra.mrb[0].mxu0 %v2829
    %v2933 = vpop.f32.mrb[0].mxu0
    %v2934 = vadd.f32 0.0, %v2933
    %v2935 = vpop.f32.mrb[0].mxu0
    %2936 = vmatprep.mubr.f32.mxu0 0.0
    %2937 = vmatmul.mubr.f32.gmra.mrb[0].mxu0 %v2832
    %v2938 = vpop.f32.mrb[0].mxu0
    %v2939 = vadd.f32 0.0, %v2938
    %v2940 = vpop.f32.mrb[0].mxu0
    %2941 = vmatprep.mubr.f32.mxu0 0.0
    %2942 = vmatmul.mubr.f32.gmra.mrb[0].mxu0 %v2835
    %v2943 = vpop.f32.mrb[0].mxu0
    %v2944 = vadd.f32 0.0, %v2943
    %v2945 = vpop.f32.mrb[0].mxu0
    %2946 = vmatprep.mubr.f32.mxu0 0.0
    %2947 = vmatmul.mubr.f32.gmra.mrb[0].mxu0 %v2838
    %v2948 = vpop.f32.mrb[0].mxu0
    %v2949 = vadd.f32 0.0, %v2948
    %v2950 = vpop.f32.mrb[0].mxu0
    %2951 = vmatprep.mubr.f32.mxu0 0.0
    %2952 = vmatmul.mubr.f32.gmra.mrb[0].mxu0 %v2841
    %v2953 = vpop.f32.mrb[0].mxu0
    %v2954 = vadd.f32 0.0, %v2953
    %v2955 = vpop.f32.mrb[0].mxu0
    %2956 = vmatprep.mubr.f32.mxu0 0.0
    %2957 = vmatmul.mubr.f32.gmra.mrb[0].mxu0 %v2844
    %v2958 = vpop.f32.mrb[0].mxu0
    %v2959 = vadd.f32 0.0, %v2958
    %v2960 = vpop.f32.mrb[0].mxu0
    %2961 = vmatprep.mubr.f32.mxu0 0.0
    %2962 = vmatmul.mubr.f32.gmra.mrb[0].mxu0 %v2847
    %v2963 = vpop.f32.mrb[0].mxu0
    %v2964 = vadd.f32 0.0, %v2963
    %v2965 = vpop.f32.mrb[0].mxu0
    %2966 = vmatprep.mubr.f32.mxu0 0.0
    %2967 = vmatmul.mubr.f32.gmra.mrb[0].mxu0 %v2850
    %v2968 = vpop.f32.mrb[0].mxu0
    %v2969 = vadd.f32 0.0, %v2968
    %v2970 = vpop.f32.mrb[0].mxu0
    %2971 = vmatprep.mubr.f32.mxu0 0.0
    %2972 = vmatmul.mubr.f32.gmra.mrb[0].mxu0 %v2853
    %v2973 = vpop.f32.mrb[0].mxu0
    %v2974 = vadd.f32 0.0, %v2973
    %v2975 = vpop.f32.mrb[0].mxu0
    %2976 = vmatprep.mubr.f32.mxu0 0.0
    %2977 = vmatmul.mubr.f32.gmra.mrb[0].mxu0 %v2856
    %v2978 = vpop.f32.mrb[0].mxu0
    %v2979 = vadd.f32 0.0, %v2978
    %v2980 = vpop.f32.mrb[0].mxu0
    %2981 = vmatprep.mubr.f32.mxu0 0.0
    %2982 = vmatmul.mubr.f32.gmra.mrb[0].mxu0 %v2859
    %v2983 = vpop.f32.mrb[0].mxu0
    %v2984 = vadd.f32 0.0, %v2983
    %v2985 = vpop.f32.mrb[0].mxu0
    %2986 = vmatprep.mubr.f32.mxu0 0.0
    %2987 = vmatmul.mubr.f32.gmra.mrb[0].mxu0 %v2862
    %v2988 = vpop.f32.mrb[0].mxu0
    %v2989 = vadd.f32 0.0, %v2988
    %v2990 = vpop.f32.mrb[0].mxu0
    %2991 = vdwg.mxu0
    %v2992 = vadd.f32 %v2764, %v2934
    %v2993 = vadd.f32 %v2765, %v2939
    %v2994 = vadd.f32 %v2766, %v2944
    %v2995 = vadd.f32 %v2767, %v2949
    %v2996 = vadd.f32 %v2768, %v2954
    %v2997 = vadd.f32 %v2769, %v2959
    %v2998 = vadd.f32 %v2770, %v2964
    %v2999 = vadd.f32 %v2771, %v2969
    %v3000 = vadd.f32 %v2772, %v2974
    %v3001 = vadd.f32 %v2773, %v2979
    %v3002 = vadd.f32 %v2774, %v2984
    %v3003 = vadd.f32 %v2775, %v2989
    %3008 = vrot.lane.b32.xlu0 %v2996, 96
    %v3009 = vpop.permute.xlu0 %3008
    %3010 = vrot.lane.b32.xlu0 %v2997, 96
    %v3011 = vpop.permute.xlu0 %3010
    %3012 = vrot.lane.b32.xlu0 %v2998, 96
    %v3013 = vpop.permute.xlu0 %3012
    %3014 = vrot.lane.b32.xlu0 %v2999, 96
    %v3015 = vpop.permute.xlu0 %3014
    %v3020 = vadd.f32 %v2992, %v3009
    %v3021 = vadd.f32 %v2993, %v3011
    %v3022 = vadd.f32 %v2994, %v3013
    %v3023 = vadd.f32 %v2995, %v3015
    %3028 = vrot.lane.b32.xlu0 %v3000, 64
    %v3029 = vpop.permute.xlu0 %3028
    %3030 = vrot.lane.b32.xlu0 %v3001, 64
    %v3031 = vpop.permute.xlu0 %3030
    %3032 = vrot.lane.b32.xlu0 %v3002, 64
    %v3033 = vpop.permute.xlu0 %3032
    %3034 = vrot.lane.b32.xlu0 %v3003, 64
    %v3035 = vpop.permute.xlu0 %3034
    %v3040 = vadd.f32 %v3020, %v3029
    %v3041 = vadd.f32 %v3021, %v3031
    %v3042 = vadd.f32 %v3022, %v3033
    %v3043 = vadd.f32 %v3023, %v3035
    %v3044 = vmul.f32 %v3040, %v2274
    %v3045 = vmul.f32 %v3041, %v2274
    %v3046 = vmul.f32 %v3042, %v2274
    %v3047 = vmul.f32 %v3043, %v2274
    %v3048 = vld [vmem:[%s7] sm:$0x1]
    %v3049 = vld [vmem:[%s7 + $0x1] sm:$0x1]
    %v3051 = vsel %vm740, %v3048, 0
    %v3054 = vsel %vm740, %v2535, 0
    %v3057 = vsel %vm740, %v2536, 0
    %v3060 = vsel %vm740, %v2537, 0
    %v3063 = vsel %vm740, %v2538, 0
    %3065 = vmatprep.subr.mxu0 0.0
    %3066 = vmatpush1.xpose.msra.mxu0 %v3054
    %3067 = vmatprep.subr.mxu0 0.0
    %3068 = vmatpush1.xpose.msra.mxu0 %v3057
    %3069 = vmatprep.subr.mxu0 0.0
    %3070 = vmatpush1.xpose.msra.mxu0 %v3060
    %3071 = vmatprep.subr.mxu0 0.0
    %3072 = vmatpush1.xpose.msra.mxu0 %v3063
    %3073 = vmatprep.subr.mxu0 0.0
    %3074 = vmatpush1.xpose.msra.mxu0 0.0
    %3075 = vmatprep.subr.mxu0 0.0
    %3076 = vmatpush1.xpose.msra.mxu0 0.0
    %3077 = vmatprep.subr.mxu0 0.0
    %3078 = vmatpush1.xpose.msra.mxu0 0.0
    %3079 = vmatprep.subr.mxu0 0.0
    %3080 = vmatpush1.xpose.msra.mxu0 0.0
    %3081 = vmatprep.subr.mxu0 0.0
    %3082 = vmatpush1.xpose.msra.mxu0 0.0
    %3083 = vmatprep.subr.mxu0 0.0
    %3084 = vmatpush1.xpose.msra.mxu0 0.0
    %3085 = vmatprep.subr.mxu0 0.0
    %3086 = vmatpush1.xpose.msra.mxu0 0.0
    %3087 = vmatprep.subr.mxu0 0.0
    %3088 = vmatpush1.xpose.msra.mxu0 0.0
    %3089 = vmatprep.subr.mxu0 0.0
    %3090 = vmatpush1.xpose.msra.mxu0 0.0
    %3091 = vmatprep.subr.mxu0 0.0
    %3092 = vmatpush1.xpose.msra.mxu0 0.0
    %3093 = vmatprep.subr.mxu0 0.0
    %3094 = vmatpush1.xpose.msra.mxu0 0.0
    %3095 = vmatprep.subr.mxu0 0.0
    %3096 = vmatpush1.xpose.msra.mxu0 0.0
    %3097 = vmatprep.subr.mxu0 0.0
    %3098 = vmatpush1.xpose.msra.mxu0 0.0
    %3099 = vmatprep.subr.mxu0 0.0
    %3100 = vmatpush1.xpose.msra.mxu0 0.0
    %3101 = vmatprep.subr.mxu0 0.0
    %3102 = vmatpush1.xpose.msra.mxu0 0.0
    %3103 = vmatprep.subr.mxu0 0.0
    %3104 = vmatpush1.xpose.msra.mxu0 0.0
    %3105 = vmatprep.subr.mxu0 0.0
    %3106 = vmatpush1.xpose.msra.mxu0 0.0
    %3107 = vmatprep.subr.mxu0 0.0
    %3108 = vmatpush1.xpose.msra.mxu0 0.0
    %3109 = vmatprep.subr.mxu0 0.0
    %3110 = vmatpush1.xpose.msra.mxu0 0.0
    %3111 = vmatprep.subr.mxu0 0.0
    %3112 = vmatpush1.xpose.msra.mxu0 0.0
    %3113 = vmatprep.subr.mxu0 0.0
    %3114 = vmatpush1.xpose.msra.mxu0 0.0
    %3115 = vmatprep.subr.mxu0 0.0
    %3116 = vmatpush1.xpose.msra.mxu0 0.0
    %3117 = vmatprep.subr.mxu0 0.0
    %3118 = vmatpush1.xpose.msra.mxu0 0.0
    %3119 = vmatprep.subr.mxu0 0.0
    %3120 = vmatpush1.xpose.msra.mxu0 0.0
    %3121 = vmatprep.subr.mxu0 0.0
    %3122 = vmatpush1.xpose.msra.mxu0 0.0
    %3123 = vmatprep.subr.mxu0 0.0
    %3124 = vmatpush1.xpose.msra.mxu0 0.0
    %3125 = vmatprep.subr.mxu0 0.0
    %3126 = vmatpush1.xpose.msra.mxu0 0.0
    %3127 = vmatprep.subr.mxu0 0.0
    %3128 = vmatpush1.xpose.msra.mxu0 0.0
    %3129 = vmatprep.mubr.f32.mxu0 0.0
    %3130 = vmatmul.mubr.f32.gmra.mrb[0].mxu0 %v3051
    %v3131 = vpop.f32.mrb[0].mxu0
    %v3132 = vadd.f32 0.0, %v3131
    %v3133 = vpop.f32.mrb[0].mxu0
    %3134 = vdwg.mxu0
    %v3135 = vadd.f32 %v2275, %v3132
    %v3137 = vsel %vm740, %v3049, 0
    %v3140 = vsel %vm740, %v3044, 0
    %v3143 = vsel %vm740, %v3045, 0
    %v3146 = vsel %vm740, %v3046, 0
    %v3149 = vsel %vm740, %v3047, 0
    %3151 = vmatprep.subr.mxu0 0.0
    %3152 = vmatpush1.xpose.msra.mxu0 %v3140
    %3153 = vmatprep.subr.mxu0 0.0
    %3154 = vmatpush1.xpose.msra.mxu0 %v3143
    %3155 = vmatprep.subr.mxu0 0.0
    %3156 = vmatpush1.xpose.msra.mxu0 %v3146
    %3157 = vmatprep.subr.mxu0 0.0
    %3158 = vmatpush1.xpose.msra.mxu0 %v3149
    %3159 = vmatprep.subr.mxu0 0.0
    %3160 = vmatpush1.xpose.msra.mxu0 0.0
    %3161 = vmatprep.subr.mxu0 0.0
    %3162 = vmatpush1.xpose.msra.mxu0 0.0
    %3163 = vmatprep.subr.mxu0 0.0
    %3164 = vmatpush1.xpose.msra.mxu0 0.0
    %3165 = vmatprep.subr.mxu0 0.0
    %3166 = vmatpush1.xpose.msra.mxu0 0.0
    %3167 = vmatprep.subr.mxu0 0.0
    %3168 = vmatpush1.xpose.msra.mxu0 0.0
    %3169 = vmatprep.subr.mxu0 0.0
    %3170 = vmatpush1.xpose.msra.mxu0 0.0
    %3171 = vmatprep.subr.mxu0 0.0
    %3172 = vmatpush1.xpose.msra.mxu0 0.0
    %3173 = vmatprep.subr.mxu0 0.0
    %3174 = vmatpush1.xpose.msra.mxu0 0.0
    %3175 = vmatprep.subr.mxu0 0.0
    %3176 = vmatpush1.xpose.msra.mxu0 0.0
    %3177 = vmatprep.subr.mxu0 0.0
    %3178 = vmatpush1.xpose.msra.mxu0 0.0
    %3179 = vmatprep.subr.mxu0 0.0
    %3180 = vmatpush1.xpose.msra.mxu0 0.0
    %3181 = vmatprep.subr.mxu0 0.0
    %3182 = vmatpush1.xpose.msra.mxu0 0.0
    %3183 = vmatprep.subr.mxu0 0.0
    %3184 = vmatpush1.xpose.msra.mxu0 0.0
    %3185 = vmatprep.subr.mxu0 0.0
    %3186 = vmatpush1.xpose.msra.mxu0 0.0
    %3187 = vmatprep.subr.mxu0 0.0
    %3188 = vmatpush1.xpose.msra.mxu0 0.0
    %3189 = vmatprep.subr.mxu0 0.0
    %3190 = vmatpush1.xpose.msra.mxu0 0.0
    %3191 = vmatprep.subr.mxu0 0.0
    %3192 = vmatpush1.xpose.msra.mxu0 0.0
    %3193 = vmatprep.subr.mxu0 0.0
    %3194 = vmatpush1.xpose.msra.mxu0 0.0
    %3195 = vmatprep.subr.mxu0 0.0
    %3196 = vmatpush1.xpose.msra.mxu0 0.0
    %3197 = vmatprep.subr.mxu0 0.0
    %3198 = vmatpush1.xpose.msra.mxu0 0.0
    %3199 = vmatprep.subr.mxu0 0.0
    %3200 = vmatpush1.xpose.msra.mxu0 0.0
    %3201 = vmatprep.subr.mxu0 0.0
    %3202 = vmatpush1.xpose.msra.mxu0 0.0
    %3203 = vmatprep.subr.mxu0 0.0
    %3204 = vmatpush1.xpose.msra.mxu0 0.0
    %3205 = vmatprep.subr.mxu0 0.0
    %3206 = vmatpush1.xpose.msra.mxu0 0.0
    %3207 = vmatprep.subr.mxu0 0.0
    %3208 = vmatpush1.xpose.msra.mxu0 0.0
    %3209 = vmatprep.subr.mxu0 0.0
    %3210 = vmatpush1.xpose.msra.mxu0 0.0
    %3211 = vmatprep.subr.mxu0 0.0
    %3212 = vmatpush1.xpose.msra.mxu0 0.0
    %3213 = vmatprep.subr.mxu0 0.0
    %3214 = vmatpush1.xpose.msra.mxu0 0.0
    %3215 = vmatprep.mubr.f32.mxu0 0.0
    %3216 = vmatmul.mubr.f32.gmra.mrb[0].mxu0 %v3137
    %v3217 = vpop.f32.mrb[0].mxu0
    %v3218 = vadd.f32 0.0, %v3217
    %v3219 = vpop.f32.mrb[0].mxu0
    %3220 = vdwg.mxu0
    %v3221 = vadd.f32 %v2785, %v3218
    %3223 = vrot.lane.b32.xlu0 %v3221, 32
    %v3224 = vpop.permute.xlu0 %3223
    %v3226 = vsel %vm740, %v3135, %v3224
    %v3227 = vld [vmem:[#allocation32] sm:$0xff]
    %v3228 = vld [vmem:[#allocation32 + $0x8] sm:$0xff]
    %v3229 = vld [vmem:[#allocation32 + $0x10] sm:$0xff]
    %v3230 = vld [vmem:[#allocation32 + $0x18] sm:$0xff]
    %v3231 = vld [vmem:[#allocation32 + $0x20] sm:$0xff]
    %v3232 = vld [vmem:[#allocation32 + $0x28] sm:$0xff]
    %v3233 = vld [vmem:[#allocation32 + $0x30] sm:$0xff]
    %v3234 = vld [vmem:[#allocation32 + $0x38] sm:$0xff]
    %v3235 = vld [vmem:[#allocation34] sm:$0x1]
    %v3237 = vsel %vm1144, %v3226, 0
    %3239 = vmatprep.subr.mxu0 0.0
    %3240 = vmatpush1.msra.mxu0 %v3227
    %3241 = vmatprep.subr.mxu0 0.0
    %3242 = vmatpush1.msra.mxu0 %v3228
    %3243 = vmatprep.subr.mxu0 0.0
    %3244 = vmatpush1.msra.mxu0 %v3229
    %3245 = vmatprep.subr.mxu0 0.0
    %3246 = vmatpush1.msra.mxu0 %v3230
    %3247 = vmatprep.subr.mxu0 0.0
    %3248 = vmatpush1.msra.mxu0 %v3231
    %3249 = vmatprep.subr.mxu0 0.0
    %3250 = vmatpush1.msra.mxu0 %v3232
    %3251 = vmatprep.subr.mxu0 0.0
    %3252 = vmatpush1.msra.mxu0 %v3233
    %3253 = vmatprep.subr.mxu0 0.0
    %3254 = vmatpush1.msra.mxu0 %v3234
    %3255 = vmatprep.subr.mxu0 0.0
    %3256 = vmatpush1.msra.mxu0 0.0
    %3257 = vmatprep.subr.mxu0 0.0
    %3258 = vmatpush1.msra.mxu0 0.0
    %3259 = vmatprep.subr.mxu0 0.0
    %3260 = vmatpush1.msra.mxu0 0.0
    %3261 = vmatprep.subr.mxu0 0.0
    %3262 = vmatpush1.msra.mxu0 0.0
    %3263 = vmatprep.subr.mxu0 0.0
    %3264 = vmatpush1.msra.mxu0 0.0
    %3265 = vmatprep.subr.mxu0 0.0
    %3266 = vmatpush1.msra.mxu0 0.0
    %3267 = vmatprep.subr.mxu0 0.0
    %3268 = vmatpush1.msra.mxu0 0.0
    %3269 = vmatprep.subr.mxu0 0.0
    %3270 = vmatpush1.msra.mxu0 0.0
    %3271 = vmatprep.subr.mxu0 0.0
    %3272 = vmatpush1.msra.mxu0 0.0
    %3273 = vmatprep.subr.mxu0 0.0
    %3274 = vmatpush1.msra.mxu0 0.0
    %3275 = vmatprep.subr.mxu0 0.0
    %3276 = vmatpush1.msra.mxu0 0.0
    %3277 = vmatprep.subr.mxu0 0.0
    %3278 = vmatpush1.msra.mxu0 0.0
    %3279 = vmatprep.subr.mxu0 0.0
    %3280 = vmatpush1.msra.mxu0 0.0
    %3281 = vmatprep.subr.mxu0 0.0
    %3282 = vmatpush1.msra.mxu0 0.0
    %3283 = vmatprep.subr.mxu0 0.0
    %3284 = vmatpush1.msra.mxu0 0.0
    %3285 = vmatprep.subr.mxu0 0.0
    %3286 = vmatpush1.msra.mxu0 0.0
    %3287 = vmatprep.subr.mxu0 0.0
    %3288 = vmatpush1.msra.mxu0 0.0
    %3289 = vmatprep.subr.mxu0 0.0
    %3290 = vmatpush1.msra.mxu0 0.0
    %3291 = vmatprep.subr.mxu0 0.0
    %3292 = vmatpush1.msra.mxu0 0.0
    %3293 = vmatprep.subr.mxu0 0.0
    %3294 = vmatpush1.msra.mxu0 0.0
    %3295 = vmatprep.subr.mxu0 0.0
    %3296 = vmatpush1.msra.mxu0 0.0
    %3297 = vmatprep.subr.mxu0 0.0
    %3298 = vmatpush1.msra.mxu0 0.0
    %3299 = vmatprep.subr.mxu0 0.0
    %3300 = vmatpush1.msra.mxu0 0.0
    %3301 = vmatprep.subr.mxu0 0.0
    %3302 = vmatpush1.msra.mxu0 0.0
    %3303 = vmatprep.mubr.f32.mxu0 0.0
    %3304 = vmatmul.mubr.f32.gmra.mrb[0].mxu0 %v3237
    %v3305 = vpop.f32.mrb[0].mxu0
    %v3306 = vadd.f32 %v3235, %v3305
    %v3307 = vpop.f32.mrb[0].mxu0
    %3308 = vdwg.mxu0
    %v3309 = vmax.f32 %v3306, 0.0
    %v3310 = vld [vmem:[%s63] sm:$0xff]
    %v3311 = vld [vmem:[%s63 + $0x8] sm:$0xff]
    %v3312 = vld [vmem:[%s63 + $0x10] sm:$0xff]
    %v3313 = vld [vmem:[%s63 + $0x18] sm:$0xff]
    %v3314 = vld [vmem:[%s63 + $0x20] sm:$0xff]
    %v3315 = vld [vmem:[%s63 + $0x28] sm:$0xff]
    %v3316 = vld [vmem:[%s63 + $0x30] sm:$0xff]
    %v3317 = vld [vmem:[%s63 + $0x38] sm:$0xff]
    %v3318 = vld [vmem:[#allocation35] sm:$0x1]
    %v3320 = vsel %vm1144, %v3309, 0
    %3322 = vmatprep.subr.mxu0 0.0
    %3323 = vmatpush1.msra.mxu0 %v3310
    %3324 = vmatprep.subr.mxu0 0.0
    %3325 = vmatpush1.msra.mxu0 %v3311
    %3326 = vmatprep.subr.mxu0 0.0
    %3327 = vmatpush1.msra.mxu0 %v3312
    %3328 = vmatprep.subr.mxu0 0.0
    %3329 = vmatpush1.msra.mxu0 %v3313
    %3330 = vmatprep.subr.mxu0 0.0
    %3331 = vmatpush1.msra.mxu0 %v3314
    %3332 = vmatprep.subr.mxu0 0.0
    %3333 = vmatpush1.msra.mxu0 %v3315
    %3334 = vmatprep.subr.mxu0 0.0
    %3335 = vmatpush1.msra.mxu0 %v3316
    %3336 = vmatprep.subr.mxu0 0.0
    %3337 = vmatpush1.msra.mxu0 %v3317
    %3338 = vmatprep.subr.mxu0 0.0
    %3339 = vmatpush1.msra.mxu0 0.0
    %3340 = vmatprep.subr.mxu0 0.0
    %3341 = vmatpush1.msra.mxu0 0.0
    %3342 = vmatprep.subr.mxu0 0.0
    %3343 = vmatpush1.msra.mxu0 0.0
    %3344 = vmatprep.subr.mxu0 0.0
    %3345 = vmatpush1.msra.mxu0 0.0
    %3346 = vmatprep.subr.mxu0 0.0
    %3347 = vmatpush1.msra.mxu0 0.0
    %3348 = vmatprep.subr.mxu0 0.0
    %3349 = vmatpush1.msra.mxu0 0.0
    %3350 = vmatprep.subr.mxu0 0.0
    %3351 = vmatpush1.msra.mxu0 0.0
    %3352 = vmatprep.subr.mxu0 0.0
    %3353 = vmatpush1.msra.mxu0 0.0
    %3354 = vmatprep.subr.mxu0 0.0
    %3355 = vmatpush1.msra.mxu0 0.0
    %3356 = vmatprep.subr.mxu0 0.0
    %3357 = vmatpush1.msra.mxu0 0.0
    %3358 = vmatprep.subr.mxu0 0.0
    %3359 = vmatpush1.msra.mxu0 0.0
    %3360 = vmatprep.subr.mxu0 0.0
    %3361 = vmatpush1.msra.mxu0 0.0
    %3362 = vmatprep.subr.mxu0 0.0
    %3363 = vmatpush1.msra.mxu0 0.0
    %3364 = vmatprep.subr.mxu0 0.0
    %3365 = vmatpush1.msra.mxu0 0.0
    %3366 = vmatprep.subr.mxu0 0.0
    %3367 = vmatpush1.msra.mxu0 0.0
    %3368 = vmatprep.subr.mxu0 0.0
    %3369 = vmatpush1.msra.mxu0 0.0
    %3370 = vmatprep.subr.mxu0 0.0
    %3371 = vmatpush1.msra.mxu0 0.0
    %3372 = vmatprep.subr.mxu0 0.0
    %3373 = vmatpush1.msra.mxu0 0.0
    %3374 = vmatprep.subr.mxu0 0.0
    %3375 = vmatpush1.msra.mxu0 0.0
    %3376 = vmatprep.subr.mxu0 0.0
    %3377 = vmatpush1.msra.mxu0 0.0
    %3378 = vmatprep.subr.mxu0 0.0
    %3379 = vmatpush1.msra.mxu0 0.0
    %3380 = vmatprep.subr.mxu0 0.0
    %3381 = vmatpush1.msra.mxu0 0.0
    %3382 = vmatprep.subr.mxu0 0.0
    %3383 = vmatpush1.msra.mxu0 0.0
    %3384 = vmatprep.subr.mxu0 0.0
    %3385 = vmatpush1.msra.mxu0 0.0
    %3386 = vmatprep.mubr.f32.mxu0 0.0
    %3387 = vmatmul.mubr.f32.gmra.mrb[0].mxu0 %v3320
    %v3388 = vpop.f32.mrb[0].mxu0
    %v3389 = vadd.f32 %v3318, %v3388
    %v3390 = vpop.f32.mrb[0].mxu0
    %3391 = vdwg.mxu0
    %v3392 = vmax.f32 %v3389, 0.0
    %v3393 = vld [vmem:[%s117] sm:$0xff]
    %v3394 = vld [vmem:[%s117 + $0x8] sm:$0xff]
    %vm3395 = vcmask 130048
    %v3397 = vsel %vm3395, %v3392, 0
    %3399 = vmatprep.subr.mxu0 0.0
    %3400 = vmatpush1.msra.mxu0 %v3393
    %3401 = vmatprep.subr.mxu0 0.0
    %3402 = vmatpush1.msra.mxu0 %v3394
    %3403 = vmatprep.subr.mxu0 0.0
    %3404 = vmatpush1.msra.mxu0 0.0
    %3405 = vmatprep.subr.mxu0 0.0
    %3406 = vmatpush1.msra.mxu0 0.0
    %3407 = vmatprep.subr.mxu0 0.0
    %3408 = vmatpush1.msra.mxu0 0.0
    %3409 = vmatprep.subr.mxu0 0.0
    %3410 = vmatpush1.msra.mxu0 0.0
    %3411 = vmatprep.subr.mxu0 0.0
    %3412 = vmatpush1.msra.mxu0 0.0
    %3413 = vmatprep.subr.mxu0 0.0
    %3414 = vmatpush1.msra.mxu0 0.0
    %3415 = vmatprep.subr.mxu0 0.0
    %3416 = vmatpush1.msra.mxu0 0.0
    %3417 = vmatprep.subr.mxu0 0.0
    %3418 = vmatpush1.msra.mxu0 0.0
    %3419 = vmatprep.subr.mxu0 0.0
    %3420 = vmatpush1.msra.mxu0 0.0
    %3421 = vmatprep.subr.mxu0 0.0
    %3422 = vmatpush1.msra.mxu0 0.0
    %3423 = vmatprep.subr.mxu0 0.0
    %3424 = vmatpush1.msra.mxu0 0.0
    %3425 = vmatprep.subr.mxu0 0.0
    %3426 = vmatpush1.msra.mxu0 0.0
    %3427 = vmatprep.subr.mxu0 0.0
    %3428 = vmatpush1.msra.mxu0 0.0
    %3429 = vmatprep.subr.mxu0 0.0
    %3430 = vmatpush1.msra.mxu0 0.0
    %3431 = vmatprep.subr.mxu0 0.0
    %3432 = vmatpush1.msra.mxu0 0.0
    %3433 = vmatprep.subr.mxu0 0.0
    %3434 = vmatpush1.msra.mxu0 0.0
    %3435 = vmatprep.subr.mxu0 0.0
    %3436 = vmatpush1.msra.mxu0 0.0
    %3437 = vmatprep.subr.mxu0 0.0
    %3438 = vmatpush1.msra.mxu0 0.0
    %3439 = vmatprep.subr.mxu0 0.0
    %3440 = vmatpush1.msra.mxu0 0.0
    %3441 = vmatprep.subr.mxu0 0.0
    %3442 = vmatpush1.msra.mxu0 0.0
    %3443 = vmatprep.subr.mxu0 0.0
    %3444 = vmatpush1.msra.mxu0 0.0
    %3445 = vmatprep.subr.mxu0 0.0
    %3446 = vmatpush1.msra.mxu0 0.0
    %3447 = vmatprep.subr.mxu0 0.0
    %3448 = vmatpush1.msra.mxu0 0.0
    %3449 = vmatprep.subr.mxu0 0.0
    %3450 = vmatpush1.msra.mxu0 0.0
    %3451 = vmatprep.subr.mxu0 0.0
    %3452 = vmatpush1.msra.mxu0 0.0
    %3453 = vmatprep.subr.mxu0 0.0
    %3454 = vmatpush1.msra.mxu0 0.0
    %3455 = vmatprep.subr.mxu0 0.0
    %3456 = vmatpush1.msra.mxu0 0.0
    %3457 = vmatprep.subr.mxu0 0.0
    %3458 = vmatpush1.msra.mxu0 0.0
    %3459 = vmatprep.subr.mxu0 0.0
    %3460 = vmatpush1.msra.mxu0 0.0
    %3461 = vmatprep.subr.mxu0 0.0
    %3462 = vmatpush1.msra.mxu0 0.0
    %3463 = vmatprep.mubr.f32.mxu0 0.0
    %3464 = vmatmul.mubr.f32.gmra.mrb[0].mxu0 %v3397
    %v3465 = vpop.f32.mrb[0].mxu0
    %v3466 = vadd.f32 0.0, %v3465
    %v3467 = vpop.f32.mrb[0].mxu0
    %3468 = vdwg.mxu0
    %v3469 = vld [vmem:[%s67] sm:$0xff]
    %v3470 = vld [vmem:[%s67 + $0x8] sm:$0xff]
    %v3471 = vld [vmem:[%s67 + $0x10] sm:$0xff]
    %v3472 = vld [vmem:[%s67 + $0x18] sm:$0xff]
    %v3473 = vld [vmem:[%s67 + $0x20] sm:$0xff]
    %v3474 = vld [vmem:[%s67 + $0x28] sm:$0xff]
    %v3475 = vld [vmem:[%s67 + $0x30] sm:$0xff]
    %v3476 = vld [vmem:[%s67 + $0x38] sm:$0xff]
    %v3477 = vld [vmem:[#allocation37] sm:$0x1]
    %v3479 = vlaneseq
    %v3480 = vshrl.u32 %v3479, 7
    %v3481 = vsub.s32 0, %v3480
    %v3482 = vrot.slane %v3477, %v3481
    %v3485 = vsel %vm1144, %v1783, 0
    %3487 = vmatprep.subr.mxu0 0.0
    %3488 = vmatpush1.msra.mxu0 %v3469
    %3489 = vmatprep.subr.mxu0 0.0
    %3490 = vmatpush1.msra.mxu0 %v3470
    %3491 = vmatprep.subr.mxu0 0.0
    %3492 = vmatpush1.msra.mxu0 %v3471
    %3493 = vmatprep.subr.mxu0 0.0
    %3494 = vmatpush1.msra.mxu0 %v3472
    %3495 = vmatprep.subr.mxu0 0.0
    %3496 = vmatpush1.msra.mxu0 %v3473
    %3497 = vmatprep.subr.mxu0 0.0
    %3498 = vmatpush1.msra.mxu0 %v3474
    %3499 = vmatprep.subr.mxu0 0.0
    %3500 = vmatpush1.msra.mxu0 %v3475
    %3501 = vmatprep.subr.mxu0 0.0
    %3502 = vmatpush1.msra.mxu0 %v3476
    %3503 = vmatprep.subr.mxu0 0.0
    %3504 = vmatpush1.msra.mxu0 0.0
    %3505 = vmatprep.subr.mxu0 0.0
    %3506 = vmatpush1.msra.mxu0 0.0
    %3507 = vmatprep.subr.mxu0 0.0
    %3508 = vmatpush1.msra.mxu0 0.0
    %3509 = vmatprep.subr.mxu0 0.0
    %3510 = vmatpush1.msra.mxu0 0.0
    %3511 = vmatprep.subr.mxu0 0.0
    %3512 = vmatpush1.msra.mxu0 0.0
    %3513 = vmatprep.subr.mxu0 0.0
    %3514 = vmatpush1.msra.mxu0 0.0
    %3515 = vmatprep.subr.mxu0 0.0
    %3516 = vmatpush1.msra.mxu0 0.0
    %3517 = vmatprep.subr.mxu0 0.0
    %3518 = vmatpush1.msra.mxu0 0.0
    %3519 = vmatprep.subr.mxu0 0.0
    %3520 = vmatpush1.msra.mxu0 0.0
    %3521 = vmatprep.subr.mxu0 0.0
    %3522 = vmatpush1.msra.mxu0 0.0
    %3523 = vmatprep.subr.mxu0 0.0
    %3524 = vmatpush1.msra.mxu0 0.0
    %3525 = vmatprep.subr.mxu0 0.0
    %3526 = vmatpush1.msra.mxu0 0.0
    %3527 = vmatprep.subr.mxu0 0.0
    %3528 = vmatpush1.msra.mxu0 0.0
    %3529 = vmatprep.subr.mxu0 0.0
    %3530 = vmatpush1.msra.mxu0 0.0
    %3531 = vmatprep.subr.mxu0 0.0
    %3532 = vmatpush1.msra.mxu0 0.0
    %3533 = vmatprep.subr.mxu0 0.0
    %3534 = vmatpush1.msra.mxu0 0.0
    %3535 = vmatprep.subr.mxu0 0.0
    %3536 = vmatpush1.msra.mxu0 0.0
    %3537 = vmatprep.subr.mxu0 0.0
    %3538 = vmatpush1.msra.mxu0 0.0
    %3539 = vmatprep.subr.mxu0 0.0
    %3540 = vmatpush1.msra.mxu0 0.0
    %3541 = vmatprep.subr.mxu0 0.0
    %3542 = vmatpush1.msra.mxu0 0.0
    %3543 = vmatprep.subr.mxu0 0.0
    %3544 = vmatpush1.msra.mxu0 0.0
    %3545 = vmatprep.subr.mxu0 0.0
    %3546 = vmatpush1.msra.mxu0 0.0
    %3547 = vmatprep.subr.mxu0 0.0
    %3548 = vmatpush1.msra.mxu0 0.0
    %3549 = vmatprep.subr.mxu0 0.0
    %3550 = vmatpush1.msra.mxu0 0.0
    %3551 = vmatprep.mubr.f32.mxu0 0.0
    %3552 = vmatmul.mubr.f32.gmra.mrb[0].mxu0 %v3485
    %v3553 = vpop.f32.mrb[0].mxu0
    %v3554 = vadd.f32 %v3482, %v3553
    %v3555 = vpop.f32.mrb[0].mxu0
    %3556 = vdwg.mxu0
    %v3557 = vmax.f32 %v3554, 0.0
    %v3558 = vld [vmem:[#allocation38] sm:$0xff]
    %v3559 = vld [vmem:[#allocation38 + $0x8] sm:$0xff]
    %v3560 = vld [vmem:[#allocation40] sm:$0x1]
    %v3562 = vlaneseq
    %v3563 = vshrl.u32 %v3562, 7
    %v3564 = vsub.s32 0, %v3563
    %v3565 = vrot.slane %v3560, %v3564
    %v3568 = vsel %vm3395, %v3557, 0
    %3570 = vmatprep.subr.mxu0 0.0
    %3571 = vmatpush1.msra.mxu0 %v3558
    %3572 = vmatprep.subr.mxu0 0.0
    %3573 = vmatpush1.msra.mxu0 %v3559
    %3574 = vmatprep.subr.mxu0 0.0
    %3575 = vmatpush1.msra.mxu0 0.0
    %3576 = vmatprep.subr.mxu0 0.0
    %3577 = vmatpush1.msra.mxu0 0.0
    %3578 = vmatprep.subr.mxu0 0.0
    %3579 = vmatpush1.msra.mxu0 0.0
    %3580 = vmatprep.subr.mxu0 0.0
    %3581 = vmatpush1.msra.mxu0 0.0
    %3582 = vmatprep.subr.mxu0 0.0
    %3583 = vmatpush1.msra.mxu0 0.0
    %3584 = vmatprep.subr.mxu0 0.0
    %3585 = vmatpush1.msra.mxu0 0.0
    %3586 = vmatprep.subr.mxu0 0.0
    %3587 = vmatpush1.msra.mxu0 0.0
    %3588 = vmatprep.subr.mxu0 0.0
    %3589 = vmatpush1.msra.mxu0 0.0
    %3590 = vmatprep.subr.mxu0 0.0
    %3591 = vmatpush1.msra.mxu0 0.0
    %3592 = vmatprep.subr.mxu0 0.0
    %3593 = vmatpush1.msra.mxu0 0.0
    %3594 = vmatprep.subr.mxu0 0.0
    %3595 = vmatpush1.msra.mxu0 0.0
    %3596 = vmatprep.subr.mxu0 0.0
    %3597 = vmatpush1.msra.mxu0 0.0
    %3598 = vmatprep.subr.mxu0 0.0
    %3599 = vmatpush1.msra.mxu0 0.0
    %3600 = vmatprep.subr.mxu0 0.0
    %3601 = vmatpush1.msra.mxu0 0.0
    %3602 = vmatprep.subr.mxu0 0.0
    %3603 = vmatpush1.msra.mxu0 0.0
    %3604 = vmatprep.subr.mxu0 0.0
    %3605 = vmatpush1.msra.mxu0 0.0
    %3606 = vmatprep.subr.mxu0 0.0
    %3607 = vmatpush1.msra.mxu0 0.0
    %3608 = vmatprep.subr.mxu0 0.0
    %3609 = vmatpush1.msra.mxu0 0.0
    %3610 = vmatprep.subr.mxu0 0.0
    %3611 = vmatpush1.msra.mxu0 0.0
    %3612 = vmatprep.subr.mxu0 0.0
    %3613 = vmatpush1.msra.mxu0 0.0
    %3614 = vmatprep.subr.mxu0 0.0
    %3615 = vmatpush1.msra.mxu0 0.0
    %3616 = vmatprep.subr.mxu0 0.0
    %3617 = vmatpush1.msra.mxu0 0.0
    %3618 = vmatprep.subr.mxu0 0.0
    %3619 = vmatpush1.msra.mxu0 0.0
    %3620 = vmatprep.subr.mxu0 0.0
    %3621 = vmatpush1.msra.mxu0 0.0
    %3622 = vmatprep.subr.mxu0 0.0
    %3623 = vmatpush1.msra.mxu0 0.0
    %3624 = vmatprep.subr.mxu0 0.0
    %3625 = vmatpush1.msra.mxu0 0.0
    %3626 = vmatprep.subr.mxu0 0.0
    %3627 = vmatpush1.msra.mxu0 0.0
    %3628 = vmatprep.subr.mxu0 0.0
    %3629 = vmatpush1.msra.mxu0 0.0
    %3630 = vmatprep.subr.mxu0 0.0
    %3631 = vmatpush1.msra.mxu0 0.0
    %3632 = vmatprep.subr.mxu0 0.0
    %3633 = vmatpush1.msra.mxu0 0.0
    %3634 = vmatprep.mubr.f32.mxu0 0.0
    %3635 = vmatmul.mubr.f32.gmra.mrb[0].mxu0 %v3568
    %v3636 = vpop.f32.mrb[0].mxu0
    %v3637 = vadd.f32 %v3565, %v3636
    %v3638 = vpop.f32.mrb[0].mxu0
    %3639 = vdwg.mxu0
    %v3640 = vld [vmem:[%s75] sm:$0xff]
    %v3641 = vld [vmem:[%s75 + $0x8] sm:$0xff]
    %v3642 = vld [vmem:[%s75 + $0x10] sm:$0xff]
    %v3643 = vld [vmem:[%s75 + $0x18] sm:$0xff]
    %v3644 = vld [vmem:[%s75 + $0x20] sm:$0xff]
    %v3645 = vld [vmem:[%s75 + $0x28] sm:$0xff]
    %v3646 = vld [vmem:[%s75 + $0x30] sm:$0xff]
    %v3647 = vld [vmem:[%s75 + $0x38] sm:$0xff]
    %v3648 = vld [vmem:[#allocation41] sm:$0x1]
    %v3650 = vlaneseq
    %v3651 = vshrl.u32 %v3650, 7
    %v3652 = vsub.s32 0, %v3651
    %v3653 = vrot.slane %v3648, %v3652
    %3655 = vmatprep.subr.mxu0 0.0
    %3656 = vmatpush1.msra.mxu0 %v3640
    %3657 = vmatprep.subr.mxu0 0.0
    %3658 = vmatpush1.msra.mxu0 %v3641
    %3659 = vmatprep.subr.mxu0 0.0
    %3660 = vmatpush1.msra.mxu0 %v3642
    %3661 = vmatprep.subr.mxu0 0.0
    %3662 = vmatpush1.msra.mxu0 %v3643
    %3663 = vmatprep.subr.mxu0 0.0
    %3664 = vmatpush1.msra.mxu0 %v3644
    %3665 = vmatprep.subr.mxu0 0.0
    %3666 = vmatpush1.msra.mxu0 %v3645
    %3667 = vmatprep.subr.mxu0 0.0
    %3668 = vmatpush1.msra.mxu0 %v3646
    %3669 = vmatprep.subr.mxu0 0.0
    %3670 = vmatpush1.msra.mxu0 %v3647
    %3671 = vmatprep.subr.mxu0 0.0
    %3672 = vmatpush1.msra.mxu0 0.0
    %3673 = vmatprep.subr.mxu0 0.0
    %3674 = vmatpush1.msra.mxu0 0.0
    %3675 = vmatprep.subr.mxu0 0.0
    %3676 = vmatpush1.msra.mxu0 0.0
    %3677 = vmatprep.subr.mxu0 0.0
    %3678 = vmatpush1.msra.mxu0 0.0
    %3679 = vmatprep.subr.mxu0 0.0
    %3680 = vmatpush1.msra.mxu0 0.0
    %3681 = vmatprep.subr.mxu0 0.0
    %3682 = vmatpush1.msra.mxu0 0.0
    %3683 = vmatprep.subr.mxu0 0.0
    %3684 = vmatpush1.msra.mxu0 0.0
    %3685 = vmatprep.subr.mxu0 0.0
    %3686 = vmatpush1.msra.mxu0 0.0
    %3687 = vmatprep.subr.mxu0 0.0
    %3688 = vmatpush1.msra.mxu0 0.0
    %3689 = vmatprep.subr.mxu0 0.0
    %3690 = vmatpush1.msra.mxu0 0.0
    %3691 = vmatprep.subr.mxu0 0.0
    %3692 = vmatpush1.msra.mxu0 0.0
    %3693 = vmatprep.subr.mxu0 0.0
    %3694 = vmatpush1.msra.mxu0 0.0
    %3695 = vmatprep.subr.mxu0 0.0
    %3696 = vmatpush1.msra.mxu0 0.0
    %3697 = vmatprep.subr.mxu0 0.0
    %3698 = vmatpush1.msra.mxu0 0.0
    %3699 = vmatprep.subr.mxu0 0.0
    %3700 = vmatpush1.msra.mxu0 0.0
    %3701 = vmatprep.subr.mxu0 0.0
    %3702 = vmatpush1.msra.mxu0 0.0
    %3703 = vmatprep.subr.mxu0 0.0
    %3704 = vmatpush1.msra.mxu0 0.0
    %3705 = vmatprep.subr.mxu0 0.0
    %3706 = vmatpush1.msra.mxu0 0.0
    %3707 = vmatprep.subr.mxu0 0.0
    %3708 = vmatpush1.msra.mxu0 0.0
    %3709 = vmatprep.subr.mxu0 0.0
    %3710 = vmatpush1.msra.mxu0 0.0
    %3711 = vmatprep.subr.mxu0 0.0
    %3712 = vmatpush1.msra.mxu0 0.0
    %3713 = vmatprep.subr.mxu0 0.0
    %3714 = vmatpush1.msra.mxu0 0.0
    %3715 = vmatprep.subr.mxu0 0.0
    %3716 = vmatpush1.msra.mxu0 0.0
    %3717 = vmatprep.subr.mxu0 0.0
    %3718 = vmatpush1.msra.mxu0 0.0
    %3719 = vmatprep.mubr.f32.mxu0 0.0
    %3720 = vmatmul.mubr.f32.gmra.mrb[0].mxu0 %v3485
    %v3721 = vpop.f32.mrb[0].mxu0
    %v3722 = vadd.f32 %v3653, %v3721
    %v3723 = vpop.f32.mrb[0].mxu0
    %3724 = vdwg.mxu0
    %v3725 = vmax.f32 %v3722, 0.0
    %v3726 = vld [vmem:[#allocation43] sm:$0xff]
    %v3727 = vld [vmem:[#allocation43 + $0x8] sm:$0xff]
    %v3728 = vld [vmem:[#allocation44] sm:$0x1]
    %v3730 = vlaneseq
    %v3731 = vshrl.u32 %v3730, 7
    %v3732 = vsub.s32 0, %v3731
    %v3733 = vrot.slane %v3728, %v3732
    %v3736 = vsel %vm3395, %v3725, 0
    %3738 = vmatprep.subr.mxu0 0.0
    %3739 = vmatpush1.msra.mxu0 %v3726
    %3740 = vmatprep.subr.mxu0 0.0
    %3741 = vmatpush1.msra.mxu0 %v3727
    %3742 = vmatprep.subr.mxu0 0.0
    %3743 = vmatpush1.msra.mxu0 0.0
    %3744 = vmatprep.subr.mxu0 0.0
    %3745 = vmatpush1.msra.mxu0 0.0
    %3746 = vmatprep.subr.mxu0 0.0
    %3747 = vmatpush1.msra.mxu0 0.0
    %3748 = vmatprep.subr.mxu0 0.0
    %3749 = vmatpush1.msra.mxu0 0.0
    %3750 = vmatprep.subr.mxu0 0.0
    %3751 = vmatpush1.msra.mxu0 0.0
    %3752 = vmatprep.subr.mxu0 0.0
    %3753 = vmatpush1.msra.mxu0 0.0
    %3754 = vmatprep.subr.mxu0 0.0
    %3755 = vmatpush1.msra.mxu0 0.0
    %3756 = vmatprep.subr.mxu0 0.0
    %3757 = vmatpush1.msra.mxu0 0.0
    %3758 = vmatprep.subr.mxu0 0.0
    %3759 = vmatpush1.msra.mxu0 0.0
    %3760 = vmatprep.subr.mxu0 0.0
    %3761 = vmatpush1.msra.mxu0 0.0
    %3762 = vmatprep.subr.mxu0 0.0
    %3763 = vmatpush1.msra.mxu0 0.0
    %3764 = vmatprep.subr.mxu0 0.0
    %3765 = vmatpush1.msra.mxu0 0.0
    %3766 = vmatprep.subr.mxu0 0.0
    %3767 = vmatpush1.msra.mxu0 0.0
    %3768 = vmatprep.subr.mxu0 0.0
    %3769 = vmatpush1.msra.mxu0 0.0
    %3770 = vmatprep.subr.mxu0 0.0
    %3771 = vmatpush1.msra.mxu0 0.0
    %3772 = vmatprep.subr.mxu0 0.0
    %3773 = vmatpush1.msra.mxu0 0.0
    %3774 = vmatprep.subr.mxu0 0.0
    %3775 = vmatpush1.msra.mxu0 0.0
    %3776 = vmatprep.subr.mxu0 0.0
    %3777 = vmatpush1.msra.mxu0 0.0
    %3778 = vmatprep.subr.mxu0 0.0
    %3779 = vmatpush1.msra.mxu0 0.0
    %3780 = vmatprep.subr.mxu0 0.0
    %3781 = vmatpush1.msra.mxu0 0.0
    %3782 = vmatprep.subr.mxu0 0.0
    %3783 = vmatpush1.msra.mxu0 0.0
    %3784 = vmatprep.subr.mxu0 0.0
    %3785 = vmatpush1.msra.mxu0 0.0
    %3786 = vmatprep.subr.mxu0 0.0
    %3787 = vmatpush1.msra.mxu0 0.0
    %3788 = vmatprep.subr.mxu0 0.0
    %3789 = vmatpush1.msra.mxu0 0.0
    %3790 = vmatprep.subr.mxu0 0.0
    %3791 = vmatpush1.msra.mxu0 0.0
    %3792 = vmatprep.subr.mxu0 0.0
    %3793 = vmatpush1.msra.mxu0 0.0
    %3794 = vmatprep.subr.mxu0 0.0
    %3795 = vmatpush1.msra.mxu0 0.0
    %3796 = vmatprep.subr.mxu0 0.0
    %3797 = vmatpush1.msra.mxu0 0.0
    %3798 = vmatprep.subr.mxu0 0.0
    %3799 = vmatpush1.msra.mxu0 0.0
    %3800 = vmatprep.subr.mxu0 0.0
    %3801 = vmatpush1.msra.mxu0 0.0
    %3802 = vmatprep.mubr.f32.mxu0 0.0
    %3803 = vmatmul.mubr.f32.gmra.mrb[0].mxu0 %v3736
    %v3804 = vpop.f32.mrb[0].mxu0
    %v3805 = vadd.f32 %v3733, %v3804
    %v3806 = vpop.f32.mrb[0].mxu0
    %3807 = vdwg.mxu0
    %v3808 = vld [vmem:[#allocation46] sm:$0xff]
    %v3809 = vld [vmem:[#allocation46 + $0x8] sm:$0xff]
    %v3810 = vld [vmem:[#allocation47] sm:$0x1]
    %v3812 = vlaneseq
    %v3813 = vshrl.u32 %v3812, 7
    %v3814 = vsub.s32 0, %v3813
    %v3815 = vrot.slane %v3810, %v3814
    %v3818 = vsel %vm3395, %v3805, 0
    %3820 = vmatprep.subr.mxu0 0.0
    %3821 = vmatpush1.msra.mxu0 %v3808
    %3822 = vmatprep.subr.mxu0 0.0
    %3823 = vmatpush1.msra.mxu0 %v3809
    %3824 = vmatprep.subr.mxu0 0.0
    %3825 = vmatpush1.msra.mxu0 0.0
    %3826 = vmatprep.subr.mxu0 0.0
    %3827 = vmatpush1.msra.mxu0 0.0
    %3828 = vmatprep.subr.mxu0 0.0
    %3829 = vmatpush1.msra.mxu0 0.0
    %3830 = vmatprep.subr.mxu0 0.0
    %3831 = vmatpush1.msra.mxu0 0.0
    %3832 = vmatprep.subr.mxu0 0.0
    %3833 = vmatpush1.msra.mxu0 0.0
    %3834 = vmatprep.subr.mxu0 0.0
    %3835 = vmatpush1.msra.mxu0 0.0
    %3836 = vmatprep.subr.mxu0 0.0
    %3837 = vmatpush1.msra.mxu0 0.0
    %3838 = vmatprep.subr.mxu0 0.0
    %3839 = vmatpush1.msra.mxu0 0.0
    %3840 = vmatprep.subr.mxu0 0.0
    %3841 = vmatpush1.msra.mxu0 0.0
    %3842 = vmatprep.subr.mxu0 0.0
    %3843 = vmatpush1.msra.mxu0 0.0
    %3844 = vmatprep.subr.mxu0 0.0
    %3845 = vmatpush1.msra.mxu0 0.0
    %3846 = vmatprep.subr.mxu0 0.0
    %3847 = vmatpush1.msra.mxu0 0.0
    %3848 = vmatprep.subr.mxu0 0.0
    %3849 = vmatpush1.msra.mxu0 0.0
    %3850 = vmatprep.subr.mxu0 0.0
    %3851 = vmatpush1.msra.mxu0 0.0
    %3852 = vmatprep.subr.mxu0 0.0
    %3853 = vmatpush1.msra.mxu0 0.0
    %3854 = vmatprep.subr.mxu0 0.0
    %3855 = vmatpush1.msra.mxu0 0.0
    %3856 = vmatprep.subr.mxu0 0.0
    %3857 = vmatpush1.msra.mxu0 0.0
    %3858 = vmatprep.subr.mxu0 0.0
    %3859 = vmatpush1.msra.mxu0 0.0
    %3860 = vmatprep.subr.mxu0 0.0
    %3861 = vmatpush1.msra.mxu0 0.0
    %3862 = vmatprep.subr.mxu0 0.0
    %3863 = vmatpush1.msra.mxu0 0.0
    %3864 = vmatprep.subr.mxu0 0.0
    %3865 = vmatpush1.msra.mxu0 0.0
    %3866 = vmatprep.subr.mxu0 0.0
    %3867 = vmatpush1.msra.mxu0 0.0
    %3868 = vmatprep.subr.mxu0 0.0
    %3869 = vmatpush1.msra.mxu0 0.0
    %3870 = vmatprep.subr.mxu0 0.0
    %3871 = vmatpush1.msra.mxu0 0.0
    %3872 = vmatprep.subr.mxu0 0.0
    %3873 = vmatpush1.msra.mxu0 0.0
    %3874 = vmatprep.subr.mxu0 0.0
    %3875 = vmatpush1.msra.mxu0 0.0
    %3876 = vmatprep.subr.mxu0 0.0
    %3877 = vmatpush1.msra.mxu0 0.0
    %3878 = vmatprep.subr.mxu0 0.0
    %3879 = vmatpush1.msra.mxu0 0.0
    %3880 = vmatprep.subr.mxu0 0.0
    %3881 = vmatpush1.msra.mxu0 0.0
    %3882 = vmatprep.subr.mxu0 0.0
    %3883 = vmatpush1.msra.mxu0 0.0
    %3884 = vmatprep.mubr.f32.mxu0 0.0
    %3885 = vmatmul.mubr.f32.gmra.mrb[0].mxu0 %v3818
    %v3886 = vpop.f32.mrb[0].mxu0
    %v3887 = vadd.f32 %v3815, %v3886
    %v3888 = vpop.f32.mrb[0].mxu0
    %3889 = vdwg.mxu0
    %v3890 = vld [vmem:[#allocation49] sm:$0xff]
    %v3891 = vld [vmem:[#allocation49 + $0x8] sm:$0xff]
    %v3892 = vld [vmem:[#allocation50] sm:$0x1]
    %v3894 = vlaneseq
    %v3895 = vshrl.u32 %v3894, 7
    %v3896 = vsub.s32 0, %v3895
    %v3897 = vrot.slane %v3892, %v3896
    %3899 = vmatprep.subr.mxu0 0.0
    %3900 = vmatpush1.msra.mxu0 %v3890
    %3901 = vmatprep.subr.mxu0 0.0
    %3902 = vmatpush1.msra.mxu0 %v3891
    %3903 = vmatprep.subr.mxu0 0.0
    %3904 = vmatpush1.msra.mxu0 0.0
    %3905 = vmatprep.subr.mxu0 0.0
    %3906 = vmatpush1.msra.mxu0 0.0
    %3907 = vmatprep.subr.mxu0 0.0
    %3908 = vmatpush1.msra.mxu0 0.0
    %3909 = vmatprep.subr.mxu0 0.0
    %3910 = vmatpush1.msra.mxu0 0.0
    %3911 = vmatprep.subr.mxu0 0.0
    %3912 = vmatpush1.msra.mxu0 0.0
    %3913 = vmatprep.subr.mxu0 0.0
    %3914 = vmatpush1.msra.mxu0 0.0
    %3915 = vmatprep.subr.mxu0 0.0
    %3916 = vmatpush1.msra.mxu0 0.0
    %3917 = vmatprep.subr.mxu0 0.0
    %3918 = vmatpush1.msra.mxu0 0.0
    %3919 = vmatprep.subr.mxu0 0.0
    %3920 = vmatpush1.msra.mxu0 0.0
    %3921 = vmatprep.subr.mxu0 0.0
    %3922 = vmatpush1.msra.mxu0 0.0
    %3923 = vmatprep.subr.mxu0 0.0
    %3924 = vmatpush1.msra.mxu0 0.0
    %3925 = vmatprep.subr.mxu0 0.0
    %3926 = vmatpush1.msra.mxu0 0.0
    %3927 = vmatprep.subr.mxu0 0.0
    %3928 = vmatpush1.msra.mxu0 0.0
    %3929 = vmatprep.subr.mxu0 0.0
    %3930 = vmatpush1.msra.mxu0 0.0
    %3931 = vmatprep.subr.mxu0 0.0
    %3932 = vmatpush1.msra.mxu0 0.0
    %3933 = vmatprep.subr.mxu0 0.0
    %3934 = vmatpush1.msra.mxu0 0.0
    %3935 = vmatprep.subr.mxu0 0.0
    %3936 = vmatpush1.msra.mxu0 0.0
    %3937 = vmatprep.subr.mxu0 0.0
    %3938 = vmatpush1.msra.mxu0 0.0
    %3939 = vmatprep.subr.mxu0 0.0
    %3940 = vmatpush1.msra.mxu0 0.0
    %3941 = vmatprep.subr.mxu0 0.0
    %3942 = vmatpush1.msra.mxu0 0.0
    %3943 = vmatprep.subr.mxu0 0.0
    %3944 = vmatpush1.msra.mxu0 0.0
    %3945 = vmatprep.subr.mxu0 0.0
    %3946 = vmatpush1.msra.mxu0 0.0
    %3947 = vmatprep.subr.mxu0 0.0
    %3948 = vmatpush1.msra.mxu0 0.0
    %3949 = vmatprep.subr.mxu0 0.0
    %3950 = vmatpush1.msra.mxu0 0.0
    %3951 = vmatprep.subr.mxu0 0.0
    %3952 = vmatpush1.msra.mxu0 0.0
    %3953 = vmatprep.subr.mxu0 0.0
    %3954 = vmatpush1.msra.mxu0 0.0
    %3955 = vmatprep.subr.mxu0 0.0
    %3956 = vmatpush1.msra.mxu0 0.0
    %3957 = vmatprep.subr.mxu0 0.0
    %3958 = vmatpush1.msra.mxu0 0.0
    %3959 = vmatprep.subr.mxu0 0.0
    %3960 = vmatpush1.msra.mxu0 0.0
    %3961 = vmatprep.subr.mxu0 0.0
    %3962 = vmatpush1.msra.mxu0 0.0
    %3963 = vmatprep.mubr.f32.mxu0 0.0
    %3964 = vmatmul.mubr.f32.gmra.mrb[0].mxu0 %v3818
    %v3965 = vpop.f32.mrb[0].mxu0
    %v3966 = vadd.f32 %v3897, %v3965
    %v3967 = vpop.f32.mrb[0].mxu0
    %3968 = vdwg.mxu0
    %v3969 = vld [vmem:[%s9] sm:$0xff]
    %v3970 = vmul.f32 %v3966, 0.5
    %v3971 = vmul.f32 %v3970, 1.442695
    %v3972 = vpow.pop %v3971
    %v3973 = vmul.f32 %v3969, %v3972
    %v3974 = vadd.f32 %v3887, %v3973
    %v3975 = vld [vmem:[#allocation52] sm:$0xff]
    %v3976 = vld [vmem:[#allocation52 + $0x8] sm:$0xff]
    %v3977 = vld [vmem:[#allocation53] sm:$0x1]
    %v3979 = vlaneseq
    %v3980 = vshrl.u32 %v3979, 7
    %v3981 = vsub.s32 0, %v3980
    %v3982 = vrot.slane %v3977, %v3981
    %v3985 = vsel %vm3395, %v3974, 0
    %3987 = vmatprep.subr.mxu0 0.0
    %3988 = vmatpush1.msra.mxu0 %v3975
    %3989 = vmatprep.subr.mxu0 0.0
    %3990 = vmatpush1.msra.mxu0 %v3976
    %3991 = vmatprep.subr.mxu0 0.0
    %3992 = vmatpush1.msra.mxu0 0.0
    %3993 = vmatprep.subr.mxu0 0.0
    %3994 = vmatpush1.msra.mxu0 0.0
    %3995 = vmatprep.subr.mxu0 0.0
    %3996 = vmatpush1.msra.mxu0 0.0
    %3997 = vmatprep.subr.mxu0 0.0
    %3998 = vmatpush1.msra.mxu0 0.0
    %3999 = vmatprep.subr.mxu0 0.0
    %4000 = vmatpush1.msra.mxu0 0.0
    %4001 = vmatprep.subr.mxu0 0.0
    %4002 = vmatpush1.msra.mxu0 0.0
    %4003 = vmatprep.subr.mxu0 0.0
    %4004 = vmatpush1.msra.mxu0 0.0
    %4005 = vmatprep.subr.mxu0 0.0
    %4006 = vmatpush1.msra.mxu0 0.0
    %4007 = vmatprep.subr.mxu0 0.0
    %4008 = vmatpush1.msra.mxu0 0.0
    %4009 = vmatprep.subr.mxu0 0.0
    %4010 = vmatpush1.msra.mxu0 0.0
    %4011 = vmatprep.subr.mxu0 0.0
    %4012 = vmatpush1.msra.mxu0 0.0
    %4013 = vmatprep.subr.mxu0 0.0
    %4014 = vmatpush1.msra.mxu0 0.0
    %4015 = vmatprep.subr.mxu0 0.0
    %4016 = vmatpush1.msra.mxu0 0.0
    %4017 = vmatprep.subr.mxu0 0.0
    %4018 = vmatpush1.msra.mxu0 0.0
    %4019 = vmatprep.subr.mxu0 0.0
    %4020 = vmatpush1.msra.mxu0 0.0
    %4021 = vmatprep.subr.mxu0 0.0
    %4022 = vmatpush1.msra.mxu0 0.0
    %4023 = vmatprep.subr.mxu0 0.0
    %4024 = vmatpush1.msra.mxu0 0.0
    %4025 = vmatprep.subr.mxu0 0.0
    %4026 = vmatpush1.msra.mxu0 0.0
    %4027 = vmatprep.subr.mxu0 0.0
    %4028 = vmatpush1.msra.mxu0 0.0
    %4029 = vmatprep.subr.mxu0 0.0
    %4030 = vmatpush1.msra.mxu0 0.0
    %4031 = vmatprep.subr.mxu0 0.0
    %4032 = vmatpush1.msra.mxu0 0.0
    %4033 = vmatprep.subr.mxu0 0.0
    %4034 = vmatpush1.msra.mxu0 0.0
    %4035 = vmatprep.subr.mxu0 0.0
    %4036 = vmatpush1.msra.mxu0 0.0
    %4037 = vmatprep.subr.mxu0 0.0
    %4038 = vmatpush1.msra.mxu0 0.0
    %4039 = vmatprep.subr.mxu0 0.0
    %4040 = vmatpush1.msra.mxu0 0.0
    %4041 = vmatprep.subr.mxu0 0.0
    %4042 = vmatpush1.msra.mxu0 0.0
    %4043 = vmatprep.subr.mxu0 0.0
    %4044 = vmatpush1.msra.mxu0 0.0
    %4045 = vmatprep.subr.mxu0 0.0
    %4046 = vmatpush1.msra.mxu0 0.0
    %4047 = vmatprep.subr.mxu0 0.0
    %4048 = vmatpush1.msra.mxu0 0.0
    %4049 = vmatprep.subr.mxu0 0.0
    %4050 = vmatpush1.msra.mxu0 0.0
    %4051 = vmatprep.mubr.f32.mxu0 0.0
    %4052 = vmatmul.mubr.f32.gmra.mrb[0].mxu0 %v3985
    %v4053 = vpop.f32.mrb[0].mxu0
    %v4054 = vadd.f32 %v3982, %v4053
    %v4055 = vpop.f32.mrb[0].mxu0
    %4056 = vdwg.mxu0
    %v4057 = vmax.f32 %v4054, 0.0
    %v4058 = vld [vmem:[%s95] sm:$0xff]
    %v4059 = vld [vmem:[%s95 + $0x8] sm:$0xff]
    %v4060 = vld [vmem:[%s95 + $0x10] sm:$0xff]
    %v4061 = vld [vmem:[%s95 + $0x18] sm:$0xff]
    %v4062 = vld [vmem:[%s95 + $0x20] sm:$0xff]
    %v4063 = vld [vmem:[%s95 + $0x28] sm:$0xff]
    %v4064 = vld [vmem:[%s95 + $0x30] sm:$0xff]
    %v4065 = vld [vmem:[%s95 + $0x38] sm:$0xff]
    %v4066 = vld [vmem:[%s95 + $0x40] sm:$0xff]
    %v4067 = vld [vmem:[%s95 + $0x48] sm:$0xff]
    %v4068 = vld [vmem:[%s95 + $0x50] sm:$0xff]
    %v4069 = vld [vmem:[%s95 + $0x58] sm:$0xff]
    %v4070 = vld [vmem:[%s95 + $0x60] sm:$0xff]
    %v4071 = vld [vmem:[%s95 + $0x68] sm:$0xff]
    %v4072 = vld [vmem:[%s95 + $0x70] sm:$0xff]
    %v4073 = vld [vmem:[%s95 + $0x78] sm:$0xff]
    %v4074 = vld [vmem:[%s97] sm:$0x1]
    %v4076 = vlaneseq
    %v4077 = vshrl.u32 %v4076, 7
    %v4078 = vsub.s32 0, %v4077
    %v4079 = vrot.slane %v4074, %v4078
    %4081 = vmatprep.subr.mxu0 0.0
    %4082 = vmatpush1.msra.mxu0 %v4058
    %4083 = vmatprep.subr.mxu0 0.0
    %4084 = vmatpush1.msra.mxu0 %v4059
    %4085 = vmatprep.subr.mxu0 0.0
    %4086 = vmatpush1.msra.mxu0 %v4060
    %4087 = vmatprep.subr.mxu0 0.0
    %4088 = vmatpush1.msra.mxu0 %v4061
    %4089 = vmatprep.subr.mxu0 0.0
    %4090 = vmatpush1.msra.mxu0 %v4062
    %4091 = vmatprep.subr.mxu0 0.0
    %4092 = vmatpush1.msra.mxu0 %v4063
    %4093 = vmatprep.subr.mxu0 0.0
    %4094 = vmatpush1.msra.mxu0 %v4064
    %4095 = vmatprep.subr.mxu0 0.0
    %4096 = vmatpush1.msra.mxu0 %v4065
    %4097 = vmatprep.subr.mxu0 0.0
    %4098 = vmatpush1.msra.mxu0 %v4066
    %4099 = vmatprep.subr.mxu0 0.0
    %4100 = vmatpush1.msra.mxu0 %v4067
    %4101 = vmatprep.subr.mxu0 0.0
    %4102 = vmatpush1.msra.mxu0 %v4068
    %4103 = vmatprep.subr.mxu0 0.0
    %4104 = vmatpush1.msra.mxu0 %v4069
    %4105 = vmatprep.subr.mxu0 0.0
    %4106 = vmatpush1.msra.mxu0 %v4070
    %4107 = vmatprep.subr.mxu0 0.0
    %4108 = vmatpush1.msra.mxu0 %v4071
    %4109 = vmatprep.subr.mxu0 0.0
    %4110 = vmatpush1.msra.mxu0 %v4072
    %4111 = vmatprep.subr.mxu0 0.0
    %4112 = vmatpush1.msra.mxu0 %v4073
    %4113 = vmatprep.subr.mxu0 0.0
    %4114 = vmatpush1.msra.mxu0 0.0
    %4115 = vmatprep.subr.mxu0 0.0
    %4116 = vmatpush1.msra.mxu0 0.0
    %4117 = vmatprep.subr.mxu0 0.0
    %4118 = vmatpush1.msra.mxu0 0.0
    %4119 = vmatprep.subr.mxu0 0.0
    %4120 = vmatpush1.msra.mxu0 0.0
    %4121 = vmatprep.subr.mxu0 0.0
    %4122 = vmatpush1.msra.mxu0 0.0
    %4123 = vmatprep.subr.mxu0 0.0
    %4124 = vmatpush1.msra.mxu0 0.0
    %4125 = vmatprep.subr.mxu0 0.0
    %4126 = vmatpush1.msra.mxu0 0.0
    %4127 = vmatprep.subr.mxu0 0.0
    %4128 = vmatpush1.msra.mxu0 0.0
    %4129 = vmatprep.subr.mxu0 0.0
    %4130 = vmatpush1.msra.mxu0 0.0
    %4131 = vmatprep.subr.mxu0 0.0
    %4132 = vmatpush1.msra.mxu0 0.0
    %4133 = vmatprep.subr.mxu0 0.0
    %4134 = vmatpush1.msra.mxu0 0.0
    %4135 = vmatprep.subr.mxu0 0.0
    %4136 = vmatpush1.msra.mxu0 0.0
    %4137 = vmatprep.subr.mxu0 0.0
    %4138 = vmatpush1.msra.mxu0 0.0
    %4139 = vmatprep.subr.mxu0 0.0
    %4140 = vmatpush1.msra.mxu0 0.0
    %4141 = vmatprep.subr.mxu0 0.0
    %4142 = vmatpush1.msra.mxu0 0.0
    %4143 = vmatprep.subr.mxu0 0.0
    %4144 = vmatpush1.msra.mxu0 0.0
    %4145 = vmatprep.mubr.f32.mxu0 0.0
    %4146 = vmatmul.mubr.f32.gmra.mrb[0].mxu0 %v4057
    %v4147 = vpop.f32.mrb[0].mxu0
    %v4148 = vadd.f32 %v4079, %v4147
    %v4149 = vpop.f32.mrb[0].mxu0
    %4150 = vdwg.mxu0
    %v4151 = vsub.f32 0.0, %v3966
    %v4152 = vmul.f32 %v3966, 1.442695
    %v4153 = vpow.pop %v4152
    %v4154 = vadd.f32 %v4151, %v4153
    %v4155 = vmul.f32 %v3887, %v3887
    %v4156 = vadd.f32 %v4154, %v4155
    %v4157 = vsub.f32 %v4156, 1.0
    %v4158 = vmul.f32 %v4157, 0.5
    %v4159 = vld [vmem:[#allocation58] sm:$0xff]
    %v4160 = vld [vmem:[#allocation58 + $0x8] sm:$0xff]
    %v4161 = vld [vmem:[#allocation58 + $0x10] sm:$0xff]
    %v4162 = vld [vmem:[#allocation58 + $0x18] sm:$0xff]
    %v4163 = vld [vmem:[#allocation58 + $0x20] sm:$0xff]
    %v4164 = vld [vmem:[#allocation58 + $0x28] sm:$0xff]
    %v4165 = vld [vmem:[#allocation58 + $0x30] sm:$0xff]
    %v4166 = vld [vmem:[#allocation58 + $0x38] sm:$0xff]
    %v4167 = vlaneseq
    %v4168 = vshrl.u32 %v4167, 7
    %v4169 = vsub.s32 0, %v4168
    %v4170 = vrot.slane %v3466, %v4169
    %v4172 = vsel %vm1144, %v3637, 0
    %4174 = vmatprep.subr.mxu0 0.0
    %4175 = vmatpush1.msra.mxu0 %v4159
    %4176 = vmatprep.subr.mxu0 0.0
    %4177 = vmatpush1.msra.mxu0 %v4160
    %4178 = vmatprep.subr.mxu0 0.0
    %4179 = vmatpush1.msra.mxu0 %v4161
    %4180 = vmatprep.subr.mxu0 0.0
    %4181 = vmatpush1.msra.mxu0 %v4162
    %4182 = vmatprep.subr.mxu0 0.0
    %4183 = vmatpush1.msra.mxu0 %v4163
    %4184 = vmatprep.subr.mxu0 0.0
    %4185 = vmatpush1.msra.mxu0 %v4164
    %4186 = vmatprep.subr.mxu0 0.0
    %4187 = vmatpush1.msra.mxu0 %v4165
    %4188 = vmatprep.subr.mxu0 0.0
    %4189 = vmatpush1.msra.mxu0 %v4166
    %4190 = vmatprep.subr.mxu0 0.0
    %4191 = vmatpush1.msra.mxu0 0.0
    %4192 = vmatprep.subr.mxu0 0.0
    %4193 = vmatpush1.msra.mxu0 0.0
    %4194 = vmatprep.subr.mxu0 0.0
    %4195 = vmatpush1.msra.mxu0 0.0
    %4196 = vmatprep.subr.mxu0 0.0
    %4197 = vmatpush1.msra.mxu0 0.0
    %4198 = vmatprep.subr.mxu0 0.0
    %4199 = vmatpush1.msra.mxu0 0.0
    %4200 = vmatprep.subr.mxu0 0.0
    %4201 = vmatpush1.msra.mxu0 0.0
    %4202 = vmatprep.subr.mxu0 0.0
    %4203 = vmatpush1.msra.mxu0 0.0
    %4204 = vmatprep.subr.mxu0 0.0
    %4205 = vmatpush1.msra.mxu0 0.0
    %4206 = vmatprep.subr.mxu0 0.0
    %4207 = vmatpush1.msra.mxu0 0.0
    %4208 = vmatprep.subr.mxu0 0.0
    %4209 = vmatpush1.msra.mxu0 0.0
    %4210 = vmatprep.subr.mxu0 0.0
    %4211 = vmatpush1.msra.mxu0 0.0
    %4212 = vmatprep.subr.mxu0 0.0
    %4213 = vmatpush1.msra.mxu0 0.0
    %4214 = vmatprep.subr.mxu0 0.0
    %4215 = vmatpush1.msra.mxu0 0.0
    %4216 = vmatprep.subr.mxu0 0.0
    %4217 = vmatpush1.msra.mxu0 0.0
    %4218 = vmatprep.subr.mxu0 0.0
    %4219 = vmatpush1.msra.mxu0 0.0
    %4220 = vmatprep.subr.mxu0 0.0
    %4221 = vmatpush1.msra.mxu0 0.0
    %4222 = vmatprep.subr.mxu0 0.0
    %4223 = vmatpush1.msra.mxu0 0.0
    %4224 = vmatprep.subr.mxu0 0.0
    %4225 = vmatpush1.msra.mxu0 0.0
    %4226 = vmatprep.subr.mxu0 0.0
    %4227 = vmatpush1.msra.mxu0 0.0
    %4228 = vmatprep.subr.mxu0 0.0
    %4229 = vmatpush1.msra.mxu0 0.0
    %4230 = vmatprep.subr.mxu0 0.0
    %4231 = vmatpush1.msra.mxu0 0.0
    %4232 = vmatprep.subr.mxu0 0.0
    %4233 = vmatpush1.msra.mxu0 0.0
    %4234 = vmatprep.subr.mxu0 0.0
    %4235 = vmatpush1.msra.mxu0 0.0
    %4236 = vmatprep.subr.mxu0 0.0
    %4237 = vmatpush1.msra.mxu0 0.0
    %4238 = vmatprep.mubr.f32.mxu0 0.0
    %4239 = vmatmul.mubr.f32.gmra.mrb[0].mxu0 %v4172
    %v4240 = vpop.f32.mrb[0].mxu0
    %v4241 = vadd.f32 %v4170, %v4240
    %v4242 = vpop.f32.mrb[0].mxu0
    %4243 = vdwg.mxu0
    %v4244 = vld [vmem:[%s119] sm:$0x1]
    %v4246 = vlaneseq
    %v4247 = vshrl.u32 %v4246, 7
    %v4248 = vsub.s32 0, %v4247
    %v4249 = vrot.slane %v4244, %v4248
    %v4251 = vadd.f32 %v4241, %v4249
    %v4252 = vmax.f32 %v4251, 0.0
    %v4253 = vld [vmem:[%s121] sm:$0xff]
    %v4254 = vld [vmem:[%s121 + $0x8] sm:$0xff]
    %v4255 = vld [vmem:[%s121 + $0x10] sm:$0xff]
    %v4256 = vld [vmem:[%s121 + $0x18] sm:$0xff]
    %v4257 = vld [vmem:[%s121 + $0x20] sm:$0xff]
    %v4258 = vld [vmem:[%s121 + $0x28] sm:$0xff]
    %v4259 = vld [vmem:[%s121 + $0x30] sm:$0xff]
    %v4260 = vld [vmem:[%s121 + $0x38] sm:$0xff]
    %v4261 = vld [vmem:[%s123] sm:$0x1]
    %v4263 = vlaneseq
    %v4264 = vshrl.u32 %v4263, 7
    %v4265 = vsub.s32 0, %v4264
    %v4266 = vrot.slane %v4261, %v4265
    %v4269 = vsel %vm1144, %v4252, 0
    %4271 = vmatprep.subr.mxu0 0.0
    %4272 = vmatpush1.msra.mxu0 %v4253
    %4273 = vmatprep.subr.mxu0 0.0
    %4274 = vmatpush1.msra.mxu0 %v4254
    %4275 = vmatprep.subr.mxu0 0.0
    %4276 = vmatpush1.msra.mxu0 %v4255
    %4277 = vmatprep.subr.mxu0 0.0
    %4278 = vmatpush1.msra.mxu0 %v4256
    %4279 = vmatprep.subr.mxu0 0.0
    %4280 = vmatpush1.msra.mxu0 %v4257
    %4281 = vmatprep.subr.mxu0 0.0
    %4282 = vmatpush1.msra.mxu0 %v4258
    %4283 = vmatprep.subr.mxu0 0.0
    %4284 = vmatpush1.msra.mxu0 %v4259
    %4285 = vmatprep.subr.mxu0 0.0
    %4286 = vmatpush1.msra.mxu0 %v4260
    %4287 = vmatprep.subr.mxu0 0.0
    %4288 = vmatpush1.msra.mxu0 0.0
    %4289 = vmatprep.subr.mxu0 0.0
    %4290 = vmatpush1.msra.mxu0 0.0
    %4291 = vmatprep.subr.mxu0 0.0
    %4292 = vmatpush1.msra.mxu0 0.0
    %4293 = vmatprep.subr.mxu0 0.0
    %4294 = vmatpush1.msra.mxu0 0.0
    %4295 = vmatprep.subr.mxu0 0.0
    %4296 = vmatpush1.msra.mxu0 0.0
    %4297 = vmatprep.subr.mxu0 0.0
    %4298 = vmatpush1.msra.mxu0 0.0
    %4299 = vmatprep.subr.mxu0 0.0
    %4300 = vmatpush1.msra.mxu0 0.0
    %4301 = vmatprep.subr.mxu0 0.0
    %4302 = vmatpush1.msra.mxu0 0.0
    %4303 = vmatprep.subr.mxu0 0.0
    %4304 = vmatpush1.msra.mxu0 0.0
    %4305 = vmatprep.subr.mxu0 0.0
    %4306 = vmatpush1.msra.mxu0 0.0
    %4307 = vmatprep.subr.mxu0 0.0
    %4308 = vmatpush1.msra.mxu0 0.0
    %4309 = vmatprep.subr.mxu0 0.0
    %4310 = vmatpush1.msra.mxu0 0.0
    %4311 = vmatprep.subr.mxu0 0.0
    %4312 = vmatpush1.msra.mxu0 0.0
    %4313 = vmatprep.subr.mxu0 0.0
    %4314 = vmatpush1.msra.mxu0 0.0
    %4315 = vmatprep.subr.mxu0 0.0
    %4316 = vmatpush1.msra.mxu0 0.0
    %4317 = vmatprep.subr.mxu0 0.0
    %4318 = vmatpush1.msra.mxu0 0.0
    %4319 = vmatprep.subr.mxu0 0.0
    %4320 = vmatpush1.msra.mxu0 0.0
    %4321 = vmatprep.subr.mxu0 0.0
    %4322 = vmatpush1.msra.mxu0 0.0
    %4323 = vmatprep.subr.mxu0 0.0
    %4324 = vmatpush1.msra.mxu0 0.0
    %4325 = vmatprep.subr.mxu0 0.0
    %4326 = vmatpush1.msra.mxu0 0.0
    %4327 = vmatprep.subr.mxu0 0.0
    %4328 = vmatpush1.msra.mxu0 0.0
    %4329 = vmatprep.subr.mxu0 0.0
    %4330 = vmatpush1.msra.mxu0 0.0
    %4331 = vmatprep.subr.mxu0 0.0
    %4332 = vmatpush1.msra.mxu0 0.0
    %4333 = vmatprep.subr.mxu0 0.0
    %4334 = vmatpush1.msra.mxu0 0.0
    %4335 = vmatprep.mubr.f32.mxu0 0.0
    %4336 = vmatmul.mubr.f32.gmra.mrb[0].mxu0 %v4269
    %v4337 = vpop.f32.mrb[0].mxu0
    %v4338 = vadd.f32 %v4266, %v4337
    %v4339 = vpop.f32.mrb[0].mxu0
    %4340 = vdwg.mxu0
    %vm4341 = vcmask 15360
    %v4342 = vsel %vm4341, %v4338, -inf
    %4343 = vmax.xlane.f32.xlu0 %v4342
    %v4344 = vpop.xlane.xlu0 %4343
    %v4345 = vsub.f32 %v4338, %v4344
    %v4346 = vmul.f32 %v4345, 1.442695
    %v4347 = vpow.pop %v4346
    %v4348 = vsel %vm4341, %v4347, 0.0
    %4349 = vadd.xlane.f32.xlu0 %v4348
    %v4350 = vpop.xlane.xlu0 %4349
    %v4351 = vlog2.pop %v4350
    %v4352 = vmul.f32 %v4351, 0.6931472
    %v4353 = vadd.f32 %v4344, %v4352
    %v4354 = vsub.f32 %v4338, %v4353
    %v4355 = vmul.f32 %v2026, %v4354
    %v4356 = vsel %vm4341, %v4355, 0.0
    %4357 = vadd.xlane.f32.xlu0 %v4356
    %v4358 = vpop.xlane.xlu0 %4357
    %v4359 = vrot.slane %v4358, 4
    %v4360 = vadd.f32 %v4358, %v4359
    %v4361 = vrot.slane %v4360, 2
    %v4362 = vadd.f32 %v4360, %v4361
    %v4363 = vrot.slane %v4362, 1
    %v4364 = vadd.f32 %v4362, %v4363
    %v4365 = vrcp.pop 8.0
    %v4366 = vmul.f32 %v4364, %v4365
    %v4367 = vsub.f32 0.0, %v4366
    %v4368 = vsub.f32 %v1783, %v4148
    %v4369 = vmul.f32 %v4368, %v4368
    %v4370 = vsel %vm1144, %v4369, 0.0
    %4371 = vadd.xlane.f32.xlu0 %v4370
    %v4372 = vpop.xlane.xlu0 %4371
    %v4373 = vrcp.pop 64.0
    %v4374 = vmul.f32 %v4372, %v4373
    %v4375 = vsub.f32 0.0, %v4374
    %v4376 = vmul.f32 %v4375, 1.442695
    %v4377 = vpow.pop %v4376
    %v4378 = vrot.slane %v4377, 4
    %v4379 = vadd.f32 %v4377, %v4378
    %v4380 = vrot.slane %v4379, 2
    %v4381 = vadd.f32 %v4379, %v4380
    %v4382 = vrot.slane %v4381, 1
    %v4383 = vadd.f32 %v4381, %v4382
    %v4384 = vmul.f32 %v4383, %v4365
    %v4385 = vsel %vm2089, %v4158, 0.0
    %4386 = vadd.xlane.f32.xlu0 %v4385
    %v4387 = vpop.xlane.xlu0 %4386
    %v4388 = vrot.slane %v4387, 4
    %v4389 = vadd.f32 %v4387, %v4388
    %v4390 = vrot.slane %v4389, 2
    %v4391 = vadd.f32 %v4389, %v4390
    %v4392 = vrot.slane %v4391, 1
    %v4393 = vadd.f32 %v4391, %v4392
    %v4394 = vmul.f32 %v4393, %v4365
    %v4395 = vadd.f32 %v4367, %v4384
    %v4396 = vadd.f32 %v4395, %v4394
    %4397 = vrot.lane.b32.xlu0 %v3637, 64
    %v4398 = vpop.permute.xlu0 %4397
    %v4399 = vsel %vm1144, %v4398, 0
    %4401 = vmatprep.subr.mxu0 0.0
    %4402 = vmatpush1.msra.mxu0 %v4159
    %4403 = vmatprep.subr.mxu0 0.0
    %4404 = vmatpush1.msra.mxu0 %v4160
    %4405 = vmatprep.subr.mxu0 0.0
    %4406 = vmatpush1.msra.mxu0 %v4161
    %4407 = vmatprep.subr.mxu0 0.0
    %4408 = vmatpush1.msra.mxu0 %v4162
    %4409 = vmatprep.subr.mxu0 0.0
    %4410 = vmatpush1.msra.mxu0 %v4163
    %4411 = vmatprep.subr.mxu0 0.0
    %4412 = vmatpush1.msra.mxu0 %v4164
    %4413 = vmatprep.subr.mxu0 0.0
    %4414 = vmatpush1.msra.mxu0 %v4165
    %4415 = vmatprep.subr.mxu0 0.0
    %4416 = vmatpush1.msra.mxu0 %v4166
    %4417 = vmatprep.subr.mxu0 0.0
    %4418 = vmatpush1.msra.mxu0 0.0
    %4419 = vmatprep.subr.mxu0 0.0
    %4420 = vmatpush1.msra.mxu0 0.0
    %4421 = vmatprep.subr.mxu0 0.0
    %4422 = vmatpush1.msra.mxu0 0.0
    %4423 = vmatprep.subr.mxu0 0.0
    %4424 = vmatpush1.msra.mxu0 0.0
    %4425 = vmatprep.subr.mxu0 0.0
    %4426 = vmatpush1.msra.mxu0 0.0
    %4427 = vmatprep.subr.mxu0 0.0
    %4428 = vmatpush1.msra.mxu0 0.0
    %4429 = vmatprep.subr.mxu0 0.0
    %4430 = vmatpush1.msra.mxu0 0.0
    %4431 = vmatprep.subr.mxu0 0.0
    %4432 = vmatpush1.msra.mxu0 0.0
    %4433 = vmatprep.subr.mxu0 0.0
    %4434 = vmatpush1.msra.mxu0 0.0
    %4435 = vmatprep.subr.mxu0 0.0
    %4436 = vmatpush1.msra.mxu0 0.0
    %4437 = vmatprep.subr.mxu0 0.0
    %4438 = vmatpush1.msra.mxu0 0.0
    %4439 = vmatprep.subr.mxu0 0.0
    %4440 = vmatpush1.msra.mxu0 0.0
    %4441 = vmatprep.subr.mxu0 0.0
    %4442 = vmatpush1.msra.mxu0 0.0
    %4443 = vmatprep.subr.mxu0 0.0
    %4444 = vmatpush1.msra.mxu0 0.0
    %4445 = vmatprep.subr.mxu0 0.0
    %4446 = vmatpush1.msra.mxu0 0.0
    %4447 = vmatprep.subr.mxu0 0.0
    %4448 = vmatpush1.msra.mxu0 0.0
    %4449 = vmatprep.subr.mxu0 0.0
    %4450 = vmatpush1.msra.mxu0 0.0
    %4451 = vmatprep.subr.mxu0 0.0
    %4452 = vmatpush1.msra.mxu0 0.0
    %4453 = vmatprep.subr.mxu0 0.0
    %4454 = vmatpush1.msra.mxu0 0.0
    %4455 = vmatprep.subr.mxu0 0.0
    %4456 = vmatpush1.msra.mxu0 0.0
    %4457 = vmatprep.subr.mxu0 0.0
    %4458 = vmatpush1.msra.mxu0 0.0
    %4459 = vmatprep.subr.mxu0 0.0
    %4460 = vmatpush1.msra.mxu0 0.0
    %4461 = vmatprep.subr.mxu0 0.0
    %4462 = vmatpush1.msra.mxu0 0.0
    %4463 = vmatprep.subr.mxu0 0.0
    %4464 = vmatpush1.msra.mxu0 0.0
    %4465 = vmatprep.mubr.f32.mxu0 0.0
    %4466 = vmatmul.mubr.f32.gmra.mrb[0].mxu0 %v4399
    %v4467 = vpop.f32.mrb[0].mxu0
    %v4468 = vadd.f32 %v4170, %v4467
    %v4469 = vpop.f32.mrb[0].mxu0
    %4470 = vdwg.mxu0
    %v4471 = vadd.f32 %v4468, %v4249
    %v4472 = vmax.f32 %v4471, 0.0
    %v4474 = vsel %vm1144, %v4472, 0
    %4476 = vmatprep.subr.mxu0 0.0
    %4477 = vmatpush1.msra.mxu0 %v4253
    %4478 = vmatprep.subr.mxu0 0.0
    %4479 = vmatpush1.msra.mxu0 %v4254
    %4480 = vmatprep.subr.mxu0 0.0
    %4481 = vmatpush1.msra.mxu0 %v4255
    %4482 = vmatprep.subr.mxu0 0.0
    %4483 = vmatpush1.msra.mxu0 %v4256
    %4484 = vmatprep.subr.mxu0 0.0
    %4485 = vmatpush1.msra.mxu0 %v4257
    %4486 = vmatprep.subr.mxu0 0.0
    %4487 = vmatpush1.msra.mxu0 %v4258
    %4488 = vmatprep.subr.mxu0 0.0
    %4489 = vmatpush1.msra.mxu0 %v4259
    %4490 = vmatprep.subr.mxu0 0.0
    %4491 = vmatpush1.msra.mxu0 %v4260
    %4492 = vmatprep.subr.mxu0 0.0
    %4493 = vmatpush1.msra.mxu0 0.0
    %4494 = vmatprep.subr.mxu0 0.0
    %4495 = vmatpush1.msra.mxu0 0.0
    %4496 = vmatprep.subr.mxu0 0.0
    %4497 = vmatpush1.msra.mxu0 0.0
    %4498 = vmatprep.subr.mxu0 0.0
    %4499 = vmatpush1.msra.mxu0 0.0
    %4500 = vmatprep.subr.mxu0 0.0
    %4501 = vmatpush1.msra.mxu0 0.0
    %4502 = vmatprep.subr.mxu0 0.0
    %4503 = vmatpush1.msra.mxu0 0.0
    %4504 = vmatprep.subr.mxu0 0.0
    %4505 = vmatpush1.msra.mxu0 0.0
    %4506 = vmatprep.subr.mxu0 0.0
    %4507 = vmatpush1.msra.mxu0 0.0
    %4508 = vmatprep.subr.mxu0 0.0
    %4509 = vmatpush1.msra.mxu0 0.0
    %4510 = vmatprep.subr.mxu0 0.0
    %4511 = vmatpush1.msra.mxu0 0.0
    %4512 = vmatprep.subr.mxu0 0.0
    %4513 = vmatpush1.msra.mxu0 0.0
    %4514 = vmatprep.subr.mxu0 0.0
    %4515 = vmatpush1.msra.mxu0 0.0
    %4516 = vmatprep.subr.mxu0 0.0
    %4517 = vmatpush1.msra.mxu0 0.0
    %4518 = vmatprep.subr.mxu0 0.0
    %4519 = vmatpush1.msra.mxu0 0.0
    %4520 = vmatprep.subr.mxu0 0.0
    %4521 = vmatpush1.msra.mxu0 0.0
    %4522 = vmatprep.subr.mxu0 0.0
    %4523 = vmatpush1.msra.mxu0 0.0
    %4524 = vmatprep.subr.mxu0 0.0
    %4525 = vmatpush1.msra.mxu0 0.0
    %4526 = vmatprep.subr.mxu0 0.0
    %4527 = vmatpush1.msra.mxu0 0.0
    %4528 = vmatprep.subr.mxu0 0.0
    %4529 = vmatpush1.msra.mxu0 0.0
    %4530 = vmatprep.subr.mxu0 0.0
    %4531 = vmatpush1.msra.mxu0 0.0
    %4532 = vmatprep.subr.mxu0 0.0
    %4533 = vmatpush1.msra.mxu0 0.0
    %4534 = vmatprep.subr.mxu0 0.0
    %4535 = vmatpush1.msra.mxu0 0.0
    %4536 = vmatprep.subr.mxu0 0.0
    %4537 = vmatpush1.msra.mxu0 0.0
    %4538 = vmatprep.subr.mxu0 0.0
    %4539 = vmatpush1.msra.mxu0 0.0
    %4540 = vmatprep.mubr.f32.mxu0 0.0
    %4541 = vmatmul.mubr.f32.gmra.mrb[0].mxu0 %v4474
    %v4542 = vpop.f32.mrb[0].mxu0
    %v4543 = vadd.f32 %v4266, %v4542
    %v4544 = vpop.f32.mrb[0].mxu0
    %4545 = vdwg.mxu0
    %v4546 = vsel %vm4341, %v4543, -inf
    %4547 = vmax.xlane.f32.xlu0 %v4546
    %v4548 = vpop.xlane.xlu0 %4547
    %v4549 = vsub.f32 %v4543, %v4548
    %v4550 = vmul.f32 %v4549, 1.442695
    %v4551 = vpow.pop %v4550
    %v4552 = vsel %vm4341, %v4551, 0.0
    %4553 = vadd.xlane.f32.xlu0 %v4552
    %v4554 = vpop.xlane.xlu0 %4553
    %v4555 = vlog2.pop %v4554
    %v4556 = vmul.f32 %v4555, 0.6931472
    %v4557 = vadd.f32 %v4548, %v4556
    %v4558 = vsub.f32 %v4543, %v4557
    %v4559 = vmul.f32 %v2026, %v4558
    %v4560 = vsel %vm4341, %v4559, 0.0
    %4561 = vadd.xlane.f32.xlu0 %v4560
    %v4562 = vpop.xlane.xlu0 %4561
    %v4563 = vrot.slane %v4562, 4
    %v4564 = vadd.f32 %v4562, %v4563
    %v4565 = vrot.slane %v4564, 2
    %v4566 = vadd.f32 %v4564, %v4565
    %v4567 = vrot.slane %v4566, 1
    %v4568 = vadd.f32 %v4566, %v4567
    %v4569 = vmul.f32 %v4568, %v4365
    %v4570 = vsub.f32 0.0, %v4569
    %4572 = vrot.lane.b32.xlu0 %v4148, 64
    %v4573 = vpop.permute.xlu0 %4572
    %v4575 = vsub.f32 %v1783, %v4573
    %v4576 = vmul.f32 %v4575, %v4575
    %v4577 = vsel %vm1144, %v4576, 0.0
    %4578 = vadd.xlane.f32.xlu0 %v4577
    %v4579 = vpop.xlane.xlu0 %4578
    %v4580 = vmul.f32 %v4579, %v4373
    %v4581 = vsub.f32 0.0, %v4580
    %v4582 = vmul.f32 %v4581, 1.442695
    %v4583 = vpow.pop %v4582
    %v4584 = vrot.slane %v4583, 4
    %v4585 = vadd.f32 %v4583, %v4584
    %v4586 = vrot.slane %v4585, 2
    %v4587 = vadd.f32 %v4585, %v4586
    %v4588 = vrot.slane %v4587, 1
    %v4589 = vadd.f32 %v4587, %v4588
    %v4590 = vmul.f32 %v4589, %v4365
    %4592 = vrot.lane.b32.xlu0 %v4158, 120
    %v4593 = vpop.permute.xlu0 %4592
    %v4595 = vsel %vm2089, %v4593, 0.0
    %4596 = vadd.xlane.f32.xlu0 %v4595
    %v4597 = vpop.xlane.xlu0 %4596
    %v4598 = vrot.slane %v4597, 4
    %v4599 = vadd.f32 %v4597, %v4598
    %v4600 = vrot.slane %v4599, 2
    %v4601 = vadd.f32 %v4599, %v4600
    %v4602 = vrot.slane %v4601, 1
    %v4603 = vadd.f32 %v4601, %v4602
    %v4604 = vmul.f32 %v4603, %v4365
    %v4605 = vadd.f32 %v4570, %v4590
    %v4606 = vadd.f32 %v4605, %v4604
    %vm4607 = vcmp.le.f32.partialorder %v4396, %v4606
    %v4608 = vsel %vm4607, 1, 0
    %v4609 = vcvt.s32.f32 %v4608
    %v4610 = vmul.f32 %v4609, %v3637
    %v4611 = vsub.f32 1.0, %v4609
    %v4612 = vmul.f32 %v4611, %v3637
    %4614 = vrot.lane.b32.xlu0 %v4612, 64
    %v4615 = vpop.permute.xlu0 %4614
    %v4617 = vadd.f32 %v4610, %v4615
    %v4618 = vld [vmem:[%s99] sm:$0xff]
    %v4619 = vld [vmem:[%s99 + $0x8] sm:$0xff]
    %v4620 = vld [vmem:[%s99 + $0x10] sm:$0xff]
    %v4621 = vld [vmem:[%s99 + $0x18] sm:$0xff]
    %v4622 = vld [vmem:[%s99 + $0x20] sm:$0xff]
    %v4623 = vld [vmem:[%s99 + $0x28] sm:$0xff]
    %v4624 = vld [vmem:[%s99 + $0x30] sm:$0xff]
    %v4625 = vld [vmem:[%s99 + $0x38] sm:$0xff]
    %v4626 = vld [vmem:[%s101] sm:$0x1]
    %v4628 = vlaneseq
    %v4629 = vshrl.u32 %v4628, 7
    %v4630 = vsub.s32 0, %v4629
    %v4631 = vrot.slane %v4626, %v4630
    %4633 = vmatprep.subr.mxu0 0.0
    %4634 = vmatpush1.msra.mxu0 %v4618
    %4635 = vmatprep.subr.mxu0 0.0
    %4636 = vmatpush1.msra.mxu0 %v4619
    %4637 = vmatprep.subr.mxu0 0.0
    %4638 = vmatpush1.msra.mxu0 %v4620
    %4639 = vmatprep.subr.mxu0 0.0
    %4640 = vmatpush1.msra.mxu0 %v4621
    %4641 = vmatprep.subr.mxu0 0.0
    %4642 = vmatpush1.msra.mxu0 %v4622
    %4643 = vmatprep.subr.mxu0 0.0
    %4644 = vmatpush1.msra.mxu0 %v4623
    %4645 = vmatprep.subr.mxu0 0.0
    %4646 = vmatpush1.msra.mxu0 %v4624
    %4647 = vmatprep.subr.mxu0 0.0
    %4648 = vmatpush1.msra.mxu0 %v4625
    %4649 = vmatprep.subr.mxu0 0.0
    %4650 = vmatpush1.msra.mxu0 0.0
    %4651 = vmatprep.subr.mxu0 0.0
    %4652 = vmatpush1.msra.mxu0 0.0
    %4653 = vmatprep.subr.mxu0 0.0
    %4654 = vmatpush1.msra.mxu0 0.0
    %4655 = vmatprep.subr.mxu0 0.0
    %4656 = vmatpush1.msra.mxu0 0.0
    %4657 = vmatprep.subr.mxu0 0.0
    %4658 = vmatpush1.msra.mxu0 0.0
    %4659 = vmatprep.subr.mxu0 0.0
    %4660 = vmatpush1.msra.mxu0 0.0
    %4661 = vmatprep.subr.mxu0 0.0
    %4662 = vmatpush1.msra.mxu0 0.0
    %4663 = vmatprep.subr.mxu0 0.0
    %4664 = vmatpush1.msra.mxu0 0.0
    %4665 = vmatprep.subr.mxu0 0.0
    %4666 = vmatpush1.msra.mxu0 0.0
    %4667 = vmatprep.subr.mxu0 0.0
    %4668 = vmatpush1.msra.mxu0 0.0
    %4669 = vmatprep.subr.mxu0 0.0
    %4670 = vmatpush1.msra.mxu0 0.0
    %4671 = vmatprep.subr.mxu0 0.0
    %4672 = vmatpush1.msra.mxu0 0.0
    %4673 = vmatprep.subr.mxu0 0.0
    %4674 = vmatpush1.msra.mxu0 0.0
    %4675 = vmatprep.subr.mxu0 0.0
    %4676 = vmatpush1.msra.mxu0 0.0
    %4677 = vmatprep.subr.mxu0 0.0
    %4678 = vmatpush1.msra.mxu0 0.0
    %4679 = vmatprep.subr.mxu0 0.0
    %4680 = vmatpush1.msra.mxu0 0.0
    %4681 = vmatprep.subr.mxu0 0.0
    %4682 = vmatpush1.msra.mxu0 0.0
    %4683 = vmatprep.subr.mxu0 0.0
    %4684 = vmatpush1.msra.mxu0 0.0
    %4685 = vmatprep.subr.mxu0 0.0
    %4686 = vmatpush1.msra.mxu0 0.0
    %4687 = vmatprep.subr.mxu0 0.0
    %4688 = vmatpush1.msra.mxu0 0.0
    %4689 = vmatprep.subr.mxu0 0.0
    %4690 = vmatpush1.msra.mxu0 0.0
    %4691 = vmatprep.subr.mxu0 0.0
    %4692 = vmatpush1.msra.mxu0 0.0
    %4693 = vmatprep.subr.mxu0 0.0
    %4694 = vmatpush1.msra.mxu0 0.0
    %4695 = vmatprep.subr.mxu0 0.0
    %4696 = vmatpush1.msra.mxu0 0.0
    %4697 = vmatprep.mubr.f32.mxu0 0.0
    %4698 = vmatmul.mubr.f32.gmra.mrb[0].mxu0 %v3485
    %v4699 = vpop.f32.mrb[0].mxu0
    %v4700 = vadd.f32 %v4631, %v4699
    %v4701 = vpop.f32.mrb[0].mxu0
    %4702 = vdwg.mxu0
    %v4703 = vmax.f32 %v4700, 0.0
    %v4704 = vld [vmem:[%s103] sm:$0xff]
    %v4705 = vld [vmem:[%s103 + $0x8] sm:$0xff]
    %v4706 = vld [vmem:[%s103 + $0x10] sm:$0xff]
    %v4707 = vld [vmem:[%s103 + $0x18] sm:$0xff]
    %v4708 = vld [vmem:[%s103 + $0x20] sm:$0xff]
    %v4709 = vld [vmem:[%s103 + $0x28] sm:$0xff]
    %v4710 = vld [vmem:[%s103 + $0x30] sm:$0xff]
    %v4711 = vld [vmem:[%s103 + $0x38] sm:$0xff]
    %v4712 = vld [vmem:[#allocation2] sm:$0x1]
    %v4714 = vlaneseq
    %v4715 = vshrl.u32 %v4714, 7
    %v4716 = vsub.s32 0, %v4715
    %v4717 = vrot.slane %v4712, %v4716
    %v4720 = vsel %vm1144, %v4703, 0
    %4722 = vmatprep.subr.mxu0 0.0
    %4723 = vmatpush1.msra.mxu0 %v4704
    %4724 = vmatprep.subr.mxu0 0.0
    %4725 = vmatpush1.msra.mxu0 %v4705
    %4726 = vmatprep.subr.mxu0 0.0
    %4727 = vmatpush1.msra.mxu0 %v4706
    %4728 = vmatprep.subr.mxu0 0.0
    %4729 = vmatpush1.msra.mxu0 %v4707
    %4730 = vmatprep.subr.mxu0 0.0
    %4731 = vmatpush1.msra.mxu0 %v4708
    %4732 = vmatprep.subr.mxu0 0.0
    %4733 = vmatpush1.msra.mxu0 %v4709
    %4734 = vmatprep.subr.mxu0 0.0
    %4735 = vmatpush1.msra.mxu0 %v4710
    %4736 = vmatprep.subr.mxu0 0.0
    %4737 = vmatpush1.msra.mxu0 %v4711
    %4738 = vmatprep.subr.mxu0 0.0
    %4739 = vmatpush1.msra.mxu0 0.0
    %4740 = vmatprep.subr.mxu0 0.0
    %4741 = vmatpush1.msra.mxu0 0.0
    %4742 = vmatprep.subr.mxu0 0.0
    %4743 = vmatpush1.msra.mxu0 0.0
    %4744 = vmatprep.subr.mxu0 0.0
    %4745 = vmatpush1.msra.mxu0 0.0
    %4746 = vmatprep.subr.mxu0 0.0
    %4747 = vmatpush1.msra.mxu0 0.0
    %4748 = vmatprep.subr.mxu0 0.0
    %4749 = vmatpush1.msra.mxu0 0.0
    %4750 = vmatprep.subr.mxu0 0.0
    %4751 = vmatpush1.msra.mxu0 0.0
    %4752 = vmatprep.subr.mxu0 0.0
    %4753 = vmatpush1.msra.mxu0 0.0
    %4754 = vmatprep.subr.mxu0 0.0
    %4755 = vmatpush1.msra.mxu0 0.0
    %4756 = vmatprep.subr.mxu0 0.0
    %4757 = vmatpush1.msra.mxu0 0.0
    %4758 = vmatprep.subr.mxu0 0.0
    %4759 = vmatpush1.msra.mxu0 0.0
    %4760 = vmatprep.subr.mxu0 0.0
    %4761 = vmatpush1.msra.mxu0 0.0
    %4762 = vmatprep.subr.mxu0 0.0
    %4763 = vmatpush1.msra.mxu0 0.0
    %4764 = vmatprep.subr.mxu0 0.0
    %4765 = vmatpush1.msra.mxu0 0.0
    %4766 = vmatprep.subr.mxu0 0.0
    %4767 = vmatpush1.msra.mxu0 0.0
    %4768 = vmatprep.subr.mxu0 0.0
    %4769 = vmatpush1.msra.mxu0 0.0
    %4770 = vmatprep.subr.mxu0 0.0
    %4771 = vmatpush1.msra.mxu0 0.0
    %4772 = vmatprep.subr.mxu0 0.0
    %4773 = vmatpush1.msra.mxu0 0.0
    %4774 = vmatprep.subr.mxu0 0.0
    %4775 = vmatpush1.msra.mxu0 0.0
    %4776 = vmatprep.subr.mxu0 0.0
    %4777 = vmatpush1.msra.mxu0 0.0
    %4778 = vmatprep.subr.mxu0 0.0
    %4779 = vmatpush1.msra.mxu0 0.0
    %4780 = vmatprep.subr.mxu0 0.0
    %4781 = vmatpush1.msra.mxu0 0.0
    %4782 = vmatprep.subr.mxu0 0.0
    %4783 = vmatpush1.msra.mxu0 0.0
    %4784 = vmatprep.subr.mxu0 0.0
    %4785 = vmatpush1.msra.mxu0 0.0
    %4786 = vmatprep.mubr.f32.mxu0 0.0
    %4787 = vmatmul.mubr.f32.gmra.mrb[0].mxu0 %v4720
    %v4788 = vpop.f32.mrb[0].mxu0
    %v4789 = vadd.f32 %v4717, %v4788
    %v4790 = vpop.f32.mrb[0].mxu0
    %4791 = vdwg.mxu0
    %4793 = vset.pattern.permute.xlu0 0
    %4794 = vperm.xlu0 %4793, %v4789
    %v4795 = vpop.permute.xlu0 %4794
    %v4797 = vmul.f32 %v4795, %v3637
    %v4798 = vsub.f32 1.0, %v4789
    %4800 = vset.pattern.permute.xlu0 0
    %4801 = vperm.xlu0 %4800, %v4798
    %v4802 = vpop.permute.xlu0 %4801
    %v4804 = vmul.f32 %v4802, %v4617
    %v4805 = vadd.f32 %v4797, %v4804
    %v4806 = vld [vmem:[#allocation55] sm:$0xff]
    %v4807 = vld [vmem:[#allocation55 + $0x8] sm:$0xff]
    %v4808 = vld [vmem:[#allocation55 + $0x10] sm:$0xff]
    %v4809 = vld [vmem:[#allocation55 + $0x18] sm:$0xff]
    %v4810 = vld [vmem:[#allocation55 + $0x20] sm:$0xff]
    %v4811 = vld [vmem:[#allocation55 + $0x28] sm:$0xff]
    %v4812 = vld [vmem:[#allocation55 + $0x30] sm:$0xff]
    %v4813 = vld [vmem:[#allocation55 + $0x38] sm:$0xff]
    %v4814 = vld [vmem:[%s109] sm:$0x1]
    %v4816 = vlaneseq
    %v4817 = vshrl.u32 %v4816, 7
    %v4818 = vsub.s32 0, %v4817
    %v4819 = vrot.slane %v4814, %v4818
    %v4822 = vsel %vm1144, %v4805, 0
    %4824 = vmatprep.subr.mxu0 0.0
    %4825 = vmatpush1.msra.mxu0 %v4806
    %4826 = vmatprep.subr.mxu0 0.0
    %4827 = vmatpush1.msra.mxu0 %v4807
    %4828 = vmatprep.subr.mxu0 0.0
    %4829 = vmatpush1.msra.mxu0 %v4808
    %4830 = vmatprep.subr.mxu0 0.0
    %4831 = vmatpush1.msra.mxu0 %v4809
    %4832 = vmatprep.subr.mxu0 0.0
    %4833 = vmatpush1.msra.mxu0 %v4810
    %4834 = vmatprep.subr.mxu0 0.0
    %4835 = vmatpush1.msra.mxu0 %v4811
    %4836 = vmatprep.subr.mxu0 0.0
    %4837 = vmatpush1.msra.mxu0 %v4812
    %4838 = vmatprep.subr.mxu0 0.0
    %4839 = vmatpush1.msra.mxu0 %v4813
    %4840 = vmatprep.subr.mxu0 0.0
    %4841 = vmatpush1.msra.mxu0 0.0
    %4842 = vmatprep.subr.mxu0 0.0
    %4843 = vmatpush1.msra.mxu0 0.0
    %4844 = vmatprep.subr.mxu0 0.0
    %4845 = vmatpush1.msra.mxu0 0.0
    %4846 = vmatprep.subr.mxu0 0.0
    %4847 = vmatpush1.msra.mxu0 0.0
    %4848 = vmatprep.subr.mxu0 0.0
    %4849 = vmatpush1.msra.mxu0 0.0
    %4850 = vmatprep.subr.mxu0 0.0
    %4851 = vmatpush1.msra.mxu0 0.0
    %4852 = vmatprep.subr.mxu0 0.0
    %4853 = vmatpush1.msra.mxu0 0.0
    %4854 = vmatprep.subr.mxu0 0.0
    %4855 = vmatpush1.msra.mxu0 0.0
    %4856 = vmatprep.subr.mxu0 0.0
    %4857 = vmatpush1.msra.mxu0 0.0
    %4858 = vmatprep.subr.mxu0 0.0
    %4859 = vmatpush1.msra.mxu0 0.0
    %4860 = vmatprep.subr.mxu0 0.0
    %4861 = vmatpush1.msra.mxu0 0.0
    %4862 = vmatprep.subr.mxu0 0.0
    %4863 = vmatpush1.msra.mxu0 0.0
    %4864 = vmatprep.subr.mxu0 0.0
    %4865 = vmatpush1.msra.mxu0 0.0
    %4866 = vmatprep.subr.mxu0 0.0
    %4867 = vmatpush1.msra.mxu0 0.0
    %4868 = vmatprep.subr.mxu0 0.0
    %4869 = vmatpush1.msra.mxu0 0.0
    %4870 = vmatprep.subr.mxu0 0.0
    %4871 = vmatpush1.msra.mxu0 0.0
    %4872 = vmatprep.subr.mxu0 0.0
    %4873 = vmatpush1.msra.mxu0 0.0
    %4874 = vmatprep.subr.mxu0 0.0
    %4875 = vmatpush1.msra.mxu0 0.0
    %4876 = vmatprep.subr.mxu0 0.0
    %4877 = vmatpush1.msra.mxu0 0.0
    %4878 = vmatprep.subr.mxu0 0.0
    %4879 = vmatpush1.msra.mxu0 0.0
    %4880 = vmatprep.subr.mxu0 0.0
    %4881 = vmatpush1.msra.mxu0 0.0
    %4882 = vmatprep.subr.mxu0 0.0
    %4883 = vmatpush1.msra.mxu0 0.0
    %4884 = vmatprep.subr.mxu0 0.0
    %4885 = vmatpush1.msra.mxu0 0.0
    %4886 = vmatprep.subr.mxu0 0.0
    %4887 = vmatpush1.msra.mxu0 0.0
    %4888 = vmatprep.mubr.f32.mxu0 0.0
    %4889 = vmatmul.mubr.f32.gmra.mrb[0].mxu0 %v4822
    %v4890 = vpop.f32.mrb[0].mxu0
    %v4891 = vadd.f32 %v4819, %v4890
    %v4892 = vpop.f32.mrb[0].mxu0
    %4893 = vdwg.mxu0
    %v4894 = vmax.f32 %v4891, 0.0
    %v4895 = vld [vmem:[#allocation56] sm:$0xff]
    %v4896 = vld [vmem:[#allocation56 + $0x8] sm:$0xff]
    %v4897 = vld [vmem:[#allocation56 + $0x10] sm:$0xff]
    %v4898 = vld [vmem:[#allocation56 + $0x18] sm:$0xff]
    %v4899 = vld [vmem:[#allocation56 + $0x20] sm:$0xff]
    %v4900 = vld [vmem:[#allocation56 + $0x28] sm:$0xff]
    %v4901 = vld [vmem:[#allocation56 + $0x30] sm:$0xff]
    %v4902 = vld [vmem:[#allocation56 + $0x38] sm:$0xff]
    %v4903 = vld [vmem:[%s113] sm:$0x1]
    %v4905 = vlaneseq
    %v4906 = vshrl.u32 %v4905, 7
    %v4907 = vsub.s32 0, %v4906
    %v4908 = vrot.slane %v4903, %v4907
    %v4911 = vsel %vm1144, %v4894, 0
    %4913 = vmatprep.subr.mxu0 0.0
    %4914 = vmatpush1.msra.mxu0 %v4895
    %4915 = vmatprep.subr.mxu0 0.0
    %4916 = vmatpush1.msra.mxu0 %v4896
    %4917 = vmatprep.subr.mxu0 0.0
    %4918 = vmatpush1.msra.mxu0 %v4897
    %4919 = vmatprep.subr.mxu0 0.0
    %4920 = vmatpush1.msra.mxu0 %v4898
    %4921 = vmatprep.subr.mxu0 0.0
    %4922 = vmatpush1.msra.mxu0 %v4899
    %4923 = vmatprep.subr.mxu0 0.0
    %4924 = vmatpush1.msra.mxu0 %v4900
    %4925 = vmatprep.subr.mxu0 0.0
    %4926 = vmatpush1.msra.mxu0 %v4901
    %4927 = vmatprep.subr.mxu0 0.0
    %4928 = vmatpush1.msra.mxu0 %v4902
    %4929 = vmatprep.subr.mxu0 0.0
    %4930 = vmatpush1.msra.mxu0 0.0
    %4931 = vmatprep.subr.mxu0 0.0
    %4932 = vmatpush1.msra.mxu0 0.0
    %4933 = vmatprep.subr.mxu0 0.0
    %4934 = vmatpush1.msra.mxu0 0.0
    %4935 = vmatprep.subr.mxu0 0.0
    %4936 = vmatpush1.msra.mxu0 0.0
    %4937 = vmatprep.subr.mxu0 0.0
    %4938 = vmatpush1.msra.mxu0 0.0
    %4939 = vmatprep.subr.mxu0 0.0
    %4940 = vmatpush1.msra.mxu0 0.0
    %4941 = vmatprep.subr.mxu0 0.0
    %4942 = vmatpush1.msra.mxu0 0.0
    %4943 = vmatprep.subr.mxu0 0.0
    %4944 = vmatpush1.msra.mxu0 0.0
    %4945 = vmatprep.subr.mxu0 0.0
    %4946 = vmatpush1.msra.mxu0 0.0
    %4947 = vmatprep.subr.mxu0 0.0
    %4948 = vmatpush1.msra.mxu0 0.0
    %4949 = vmatprep.subr.mxu0 0.0
    %4950 = vmatpush1.msra.mxu0 0.0
    %4951 = vmatprep.subr.mxu0 0.0
    %4952 = vmatpush1.msra.mxu0 0.0
    %4953 = vmatprep.subr.mxu0 0.0
    %4954 = vmatpush1.msra.mxu0 0.0
    %4955 = vmatprep.subr.mxu0 0.0
    %4956 = vmatpush1.msra.mxu0 0.0
    %4957 = vmatprep.subr.mxu0 0.0
    %4958 = vmatpush1.msra.mxu0 0.0
    %4959 = vmatprep.subr.mxu0 0.0
    %4960 = vmatpush1.msra.mxu0 0.0
    %4961 = vmatprep.subr.mxu0 0.0
    %4962 = vmatpush1.msra.mxu0 0.0
    %4963 = vmatprep.subr.mxu0 0.0
    %4964 = vmatpush1.msra.mxu0 0.0
    %4965 = vmatprep.subr.mxu0 0.0
    %4966 = vmatpush1.msra.mxu0 0.0
    %4967 = vmatprep.subr.mxu0 0.0
    %4968 = vmatpush1.msra.mxu0 0.0
    %4969 = vmatprep.subr.mxu0 0.0
    %4970 = vmatpush1.msra.mxu0 0.0
    %4971 = vmatprep.subr.mxu0 0.0
    %4972 = vmatpush1.msra.mxu0 0.0
    %4973 = vmatprep.subr.mxu0 0.0
    %4974 = vmatpush1.msra.mxu0 0.0
    %4975 = vmatprep.subr.mxu0 0.0
    %4976 = vmatpush1.msra.mxu0 0.0
    %4977 = vmatprep.mubr.f32.mxu0 0.0
    %4978 = vmatmul.mubr.f32.gmra.mrb[0].mxu0 %v4911
    %v4979 = vpop.f32.mrb[0].mxu0
    %v4980 = vadd.f32 %v4908, %v4979
    %v4981 = vpop.f32.mrb[0].mxu0
    %4982 = vdwg.mxu0
    %v4983 = vmax.f32 %v4980, 0.0
    %v4985 = vsel %vm1144, %v4983, 0
    %4987 = vmatprep.subr.mxu0 0.0
    %4988 = vmatpush1.msra.mxu0 %v4159
    %4989 = vmatprep.subr.mxu0 0.0
    %4990 = vmatpush1.msra.mxu0 %v4160
    %4991 = vmatprep.subr.mxu0 0.0
    %4992 = vmatpush1.msra.mxu0 %v4161
    %4993 = vmatprep.subr.mxu0 0.0
    %4994 = vmatpush1.msra.mxu0 %v4162
    %4995 = vmatprep.subr.mxu0 0.0
    %4996 = vmatpush1.msra.mxu0 %v4163
    %4997 = vmatprep.subr.mxu0 0.0
    %4998 = vmatpush1.msra.mxu0 %v4164
    %4999 = vmatprep.subr.mxu0 0.0
    %5000 = vmatpush1.msra.mxu0 %v4165
    %5001 = vmatprep.subr.mxu0 0.0
    %5002 = vmatpush1.msra.mxu0 %v4166
    %5003 = vmatprep.subr.mxu0 0.0
    %5004 = vmatpush1.msra.mxu0 0.0
    %5005 = vmatprep.subr.mxu0 0.0
    %5006 = vmatpush1.msra.mxu0 0.0
    %5007 = vmatprep.subr.mxu0 0.0
    %5008 = vmatpush1.msra.mxu0 0.0
    %5009 = vmatprep.subr.mxu0 0.0
    %5010 = vmatpush1.msra.mxu0 0.0
    %5011 = vmatprep.subr.mxu0 0.0
    %5012 = vmatpush1.msra.mxu0 0.0
    %5013 = vmatprep.subr.mxu0 0.0
    %5014 = vmatpush1.msra.mxu0 0.0
    %5015 = vmatprep.subr.mxu0 0.0
    %5016 = vmatpush1.msra.mxu0 0.0
    %5017 = vmatprep.subr.mxu0 0.0
    %5018 = vmatpush1.msra.mxu0 0.0
    %5019 = vmatprep.subr.mxu0 0.0
    %5020 = vmatpush1.msra.mxu0 0.0
    %5021 = vmatprep.subr.mxu0 0.0
    %5022 = vmatpush1.msra.mxu0 0.0
    %5023 = vmatprep.subr.mxu0 0.0
    %5024 = vmatpush1.msra.mxu0 0.0
    %5025 = vmatprep.subr.mxu0 0.0
    %5026 = vmatpush1.msra.mxu0 0.0
    %5027 = vmatprep.subr.mxu0 0.0
    %5028 = vmatpush1.msra.mxu0 0.0
    %5029 = vmatprep.subr.mxu0 0.0
    %5030 = vmatpush1.msra.mxu0 0.0
    %5031 = vmatprep.subr.mxu0 0.0
    %5032 = vmatpush1.msra.mxu0 0.0
    %5033 = vmatprep.subr.mxu0 0.0
    %5034 = vmatpush1.msra.mxu0 0.0
    %5035 = vmatprep.subr.mxu0 0.0
    %5036 = vmatpush1.msra.mxu0 0.0
    %5037 = vmatprep.subr.mxu0 0.0
    %5038 = vmatpush1.msra.mxu0 0.0
    %5039 = vmatprep.subr.mxu0 0.0
    %5040 = vmatpush1.msra.mxu0 0.0
    %5041 = vmatprep.subr.mxu0 0.0
    %5042 = vmatpush1.msra.mxu0 0.0
    %5043 = vmatprep.subr.mxu0 0.0
    %5044 = vmatpush1.msra.mxu0 0.0
    %5045 = vmatprep.subr.mxu0 0.0
    %5046 = vmatpush1.msra.mxu0 0.0
    %5047 = vmatprep.subr.mxu0 0.0
    %5048 = vmatpush1.msra.mxu0 0.0
    %5049 = vmatprep.subr.mxu0 0.0
    %5050 = vmatpush1.msra.mxu0 0.0
    %5051 = vmatprep.mubr.f32.mxu0 0.0
    %5052 = vmatmul.mubr.f32.gmra.mrb[0].mxu0 %v4985
    %v5053 = vpop.f32.mrb[0].mxu0
    %v5054 = vadd.f32 %v4170, %v5053
    %v5055 = vpop.f32.mrb[0].mxu0
    %5056 = vdwg.mxu0
    %v5057 = vadd.f32 %v5054, %v4249
    %v5058 = vmax.f32 %v5057, 0.0
    %v5060 = vsel %vm1144, %v5058, 0
    %5062 = vmatprep.subr.mxu0 0.0
    %5063 = vmatpush1.msra.mxu0 %v4253
    %5064 = vmatprep.subr.mxu0 0.0
    %5065 = vmatpush1.msra.mxu0 %v4254
    %5066 = vmatprep.subr.mxu0 0.0
    %5067 = vmatpush1.msra.mxu0 %v4255
    %5068 = vmatprep.subr.mxu0 0.0
    %5069 = vmatpush1.msra.mxu0 %v4256
    %5070 = vmatprep.subr.mxu0 0.0
    %5071 = vmatpush1.msra.mxu0 %v4257
    %5072 = vmatprep.subr.mxu0 0.0
    %5073 = vmatpush1.msra.mxu0 %v4258
    %5074 = vmatprep.subr.mxu0 0.0
    %5075 = vmatpush1.msra.mxu0 %v4259
    %5076 = vmatprep.subr.mxu0 0.0
    %5077 = vmatpush1.msra.mxu0 %v4260
    %5078 = vmatprep.subr.mxu0 0.0
    %5079 = vmatpush1.msra.mxu0 0.0
    %5080 = vmatprep.subr.mxu0 0.0
    %5081 = vmatpush1.msra.mxu0 0.0
    %5082 = vmatprep.subr.mxu0 0.0
    %5083 = vmatpush1.msra.mxu0 0.0
    %5084 = vmatprep.subr.mxu0 0.0
    %5085 = vmatpush1.msra.mxu0 0.0
    %5086 = vmatprep.subr.mxu0 0.0
    %5087 = vmatpush1.msra.mxu0 0.0
    %5088 = vmatprep.subr.mxu0 0.0
    %5089 = vmatpush1.msra.mxu0 0.0
    %5090 = vmatprep.subr.mxu0 0.0
    %5091 = vmatpush1.msra.mxu0 0.0
    %5092 = vmatprep.subr.mxu0 0.0
    %5093 = vmatpush1.msra.mxu0 0.0
    %5094 = vmatprep.subr.mxu0 0.0
    %5095 = vmatpush1.msra.mxu0 0.0
    %5096 = vmatprep.subr.mxu0 0.0
    %5097 = vmatpush1.msra.mxu0 0.0
    %5098 = vmatprep.subr.mxu0 0.0
    %5099 = vmatpush1.msra.mxu0 0.0
    %5100 = vmatprep.subr.mxu0 0.0
    %5101 = vmatpush1.msra.mxu0 0.0
    %5102 = vmatprep.subr.mxu0 0.0
    %5103 = vmatpush1.msra.mxu0 0.0
    %5104 = vmatprep.subr.mxu0 0.0
    %5105 = vmatpush1.msra.mxu0 0.0
    %5106 = vmatprep.subr.mxu0 0.0
    %5107 = vmatpush1.msra.mxu0 0.0
    %5108 = vmatprep.subr.mxu0 0.0
    %5109 = vmatpush1.msra.mxu0 0.0
    %5110 = vmatprep.subr.mxu0 0.0
    %5111 = vmatpush1.msra.mxu0 0.0
    %5112 = vmatprep.subr.mxu0 0.0
    %5113 = vmatpush1.msra.mxu0 0.0
    %5114 = vmatprep.subr.mxu0 0.0
    %5115 = vmatpush1.msra.mxu0 0.0
    %5116 = vmatprep.subr.mxu0 0.0
    %5117 = vmatpush1.msra.mxu0 0.0
    %5118 = vmatprep.subr.mxu0 0.0
    %5119 = vmatpush1.msra.mxu0 0.0
    %5120 = vmatprep.subr.mxu0 0.0
    %5121 = vmatpush1.msra.mxu0 0.0
    %5122 = vmatprep.subr.mxu0 0.0
    %5123 = vmatpush1.msra.mxu0 0.0
    %5124 = vmatprep.subr.mxu0 0.0
    %5125 = vmatpush1.msra.mxu0 0.0
    %5126 = vmatprep.mubr.f32.mxu0 0.0
    %5127 = vmatmul.mubr.f32.gmra.mrb[0].mxu0 %v5060
    %v5128 = vpop.f32.mrb[0].mxu0
    %v5129 = vadd.f32 %v4266, %v5128
    %v5130 = vpop.f32.mrb[0].mxu0
    %5131 = vdwg.mxu0
    %v5132 = vmul.f32 %v1114, %v1518
    %v5133 = vsel %vm1144, %v5132, 0.0
    %5134 = vadd.xlane.f32.xlu0 %v5133
    %v5135 = vpop.xlane.xlu0 %5134
    %v5136 = vmul.f32 %v1114, %v1114
    %v5137 = vsel %vm1144, %v5136, 0.0
    %5138 = vadd.xlane.f32.xlu0 %v5137
    %v5139 = vpop.xlane.xlu0 %5138
    %v5140 = vmul.f32 %v1518, %v1518
    %v5141 = vsel %vm1144, %v5140, 0.0
    %5142 = vadd.xlane.f32.xlu0 %v5141
    %v5143 = vpop.xlane.xlu0 %5142
    %v5144 = vmul.f32 %v5139, %v5143
    %v5145 = vrsqrt.pop %v5144
    %v5146 = vmul.f32 %v5144, %v5145
    %vm5147 = vcmp.eq.f32.partialorder %v5144, inf
    %v5148 = vsel %vm5147, %v5144, %v5146
    %vm5149 = vcmp.eq.f32.partialorder %v5144, 0.0
    %v5150 = vand.u32 %v5144, 2147483648
    %v5151 = vsel %vm5149, %v5150, %v5148
    %v5152 = vadd.f32 %v5135, %v5151
    %v5153 = vmul.f32 %v5151, 2.0
    %v5154 = vadd.f32 %v5153, 1e-12
    %v5155 = vrcp.pop %v5154
    %v5156 = vmul.f32 %v5152, %v5155
    %5157 = vrot.lane.b32.xlu0 %v1518, 64
    %v5158 = vpop.permute.xlu0 %5157
    %v5160 = vsel %vm1144, %v1114, %v5158
    %5161 = vst [vmem:[%s125] sm:$0xff] %v5160
    %v5162 = vsub.f32 1.0, %v5156
    %5164 = vrot.lane.b32.xlu0 %v5129, 64
    %v5165 = vpop.permute.xlu0 %5164
    %v5167 = vsel %vm1144, %v1783, %v5165
    %vm5168 = vcmask 539648
    %v5169 = vsel %vm5168, %v5167, %v5156
    %vm5170 = vcmask 547840
    %v5171 = vsel %vm5170, %v5169, %v5162
    %vm5172 = vcmask 556032
    %v5173 = vsel %vm5172, %v5171, 0.0
    %5174 = vst [vmem:[%s127] sm:$0xff] %v5173
    %v5175 = vsel %vm740, %v2275, %v2788
    %vm5176 = vcmask 516096
    %5177 = vst.msk [vmem:[%s129] sm:$0x1] %vm5176, %v5175
    %5178 = vrot.lane.b32.xlu0 %v3044, 32
    %v5179 = vpop.permute.xlu0 %5178
    %5180 = vrot.lane.b32.xlu0 %v3045, 32
    %v5181 = vpop.permute.xlu0 %5180
    %5182 = vrot.lane.b32.xlu0 %v3046, 32
    %v5183 = vpop.permute.xlu0 %5182
    %5184 = vrot.lane.b32.xlu0 %v3047, 32
    %v5185 = vpop.permute.xlu0 %5184
    %v5190 = vsel %vm740, %v2535, %v5179
    %v5191 = vsel %vm740, %v2536, %v5181
    %v5192 = vsel %vm740, %v2537, %v5183
    %v5193 = vsel %vm740, %v2538, %v5185
    %5194 = vst.msk [vmem:[%s131] sm:$0xff] %vm1144, %v5190
    %5195 = vst.msk [vmem:[%s131 + $0x8] sm:$0xff] %vm1144, %v5191
    %5196 = vst.msk [vmem:[%s131 + $0x10] sm:$0xff] %vm1144, %v5192
    %5197 = vst.msk [vmem:[%s131 + $0x18] sm:$0xff] %vm1144, %v5193
    %5198 = vst.msk [vmem:[%s133] sm:$0xff] %vm2045, %v2764
    %5199 = vst.msk [vmem:[%s133 + $0x8] sm:$0xff] %vm2045, %v2765
    %5200 = vst.msk [vmem:[%s133 + $0x10] sm:$0xff] %vm2045, %v2766
    %5201 = vst.msk [vmem:[%s133 + $0x18] sm:$0xff] %vm2045, %v2767
    %5202 = vst.msk [vmem:[%s133 + $0x20] sm:$0xff] %vm2045, %v2768
    %5203 = vst.msk [vmem:[%s133 + $0x28] sm:$0xff] %vm2045, %v2769
    %5204 = vst.msk [vmem:[%s133 + $0x30] sm:$0xff] %vm2045, %v2770
    %5205 = vst.msk [vmem:[%s133 + $0x38] sm:$0xff] %vm2045, %v2771
    %5206 = vst.msk [vmem:[%s133 + $0x40] sm:$0xff] %vm2045, %v2772
    %5207 = vst.msk [vmem:[%s133 + $0x48] sm:$0xff] %vm2045, %v2773
    %5208 = vst.msk [vmem:[%s133 + $0x50] sm:$0xff] %vm2045, %v2774
    %5209 = vst.msk [vmem:[%s133 + $0x58] sm:$0xff] %vm2045, %v2775
    // Predicated region
    $region398: #{_forward_core.3} parent=1 // pred_check
      _
    $region399: #{_forward_core.3} parent=1 // pred_check_branch
      %5211 = sbr.rel (0) target = $region401
    $region400: #{_forward_core.3} parent=1 // pred_region
      _
    $region401: #{_forward_core.3} parent=1 // pred_fallthru
      _
    // Predicated region
    $region402: #{_forward_core.3} parent=1 // pred_check
      _
    $region403: #{_forward_core.3} parent=1 // pred_check_branch
      %5213 = sbr.rel (0) target = $region405
    $region404: #{_forward_core.3} parent=1 // pred_region
      _
    $region405: #{_forward_core.3} parent=1 // pred_fallthru
      _
    // Predicated region
    $region406: #{_forward_core.3} parent=1 // pred_check
      _
    $region407: #{_forward_core.3} parent=1 // pred_check_branch
      %5215 = sbr.rel (0) target = $region409
    $region408: #{_forward_core.3} parent=1 // pred_region
      _
    $region409: #{_forward_core.3} parent=1 // pred_fallthru
      _
    // Predicated region
    $region410: #{_forward_core.3} parent=1 // pred_check
      _
    $region411: #{_forward_core.3} parent=1 // pred_check_branch
      %5217 = sbr.rel (0) target = $region413
    $region412: #{_forward_core.3} parent=1 // pred_region
      _
    $region413: #{_forward_core.3} parent=1 // pred_fallthru
      _
    // Predicated region
    $region414: #{_forward_core.3} parent=1 // pred_check
      _
    $region415: #{_forward_core.3} parent=1 // pred_check_branch
      %5219 = sbr.rel (0) target = $region417
    $region416: #{_forward_core.3} parent=1 // pred_region
      _
    $region417: #{_forward_core.3} parent=1 // pred_fallthru
      _
    // Predicated region
    $region418: #{_forward_core.3} parent=1 // pred_check
      _
    $region419: #{_forward_core.3} parent=1 // pred_check_branch
      %5221 = sbr.rel (0) target = $region421
    $region420: #{_forward_core.3} parent=1 // pred_region
      _
    $region421: #{_forward_core.3} parent=1 // pred_fallthru
      _
    // Predicated region
    $region422: #{_forward_core.3} parent=1 // pred_check
      _
    $region423: #{_forward_core.3} parent=1 // pred_check_branch
      %5223 = sbr.rel (0) target = $region425
    $region424: #{_forward_core.3} parent=1 // pred_region
      _
    $region425: #{_forward_core.3} parent=1 // pred_fallthru
      _
    // Predicated region
    $region426: #{_forward_core.3} parent=1 // pred_check
      _
    $region427: #{_forward_core.3} parent=1 // pred_check_branch
      %5225 = sbr.rel (0) target = $region429
    $region428: #{_forward_core.3} parent=1 // pred_region
      _
    $region429: #{_forward_core.3} parent=1 // pred_fallthru
      _
    // Predicated region
    $region430: #{_forward_core.3} parent=1 // pred_check
      _
    $region431: #{_forward_core.3} parent=1 // pred_check_branch
      %5227 = sbr.rel (0) target = $region433
    $region432: #{_forward_core.3} parent=1 // pred_region
      _
    $region433: #{_forward_core.3} parent=1 // pred_fallthru
      _
    // Predicated region
    $region434: #{_forward_core.3} parent=1 // pred_check
      _
    $region435: #{_forward_core.3} parent=1 // pred_check_branch
      %5229 = sbr.rel (0) target = $region437
    $region436: #{_forward_core.3} parent=1 // pred_region
      _
    $region437: #{_forward_core.3} parent=1 // pred_fallthru
      _
    %5230 = vsyncpa [#allocation4], 1
    %5231 = vsyncpa [#allocation6], 1
    %5232 = vsyncpa [#allocation9], 1
    %5233 = vsyncpa [#allocation12], 1
    %5234 = vsyncpa [#allocation15], 1
    %5235 = vsyncpa [#allocation18], 1
    %5236 = vsyncpa [#allocation21], 1
    %5237 = vsyncpa [#allocation24], 1
    %5238 = vsyncpa [#allocation27], 1
    %5239 = vsyncpa [#allocation30], 1
    %5240 = vsyncpa [#allocation33], 1
    %5241 = vsyncpa [#allocation36], 1
    %5242 = vsyncpa [#allocation39], 1
    %5243 = vsyncpa [#allocation42], 1
    %5244 = vsyncpa [#allocation45], 1
    %5245 = vsyncpa [#allocation48], 1
    %5246 = vsyncpa [#allocation51], 1
    %5247 = vsyncpa [#allocation54], 1
    %5248 = vsyncpa [#allocation57], 1

</llo_original>
